<compile_context>
chip_gen: v7x
topology: tpu7x:2x2x1
jax: 0.10.0
libtpu: 0.0.40
codegen_flags: <defaults>
</compile_context>

<pallas_src>
import jax
import jax.numpy as jnp
from jax.experimental import pallas as pl
from jax.experimental.pallas import tpu as pltpu

# ---- module hyper-parameters (small, consistent with the module signature) ----
M, K, P, B = 16, 4, 2, 8           # antennas, users, sub-arrays, feedback bits/user
N_BATCH = 8                        # batch size
IN_DIM = K * B                     # 32  (decoder input width)
H1, H2, H3 = 2048, 1024, 1024      # decoder hidden widths (fixed by the module)
HEAD = M + 2 * P * K               # 32  (packed [theta | bb_re | bb_im] head width)
OUT_LANES = 2 * M * K              # 128 (lane-dense output slab width)
SLAB_W = H1 + H2 + H3 + HEAD       # 4128 (packed scale/shift slab width)
BN_EPS = 1e-5
TILE_N = 16                        # batch tile (>=16 rows -> full bf16 sublane pack)

# shift/mask constants for the in-kernel expansion-matrix generation
REP = M // P
assert (M * K) & (M * K - 1) == 0 and K & (K - 1) == 0 and REP & (REP - 1) == 0
LOG2_MK = (M * K).bit_length() - 1      # 6
LOG2_K = K.bit_length() - 1             # 2
LOG2_REP = REP.bit_length() - 1         # 3


# =======================  fully fused DecoderNet forward  =========================
def decoder_net_kernel(q_ref, w1_ref, w2_ref, w3_ref, wh_ref, st_ref, out_ref):
    # ---- packed scale/shift slab: row 0 = per-column multiplier on the f32
    #      matmul accumulator (int8 dequant scale), row 1 = additive shift ----
    t1 = st_ref[1:2, 0:H1]
    s2 = st_ref[0:1, H1:H1 + H2]
    t2 = st_ref[1:2, H1:H1 + H2]
    s3 = st_ref[0:1, H1 + H2:H1 + H2 + H3]
    t3 = st_ref[1:2, H1 + H2:H1 + H2 + H3]
    bh = st_ref[1:2, H1 + H2 + H3:SLAB_W]

    # ---- decoder: (fc + folded-BN + relu) x 3; bf16 MXU, f32 accumulation ----
    x = q_ref[...].astype(jnp.bfloat16)
    h = jnp.dot(x, w1_ref[...], preferred_element_type=jnp.float32)
    h = jnp.maximum(h + t1, 0.0)

    # int8 -> bf16 dequant in VMEM (exact: |int8| <= 127 representable in bf16);
    # per-column scale applied to the f32 accumulator after the dot.
    w2 = w2_ref[...].astype(jnp.bfloat16)
    h = jnp.dot(h.astype(jnp.bfloat16), w2, preferred_element_type=jnp.float32)
    h = jnp.maximum(h * s2 + t2, 0.0)

    w3 = w3_ref[...].astype(jnp.bfloat16)
    h = jnp.dot(h.astype(jnp.bfloat16), w3, preferred_element_type=jnp.float32)
    f = jnp.maximum(h * s3 + t3, 0.0)                            # (TILE_N, 1024)

    # ---- beamformer head: packed projection [theta | bb_re | bb_im] ----
    head = jnp.dot(f.astype(jnp.bfloat16), wh_ref[...],
                   preferred_element_type=jnp.float32) + bh      # (TILE_N, 32)
    ch = jnp.cos(head)                                            # EUP; bb cols unused
    sh = jnp.sin(head)

    # ---- constant 0/+-1 expansion matrices, regenerated in-kernel (no DMA) ----
    j = jax.lax.broadcasted_iota(jnp.int32, (HEAD, OUT_LANES), 0)  # head column
    c = jax.lax.broadcasted_iota(jnp.int32, (HEAD, OUT_LANES), 1)  # output lane
    half = c >> LOG2_MK                    # 0 = real half, 1 = imag half
    r = c & (M * K - 1)
    m = r >> LOG2_K                        # antenna index
    kk = r & (K - 1)                       # user index
    p = m >> LOG2_REP                      # sub-array of antenna m
    re_col = M + (p << LOG2_K) + kk        # bb real column feeding lane c
    im_col = re_col + P * K                # bb imag column feeding lane c
    is_re = (j == re_col).astype(jnp.float32)
    is_im = (j == im_col).astype(jnp.float32)
    e_sel = ((j < M) & (j == m)).astype(jnp.float32)   # selects cos/sin(theta_m)
    e_a = jnp.where(half == 0, is_re, is_im)           # cos multiplies this
    e_b = jnp.where(half == 0, -is_im, is_re)          # sin multiplies this

    # ---- complex block-diagonal combine via tiny MXU dots ----
    #   out[:, :MK] = cos*bb_re - sin*bb_im ; out[:, MK:] = sin*bb_re + cos*bb_im
    cosx = jnp.dot(ch, e_sel, preferred_element_type=jnp.float32)
    sinx = jnp.dot(sh, e_sel, preferred_element_type=jnp.float32)
    a = jnp.dot(head, e_a, preferred_element_type=jnp.float32)
    b = jnp.dot(head, e_b, preferred_element_type=jnp.float32)
    out_u = cosx * a + sinx * b                                   # (TILE_N, 128)

    # ---- Frobenius power normalization: ||F||_F = sqrt(K) ----
    pw = jnp.sum(out_u * out_u, axis=-1, keepdims=True)
    scale = jnp.sqrt(jnp.float32(K)) * jax.lax.rsqrt(pw + 1e-12)
    out_ref[...] = out_u * scale                    # one full lane-dense store


def decoder_net_forward(q, params):
    n = q.shape[0]
    n_pad = ((n + TILE_N - 1) // TILE_N) * TILE_N
    if n_pad != n:
        q = jnp.pad(q, ((0, n_pad - n), (0, 0)))

    w1, w2, w3 = params["w1"], params["w2"], params["w3"]
    wh, st = params["w_head"], params["scale_shift"]

    def const_spec(arr):
        # full-array block, constant index map -> DMA'd once, VMEM-resident
        return pl.BlockSpec(arr.shape, lambda i: (0, 0))

    flat = pl.pallas_call(
        decoder_net_kernel,
        out_shape=jax.ShapeDtypeStruct((n_pad, OUT_LANES), jnp.float32),
        grid=(n_pad // TILE_N,),
        in_specs=[
            pl.BlockSpec((TILE_N, IN_DIM), lambda i: (i, 0)),
            const_spec(w1), const_spec(w2), const_spec(w3),
            const_spec(wh), const_spec(st),
        ],
        out_specs=pl.BlockSpec((TILE_N, OUT_LANES), lambda i: (i, 0)),
        compiler_params=pltpu.CompilerParams(
            dimension_semantics=("parallel",),
            vmem_limit_bytes=32 * 1024 * 1024),
    )(q, w1, w2, w3, wh, st)
    return flat[:n].reshape(n, 2, M, K)


# ===========================  deterministic parameters  ============================
def init_params(key):
    ks = jax.random.split(key, 16)

    def lin(kw, kb, fan_in, fan_out):
        w = jax.random.normal(kw, (fan_in, fan_out), jnp.float32) * 0.02
        b = jax.random.normal(kb, (fan_out,), jnp.float32) * 0.01
        return w, b

    def bn(k, dim):
        k1, k2, k3, k4 = jax.random.split(k, 4)
        gamma = 1.0 + 0.1 * jax.random.normal(k1, (dim,), jnp.float32)
        beta = 0.05 * jax.random.normal(k2, (dim,), jnp.float32)
        mean = 0.02 * jax.random.normal(k3, (dim,), jnp.float32)
        var = jnp.abs(0.1 * jax.random.normal(k4, (dim,), jnp.float32)) + 0.9
        return gamma, beta, mean, var

    def fold(w, b, gamma, beta, mean, var):
        # eval-mode BatchNorm1d folded INTO the weights (ReLU after -> exact):
        #   BN(xW + b) = x(W*s) + ((b - mean)*s + beta),  s = gamma/sqrt(var+eps)
        s = gamma / jnp.sqrt(var + BN_EPS)
        return w * s[None, :], (b - mean) * s + beta

    def quant_i8(w):
        # symmetric per-output-column int8 quantization
        s = jnp.maximum(jnp.max(jnp.abs(w), axis=0, keepdims=True), 1e-12) / 127.0
        wq = jnp.clip(jnp.round(w / s), -127, 127).astype(jnp.int8)
        return wq, s

    p = {}
    w1, b1 = lin(ks[0], ks[1], IN_DIM, H1)
    w2, b2 = lin(ks[2], ks[3], H1, H2)
    w3, b3 = lin(ks[4], ks[5], H2, H3)

    w1f, t1 = fold(w1, b1, *bn(ks[6], H1))
    w2f, t2 = fold(w2, b2, *bn(ks[7], H2))
    w3f, t3 = fold(w3, b3, *bn(ks[8], H3))

    p["w1"] = w1f.astype(jnp.bfloat16)            # (32, 2048)   small -> bf16
    p["w2"], s2 = quant_i8(w2f)                   # (2048, 1024) int8 + (1,1024) scale
    p["w3"], s3 = quant_i8(w3f)                   # (1024, 1024) int8 + (1,1024) scale

    wt, bt = lin(ks[9], ks[10], H3, M)            # analog phase layer
    wb, bbs = lin(ks[11], ks[12], H3, 2 * P * K)  # digital baseband layer
    p["w_head"] = jnp.concatenate([wt, wb], axis=1).astype(jnp.bfloat16)   # (1024, 32)
    b_head = jnp.concatenate([bt, bbs])                                    # (32,)

    # copies for the pure-JAX reference
    p["t1"] = t1[None, :]
    p["s2"], p["t2"] = s2, t2[None, :]
    p["s3"], p["t3"] = s3, t3[None, :]
    p["b_head"] = b_head[None, :]

    # packed (2, 4128) scale/shift slab (single DMA for all per-column vectors)
    slab = jnp.zeros((2, SLAB_W), jnp.float32)
    slab = slab.at[0, :].set(1.0)
    slab = slab.at[1, 0:H1].set(t1)
    slab = slab.at[0, H1:H1 + H2].set(s2[0])
    slab = slab.at[1, H1:H1 + H2].set(t2)
    slab = slab.at[0, H1 + H2:H1 + H2 + H3].set(s3[0])
    slab = slab.at[1, H1 + H2:H1 + H2 + H3].set(t3)
    slab = slab.at[1, H1 + H2 + H3:].set(b_head)
    p["scale_shift"] = slab
    return p


# ======================  pure-JAX reference (same quantized net)  ==================
def reference_forward(q, params):
    def mm(x, w):
        return jnp.dot(x.astype(jnp.bfloat16), w.astype(jnp.bfloat16),
                       preferred_element_type=jnp.float32)

    h = jnp.maximum(mm(q, params["w1"]) + params["t1"], 0.0)
    h = jnp.maximum(mm(h, params["w2"]) * params["s2"] + params["t2"], 0.0)
    f = jnp.maximum(mm(h, params["w3"]) * params["s3"] + params["t3"], 0.0)
    head = mm(f, params["w_head"]) + params["b_head"]

    n = q.shape[0]
    theta = head[:, :M]
    bbr = head[:, M:M + P * K].reshape(n, P, K)
    bbi = head[:, M + P * K:].reshape(n, P, K)
    bbr_f = jnp.repeat(bbr, REP, axis=1)          # block-contiguous sub-array mapping
    bbi_f = jnp.repeat(bbi, REP, axis=1)
    ct = jnp.cos(theta)[:, :, None]
    st = jnp.sin(theta)[:, :, None]
    f_re = ct * bbr_f - st * bbi_f
    f_im = st * bbr_f + ct * bbi_f
    fro2 = jnp.sum(f_re ** 2 + f_im ** 2, axis=(1, 2), keepdims=True)
    scale = jnp.sqrt(jnp.float32(K)) / jnp.sqrt(fro2 + 1e-12)
    return jnp.stack([f_re * scale, f_im * scale], axis=1)


if __name__ == "__main__":
    key = jax.random.PRNGKey(0)
    k_param, k_q = jax.random.split(key)
    params = init_params(k_param)
    q = jax.random.normal(k_q, (N_BATCH, IN_DIM), jnp.float32)

    out = decoder_net_forward(q, params)
    out = jax.block_until_ready(out)

    assert out.shape == (N_BATCH, 2, M, K)
    assert bool(jnp.all(jnp.isfinite(out)))

    ref = reference_forward(q, params)
    max_err = float(jnp.max(jnp.abs(out - ref)))
    assert max_err < 3e-2, f"kernel vs reference max abs error {max_err}"

    print("KERNEL_OK")
</pallas_src>

<mosaic_0001>
module attributes {stable_mosaic.version = 11 : i64} {
  func.func @decoder_net_kernel(%arg0: i32, %arg1: memref<16x32xf32, #tpu.memory_space<vmem>>, %arg2: memref<32x2048xbf16, #tpu.memory_space<vmem>>, %arg3: memref<2048x1024xi8, #tpu.memory_space<vmem>>, %arg4: memref<1024x1024xi8, #tpu.memory_space<vmem>>, %arg5: memref<1024x32xbf16, #tpu.memory_space<vmem>>, %arg6: memref<2x4128xf32, #tpu.memory_space<vmem>>, %arg7: memref<16x128xf32, #tpu.memory_space<vmem>>) attributes {dimension_semantics = [#tpu.dimension_semantics<parallel>], iteration_bounds = array<i64: 1>, scalar_prefetch = 0 : i64, scratch_operands = 0 : i64, tpu.core_type = #tpu.core_type<tc>, window_params = [{transform_indices = @transform_0, window_bounds = array<i64: 16, 32>}, {pipeline_mode = #tpu.pipeline_mode<synchronous>, transform_indices = @transform_1, window_bounds = array<i64: 32, 2048>}, {pipeline_mode = #tpu.pipeline_mode<synchronous>, transform_indices = @transform_2, window_bounds = array<i64: 2048, 1024>}, {pipeline_mode = #tpu.pipeline_mode<synchronous>, transform_indices = @transform_3, window_bounds = array<i64: 1024, 1024>}, {pipeline_mode = #tpu.pipeline_mode<synchronous>, transform_indices = @transform_4, window_bounds = array<i64: 1024, 32>}, {pipeline_mode = #tpu.pipeline_mode<synchronous>, transform_indices = @transform_5, window_bounds = array<i64: 2, 4128>}, {transform_indices = @transform_6, window_bounds = array<i64: 16, 128>}]} {
    %c1 = arith.constant 1 : index
    %c0 = arith.constant 0 : index
    %0 = vector.load %arg6[%c1, %c0] : memref<2x4128xf32, #tpu.memory_space<vmem>>, vector<1x2048xf32>
    %c0_0 = arith.constant 0 : index
    %c2048 = arith.constant 2048 : index
    %1 = vector.load %arg6[%c0_0, %c2048] : memref<2x4128xf32, #tpu.memory_space<vmem>>, vector<1x1024xf32>
    %c1_1 = arith.constant 1 : index
    %c2048_2 = arith.constant 2048 : index
    %2 = vector.load %arg6[%c1_1, %c2048_2] : memref<2x4128xf32, #tpu.memory_space<vmem>>, vector<1x1024xf32>
    %c0_3 = arith.constant 0 : index
    %c3072 = arith.constant 3072 : index
    %3 = vector.load %arg6[%c0_3, %c3072] : memref<2x4128xf32, #tpu.memory_space<vmem>>, vector<1x1024xf32>
    %c1_4 = arith.constant 1 : index
    %c3072_5 = arith.constant 3072 : index
    %4 = vector.load %arg6[%c1_4, %c3072_5] : memref<2x4128xf32, #tpu.memory_space<vmem>>, vector<1x1024xf32>
    %c1_6 = arith.constant 1 : index
    %c4096 = arith.constant 4096 : index
    %5 = vector.load %arg6[%c1_6, %c4096] : memref<2x4128xf32, #tpu.memory_space<vmem>>, vector<1x32xf32>
    %c0_7 = arith.constant 0 : index
    %c0_8 = arith.constant 0 : index
    %6 = vector.load %arg1[%c0_7, %c0_8] : memref<16x32xf32, #tpu.memory_space<vmem>>, vector<16x32xf32>
    %7 = arith.truncf %6 : vector<16x32xf32> to vector<16x32xbf16>
    %c0_9 = arith.constant 0 : index
    %c0_10 = arith.constant 0 : index
    %8 = vector.load %arg2[%c0_9, %c0_10] : memref<32x2048xbf16, #tpu.memory_space<vmem>>, vector<32x2048xbf16>
    %cst = arith.constant dense<0.000000e+00> : vector<16x2048xf32>
    %9 = tpu.matmul %7, %8, %cst {dimension_numbers = #tpu.dot_dimension_numbers<[1], [0], [0], [1], [0, 0, 1, 1], [], []>} : vector<16x32xbf16>, vector<32x2048xbf16>, vector<16x2048xf32> -> vector<16x2048xf32>
    %10 = vector.broadcast %0 : vector<1x2048xf32> to vector<16x2048xf32>
    %11 = arith.addf %9, %10 : vector<16x2048xf32>
    %cst_11 = arith.constant 0.000000e+00 : f32
    %12 = vector.broadcast %cst_11 : f32 to vector<16x2048xf32>
    %13 = arith.maximumf %11, %12 : vector<16x2048xf32>
    %c0_12 = arith.constant 0 : index
    %c0_13 = arith.constant 0 : index
    %14 = vector.load %arg3[%c0_12, %c0_13] : memref<2048x1024xi8, #tpu.memory_space<vmem>>, vector<2048x1024xi8>
    %15 = arith.sitofp %14 : vector<2048x1024xi8> to vector<2048x1024xbf16>
    %16 = arith.truncf %13 : vector<16x2048xf32> to vector<16x2048xbf16>
    %cst_14 = arith.constant dense<0.000000e+00> : vector<16x1024xf32>
    %17 = tpu.matmul %16, %15, %cst_14 {dimension_numbers = #tpu.dot_dimension_numbers<[1], [0], [0], [1], [0, 0, 1, 1], [], []>} : vector<16x2048xbf16>, vector<2048x1024xbf16>, vector<16x1024xf32> -> vector<16x1024xf32>
    %18 = vector.broadcast %1 : vector<1x1024xf32> to vector<16x1024xf32>
    %19 = arith.mulf %17, %18 : vector<16x1024xf32>
    %20 = vector.broadcast %2 : vector<1x1024xf32> to vector<16x1024xf32>
    %21 = arith.addf %19, %20 : vector<16x1024xf32>
    %cst_15 = arith.constant 0.000000e+00 : f32
    %22 = vector.broadcast %cst_15 : f32 to vector<16x1024xf32>
    %23 = arith.maximumf %21, %22 : vector<16x1024xf32>
    %c0_16 = arith.constant 0 : index
    %c0_17 = arith.constant 0 : index
    %24 = vector.load %arg4[%c0_16, %c0_17] : memref<1024x1024xi8, #tpu.memory_space<vmem>>, vector<1024x1024xi8>
    %25 = arith.sitofp %24 : vector<1024x1024xi8> to vector<1024x1024xbf16>
    %26 = arith.truncf %23 : vector<16x1024xf32> to vector<16x1024xbf16>
    %cst_18 = arith.constant dense<0.000000e+00> : vector<16x1024xf32>
    %27 = tpu.matmul %26, %25, %cst_18 {dimension_numbers = #tpu.dot_dimension_numbers<[1], [0], [0], [1], [0, 0, 1, 1], [], []>} : vector<16x1024xbf16>, vector<1024x1024xbf16>, vector<16x1024xf32> -> vector<16x1024xf32>
    %28 = vector.broadcast %3 : vector<1x1024xf32> to vector<16x1024xf32>
    %29 = arith.mulf %27, %28 : vector<16x1024xf32>
    %30 = vector.broadcast %4 : vector<1x1024xf32> to vector<16x1024xf32>
    %31 = arith.addf %29, %30 : vector<16x1024xf32>
    %cst_19 = arith.constant 0.000000e+00 : f32
    %32 = vector.broadcast %cst_19 : f32 to vector<16x1024xf32>
    %33 = arith.maximumf %31, %32 : vector<16x1024xf32>
    %34 = arith.truncf %33 : vector<16x1024xf32> to vector<16x1024xbf16>
    %c0_20 = arith.constant 0 : index
    %c0_21 = arith.constant 0 : index
    %35 = vector.load %arg5[%c0_20, %c0_21] : memref<1024x32xbf16, #tpu.memory_space<vmem>>, vector<1024x32xbf16>
    %cst_22 = arith.constant dense<0.000000e+00> : vector<16x32xf32>
    %36 = tpu.matmul %34, %35, %cst_22 {dimension_numbers = #tpu.dot_dimension_numbers<[1], [0], [0], [1], [0, 0, 1, 1], [], []>} : vector<16x1024xbf16>, vector<1024x32xbf16>, vector<16x32xf32> -> vector<16x32xf32>
    %37 = vector.broadcast %5 : vector<1x32xf32> to vector<16x32xf32>
    %38 = arith.addf %36, %37 : vector<16x32xf32>
    %39 = math.cos %38 : vector<16x32xf32>
    %40 = math.sin %38 : vector<16x32xf32>
    %41 = tpu.iota {dimensions = array<i32: 0>} : vector<32x128xi32>
    %42 = tpu.iota {dimensions = array<i32: 1>} : vector<32x128xi32>
    %c6_i32 = arith.constant 6 : i32
    %43 = vector.broadcast %c6_i32 : i32 to vector<32x128xi32>
    %44 = arith.shrsi %42, %43 : vector<32x128xi32>
    %c63_i32 = arith.constant 63 : i32
    %45 = vector.broadcast %c63_i32 : i32 to vector<32x128xi32>
    %46 = arith.andi %42, %45 : vector<32x128xi32>
    %c2_i32 = arith.constant 2 : i32
    %47 = vector.broadcast %c2_i32 : i32 to vector<32x128xi32>
    %48 = arith.shrsi %46, %47 : vector<32x128xi32>
    %c3_i32 = arith.constant 3 : i32
    %49 = vector.broadcast %c3_i32 : i32 to vector<32x128xi32>
    %50 = arith.andi %46, %49 : vector<32x128xi32>
    %c3_i32_23 = arith.constant 3 : i32
    %51 = vector.broadcast %c3_i32_23 : i32 to vector<32x128xi32>
    %52 = arith.shrsi %48, %51 : vector<32x128xi32>
    %c2_i32_24 = arith.constant 2 : i32
    %53 = vector.broadcast %c2_i32_24 : i32 to vector<32x128xi32>
    %54 = arith.shli %52, %53 : vector<32x128xi32>
    %c16_i32 = arith.constant 16 : i32
    %55 = vector.broadcast %c16_i32 : i32 to vector<32x128xi32>
    %56 = arith.addi %55, %54 : vector<32x128xi32>
    %57 = arith.addi %56, %50 : vector<32x128xi32>
    %c8_i32 = arith.constant 8 : i32
    %58 = vector.broadcast %c8_i32 : i32 to vector<32x128xi32>
    %59 = arith.addi %57, %58 : vector<32x128xi32>
    %60 = arith.cmpi eq, %41, %57 : vector<32x128xi32>
    %61 = arith.extui %60 : vector<32x128xi1> to vector<32x128xi32>
    %62 = arith.sitofp %61 : vector<32x128xi32> to vector<32x128xf32>
    %63 = arith.cmpi eq, %41, %59 : vector<32x128xi32>
    %64 = arith.extui %63 : vector<32x128xi1> to vector<32x128xi32>
    %65 = arith.sitofp %64 : vector<32x128xi32> to vector<32x128xf32>
    %c16_i32_25 = arith.constant 16 : i32
    %66 = vector.broadcast %c16_i32_25 : i32 to vector<32x128xi32>
    %67 = arith.cmpi slt, %41, %66 : vector<32x128xi32>
    %68 = arith.cmpi eq, %41, %48 : vector<32x128xi32>
    %69 = arith.andi %67, %68 : vector<32x128xi1>
    %70 = arith.extui %69 : vector<32x128xi1> to vector<32x128xi32>
    %71 = arith.sitofp %70 : vector<32x128xi32> to vector<32x128xf32>
    %c0_i32 = arith.constant 0 : i32
    %72 = vector.broadcast %c0_i32 : i32 to vector<32x128xi32>
    %73 = arith.cmpi eq, %44, %72 : vector<32x128xi32>
    %74 = arith.select %73, %62, %65 : vector<32x128xi1>, vector<32x128xf32>
    %c0_i32_26 = arith.constant 0 : i32
    %75 = vector.broadcast %c0_i32_26 : i32 to vector<32x128xi32>
    %76 = arith.cmpi eq, %44, %75 : vector<32x128xi32>
    %cst_27 = arith.constant 0.000000e+00 : f32
    %77 = vector.broadcast %cst_27 : f32 to vector<32x128xf32>
    %78 = arith.subf %77, %65 : vector<32x128xf32>
    %79 = arith.select %76, %78, %62 : vector<32x128xi1>, vector<32x128xf32>
    %cst_28 = arith.constant dense<0.000000e+00> : vector<16x128xf32>
    %80 = tpu.matmul %39, %71, %cst_28 {dimension_numbers = #tpu.dot_dimension_numbers<[1], [0], [0], [1], [0, 0, 1, 1], [], []>} : vector<16x32xf32>, vector<32x128xf32>, vector<16x128xf32> -> vector<16x128xf32>
    %cst_29 = arith.constant dense<0.000000e+00> : vector<16x128xf32>
    %81 = tpu.matmul %40, %71, %cst_29 {dimension_numbers = #tpu.dot_dimension_numbers<[1], [0], [0], [1], [0, 0, 1, 1], [], []>} : vector<16x32xf32>, vector<32x128xf32>, vector<16x128xf32> -> vector<16x128xf32>
    %cst_30 = arith.constant dense<0.000000e+00> : vector<16x128xf32>
    %82 = tpu.matmul %38, %74, %cst_30 {dimension_numbers = #tpu.dot_dimension_numbers<[1], [0], [0], [1], [0, 0, 1, 1], [], []>} : vector<16x32xf32>, vector<32x128xf32>, vector<16x128xf32> -> vector<16x128xf32>
    %cst_31 = arith.constant dense<0.000000e+00> : vector<16x128xf32>
    %83 = tpu.matmul %38, %79, %cst_31 {dimension_numbers = #tpu.dot_dimension_numbers<[1], [0], [0], [1], [0, 0, 1, 1], [], []>} : vector<16x32xf32>, vector<32x128xf32>, vector<16x128xf32> -> vector<16x128xf32>
    %84 = arith.mulf %80, %82 : vector<16x128xf32>
    %85 = arith.mulf %81, %83 : vector<16x128xf32>
    %86 = arith.addf %84, %85 : vector<16x128xf32>
    %87 = arith.mulf %86, %86 : vector<16x128xf32>
    %cst_32 = arith.constant dense<0.000000e+00> : vector<16xf32>
    %88 = vector.multi_reduction <add>, %87, %cst_32 [1] : vector<16x128xf32> to vector<16xf32>
    %89 = vector.shape_cast %88 : vector<16xf32> to vector<16x1xf32>
    %cst_33 = arith.constant 4.000000e+00 : f32
    %90 = math.sqrt %cst_33 : f32
    %cst_34 = arith.constant 9.99999996E-13 : f32
    %91 = vector.broadcast %cst_34 : f32 to vector<16x1xf32>
    %92 = arith.addf %89, %91 : vector<16x1xf32>
    %93 = math.rsqrt %92 : vector<16x1xf32>
    %94 = vector.broadcast %90 : f32 to vector<16x1xf32>
    %95 = arith.mulf %94, %93 : vector<16x1xf32>
    %96 = vector.broadcast %95 : vector<16x1xf32> to vector<16x128xf32>
    %97 = arith.mulf %86, %96 : vector<16x128xf32>
    %c0_35 = arith.constant 0 : index
    %c0_36 = arith.constant 0 : index
    %98 = vector.load %arg7[%c0_35, %c0_36] : memref<16x128xf32, #tpu.memory_space<vmem>>, vector<16x128xf32>
    tpu.vector_store %arg7[%c0_35, %c0_36], %97 {strides = array<i32>} : memref<16x128xf32, #tpu.memory_space<vmem>>, vector<16x128xf32>,
    return
  }
  func.func @transform_0(%arg0: i32) -> (i32, i32) {
    %c0_i32 = arith.constant 0 : i32
    %c0_i32_0 = arith.constant 0 : i32
    return %arg0, %c0_i32 : i32, i32
  }
  func.func @transform_1(%arg0: i32) -> (i32, i32) {
    %c0_i32 = arith.constant 0 : i32
    %c0_i32_0 = arith.constant 0 : i32
    %c0_i32_1 = arith.constant 0 : i32
    return %c0_i32, %c0_i32_0 : i32, i32
  }
  func.func @transform_2(%arg0: i32) -> (i32, i32) {
    %c0_i32 = arith.constant 0 : i32
    %c0_i32_0 = arith.constant 0 : i32
    %c0_i32_1 = arith.constant 0 : i32
    return %c0_i32, %c0_i32_0 : i32, i32
  }
  func.func @transform_3(%arg0: i32) -> (i32, i32) {
    %c0_i32 = arith.constant 0 : i32
    %c0_i32_0 = arith.constant 0 : i32
    %c0_i32_1 = arith.constant 0 : i32
    return %c0_i32, %c0_i32_0 : i32, i32
  }
  func.func @transform_4(%arg0: i32) -> (i32, i32) {
    %c0_i32 = arith.constant 0 : i32
    %c0_i32_0 = arith.constant 0 : i32
    %c0_i32_1 = arith.constant 0 : i32
    return %c0_i32, %c0_i32_0 : i32, i32
  }
  func.func @transform_5(%arg0: i32) -> (i32, i32) {
    %c0_i32 = arith.constant 0 : i32
    %c0_i32_0 = arith.constant 0 : i32
    %c0_i32_1 = arith.constant 0 : i32
    return %c0_i32, %c0_i32_0 : i32, i32
  }
  func.func @transform_6(%arg0: i32) -> (i32, i32) {
    %c0_i32 = arith.constant 0 : i32
    %c0_i32_0 = arith.constant 0 : i32
    return %arg0, %c0_i32 : i32, i32
  }
}

</mosaic_0001>

<llo_original>
// kernel: tpu_custom_call.1
$region0: #{tpu_custom_call.1}
  #allocation0 [shape = 'u32[]', space=smem, size = 0x4, offset = 0x4, fixed_abs, tag = 'smem constant byte address 0x4 - core index']
  #allocation1 [shape = 'u32[144,128]{1,0:T(1,128)}', space=vmem, size = 0x12000, scoped, tag = 'internal scratch']
  %s0 = inlined_call_operand.hbm [shape: f32[16,32], index: 0, kind: input, shape index: {}]
  %s1 = inlined_call_operand.hbm [shape: bf16[32,2048], index: 1, kind: input, shape index: {}]
  %s2 = inlined_call_operand.hbm [shape: s8[2048,1024], index: 2, kind: input, shape index: {}]
  %s3 = inlined_call_operand.hbm [shape: s8[1024,1024], index: 3, kind: input, shape index: {}]
  %s4 = inlined_call_operand.vmem [shape: bf16[1024,32], index: 4, kind: input, shape index: {}]
  %s5 = inlined_call_operand.hbm [shape: f32[2,4128], index: 5, kind: input, shape index: {}]
  %s6 = inlined_call_operand.hbm [shape: f32[16,128], index: 6, kind: output, shape index: {}]
  %s7 = sld [smem:[#allocation0]]
  $region54: #{tpu_custom_call.1} parent=0
    _
  %s9 = ssub.s32 1, %s7
  %s10 = scalar_select 0, %s9, %s7
  $region1: #{tpu_custom_call.1} parent=0
    #allocation2 [shape = 'u8[8192]{0}', space=vmem, size = 0x2000, scoped, tag = 'input window, operand 0, single buffered']
    #allocation3 [shape = 's32[1]{0}', space=sflag, size = 0x4, scoped, tag = 'scoped memory for tpu_custom_call.1']
    #allocation4 [shape = 's32[1]{0}', space=sflag, size = 0x4, scoped, tag = 'scoped memory for tpu_custom_call.1']
    #allocation5 [shape = 'u8[131072]{0}', space=vmem, size = 0x20000, scoped, tag = 'input window, operand 1, single buffered']
    #allocation6 [shape = 's32[1]{0}', space=sflag, size = 0x4, scoped, tag = 'scoped memory for tpu_custom_call.1']
    #allocation7 [shape = 'u8[2097152]{0}', space=vmem, size = 0x200000, scoped, tag = 'input window, operand 2, single buffered']
    #allocation8 [shape = 'u8[1048576]{0}', space=vmem, size = 0x100000, scoped, tag = 'input window, operand 3, single buffered']
    #allocation9 [shape = 's32[1]{0}', space=sflag, size = 0x4, scoped, tag = 'scoped memory for tpu_custom_call.1']
    #allocation10 [shape = 'u8[33792]{0}', space=vmem, size = 0x8400, scoped, tag = 'input window, operand 5, single buffered']
    #allocation11 [shape = 'u8[8192]{0}', space=vmem, size = 0x2000, scoped, tag = 'output window, operand 0, single buffered']
    %11 = vsyncpa [#allocation3], 0
    %12 = vsyncpa [#allocation6], 0
    %13 = vsyncpa [#allocation9], 0
    %14 = vsyncpa [#allocation4], 0
    // Predicated region
    $region2: #{tpu_custom_call.1} parent=1 // pred_check
      _
    $region3: #{tpu_custom_call.1} parent=1 // pred_check_branch
      %16 = sbr.rel (0) target = $region5
    $region4: #{tpu_custom_call.1} parent=1 // pred_region
      %s18 = ssub.s32 256, 256
      %19 = vsyncadd [#allocation3], %s18
      %s20 = sshll.u32 [#allocation2], 4
      %s21 = int_to_ptr.vmem [resolvable:$true] %s20
      %26 = dma.hbm_to_vmem [thread:$0]  %s0, 256, %s21, [#allocation3], 128, 128, 8
    $region5: #{tpu_custom_call.1} parent=1 // pred_fallthru
      _
    // Predicated region
    $region6: #{tpu_custom_call.1} parent=1 // pred_check
      _
    $region7: #{tpu_custom_call.1} parent=1 // pred_check_branch
      %28 = sbr.rel (0) target = $region9
    $region8: #{tpu_custom_call.1} parent=1 // pred_region
      %s30 = ssub.s32 4096, 4096
      %31 = vsyncadd [#allocation6], %s30
      %s32 = sshll.u32 [#allocation5], 4
      %s33 = int_to_ptr.vmem [resolvable:$true] %s32
      %38 = dma.hbm_to_vmem [thread:$0]  %s1, 4096, %s33, [#allocation6], 1024, 1024, 64
    $region9: #{tpu_custom_call.1} parent=1 // pred_fallthru
      _
    // Predicated region
    $region10: #{tpu_custom_call.1} parent=1 // pred_check
      _
    $region11: #{tpu_custom_call.1} parent=1 // pred_check_branch
      %40 = sbr.rel (0) target = $region13
    $region12: #{tpu_custom_call.1} parent=1 // pred_region
      %s42 = ssub.s32 65536, 65536
      %43 = vsyncadd [#allocation6], %s42
      %s44 = sshll.u32 [#allocation7], 4
      %s45 = int_to_ptr.vmem [resolvable:$true] %s44
      %50 = dma.hbm_to_vmem [thread:$0]  %s2, 65536, %s45, [#allocation6], 1024, 1024, 64
    $region13: #{tpu_custom_call.1} parent=1 // pred_fallthru
      _
    // Predicated region
    $region14: #{tpu_custom_call.1} parent=1 // pred_check
      _
    $region15: #{tpu_custom_call.1} parent=1 // pred_check_branch
      %52 = sbr.rel (0) target = $region17
    $region16: #{tpu_custom_call.1} parent=1 // pred_region
      %s54 = ssub.s32 32768, 32768
      %55 = vsyncadd [#allocation9], %s54
      %s56 = sshll.u32 [#allocation8], 4
      %s57 = int_to_ptr.vmem [resolvable:$true] %s56
      %62 = dma.hbm_to_vmem [thread:$0]  %s3, 32768, %s57, [#allocation9], 1024, 1024, 64
    $region17: #{tpu_custom_call.1} parent=1 // pred_fallthru
      _
    // Predicated region
    $region18: #{tpu_custom_call.1} parent=1 // pred_check
      _
    $region19: #{tpu_custom_call.1} parent=1 // pred_check_branch
      %64 = sbr.rel (0) target = $region21
    $region20: #{tpu_custom_call.1} parent=1 // pred_region
      _
    $region21: #{tpu_custom_call.1} parent=1 // pred_fallthru
      _
    // Predicated region
    $region22: #{tpu_custom_call.1} parent=1 // pred_check
      _
    $region23: #{tpu_custom_call.1} parent=1 // pred_check_branch
      %66 = sbr.rel (0) target = $region25
    $region24: #{tpu_custom_call.1} parent=1 // pred_region
      %s68 = ssub.s32 1056, 1056
      %69 = vsyncadd [#allocation9], %s68
      %s71 = sshll.u32 [#allocation10], 4
      %s72 = int_to_ptr.vmem [resolvable:$true] %s71
      %74 = dma.hbm_to_vmem [thread:$0]  %s5, 1056, %s72, [#allocation9]
    $region25: #{tpu_custom_call.1} parent=1 // pred_fallthru
      _
    // Predicated region
    $region26: #{tpu_custom_call.1} parent=1 // pred_check
      _
    $region27: #{tpu_custom_call.1} parent=1 // pred_check_branch
      %76 = sbr.rel (0) target = $region29
    $region28: #{tpu_custom_call.1} parent=1 // pred_region
      %77 = dma.done [#allocation3], 256
    $region29: #{tpu_custom_call.1} parent=1 // pred_fallthru
      _
    // Predicated region
    $region30: #{tpu_custom_call.1} parent=1 // pred_check
      _
    $region31: #{tpu_custom_call.1} parent=1 // pred_check_branch
      %79 = sbr.rel (0) target = $region33
    $region32: #{tpu_custom_call.1} parent=1 // pred_region
      %80 = dma.done [#allocation6], 4096
    $region33: #{tpu_custom_call.1} parent=1 // pred_fallthru
      _
    // Predicated region
    $region34: #{tpu_custom_call.1} parent=1 // pred_check
      _
    $region35: #{tpu_custom_call.1} parent=1 // pred_check_branch
      %82 = sbr.rel (0) target = $region37
    $region36: #{tpu_custom_call.1} parent=1 // pred_region
      %83 = dma.done [#allocation6], 65536
    $region37: #{tpu_custom_call.1} parent=1 // pred_fallthru
      _
    // Predicated region
    $region38: #{tpu_custom_call.1} parent=1 // pred_check
      _
    $region39: #{tpu_custom_call.1} parent=1 // pred_check_branch
      %85 = sbr.rel (0) target = $region41
    $region40: #{tpu_custom_call.1} parent=1 // pred_region
      %86 = dma.done [#allocation9], 32768
    $region41: #{tpu_custom_call.1} parent=1 // pred_fallthru
      _
    // Predicated region
    $region42: #{tpu_custom_call.1} parent=1 // pred_check
      _
    $region43: #{tpu_custom_call.1} parent=1 // pred_check_branch
      %88 = sbr.rel (0) target = $region45
    $region44: #{tpu_custom_call.1} parent=1 // pred_region
      %89 = dma.done [#allocation9], 1056
    $region45: #{tpu_custom_call.1} parent=1 // pred_fallthru
      _
    %s91 = scalar_lea.vmem [#allocation10], 1
    %v92 = vld [vmem:[%s91] ss:$2 sm:$0xff]
    %s93 = scalar_lea.vmem [#allocation10], 17
    %v94 = vld [vmem:[%s93] ss:$2 sm:$0xff]
    %s95 = scalar_lea.vmem [#allocation10], 32
    %v96 = vld [vmem:[%s95] ss:$2 sm:$0xff]
    %s97 = scalar_lea.vmem [#allocation10], 33
    %v98 = vld [vmem:[%s97] ss:$2 sm:$0xff]
    %s99 = scalar_lea.vmem [#allocation10], 48
    %v100 = vld [vmem:[%s99] ss:$2 sm:$0xff]
    %s101 = scalar_lea.vmem [#allocation10], 49
    %v102 = vld [vmem:[%s101] ss:$2 sm:$0xff]
    %v103 = vld [vmem:[#allocation10 + $0x41] sm:$0x1]
    %v104 = vld [vmem:[#allocation2] sm:$0xff]
    %v105 = vld [vmem:[#allocation2 + $0x8] sm:$0xff]
    %v106 = vpack.c.bf16 %v105, %v104
    %v107 = vld [vmem:[#allocation5] sm:$0xff]
    %v108 = vld [vmem:[#allocation5 + $0x8] sm:$0xff]
    %v109 = vld [vmem:[#allocation5 + $0x10] sm:$0xff]
    %v110 = vld [vmem:[#allocation5 + $0x18] sm:$0xff]
    %v111 = vld [vmem:[#allocation5 + $0x20] sm:$0xff]
    %v112 = vld [vmem:[#allocation5 + $0x28] sm:$0xff]
    %v113 = vld [vmem:[#allocation5 + $0x30] sm:$0xff]
    %v114 = vld [vmem:[#allocation5 + $0x38] sm:$0xff]
    %v115 = vld [vmem:[#allocation5 + $0x40] sm:$0xff]
    %v116 = vld [vmem:[#allocation5 + $0x48] sm:$0xff]
    %v117 = vld [vmem:[#allocation5 + $0x50] sm:$0xff]
    %v118 = vld [vmem:[#allocation5 + $0x58] sm:$0xff]
    %v119 = vld [vmem:[#allocation5 + $0x60] sm:$0xff]
    %v120 = vld [vmem:[#allocation5 + $0x68] sm:$0xff]
    %v121 = vld [vmem:[#allocation5 + $0x70] sm:$0xff]
    %v122 = vld [vmem:[#allocation5 + $0x78] sm:$0xff]
    %v123 = vld [vmem:[#allocation5 + $0x80] sm:$0xff]
    %v124 = vld [vmem:[#allocation5 + $0x88] sm:$0xff]
    %v125 = vld [vmem:[#allocation5 + $0x90] sm:$0xff]
    %v126 = vld [vmem:[#allocation5 + $0x98] sm:$0xff]
    %v127 = vld [vmem:[#allocation5 + $0xa0] sm:$0xff]
    %v128 = vld [vmem:[#allocation5 + $0xa8] sm:$0xff]
    %v129 = vld [vmem:[#allocation5 + $0xb0] sm:$0xff]
    %v130 = vld [vmem:[#allocation5 + $0xb8] sm:$0xff]
    %v131 = vld [vmem:[#allocation5 + $0xc0] sm:$0xff]
    %v132 = vld [vmem:[#allocation5 + $0xc8] sm:$0xff]
    %v133 = vld [vmem:[#allocation5 + $0xd0] sm:$0xff]
    %v134 = vld [vmem:[#allocation5 + $0xd8] sm:$0xff]
    %v135 = vld [vmem:[#allocation5 + $0xe0] sm:$0xff]
    %v136 = vld [vmem:[#allocation5 + $0xe8] sm:$0xff]
    %v137 = vld [vmem:[#allocation5 + $0xf0] sm:$0xff]
    %v138 = vld [vmem:[#allocation5 + $0xf8] sm:$0xff]
    %v141 = vlaneseq
    %v142 = vshrl.u32 %v141, 7
    %v143 = vsub.s32 0, %v142
    %v144 = vrot.slane %v92, %v143
    %v145 = vlaneseq
    %v146 = vshrl.u32 %v145, 7
    %v147 = vsub.s32 1, %v146
    %v148 = vrot.slane %v92, %v147
    %v149 = vlaneseq
    %v150 = vshrl.u32 %v149, 7
    %v151 = vsub.s32 2, %v150
    %v152 = vrot.slane %v92, %v151
    %v153 = vlaneseq
    %v154 = vshrl.u32 %v153, 7
    %v155 = vsub.s32 3, %v154
    %v156 = vrot.slane %v92, %v155
    %v157 = vlaneseq
    %v158 = vshrl.u32 %v157, 7
    %v159 = vsub.s32 4, %v158
    %v160 = vrot.slane %v92, %v159
    %v161 = vlaneseq
    %v162 = vshrl.u32 %v161, 7
    %v163 = vsub.s32 5, %v162
    %v164 = vrot.slane %v92, %v163
    %v165 = vlaneseq
    %v166 = vshrl.u32 %v165, 7
    %v167 = vsub.s32 6, %v166
    %v168 = vrot.slane %v92, %v167
    %v169 = vlaneseq
    %v170 = vshrl.u32 %v169, 7
    %v171 = vsub.s32 7, %v170
    %v172 = vrot.slane %v92, %v171
    %v173 = vlaneseq
    %v174 = vshrl.u32 %v173, 7
    %v175 = vsub.s32 0, %v174
    %v176 = vrot.slane %v94, %v175
    %v177 = vlaneseq
    %v178 = vshrl.u32 %v177, 7
    %v179 = vsub.s32 1, %v178
    %v180 = vrot.slane %v94, %v179
    %v181 = vlaneseq
    %v182 = vshrl.u32 %v181, 7
    %v183 = vsub.s32 2, %v182
    %v184 = vrot.slane %v94, %v183
    %v185 = vlaneseq
    %v186 = vshrl.u32 %v185, 7
    %v187 = vsub.s32 3, %v186
    %v188 = vrot.slane %v94, %v187
    %v189 = vlaneseq
    %v190 = vshrl.u32 %v189, 7
    %v191 = vsub.s32 4, %v190
    %v192 = vrot.slane %v94, %v191
    %v193 = vlaneseq
    %v194 = vshrl.u32 %v193, 7
    %v195 = vsub.s32 5, %v194
    %v196 = vrot.slane %v94, %v195
    %v197 = vlaneseq
    %v198 = vshrl.u32 %v197, 7
    %v199 = vsub.s32 6, %v198
    %v200 = vrot.slane %v94, %v199
    %v201 = vlaneseq
    %v202 = vshrl.u32 %v201, 7
    %v203 = vsub.s32 7, %v202
    %v204 = vrot.slane %v94, %v203
    %v253 = vunpack.c.l.b16 %v107
    %v254 = vunpack.c.h.b16 %v107
    %v255 = vunpack.c.l.b16 %v108
    %v256 = vunpack.c.h.b16 %v108
    %v257 = vunpack.c.l.b16 %v109
    %v258 = vunpack.c.h.b16 %v109
    %v259 = vunpack.c.l.b16 %v110
    %v260 = vunpack.c.h.b16 %v110
    %v261 = vunpack.c.l.b16 %v111
    %v262 = vunpack.c.h.b16 %v111
    %v263 = vunpack.c.l.b16 %v112
    %v264 = vunpack.c.h.b16 %v112
    %v265 = vunpack.c.l.b16 %v113
    %v266 = vunpack.c.h.b16 %v113
    %v267 = vunpack.c.l.b16 %v114
    %v268 = vunpack.c.h.b16 %v114
    %v269 = vunpack.c.l.b16 %v115
    %v270 = vunpack.c.h.b16 %v115
    %v271 = vunpack.c.l.b16 %v116
    %v272 = vunpack.c.h.b16 %v116
    %v273 = vunpack.c.l.b16 %v117
    %v274 = vunpack.c.h.b16 %v117
    %v275 = vunpack.c.l.b16 %v118
    %v276 = vunpack.c.h.b16 %v118
    %v277 = vunpack.c.l.b16 %v119
    %v278 = vunpack.c.h.b16 %v119
    %v279 = vunpack.c.l.b16 %v120
    %v280 = vunpack.c.h.b16 %v120
    %v281 = vunpack.c.l.b16 %v121
    %v282 = vunpack.c.h.b16 %v121
    %v283 = vunpack.c.l.b16 %v122
    %v284 = vunpack.c.h.b16 %v122
    %v285 = vunpack.c.l.b16 %v123
    %v286 = vunpack.c.h.b16 %v123
    %v287 = vunpack.c.l.b16 %v124
    %v288 = vunpack.c.h.b16 %v124
    %v289 = vunpack.c.l.b16 %v125
    %v290 = vunpack.c.h.b16 %v125
    %v291 = vunpack.c.l.b16 %v126
    %v292 = vunpack.c.h.b16 %v126
    %v293 = vunpack.c.l.b16 %v127
    %v294 = vunpack.c.h.b16 %v127
    %v295 = vunpack.c.l.b16 %v128
    %v296 = vunpack.c.h.b16 %v128
    %v297 = vunpack.c.l.b16 %v129
    %v298 = vunpack.c.h.b16 %v129
    %v299 = vunpack.c.l.b16 %v130
    %v300 = vunpack.c.h.b16 %v130
    %v301 = vunpack.c.l.b16 %v131
    %v302 = vunpack.c.h.b16 %v131
    %v303 = vunpack.c.l.b16 %v132
    %v304 = vunpack.c.h.b16 %v132
    %v305 = vunpack.c.l.b16 %v133
    %v306 = vunpack.c.h.b16 %v133
    %v307 = vunpack.c.l.b16 %v134
    %v308 = vunpack.c.h.b16 %v134
    %v309 = vunpack.c.l.b16 %v135
    %v310 = vunpack.c.h.b16 %v135
    %v311 = vunpack.c.l.b16 %v136
    %v312 = vunpack.c.h.b16 %v136
    %v313 = vunpack.c.l.b16 %v137
    %v314 = vunpack.c.h.b16 %v137
    %v315 = vunpack.c.l.b16 %v138
    %v316 = vunpack.c.h.b16 %v138
    %v317 = vpack.c.b16 %v269, %v253
    %v318 = vpack.c.b16 %v270, %v254
    %v319 = vpack.c.b16 %v271, %v255
    %v320 = vpack.c.b16 %v272, %v256
    %v321 = vpack.c.b16 %v273, %v257
    %v322 = vpack.c.b16 %v274, %v258
    %v323 = vpack.c.b16 %v275, %v259
    %v324 = vpack.c.b16 %v276, %v260
    %v325 = vpack.c.b16 %v277, %v261
    %v326 = vpack.c.b16 %v278, %v262
    %v327 = vpack.c.b16 %v279, %v263
    %v328 = vpack.c.b16 %v280, %v264
    %v329 = vpack.c.b16 %v281, %v265
    %v330 = vpack.c.b16 %v282, %v266
    %v331 = vpack.c.b16 %v283, %v267
    %v332 = vpack.c.b16 %v284, %v268
    %v333 = vpack.c.b16 %v301, %v285
    %v334 = vpack.c.b16 %v302, %v286
    %v335 = vpack.c.b16 %v303, %v287
    %v336 = vpack.c.b16 %v304, %v288
    %v337 = vpack.c.b16 %v305, %v289
    %v338 = vpack.c.b16 %v306, %v290
    %v339 = vpack.c.b16 %v307, %v291
    %v340 = vpack.c.b16 %v308, %v292
    %v341 = vpack.c.b16 %v309, %v293
    %v342 = vpack.c.b16 %v310, %v294
    %v343 = vpack.c.b16 %v311, %v295
    %v344 = vpack.c.b16 %v312, %v296
    %v345 = vpack.c.b16 %v313, %v297
    %v346 = vpack.c.b16 %v314, %v298
    %v347 = vpack.c.b16 %v315, %v299
    %v348 = vpack.c.b16 %v316, %v300
    %vm381 = vcmask 261120
    %v383 = vsel %vm381, %v106, 0
    %385 = vmatprep.subr.bf16.mxu0 %v318
    %386 = vmatpush1.bf16.msra.mxu0 %v317
    %387 = vmatprep.subr.bf16.mxu0 %v334
    %388 = vmatpush1.bf16.msra.mxu0 %v333
    %389 = vmatprep.subr.bf16.mxu0 0
    %390 = vmatpush1.bf16.msra.mxu0 0
    %391 = vmatprep.subr.bf16.mxu0 0
    %392 = vmatpush1.bf16.msra.mxu0 0
    %393 = vmatprep.subr.bf16.mxu0 0
    %394 = vmatpush1.bf16.msra.mxu0 0
    %395 = vmatprep.subr.bf16.mxu0 0
    %396 = vmatpush1.bf16.msra.mxu0 0
    %397 = vmatprep.subr.bf16.mxu0 0
    %398 = vmatpush1.bf16.msra.mxu0 0
    %399 = vmatprep.subr.bf16.mxu0 0
    %400 = vmatpush1.bf16.msra.mxu0 0
    %401 = vmatprep.subr.bf16.mxu0 0
    %402 = vmatpush1.bf16.msra.mxu0 0
    %403 = vmatprep.subr.bf16.mxu0 0
    %404 = vmatpush1.bf16.msra.mxu0 0
    %405 = vmatprep.subr.bf16.mxu0 0
    %406 = vmatpush1.bf16.msra.mxu0 0
    %407 = vmatprep.subr.bf16.mxu0 0
    %408 = vmatpush1.bf16.msra.mxu0 0
    %409 = vmatprep.subr.bf16.mxu0 0
    %410 = vmatpush1.bf16.msra.mxu0 0
    %411 = vmatprep.subr.bf16.mxu0 0
    %412 = vmatpush1.bf16.msra.mxu0 0
    %413 = vmatprep.subr.bf16.mxu0 0
    %414 = vmatpush1.bf16.msra.mxu0 0
    %415 = vmatprep.subr.bf16.mxu0 0
    %416 = vmatpush1.bf16.msra.mxu0 0
    %417 = vmatprep.mubr.bf16.mxu0 0
    %418 = vmatmul.mubr.bf16.gmra.mrb[0].mxu0 %v383
    %v419 = vpop.f32.mrb[0].mxu0
    %v420 = vadd.f32 %v144, %v419
    %v421 = vpop.f32.mrb[0].mxu0
    %v422 = vadd.f32 %v148, %v421
    %v423 = vpop.f32.mrb[0].mxu0
    %v424 = vadd.f32 %v144, %v423
    %v425 = vpop.f32.mrb[0].mxu0
    %v426 = vadd.f32 %v148, %v425
    %427 = vdwg.mxu0
    %428 = vmatprep.subr.bf16.mxu0 %v320
    %429 = vmatpush1.bf16.msra.mxu0 %v319
    %430 = vmatprep.subr.bf16.mxu0 %v336
    %431 = vmatpush1.bf16.msra.mxu0 %v335
    %432 = vmatprep.subr.bf16.mxu0 0
    %433 = vmatpush1.bf16.msra.mxu0 0
    %434 = vmatprep.subr.bf16.mxu0 0
    %435 = vmatpush1.bf16.msra.mxu0 0
    %436 = vmatprep.subr.bf16.mxu0 0
    %437 = vmatpush1.bf16.msra.mxu0 0
    %438 = vmatprep.subr.bf16.mxu0 0
    %439 = vmatpush1.bf16.msra.mxu0 0
    %440 = vmatprep.subr.bf16.mxu0 0
    %441 = vmatpush1.bf16.msra.mxu0 0
    %442 = vmatprep.subr.bf16.mxu0 0
    %443 = vmatpush1.bf16.msra.mxu0 0
    %444 = vmatprep.subr.bf16.mxu0 0
    %445 = vmatpush1.bf16.msra.mxu0 0
    %446 = vmatprep.subr.bf16.mxu0 0
    %447 = vmatpush1.bf16.msra.mxu0 0
    %448 = vmatprep.subr.bf16.mxu0 0
    %449 = vmatpush1.bf16.msra.mxu0 0
    %450 = vmatprep.subr.bf16.mxu0 0
    %451 = vmatpush1.bf16.msra.mxu0 0
    %452 = vmatprep.subr.bf16.mxu0 0
    %453 = vmatpush1.bf16.msra.mxu0 0
    %454 = vmatprep.subr.bf16.mxu0 0
    %455 = vmatpush1.bf16.msra.mxu0 0
    %456 = vmatprep.subr.bf16.mxu0 0
    %457 = vmatpush1.bf16.msra.mxu0 0
    %458 = vmatprep.subr.bf16.mxu0 0
    %459 = vmatpush1.bf16.msra.mxu0 0
    %460 = vmatprep.mubr.bf16.mxu0 0
    %461 = vmatmul.mubr.bf16.gmra.mrb[0].mxu0 %v383
    %v462 = vpop.f32.mrb[0].mxu0
    %v463 = vadd.f32 %v152, %v462
    %v464 = vpop.f32.mrb[0].mxu0
    %v465 = vadd.f32 %v156, %v464
    %v466 = vpop.f32.mrb[0].mxu0
    %v467 = vadd.f32 %v152, %v466
    %v468 = vpop.f32.mrb[0].mxu0
    %v469 = vadd.f32 %v156, %v468
    %470 = vdwg.mxu0
    %471 = vmatprep.subr.bf16.mxu0 %v322
    %472 = vmatpush1.bf16.msra.mxu0 %v321
    %473 = vmatprep.subr.bf16.mxu0 %v338
    %474 = vmatpush1.bf16.msra.mxu0 %v337
    %475 = vmatprep.subr.bf16.mxu0 0
    %476 = vmatpush1.bf16.msra.mxu0 0
    %477 = vmatprep.subr.bf16.mxu0 0
    %478 = vmatpush1.bf16.msra.mxu0 0
    %479 = vmatprep.subr.bf16.mxu0 0
    %480 = vmatpush1.bf16.msra.mxu0 0
    %481 = vmatprep.subr.bf16.mxu0 0
    %482 = vmatpush1.bf16.msra.mxu0 0
    %483 = vmatprep.subr.bf16.mxu0 0
    %484 = vmatpush1.bf16.msra.mxu0 0
    %485 = vmatprep.subr.bf16.mxu0 0
    %486 = vmatpush1.bf16.msra.mxu0 0
    %487 = vmatprep.subr.bf16.mxu0 0
    %488 = vmatpush1.bf16.msra.mxu0 0
    %489 = vmatprep.subr.bf16.mxu0 0
    %490 = vmatpush1.bf16.msra.mxu0 0
    %491 = vmatprep.subr.bf16.mxu0 0
    %492 = vmatpush1.bf16.msra.mxu0 0
    %493 = vmatprep.subr.bf16.mxu0 0
    %494 = vmatpush1.bf16.msra.mxu0 0
    %495 = vmatprep.subr.bf16.mxu0 0
    %496 = vmatpush1.bf16.msra.mxu0 0
    %497 = vmatprep.subr.bf16.mxu0 0
    %498 = vmatpush1.bf16.msra.mxu0 0
    %499 = vmatprep.subr.bf16.mxu0 0
    %500 = vmatpush1.bf16.msra.mxu0 0
    %501 = vmatprep.subr.bf16.mxu0 0
    %502 = vmatpush1.bf16.msra.mxu0 0
    %503 = vmatprep.mubr.bf16.mxu0 0
    %504 = vmatmul.mubr.bf16.gmra.mrb[0].mxu0 %v383
    %v505 = vpop.f32.mrb[0].mxu0
    %v506 = vadd.f32 %v160, %v505
    %v507 = vpop.f32.mrb[0].mxu0
    %v508 = vadd.f32 %v164, %v507
    %v509 = vpop.f32.mrb[0].mxu0
    %v510 = vadd.f32 %v160, %v509
    %v511 = vpop.f32.mrb[0].mxu0
    %v512 = vadd.f32 %v164, %v511
    %513 = vdwg.mxu0
    %514 = vmatprep.subr.bf16.mxu0 %v324
    %515 = vmatpush1.bf16.msra.mxu0 %v323
    %516 = vmatprep.subr.bf16.mxu0 %v340
    %517 = vmatpush1.bf16.msra.mxu0 %v339
    %518 = vmatprep.subr.bf16.mxu0 0
    %519 = vmatpush1.bf16.msra.mxu0 0
    %520 = vmatprep.subr.bf16.mxu0 0
    %521 = vmatpush1.bf16.msra.mxu0 0
    %522 = vmatprep.subr.bf16.mxu0 0
    %523 = vmatpush1.bf16.msra.mxu0 0
    %524 = vmatprep.subr.bf16.mxu0 0
    %525 = vmatpush1.bf16.msra.mxu0 0
    %526 = vmatprep.subr.bf16.mxu0 0
    %527 = vmatpush1.bf16.msra.mxu0 0
    %528 = vmatprep.subr.bf16.mxu0 0
    %529 = vmatpush1.bf16.msra.mxu0 0
    %530 = vmatprep.subr.bf16.mxu0 0
    %531 = vmatpush1.bf16.msra.mxu0 0
    %532 = vmatprep.subr.bf16.mxu0 0
    %533 = vmatpush1.bf16.msra.mxu0 0
    %534 = vmatprep.subr.bf16.mxu0 0
    %535 = vmatpush1.bf16.msra.mxu0 0
    %536 = vmatprep.subr.bf16.mxu0 0
    %537 = vmatpush1.bf16.msra.mxu0 0
    %538 = vmatprep.subr.bf16.mxu0 0
    %539 = vmatpush1.bf16.msra.mxu0 0
    %540 = vmatprep.subr.bf16.mxu0 0
    %541 = vmatpush1.bf16.msra.mxu0 0
    %542 = vmatprep.subr.bf16.mxu0 0
    %543 = vmatpush1.bf16.msra.mxu0 0
    %544 = vmatprep.subr.bf16.mxu0 0
    %545 = vmatpush1.bf16.msra.mxu0 0
    %546 = vmatprep.mubr.bf16.mxu0 0
    %547 = vmatmul.mubr.bf16.gmra.mrb[0].mxu0 %v383
    %v548 = vpop.f32.mrb[0].mxu0
    %v549 = vadd.f32 %v168, %v548
    %v550 = vpop.f32.mrb[0].mxu0
    %v551 = vadd.f32 %v172, %v550
    %v552 = vpop.f32.mrb[0].mxu0
    %v553 = vadd.f32 %v168, %v552
    %v554 = vpop.f32.mrb[0].mxu0
    %v555 = vadd.f32 %v172, %v554
    %556 = vdwg.mxu0
    %557 = vmatprep.subr.bf16.mxu0 %v326
    %558 = vmatpush1.bf16.msra.mxu0 %v325
    %559 = vmatprep.subr.bf16.mxu0 %v342
    %560 = vmatpush1.bf16.msra.mxu0 %v341
    %561 = vmatprep.subr.bf16.mxu0 0
    %562 = vmatpush1.bf16.msra.mxu0 0
    %563 = vmatprep.subr.bf16.mxu0 0
    %564 = vmatpush1.bf16.msra.mxu0 0
    %565 = vmatprep.subr.bf16.mxu0 0
    %566 = vmatpush1.bf16.msra.mxu0 0
    %567 = vmatprep.subr.bf16.mxu0 0
    %568 = vmatpush1.bf16.msra.mxu0 0
    %569 = vmatprep.subr.bf16.mxu0 0
    %570 = vmatpush1.bf16.msra.mxu0 0
    %571 = vmatprep.subr.bf16.mxu0 0
    %572 = vmatpush1.bf16.msra.mxu0 0
    %573 = vmatprep.subr.bf16.mxu0 0
    %574 = vmatpush1.bf16.msra.mxu0 0
    %575 = vmatprep.subr.bf16.mxu0 0
    %576 = vmatpush1.bf16.msra.mxu0 0
    %577 = vmatprep.subr.bf16.mxu0 0
    %578 = vmatpush1.bf16.msra.mxu0 0
    %579 = vmatprep.subr.bf16.mxu0 0
    %580 = vmatpush1.bf16.msra.mxu0 0
    %581 = vmatprep.subr.bf16.mxu0 0
    %582 = vmatpush1.bf16.msra.mxu0 0
    %583 = vmatprep.subr.bf16.mxu0 0
    %584 = vmatpush1.bf16.msra.mxu0 0
    %585 = vmatprep.subr.bf16.mxu0 0
    %586 = vmatpush1.bf16.msra.mxu0 0
    %587 = vmatprep.subr.bf16.mxu0 0
    %588 = vmatpush1.bf16.msra.mxu0 0
    %589 = vmatprep.mubr.bf16.mxu0 0
    %590 = vmatmul.mubr.bf16.gmra.mrb[0].mxu0 %v383
    %v591 = vpop.f32.mrb[0].mxu0
    %v592 = vadd.f32 %v176, %v591
    %v593 = vpop.f32.mrb[0].mxu0
    %v594 = vadd.f32 %v180, %v593
    %v595 = vpop.f32.mrb[0].mxu0
    %v596 = vadd.f32 %v176, %v595
    %v597 = vpop.f32.mrb[0].mxu0
    %v598 = vadd.f32 %v180, %v597
    %599 = vdwg.mxu0
    %600 = vmatprep.subr.bf16.mxu0 %v328
    %601 = vmatpush1.bf16.msra.mxu0 %v327
    %602 = vmatprep.subr.bf16.mxu0 %v344
    %603 = vmatpush1.bf16.msra.mxu0 %v343
    %604 = vmatprep.subr.bf16.mxu0 0
    %605 = vmatpush1.bf16.msra.mxu0 0
    %606 = vmatprep.subr.bf16.mxu0 0
    %607 = vmatpush1.bf16.msra.mxu0 0
    %608 = vmatprep.subr.bf16.mxu0 0
    %609 = vmatpush1.bf16.msra.mxu0 0
    %610 = vmatprep.subr.bf16.mxu0 0
    %611 = vmatpush1.bf16.msra.mxu0 0
    %612 = vmatprep.subr.bf16.mxu0 0
    %613 = vmatpush1.bf16.msra.mxu0 0
    %614 = vmatprep.subr.bf16.mxu0 0
    %615 = vmatpush1.bf16.msra.mxu0 0
    %616 = vmatprep.subr.bf16.mxu0 0
    %617 = vmatpush1.bf16.msra.mxu0 0
    %618 = vmatprep.subr.bf16.mxu0 0
    %619 = vmatpush1.bf16.msra.mxu0 0
    %620 = vmatprep.subr.bf16.mxu0 0
    %621 = vmatpush1.bf16.msra.mxu0 0
    %622 = vmatprep.subr.bf16.mxu0 0
    %623 = vmatpush1.bf16.msra.mxu0 0
    %624 = vmatprep.subr.bf16.mxu0 0
    %625 = vmatpush1.bf16.msra.mxu0 0
    %626 = vmatprep.subr.bf16.mxu0 0
    %627 = vmatpush1.bf16.msra.mxu0 0
    %628 = vmatprep.subr.bf16.mxu0 0
    %629 = vmatpush1.bf16.msra.mxu0 0
    %630 = vmatprep.subr.bf16.mxu0 0
    %631 = vmatpush1.bf16.msra.mxu0 0
    %632 = vmatprep.mubr.bf16.mxu0 0
    %633 = vmatmul.mubr.bf16.gmra.mrb[0].mxu0 %v383
    %v634 = vpop.f32.mrb[0].mxu0
    %v635 = vadd.f32 %v184, %v634
    %v636 = vpop.f32.mrb[0].mxu0
    %v637 = vadd.f32 %v188, %v636
    %v638 = vpop.f32.mrb[0].mxu0
    %v639 = vadd.f32 %v184, %v638
    %v640 = vpop.f32.mrb[0].mxu0
    %v641 = vadd.f32 %v188, %v640
    %642 = vdwg.mxu0
    %643 = vmatprep.subr.bf16.mxu0 %v330
    %644 = vmatpush1.bf16.msra.mxu0 %v329
    %645 = vmatprep.subr.bf16.mxu0 %v346
    %646 = vmatpush1.bf16.msra.mxu0 %v345
    %647 = vmatprep.subr.bf16.mxu0 0
    %648 = vmatpush1.bf16.msra.mxu0 0
    %649 = vmatprep.subr.bf16.mxu0 0
    %650 = vmatpush1.bf16.msra.mxu0 0
    %651 = vmatprep.subr.bf16.mxu0 0
    %652 = vmatpush1.bf16.msra.mxu0 0
    %653 = vmatprep.subr.bf16.mxu0 0
    %654 = vmatpush1.bf16.msra.mxu0 0
    %655 = vmatprep.subr.bf16.mxu0 0
    %656 = vmatpush1.bf16.msra.mxu0 0
    %657 = vmatprep.subr.bf16.mxu0 0
    %658 = vmatpush1.bf16.msra.mxu0 0
    %659 = vmatprep.subr.bf16.mxu0 0
    %660 = vmatpush1.bf16.msra.mxu0 0
    %661 = vmatprep.subr.bf16.mxu0 0
    %662 = vmatpush1.bf16.msra.mxu0 0
    %663 = vmatprep.subr.bf16.mxu0 0
    %664 = vmatpush1.bf16.msra.mxu0 0
    %665 = vmatprep.subr.bf16.mxu0 0
    %666 = vmatpush1.bf16.msra.mxu0 0
    %667 = vmatprep.subr.bf16.mxu0 0
    %668 = vmatpush1.bf16.msra.mxu0 0
    %669 = vmatprep.subr.bf16.mxu0 0
    %670 = vmatpush1.bf16.msra.mxu0 0
    %671 = vmatprep.subr.bf16.mxu0 0
    %672 = vmatpush1.bf16.msra.mxu0 0
    %673 = vmatprep.subr.bf16.mxu0 0
    %674 = vmatpush1.bf16.msra.mxu0 0
    %675 = vmatprep.mubr.bf16.mxu0 0
    %676 = vmatmul.mubr.bf16.gmra.mrb[0].mxu0 %v383
    %v677 = vpop.f32.mrb[0].mxu0
    %v678 = vadd.f32 %v192, %v677
    %v679 = vpop.f32.mrb[0].mxu0
    %v680 = vadd.f32 %v196, %v679
    %v681 = vpop.f32.mrb[0].mxu0
    %v682 = vadd.f32 %v192, %v681
    %v683 = vpop.f32.mrb[0].mxu0
    %v684 = vadd.f32 %v196, %v683
    %685 = vdwg.mxu0
    %686 = vmatprep.subr.bf16.mxu0 %v332
    %687 = vmatpush1.bf16.msra.mxu0 %v331
    %688 = vmatprep.subr.bf16.mxu0 %v348
    %689 = vmatpush1.bf16.msra.mxu0 %v347
    %690 = vmatprep.subr.bf16.mxu0 0
    %691 = vmatpush1.bf16.msra.mxu0 0
    %692 = vmatprep.subr.bf16.mxu0 0
    %693 = vmatpush1.bf16.msra.mxu0 0
    %694 = vmatprep.subr.bf16.mxu0 0
    %695 = vmatpush1.bf16.msra.mxu0 0
    %696 = vmatprep.subr.bf16.mxu0 0
    %697 = vmatpush1.bf16.msra.mxu0 0
    %698 = vmatprep.subr.bf16.mxu0 0
    %699 = vmatpush1.bf16.msra.mxu0 0
    %700 = vmatprep.subr.bf16.mxu0 0
    %701 = vmatpush1.bf16.msra.mxu0 0
    %702 = vmatprep.subr.bf16.mxu0 0
    %703 = vmatpush1.bf16.msra.mxu0 0
    %704 = vmatprep.subr.bf16.mxu0 0
    %705 = vmatpush1.bf16.msra.mxu0 0
    %706 = vmatprep.subr.bf16.mxu0 0
    %707 = vmatpush1.bf16.msra.mxu0 0
    %708 = vmatprep.subr.bf16.mxu0 0
    %709 = vmatpush1.bf16.msra.mxu0 0
    %710 = vmatprep.subr.bf16.mxu0 0
    %711 = vmatpush1.bf16.msra.mxu0 0
    %712 = vmatprep.subr.bf16.mxu0 0
    %713 = vmatpush1.bf16.msra.mxu0 0
    %714 = vmatprep.subr.bf16.mxu0 0
    %715 = vmatpush1.bf16.msra.mxu0 0
    %716 = vmatprep.subr.bf16.mxu0 0
    %717 = vmatpush1.bf16.msra.mxu0 0
    %718 = vmatprep.mubr.bf16.mxu0 0
    %719 = vmatmul.mubr.bf16.gmra.mrb[0].mxu0 %v383
    %v720 = vpop.f32.mrb[0].mxu0
    %v721 = vadd.f32 %v200, %v720
    %v722 = vpop.f32.mrb[0].mxu0
    %v723 = vadd.f32 %v204, %v722
    %v724 = vpop.f32.mrb[0].mxu0
    %v725 = vadd.f32 %v200, %v724
    %v726 = vpop.f32.mrb[0].mxu0
    %v727 = vadd.f32 %v204, %v726
    %728 = vdwg.mxu0
    %v729 = vmax.f32 %v420, 0.0
    %v730 = vmax.f32 %v422, 0.0
    %v731 = vmax.f32 %v463, 0.0
    %v732 = vmax.f32 %v465, 0.0
    %v733 = vmax.f32 %v506, 0.0
    %v734 = vmax.f32 %v508, 0.0
    %v735 = vmax.f32 %v549, 0.0
    %v736 = vmax.f32 %v551, 0.0
    %v737 = vmax.f32 %v592, 0.0
    %v738 = vmax.f32 %v594, 0.0
    %v739 = vmax.f32 %v635, 0.0
    %v740 = vmax.f32 %v637, 0.0
    %v741 = vmax.f32 %v678, 0.0
    %v742 = vmax.f32 %v680, 0.0
    %v743 = vmax.f32 %v721, 0.0
    %v744 = vmax.f32 %v723, 0.0
    %v745 = vmax.f32 %v424, 0.0
    %v746 = vmax.f32 %v426, 0.0
    %v747 = vmax.f32 %v467, 0.0
    %v748 = vmax.f32 %v469, 0.0
    %v749 = vmax.f32 %v510, 0.0
    %v750 = vmax.f32 %v512, 0.0
    %v751 = vmax.f32 %v553, 0.0
    %v752 = vmax.f32 %v555, 0.0
    %v753 = vmax.f32 %v596, 0.0
    %v754 = vmax.f32 %v598, 0.0
    %v755 = vmax.f32 %v639, 0.0
    %v756 = vmax.f32 %v641, 0.0
    %v757 = vmax.f32 %v682, 0.0
    %v758 = vmax.f32 %v684, 0.0
    %v759 = vmax.f32 %v725, 0.0
    %v760 = vmax.f32 %v727, 0.0
    %v761 = vld [vmem:[#allocation7] sm:$0xff]
    %v762 = vld [vmem:[#allocation7 + $0x8] sm:$0xff]
    %v763 = vld [vmem:[#allocation7 + $0x10] sm:$0xff]
    %v764 = vld [vmem:[#allocation7 + $0x18] sm:$0xff]
    %v765 = vld [vmem:[#allocation7 + $0x20] sm:$0xff]
    %v766 = vld [vmem:[#allocation7 + $0x28] sm:$0xff]
    %v767 = vld [vmem:[#allocation7 + $0x30] sm:$0xff]
    %v768 = vld [vmem:[#allocation7 + $0x38] sm:$0xff]
    %v769 = vld [vmem:[#allocation7 + $0x40] sm:$0xff]
    %v770 = vld [vmem:[#allocation7 + $0x48] sm:$0xff]
    %v771 = vld [vmem:[#allocation7 + $0x50] sm:$0xff]
    %v772 = vld [vmem:[#allocation7 + $0x58] sm:$0xff]
    %v773 = vld [vmem:[#allocation7 + $0x60] sm:$0xff]
    %v774 = vld [vmem:[#allocation7 + $0x68] sm:$0xff]
    %v775 = vld [vmem:[#allocation7 + $0x70] sm:$0xff]
    %v776 = vld [vmem:[#allocation7 + $0x78] sm:$0xff]
    %v777 = vld [vmem:[#allocation7 + $0x80] sm:$0xff]
    %v778 = vld [vmem:[#allocation7 + $0x88] sm:$0xff]
    %v779 = vld [vmem:[#allocation7 + $0x90] sm:$0xff]
    %v780 = vld [vmem:[#allocation7 + $0x98] sm:$0xff]
    %v781 = vld [vmem:[#allocation7 + $0xa0] sm:$0xff]
    %v782 = vld [vmem:[#allocation7 + $0xa8] sm:$0xff]
    %v783 = vld [vmem:[#allocation7 + $0xb0] sm:$0xff]
    %v784 = vld [vmem:[#allocation7 + $0xb8] sm:$0xff]
    %v785 = vld [vmem:[#allocation7 + $0xc0] sm:$0xff]
    %v786 = vld [vmem:[#allocation7 + $0xc8] sm:$0xff]
    %v787 = vld [vmem:[#allocation7 + $0xd0] sm:$0xff]
    %v788 = vld [vmem:[#allocation7 + $0xd8] sm:$0xff]
    %v789 = vld [vmem:[#allocation7 + $0xe0] sm:$0xff]
    %v790 = vld [vmem:[#allocation7 + $0xe8] sm:$0xff]
    %v791 = vld [vmem:[#allocation7 + $0xf0] sm:$0xff]
    %v792 = vld [vmem:[#allocation7 + $0xf8] sm:$0xff]
    %v793 = vld [vmem:[#allocation7 + $0x100] sm:$0xff]
    %v794 = vld [vmem:[#allocation7 + $0x108] sm:$0xff]
    %v795 = vld [vmem:[#allocation7 + $0x110] sm:$0xff]
    %v796 = vld [vmem:[#allocation7 + $0x118] sm:$0xff]
    %v797 = vld [vmem:[#allocation7 + $0x120] sm:$0xff]
    %v798 = vld [vmem:[#allocation7 + $0x128] sm:$0xff]
    %v799 = vld [vmem:[#allocation7 + $0x130] sm:$0xff]
    %v800 = vld [vmem:[#allocation7 + $0x138] sm:$0xff]
    %v801 = vld [vmem:[#allocation7 + $0x140] sm:$0xff]
    %v802 = vld [vmem:[#allocation7 + $0x148] sm:$0xff]
    %v803 = vld [vmem:[#allocation7 + $0x150] sm:$0xff]
    %v804 = vld [vmem:[#allocation7 + $0x158] sm:$0xff]
    %v805 = vld [vmem:[#allocation7 + $0x160] sm:$0xff]
    %v806 = vld [vmem:[#allocation7 + $0x168] sm:$0xff]
    %v807 = vld [vmem:[#allocation7 + $0x170] sm:$0xff]
    %v808 = vld [vmem:[#allocation7 + $0x178] sm:$0xff]
    %v809 = vld [vmem:[#allocation7 + $0x180] sm:$0xff]
    %v810 = vld [vmem:[#allocation7 + $0x188] sm:$0xff]
    %v811 = vld [vmem:[#allocation7 + $0x190] sm:$0xff]
    %v812 = vld [vmem:[#allocation7 + $0x198] sm:$0xff]
    %v813 = vld [vmem:[#allocation7 + $0x1a0] sm:$0xff]
    %v814 = vld [vmem:[#allocation7 + $0x1a8] sm:$0xff]
    %v815 = vld [vmem:[#allocation7 + $0x1b0] sm:$0xff]
    %v816 = vld [vmem:[#allocation7 + $0x1b8] sm:$0xff]
    %v817 = vld [vmem:[#allocation7 + $0x1c0] sm:$0xff]
    %v818 = vld [vmem:[#allocation7 + $0x1c8] sm:$0xff]
    %v819 = vld [vmem:[#allocation7 + $0x1d0] sm:$0xff]
    %v820 = vld [vmem:[#allocation7 + $0x1d8] sm:$0xff]
    %v821 = vld [vmem:[#allocation7 + $0x1e0] sm:$0xff]
    %v822 = vld [vmem:[#allocation7 + $0x1e8] sm:$0xff]
    %v823 = vld [vmem:[#allocation7 + $0x1f0] sm:$0xff]
    %v824 = vld [vmem:[#allocation7 + $0x1f8] sm:$0xff]
    %v825 = vld [vmem:[#allocation7 + $0x200] sm:$0xff]
    %v826 = vld [vmem:[#allocation7 + $0x208] sm:$0xff]
    %v827 = vld [vmem:[#allocation7 + $0x210] sm:$0xff]
    %v828 = vld [vmem:[#allocation7 + $0x218] sm:$0xff]
    %v829 = vld [vmem:[#allocation7 + $0x220] sm:$0xff]
    %v830 = vld [vmem:[#allocation7 + $0x228] sm:$0xff]
    %v831 = vld [vmem:[#allocation7 + $0x230] sm:$0xff]
    %v832 = vld [vmem:[#allocation7 + $0x238] sm:$0xff]
    %v833 = vld [vmem:[#allocation7 + $0x240] sm:$0xff]
    %v834 = vld [vmem:[#allocation7 + $0x248] sm:$0xff]
    %v835 = vld [vmem:[#allocation7 + $0x250] sm:$0xff]
    %v836 = vld [vmem:[#allocation7 + $0x258] sm:$0xff]
    %v837 = vld [vmem:[#allocation7 + $0x260] sm:$0xff]
    %v838 = vld [vmem:[#allocation7 + $0x268] sm:$0xff]
    %v839 = vld [vmem:[#allocation7 + $0x270] sm:$0xff]
    %v840 = vld [vmem:[#allocation7 + $0x278] sm:$0xff]
    %v841 = vld [vmem:[#allocation7 + $0x280] sm:$0xff]
    %v842 = vld [vmem:[#allocation7 + $0x288] sm:$0xff]
    %v843 = vld [vmem:[#allocation7 + $0x290] sm:$0xff]
    %v844 = vld [vmem:[#allocation7 + $0x298] sm:$0xff]
    %v845 = vld [vmem:[#allocation7 + $0x2a0] sm:$0xff]
    %v846 = vld [vmem:[#allocation7 + $0x2a8] sm:$0xff]
    %v847 = vld [vmem:[#allocation7 + $0x2b0] sm:$0xff]
    %v848 = vld [vmem:[#allocation7 + $0x2b8] sm:$0xff]
    %v849 = vld [vmem:[#allocation7 + $0x2c0] sm:$0xff]
    %v850 = vld [vmem:[#allocation7 + $0x2c8] sm:$0xff]
    %v851 = vld [vmem:[#allocation7 + $0x2d0] sm:$0xff]
    %v852 = vld [vmem:[#allocation7 + $0x2d8] sm:$0xff]
    %v853 = vld [vmem:[#allocation7 + $0x2e0] sm:$0xff]
    %v854 = vld [vmem:[#allocation7 + $0x2e8] sm:$0xff]
    %v855 = vld [vmem:[#allocation7 + $0x2f0] sm:$0xff]
    %v856 = vld [vmem:[#allocation7 + $0x2f8] sm:$0xff]
    %v857 = vld [vmem:[#allocation7 + $0x300] sm:$0xff]
    %v858 = vld [vmem:[#allocation7 + $0x308] sm:$0xff]
    %v859 = vld [vmem:[#allocation7 + $0x310] sm:$0xff]
    %v860 = vld [vmem:[#allocation7 + $0x318] sm:$0xff]
    %v861 = vld [vmem:[#allocation7 + $0x320] sm:$0xff]
    %v862 = vld [vmem:[#allocation7 + $0x328] sm:$0xff]
    %v863 = vld [vmem:[#allocation7 + $0x330] sm:$0xff]
    %v864 = vld [vmem:[#allocation7 + $0x338] sm:$0xff]
    %v865 = vld [vmem:[#allocation7 + $0x340] sm:$0xff]
    %v866 = vld [vmem:[#allocation7 + $0x348] sm:$0xff]
    %v867 = vld [vmem:[#allocation7 + $0x350] sm:$0xff]
    %v868 = vld [vmem:[#allocation7 + $0x358] sm:$0xff]
    %v869 = vld [vmem:[#allocation7 + $0x360] sm:$0xff]
    %v870 = vld [vmem:[#allocation7 + $0x368] sm:$0xff]
    %v871 = vld [vmem:[#allocation7 + $0x370] sm:$0xff]
    %v872 = vld [vmem:[#allocation7 + $0x378] sm:$0xff]
    %v873 = vld [vmem:[#allocation7 + $0x380] sm:$0xff]
    %v874 = vld [vmem:[#allocation7 + $0x388] sm:$0xff]
    %v875 = vld [vmem:[#allocation7 + $0x390] sm:$0xff]
    %v876 = vld [vmem:[#allocation7 + $0x398] sm:$0xff]
    %v877 = vld [vmem:[#allocation7 + $0x3a0] sm:$0xff]
    %v878 = vld [vmem:[#allocation7 + $0x3a8] sm:$0xff]
    %v879 = vld [vmem:[#allocation7 + $0x3b0] sm:$0xff]
    %v880 = vld [vmem:[#allocation7 + $0x3b8] sm:$0xff]
    %v881 = vld [vmem:[#allocation7 + $0x3c0] sm:$0xff]
    %v882 = vld [vmem:[#allocation7 + $0x3c8] sm:$0xff]
    %v883 = vld [vmem:[#allocation7 + $0x3d0] sm:$0xff]
    %v884 = vld [vmem:[#allocation7 + $0x3d8] sm:$0xff]
    %v885 = vld [vmem:[#allocation7 + $0x3e0] sm:$0xff]
    %v886 = vld [vmem:[#allocation7 + $0x3e8] sm:$0xff]
    %v887 = vld [vmem:[#allocation7 + $0x3f0] sm:$0xff]
    %v888 = vld [vmem:[#allocation7 + $0x3f8] sm:$0xff]
    %v889 = vld [vmem:[#allocation7 + $0x400] sm:$0xff]
    %v890 = vld [vmem:[#allocation7 + $0x408] sm:$0xff]
    %v891 = vld [vmem:[#allocation7 + $0x410] sm:$0xff]
    %v892 = vld [vmem:[#allocation7 + $0x418] sm:$0xff]
    %v893 = vld [vmem:[#allocation7 + $0x420] sm:$0xff]
    %v894 = vld [vmem:[#allocation7 + $0x428] sm:$0xff]
    %v895 = vld [vmem:[#allocation7 + $0x430] sm:$0xff]
    %v896 = vld [vmem:[#allocation7 + $0x438] sm:$0xff]
    %v897 = vld [vmem:[#allocation7 + $0x440] sm:$0xff]
    %v898 = vld [vmem:[#allocation7 + $0x448] sm:$0xff]
    %v899 = vld [vmem:[#allocation7 + $0x450] sm:$0xff]
    %v900 = vld [vmem:[#allocation7 + $0x458] sm:$0xff]
    %v901 = vld [vmem:[#allocation7 + $0x460] sm:$0xff]
    %v902 = vld [vmem:[#allocation7 + $0x468] sm:$0xff]
    %v903 = vld [vmem:[#allocation7 + $0x470] sm:$0xff]
    %v904 = vld [vmem:[#allocation7 + $0x478] sm:$0xff]
    %v905 = vld [vmem:[#allocation7 + $0x480] sm:$0xff]
    %v906 = vld [vmem:[#allocation7 + $0x488] sm:$0xff]
    %v907 = vld [vmem:[#allocation7 + $0x490] sm:$0xff]
    %v908 = vld [vmem:[#allocation7 + $0x498] sm:$0xff]
    %v909 = vld [vmem:[#allocation7 + $0x4a0] sm:$0xff]
    %v910 = vld [vmem:[#allocation7 + $0x4a8] sm:$0xff]
    %v911 = vld [vmem:[#allocation7 + $0x4b0] sm:$0xff]
    %v912 = vld [vmem:[#allocation7 + $0x4b8] sm:$0xff]
    %v913 = vld [vmem:[#allocation7 + $0x4c0] sm:$0xff]
    %v914 = vld [vmem:[#allocation7 + $0x4c8] sm:$0xff]
    %v915 = vld [vmem:[#allocation7 + $0x4d0] sm:$0xff]
    %v916 = vld [vmem:[#allocation7 + $0x4d8] sm:$0xff]
    %v917 = vld [vmem:[#allocation7 + $0x4e0] sm:$0xff]
    %v918 = vld [vmem:[#allocation7 + $0x4e8] sm:$0xff]
    %v919 = vld [vmem:[#allocation7 + $0x4f0] sm:$0xff]
    %v920 = vld [vmem:[#allocation7 + $0x4f8] sm:$0xff]
    %v921 = vld [vmem:[#allocation7 + $0x500] sm:$0xff]
    %v922 = vld [vmem:[#allocation7 + $0x508] sm:$0xff]
    %v923 = vld [vmem:[#allocation7 + $0x510] sm:$0xff]
    %v924 = vld [vmem:[#allocation7 + $0x518] sm:$0xff]
    %v925 = vld [vmem:[#allocation7 + $0x520] sm:$0xff]
    %v926 = vld [vmem:[#allocation7 + $0x528] sm:$0xff]
    %v927 = vld [vmem:[#allocation7 + $0x530] sm:$0xff]
    %v928 = vld [vmem:[#allocation7 + $0x538] sm:$0xff]
    %v929 = vld [vmem:[#allocation7 + $0x540] sm:$0xff]
    %v930 = vld [vmem:[#allocation7 + $0x548] sm:$0xff]
    %v931 = vld [vmem:[#allocation7 + $0x550] sm:$0xff]
    %v932 = vld [vmem:[#allocation7 + $0x558] sm:$0xff]
    %v933 = vld [vmem:[#allocation7 + $0x560] sm:$0xff]
    %v934 = vld [vmem:[#allocation7 + $0x568] sm:$0xff]
    %v935 = vld [vmem:[#allocation7 + $0x570] sm:$0xff]
    %v936 = vld [vmem:[#allocation7 + $0x578] sm:$0xff]
    %v937 = vld [vmem:[#allocation7 + $0x580] sm:$0xff]
    %v938 = vld [vmem:[#allocation7 + $0x588] sm:$0xff]
    %v939 = vld [vmem:[#allocation7 + $0x590] sm:$0xff]
    %v940 = vld [vmem:[#allocation7 + $0x598] sm:$0xff]
    %v941 = vld [vmem:[#allocation7 + $0x5a0] sm:$0xff]
    %v942 = vld [vmem:[#allocation7 + $0x5a8] sm:$0xff]
    %v943 = vld [vmem:[#allocation7 + $0x5b0] sm:$0xff]
    %v944 = vld [vmem:[#allocation7 + $0x5b8] sm:$0xff]
    %v945 = vld [vmem:[#allocation7 + $0x5c0] sm:$0xff]
    %v946 = vld [vmem:[#allocation7 + $0x5c8] sm:$0xff]
    %v947 = vld [vmem:[#allocation7 + $0x5d0] sm:$0xff]
    %v948 = vld [vmem:[#allocation7 + $0x5d8] sm:$0xff]
    %v949 = vld [vmem:[#allocation7 + $0x5e0] sm:$0xff]
    %v950 = vld [vmem:[#allocation7 + $0x5e8] sm:$0xff]
    %v951 = vld [vmem:[#allocation7 + $0x5f0] sm:$0xff]
    %v952 = vld [vmem:[#allocation7 + $0x5f8] sm:$0xff]
    %v953 = vld [vmem:[#allocation7 + $0x600] sm:$0xff]
    %v954 = vld [vmem:[#allocation7 + $0x608] sm:$0xff]
    %v955 = vld [vmem:[#allocation7 + $0x610] sm:$0xff]
    %v956 = vld [vmem:[#allocation7 + $0x618] sm:$0xff]
    %v957 = vld [vmem:[#allocation7 + $0x620] sm:$0xff]
    %v958 = vld [vmem:[#allocation7 + $0x628] sm:$0xff]
    %v959 = vld [vmem:[#allocation7 + $0x630] sm:$0xff]
    %v960 = vld [vmem:[#allocation7 + $0x638] sm:$0xff]
    %v961 = vld [vmem:[#allocation7 + $0x640] sm:$0xff]
    %v962 = vld [vmem:[#allocation7 + $0x648] sm:$0xff]
    %v963 = vld [vmem:[#allocation7 + $0x650] sm:$0xff]
    %v964 = vld [vmem:[#allocation7 + $0x658] sm:$0xff]
    %v965 = vld [vmem:[#allocation7 + $0x660] sm:$0xff]
    %v966 = vld [vmem:[#allocation7 + $0x668] sm:$0xff]
    %v967 = vld [vmem:[#allocation7 + $0x670] sm:$0xff]
    %v968 = vld [vmem:[#allocation7 + $0x678] sm:$0xff]
    %v969 = vld [vmem:[#allocation7 + $0x680] sm:$0xff]
    %v970 = vld [vmem:[#allocation7 + $0x688] sm:$0xff]
    %v971 = vld [vmem:[#allocation7 + $0x690] sm:$0xff]
    %v972 = vld [vmem:[#allocation7 + $0x698] sm:$0xff]
    %v973 = vld [vmem:[#allocation7 + $0x6a0] sm:$0xff]
    %v974 = vld [vmem:[#allocation7 + $0x6a8] sm:$0xff]
    %v975 = vld [vmem:[#allocation7 + $0x6b0] sm:$0xff]
    %v976 = vld [vmem:[#allocation7 + $0x6b8] sm:$0xff]
    %v977 = vld [vmem:[#allocation7 + $0x6c0] sm:$0xff]
    %v978 = vld [vmem:[#allocation7 + $0x6c8] sm:$0xff]
    %v979 = vld [vmem:[#allocation7 + $0x6d0] sm:$0xff]
    %v980 = vld [vmem:[#allocation7 + $0x6d8] sm:$0xff]
    %v981 = vld [vmem:[#allocation7 + $0x6e0] sm:$0xff]
    %v982 = vld [vmem:[#allocation7 + $0x6e8] sm:$0xff]
    %v983 = vld [vmem:[#allocation7 + $0x6f0] sm:$0xff]
    %v984 = vld [vmem:[#allocation7 + $0x6f8] sm:$0xff]
    %v985 = vld [vmem:[#allocation7 + $0x700] sm:$0xff]
    %v986 = vld [vmem:[#allocation7 + $0x708] sm:$0xff]
    %v987 = vld [vmem:[#allocation7 + $0x710] sm:$0xff]
    %v988 = vld [vmem:[#allocation7 + $0x718] sm:$0xff]
    %v989 = vld [vmem:[#allocation7 + $0x720] sm:$0xff]
    %v990 = vld [vmem:[#allocation7 + $0x728] sm:$0xff]
    %v991 = vld [vmem:[#allocation7 + $0x730] sm:$0xff]
    %v992 = vld [vmem:[#allocation7 + $0x738] sm:$0xff]
    %v993 = vld [vmem:[#allocation7 + $0x740] sm:$0xff]
    %v994 = vld [vmem:[#allocation7 + $0x748] sm:$0xff]
    %v995 = vld [vmem:[#allocation7 + $0x750] sm:$0xff]
    %v996 = vld [vmem:[#allocation7 + $0x758] sm:$0xff]
    %v997 = vld [vmem:[#allocation7 + $0x760] sm:$0xff]
    %v998 = vld [vmem:[#allocation7 + $0x768] sm:$0xff]
    %v999 = vld [vmem:[#allocation7 + $0x770] sm:$0xff]
    %v1000 = vld [vmem:[#allocation7 + $0x778] sm:$0xff]
    %v1001 = vld [vmem:[#allocation7 + $0x780] sm:$0xff]
    %v1002 = vld [vmem:[#allocation7 + $0x788] sm:$0xff]
    %v1003 = vld [vmem:[#allocation7 + $0x790] sm:$0xff]
    %v1004 = vld [vmem:[#allocation7 + $0x798] sm:$0xff]
    %v1005 = vld [vmem:[#allocation7 + $0x7a0] sm:$0xff]
    %v1006 = vld [vmem:[#allocation7 + $0x7a8] sm:$0xff]
    %v1007 = vld [vmem:[#allocation7 + $0x7b0] sm:$0xff]
    %v1008 = vld [vmem:[#allocation7 + $0x7b8] sm:$0xff]
    %v1009 = vld [vmem:[#allocation7 + $0x7c0] sm:$0xff]
    %v1010 = vld [vmem:[#allocation7 + $0x7c8] sm:$0xff]
    %v1011 = vld [vmem:[#allocation7 + $0x7d0] sm:$0xff]
    %v1012 = vld [vmem:[#allocation7 + $0x7d8] sm:$0xff]
    %v1013 = vld [vmem:[#allocation7 + $0x7e0] sm:$0xff]
    %v1014 = vld [vmem:[#allocation7 + $0x7e8] sm:$0xff]
    %v1015 = vld [vmem:[#allocation7 + $0x7f0] sm:$0xff]
    %v1016 = vld [vmem:[#allocation7 + $0x7f8] sm:$0xff]
    %v1017 = vld [vmem:[#allocation7 + $0x800] sm:$0xff]
    %v1018 = vld [vmem:[#allocation7 + $0x808] sm:$0xff]
    %v1019 = vld [vmem:[#allocation7 + $0x810] sm:$0xff]
    %v1020 = vld [vmem:[#allocation7 + $0x818] sm:$0xff]
    %v1021 = vld [vmem:[#allocation7 + $0x820] sm:$0xff]
    %v1022 = vld [vmem:[#allocation7 + $0x828] sm:$0xff]
    %v1023 = vld [vmem:[#allocation7 + $0x830] sm:$0xff]
    %v1024 = vld [vmem:[#allocation7 + $0x838] sm:$0xff]
    %v1025 = vld [vmem:[#allocation7 + $0x840] sm:$0xff]
    %v1026 = vld [vmem:[#allocation7 + $0x848] sm:$0xff]
    %v1027 = vld [vmem:[#allocation7 + $0x850] sm:$0xff]
    %v1028 = vld [vmem:[#allocation7 + $0x858] sm:$0xff]
    %v1029 = vld [vmem:[#allocation7 + $0x860] sm:$0xff]
    %v1030 = vld [vmem:[#allocation7 + $0x868] sm:$0xff]
    %v1031 = vld [vmem:[#allocation7 + $0x870] sm:$0xff]
    %v1032 = vld [vmem:[#allocation7 + $0x878] sm:$0xff]
    %v1033 = vld [vmem:[#allocation7 + $0x880] sm:$0xff]
    %v1034 = vld [vmem:[#allocation7 + $0x888] sm:$0xff]
    %v1035 = vld [vmem:[#allocation7 + $0x890] sm:$0xff]
    %v1036 = vld [vmem:[#allocation7 + $0x898] sm:$0xff]
    %v1037 = vld [vmem:[#allocation7 + $0x8a0] sm:$0xff]
    %v1038 = vld [vmem:[#allocation7 + $0x8a8] sm:$0xff]
    %v1039 = vld [vmem:[#allocation7 + $0x8b0] sm:$0xff]
    %v1040 = vld [vmem:[#allocation7 + $0x8b8] sm:$0xff]
    %v1041 = vld [vmem:[#allocation7 + $0x8c0] sm:$0xff]
    %v1042 = vld [vmem:[#allocation7 + $0x8c8] sm:$0xff]
    %v1043 = vld [vmem:[#allocation7 + $0x8d0] sm:$0xff]
    %v1044 = vld [vmem:[#allocation7 + $0x8d8] sm:$0xff]
    %v1045 = vld [vmem:[#allocation7 + $0x8e0] sm:$0xff]
    %v1046 = vld [vmem:[#allocation7 + $0x8e8] sm:$0xff]
    %v1047 = vld [vmem:[#allocation7 + $0x8f0] sm:$0xff]
    %v1048 = vld [vmem:[#allocation7 + $0x8f8] sm:$0xff]
    %v1049 = vld [vmem:[#allocation7 + $0x900] sm:$0xff]
    %v1050 = vld [vmem:[#allocation7 + $0x908] sm:$0xff]
    %v1051 = vld [vmem:[#allocation7 + $0x910] sm:$0xff]
    %v1052 = vld [vmem:[#allocation7 + $0x918] sm:$0xff]
    %v1053 = vld [vmem:[#allocation7 + $0x920] sm:$0xff]
    %v1054 = vld [vmem:[#allocation7 + $0x928] sm:$0xff]
    %v1055 = vld [vmem:[#allocation7 + $0x930] sm:$0xff]
    %v1056 = vld [vmem:[#allocation7 + $0x938] sm:$0xff]
    %v1057 = vld [vmem:[#allocation7 + $0x940] sm:$0xff]
    %v1058 = vld [vmem:[#allocation7 + $0x948] sm:$0xff]
    %v1059 = vld [vmem:[#allocation7 + $0x950] sm:$0xff]
    %v1060 = vld [vmem:[#allocation7 + $0x958] sm:$0xff]
    %v1061 = vld [vmem:[#allocation7 + $0x960] sm:$0xff]
    %v1062 = vld [vmem:[#allocation7 + $0x968] sm:$0xff]
    %v1063 = vld [vmem:[#allocation7 + $0x970] sm:$0xff]
    %v1064 = vld [vmem:[#allocation7 + $0x978] sm:$0xff]
    %v1065 = vld [vmem:[#allocation7 + $0x980] sm:$0xff]
    %v1066 = vld [vmem:[#allocation7 + $0x988] sm:$0xff]
    %v1067 = vld [vmem:[#allocation7 + $0x990] sm:$0xff]
    %v1068 = vld [vmem:[#allocation7 + $0x998] sm:$0xff]
    %v1069 = vld [vmem:[#allocation7 + $0x9a0] sm:$0xff]
    %v1070 = vld [vmem:[#allocation7 + $0x9a8] sm:$0xff]
    %v1071 = vld [vmem:[#allocation7 + $0x9b0] sm:$0xff]
    %v1072 = vld [vmem:[#allocation7 + $0x9b8] sm:$0xff]
    %v1073 = vld [vmem:[#allocation7 + $0x9c0] sm:$0xff]
    %v1074 = vld [vmem:[#allocation7 + $0x9c8] sm:$0xff]
    %v1075 = vld [vmem:[#allocation7 + $0x9d0] sm:$0xff]
    %v1076 = vld [vmem:[#allocation7 + $0x9d8] sm:$0xff]
    %v1077 = vld [vmem:[#allocation7 + $0x9e0] sm:$0xff]
    %v1078 = vld [vmem:[#allocation7 + $0x9e8] sm:$0xff]
    %v1079 = vld [vmem:[#allocation7 + $0x9f0] sm:$0xff]
    %v1080 = vld [vmem:[#allocation7 + $0x9f8] sm:$0xff]
    %v1081 = vld [vmem:[#allocation7 + $0xa00] sm:$0xff]
    %v1082 = vld [vmem:[#allocation7 + $0xa08] sm:$0xff]
    %v1083 = vld [vmem:[#allocation7 + $0xa10] sm:$0xff]
    %v1084 = vld [vmem:[#allocation7 + $0xa18] sm:$0xff]
    %v1085 = vld [vmem:[#allocation7 + $0xa20] sm:$0xff]
    %v1086 = vld [vmem:[#allocation7 + $0xa28] sm:$0xff]
    %v1087 = vld [vmem:[#allocation7 + $0xa30] sm:$0xff]
    %v1088 = vld [vmem:[#allocation7 + $0xa38] sm:$0xff]
    %v1089 = vld [vmem:[#allocation7 + $0xa40] sm:$0xff]
    %v1090 = vld [vmem:[#allocation7 + $0xa48] sm:$0xff]
    %v1091 = vld [vmem:[#allocation7 + $0xa50] sm:$0xff]
    %v1092 = vld [vmem:[#allocation7 + $0xa58] sm:$0xff]
    %v1093 = vld [vmem:[#allocation7 + $0xa60] sm:$0xff]
    %v1094 = vld [vmem:[#allocation7 + $0xa68] sm:$0xff]
    %v1095 = vld [vmem:[#allocation7 + $0xa70] sm:$0xff]
    %v1096 = vld [vmem:[#allocation7 + $0xa78] sm:$0xff]
    %v1097 = vld [vmem:[#allocation7 + $0xa80] sm:$0xff]
    %v1098 = vld [vmem:[#allocation7 + $0xa88] sm:$0xff]
    %v1099 = vld [vmem:[#allocation7 + $0xa90] sm:$0xff]
    %v1100 = vld [vmem:[#allocation7 + $0xa98] sm:$0xff]
    %v1101 = vld [vmem:[#allocation7 + $0xaa0] sm:$0xff]
    %v1102 = vld [vmem:[#allocation7 + $0xaa8] sm:$0xff]
    %v1103 = vld [vmem:[#allocation7 + $0xab0] sm:$0xff]
    %v1104 = vld [vmem:[#allocation7 + $0xab8] sm:$0xff]
    %v1105 = vld [vmem:[#allocation7 + $0xac0] sm:$0xff]
    %v1106 = vld [vmem:[#allocation7 + $0xac8] sm:$0xff]
    %v1107 = vld [vmem:[#allocation7 + $0xad0] sm:$0xff]
    %v1108 = vld [vmem:[#allocation7 + $0xad8] sm:$0xff]
    %v1109 = vld [vmem:[#allocation7 + $0xae0] sm:$0xff]
    %v1110 = vld [vmem:[#allocation7 + $0xae8] sm:$0xff]
    %v1111 = vld [vmem:[#allocation7 + $0xaf0] sm:$0xff]
    %v1112 = vld [vmem:[#allocation7 + $0xaf8] sm:$0xff]
    %v1113 = vld [vmem:[#allocation7 + $0xb00] sm:$0xff]
    %v1114 = vld [vmem:[#allocation7 + $0xb08] sm:$0xff]
    %v1115 = vld [vmem:[#allocation7 + $0xb10] sm:$0xff]
    %v1116 = vld [vmem:[#allocation7 + $0xb18] sm:$0xff]
    %v1117 = vld [vmem:[#allocation7 + $0xb20] sm:$0xff]
    %v1118 = vld [vmem:[#allocation7 + $0xb28] sm:$0xff]
    %v1119 = vld [vmem:[#allocation7 + $0xb30] sm:$0xff]
    %v1120 = vld [vmem:[#allocation7 + $0xb38] sm:$0xff]
    %v1121 = vld [vmem:[#allocation7 + $0xb40] sm:$0xff]
    %v1122 = vld [vmem:[#allocation7 + $0xb48] sm:$0xff]
    %v1123 = vld [vmem:[#allocation7 + $0xb50] sm:$0xff]
    %v1124 = vld [vmem:[#allocation7 + $0xb58] sm:$0xff]
    %v1125 = vld [vmem:[#allocation7 + $0xb60] sm:$0xff]
    %v1126 = vld [vmem:[#allocation7 + $0xb68] sm:$0xff]
    %v1127 = vld [vmem:[#allocation7 + $0xb70] sm:$0xff]
    %v1128 = vld [vmem:[#allocation7 + $0xb78] sm:$0xff]
    %v1129 = vld [vmem:[#allocation7 + $0xb80] sm:$0xff]
    %v1130 = vld [vmem:[#allocation7 + $0xb88] sm:$0xff]
    %v1131 = vld [vmem:[#allocation7 + $0xb90] sm:$0xff]
    %v1132 = vld [vmem:[#allocation7 + $0xb98] sm:$0xff]
    %v1133 = vld [vmem:[#allocation7 + $0xba0] sm:$0xff]
    %v1134 = vld [vmem:[#allocation7 + $0xba8] sm:$0xff]
    %v1135 = vld [vmem:[#allocation7 + $0xbb0] sm:$0xff]
    %v1136 = vld [vmem:[#allocation7 + $0xbb8] sm:$0xff]
    %v1137 = vld [vmem:[#allocation7 + $0xbc0] sm:$0xff]
    %v1138 = vld [vmem:[#allocation7 + $0xbc8] sm:$0xff]
    %v1139 = vld [vmem:[#allocation7 + $0xbd0] sm:$0xff]
    %v1140 = vld [vmem:[#allocation7 + $0xbd8] sm:$0xff]
    %v1141 = vld [vmem:[#allocation7 + $0xbe0] sm:$0xff]
    %v1142 = vld [vmem:[#allocation7 + $0xbe8] sm:$0xff]
    %v1143 = vld [vmem:[#allocation7 + $0xbf0] sm:$0xff]
    %v1144 = vld [vmem:[#allocation7 + $0xbf8] sm:$0xff]
    %v1145 = vld [vmem:[#allocation7 + $0xc00] sm:$0xff]
    %v1146 = vld [vmem:[#allocation7 + $0xc08] sm:$0xff]
    %v1147 = vld [vmem:[#allocation7 + $0xc10] sm:$0xff]
    %v1148 = vld [vmem:[#allocation7 + $0xc18] sm:$0xff]
    %v1149 = vld [vmem:[#allocation7 + $0xc20] sm:$0xff]
    %v1150 = vld [vmem:[#allocation7 + $0xc28] sm:$0xff]
    %v1151 = vld [vmem:[#allocation7 + $0xc30] sm:$0xff]
    %v1152 = vld [vmem:[#allocation7 + $0xc38] sm:$0xff]
    %v1153 = vld [vmem:[#allocation7 + $0xc40] sm:$0xff]
    %v1154 = vld [vmem:[#allocation7 + $0xc48] sm:$0xff]
    %v1155 = vld [vmem:[#allocation7 + $0xc50] sm:$0xff]
    %v1156 = vld [vmem:[#allocation7 + $0xc58] sm:$0xff]
    %v1157 = vld [vmem:[#allocation7 + $0xc60] sm:$0xff]
    %v1158 = vld [vmem:[#allocation7 + $0xc68] sm:$0xff]
    %v1159 = vld [vmem:[#allocation7 + $0xc70] sm:$0xff]
    %v1160 = vld [vmem:[#allocation7 + $0xc78] sm:$0xff]
    %v1161 = vld [vmem:[#allocation7 + $0xc80] sm:$0xff]
    %v1162 = vld [vmem:[#allocation7 + $0xc88] sm:$0xff]
    %v1163 = vld [vmem:[#allocation7 + $0xc90] sm:$0xff]
    %v1164 = vld [vmem:[#allocation7 + $0xc98] sm:$0xff]
    %v1165 = vld [vmem:[#allocation7 + $0xca0] sm:$0xff]
    %v1166 = vld [vmem:[#allocation7 + $0xca8] sm:$0xff]
    %v1167 = vld [vmem:[#allocation7 + $0xcb0] sm:$0xff]
    %v1168 = vld [vmem:[#allocation7 + $0xcb8] sm:$0xff]
    %v1169 = vld [vmem:[#allocation7 + $0xcc0] sm:$0xff]
    %v1170 = vld [vmem:[#allocation7 + $0xcc8] sm:$0xff]
    %v1171 = vld [vmem:[#allocation7 + $0xcd0] sm:$0xff]
    %v1172 = vld [vmem:[#allocation7 + $0xcd8] sm:$0xff]
    %v1173 = vld [vmem:[#allocation7 + $0xce0] sm:$0xff]
    %v1174 = vld [vmem:[#allocation7 + $0xce8] sm:$0xff]
    %v1175 = vld [vmem:[#allocation7 + $0xcf0] sm:$0xff]
    %v1176 = vld [vmem:[#allocation7 + $0xcf8] sm:$0xff]
    %v1177 = vld [vmem:[#allocation7 + $0xd00] sm:$0xff]
    %v1178 = vld [vmem:[#allocation7 + $0xd08] sm:$0xff]
    %v1179 = vld [vmem:[#allocation7 + $0xd10] sm:$0xff]
    %v1180 = vld [vmem:[#allocation7 + $0xd18] sm:$0xff]
    %v1181 = vld [vmem:[#allocation7 + $0xd20] sm:$0xff]
    %v1182 = vld [vmem:[#allocation7 + $0xd28] sm:$0xff]
    %v1183 = vld [vmem:[#allocation7 + $0xd30] sm:$0xff]
    %v1184 = vld [vmem:[#allocation7 + $0xd38] sm:$0xff]
    %v1185 = vld [vmem:[#allocation7 + $0xd40] sm:$0xff]
    %v1186 = vld [vmem:[#allocation7 + $0xd48] sm:$0xff]
    %v1187 = vld [vmem:[#allocation7 + $0xd50] sm:$0xff]
    %v1188 = vld [vmem:[#allocation7 + $0xd58] sm:$0xff]
    %v1189 = vld [vmem:[#allocation7 + $0xd60] sm:$0xff]
    %v1190 = vld [vmem:[#allocation7 + $0xd68] sm:$0xff]
    %v1191 = vld [vmem:[#allocation7 + $0xd70] sm:$0xff]
    %v1192 = vld [vmem:[#allocation7 + $0xd78] sm:$0xff]
    %v1193 = vld [vmem:[#allocation7 + $0xd80] sm:$0xff]
    %v1194 = vld [vmem:[#allocation7 + $0xd88] sm:$0xff]
    %v1195 = vld [vmem:[#allocation7 + $0xd90] sm:$0xff]
    %v1196 = vld [vmem:[#allocation7 + $0xd98] sm:$0xff]
    %v1197 = vld [vmem:[#allocation7 + $0xda0] sm:$0xff]
    %v1198 = vld [vmem:[#allocation7 + $0xda8] sm:$0xff]
    %v1199 = vld [vmem:[#allocation7 + $0xdb0] sm:$0xff]
    %v1200 = vld [vmem:[#allocation7 + $0xdb8] sm:$0xff]
    %v1201 = vld [vmem:[#allocation7 + $0xdc0] sm:$0xff]
    %v1202 = vld [vmem:[#allocation7 + $0xdc8] sm:$0xff]
    %v1203 = vld [vmem:[#allocation7 + $0xdd0] sm:$0xff]
    %v1204 = vld [vmem:[#allocation7 + $0xdd8] sm:$0xff]
    %v1205 = vld [vmem:[#allocation7 + $0xde0] sm:$0xff]
    %v1206 = vld [vmem:[#allocation7 + $0xde8] sm:$0xff]
    %v1207 = vld [vmem:[#allocation7 + $0xdf0] sm:$0xff]
    %v1208 = vld [vmem:[#allocation7 + $0xdf8] sm:$0xff]
    %v1209 = vld [vmem:[#allocation7 + $0xe00] sm:$0xff]
    %v1210 = vld [vmem:[#allocation7 + $0xe08] sm:$0xff]
    %v1211 = vld [vmem:[#allocation7 + $0xe10] sm:$0xff]
    %v1212 = vld [vmem:[#allocation7 + $0xe18] sm:$0xff]
    %v1213 = vld [vmem:[#allocation7 + $0xe20] sm:$0xff]
    %v1214 = vld [vmem:[#allocation7 + $0xe28] sm:$0xff]
    %v1215 = vld [vmem:[#allocation7 + $0xe30] sm:$0xff]
    %v1216 = vld [vmem:[#allocation7 + $0xe38] sm:$0xff]
    %v1217 = vld [vmem:[#allocation7 + $0xe40] sm:$0xff]
    %v1218 = vld [vmem:[#allocation7 + $0xe48] sm:$0xff]
    %v1219 = vld [vmem:[#allocation7 + $0xe50] sm:$0xff]
    %v1220 = vld [vmem:[#allocation7 + $0xe58] sm:$0xff]
    %v1221 = vld [vmem:[#allocation7 + $0xe60] sm:$0xff]
    %v1222 = vld [vmem:[#allocation7 + $0xe68] sm:$0xff]
    %v1223 = vld [vmem:[#allocation7 + $0xe70] sm:$0xff]
    %v1224 = vld [vmem:[#allocation7 + $0xe78] sm:$0xff]
    %v1225 = vld [vmem:[#allocation7 + $0xe80] sm:$0xff]
    %v1226 = vld [vmem:[#allocation7 + $0xe88] sm:$0xff]
    %v1227 = vld [vmem:[#allocation7 + $0xe90] sm:$0xff]
    %v1228 = vld [vmem:[#allocation7 + $0xe98] sm:$0xff]
    %v1229 = vld [vmem:[#allocation7 + $0xea0] sm:$0xff]
    %v1230 = vld [vmem:[#allocation7 + $0xea8] sm:$0xff]
    %v1231 = vld [vmem:[#allocation7 + $0xeb0] sm:$0xff]
    %v1232 = vld [vmem:[#allocation7 + $0xeb8] sm:$0xff]
    %v1233 = vld [vmem:[#allocation7 + $0xec0] sm:$0xff]
    %v1234 = vld [vmem:[#allocation7 + $0xec8] sm:$0xff]
    %v1235 = vld [vmem:[#allocation7 + $0xed0] sm:$0xff]
    %v1236 = vld [vmem:[#allocation7 + $0xed8] sm:$0xff]
    %v1237 = vld [vmem:[#allocation7 + $0xee0] sm:$0xff]
    %v1238 = vld [vmem:[#allocation7 + $0xee8] sm:$0xff]
    %v1239 = vld [vmem:[#allocation7 + $0xef0] sm:$0xff]
    %v1240 = vld [vmem:[#allocation7 + $0xef8] sm:$0xff]
    %v1241 = vld [vmem:[#allocation7 + $0xf00] sm:$0xff]
    %v1242 = vld [vmem:[#allocation7 + $0xf08] sm:$0xff]
    %v1243 = vld [vmem:[#allocation7 + $0xf10] sm:$0xff]
    %v1244 = vld [vmem:[#allocation7 + $0xf18] sm:$0xff]
    %v1245 = vld [vmem:[#allocation7 + $0xf20] sm:$0xff]
    %v1246 = vld [vmem:[#allocation7 + $0xf28] sm:$0xff]
    %v1247 = vld [vmem:[#allocation7 + $0xf30] sm:$0xff]
    %v1248 = vld [vmem:[#allocation7 + $0xf38] sm:$0xff]
    %v1249 = vld [vmem:[#allocation7 + $0xf40] sm:$0xff]
    %v1250 = vld [vmem:[#allocation7 + $0xf48] sm:$0xff]
    %v1251 = vld [vmem:[#allocation7 + $0xf50] sm:$0xff]
    %v1252 = vld [vmem:[#allocation7 + $0xf58] sm:$0xff]
    %v1253 = vld [vmem:[#allocation7 + $0xf60] sm:$0xff]
    %v1254 = vld [vmem:[#allocation7 + $0xf68] sm:$0xff]
    %v1255 = vld [vmem:[#allocation7 + $0xf70] sm:$0xff]
    %v1256 = vld [vmem:[#allocation7 + $0xf78] sm:$0xff]
    %v1257 = vld [vmem:[#allocation7 + $0xf80] sm:$0xff]
    %v1258 = vld [vmem:[#allocation7 + $0xf88] sm:$0xff]
    %v1259 = vld [vmem:[#allocation7 + $0xf90] sm:$0xff]
    %v1260 = vld [vmem:[#allocation7 + $0xf98] sm:$0xff]
    %v1261 = vld [vmem:[#allocation7 + $0xfa0] sm:$0xff]
    %v1262 = vld [vmem:[#allocation7 + $0xfa8] sm:$0xff]
    %v1263 = vld [vmem:[#allocation7 + $0xfb0] sm:$0xff]
    %v1264 = vld [vmem:[#allocation7 + $0xfb8] sm:$0xff]
    %v1265 = vld [vmem:[#allocation7 + $0xfc0] sm:$0xff]
    %v1266 = vld [vmem:[#allocation7 + $0xfc8] sm:$0xff]
    %v1267 = vld [vmem:[#allocation7 + $0xfd0] sm:$0xff]
    %v1268 = vld [vmem:[#allocation7 + $0xfd8] sm:$0xff]
    %v1269 = vld [vmem:[#allocation7 + $0xfe0] sm:$0xff]
    %v1270 = vld [vmem:[#allocation7 + $0xfe8] sm:$0xff]
    %v1271 = vld [vmem:[#allocation7 + $0xff0] sm:$0xff]
    %v1272 = vld [vmem:[#allocation7 + $0xff8] sm:$0xff]
    %v1273 = vunpack.c.l.s8.bf16 %v761
    %v1274 = vunpack.c.l.s8.bf16 %v762
    %v1275 = vunpack.c.l.s8.bf16 %v763
    %v1276 = vunpack.c.l.s8.bf16 %v764
    %v1277 = vunpack.c.l.s8.bf16 %v765
    %v1278 = vunpack.c.l.s8.bf16 %v766
    %v1279 = vunpack.c.l.s8.bf16 %v767
    %v1280 = vunpack.c.l.s8.bf16 %v768
    %v1281 = vunpack.c.h.s8.bf16 %v761
    %v1282 = vunpack.c.h.s8.bf16 %v762
    %v1283 = vunpack.c.h.s8.bf16 %v763
    %v1284 = vunpack.c.h.s8.bf16 %v764
    %v1285 = vunpack.c.h.s8.bf16 %v765
    %v1286 = vunpack.c.h.s8.bf16 %v766
    %v1287 = vunpack.c.h.s8.bf16 %v767
    %v1288 = vunpack.c.h.s8.bf16 %v768
    %v1289 = vunpack.c.l.s8.bf16 %v769
    %v1290 = vunpack.c.l.s8.bf16 %v770
    %v1291 = vunpack.c.l.s8.bf16 %v771
    %v1292 = vunpack.c.l.s8.bf16 %v772
    %v1293 = vunpack.c.l.s8.bf16 %v773
    %v1294 = vunpack.c.l.s8.bf16 %v774
    %v1295 = vunpack.c.l.s8.bf16 %v775
    %v1296 = vunpack.c.l.s8.bf16 %v776
    %v1297 = vunpack.c.h.s8.bf16 %v769
    %v1298 = vunpack.c.h.s8.bf16 %v770
    %v1299 = vunpack.c.h.s8.bf16 %v771
    %v1300 = vunpack.c.h.s8.bf16 %v772
    %v1301 = vunpack.c.h.s8.bf16 %v773
    %v1302 = vunpack.c.h.s8.bf16 %v774
    %v1303 = vunpack.c.h.s8.bf16 %v775
    %v1304 = vunpack.c.h.s8.bf16 %v776
    %v1305 = vunpack.c.l.s8.bf16 %v777
    %v1306 = vunpack.c.l.s8.bf16 %v778
    %v1307 = vunpack.c.l.s8.bf16 %v779
    %v1308 = vunpack.c.l.s8.bf16 %v780
    %v1309 = vunpack.c.l.s8.bf16 %v781
    %v1310 = vunpack.c.l.s8.bf16 %v782
    %v1311 = vunpack.c.l.s8.bf16 %v783
    %v1312 = vunpack.c.l.s8.bf16 %v784
    %v1313 = vunpack.c.h.s8.bf16 %v777
    %v1314 = vunpack.c.h.s8.bf16 %v778
    %v1315 = vunpack.c.h.s8.bf16 %v779
    %v1316 = vunpack.c.h.s8.bf16 %v780
    %v1317 = vunpack.c.h.s8.bf16 %v781
    %v1318 = vunpack.c.h.s8.bf16 %v782
    %v1319 = vunpack.c.h.s8.bf16 %v783
    %v1320 = vunpack.c.h.s8.bf16 %v784
    %v1321 = vunpack.c.l.s8.bf16 %v785
    %v1322 = vunpack.c.l.s8.bf16 %v786
    %v1323 = vunpack.c.l.s8.bf16 %v787
    %v1324 = vunpack.c.l.s8.bf16 %v788
    %v1325 = vunpack.c.l.s8.bf16 %v789
    %v1326 = vunpack.c.l.s8.bf16 %v790
    %v1327 = vunpack.c.l.s8.bf16 %v791
    %v1328 = vunpack.c.l.s8.bf16 %v792
    %v1329 = vunpack.c.h.s8.bf16 %v785
    %v1330 = vunpack.c.h.s8.bf16 %v786
    %v1331 = vunpack.c.h.s8.bf16 %v787
    %v1332 = vunpack.c.h.s8.bf16 %v788
    %v1333 = vunpack.c.h.s8.bf16 %v789
    %v1334 = vunpack.c.h.s8.bf16 %v790
    %v1335 = vunpack.c.h.s8.bf16 %v791
    %v1336 = vunpack.c.h.s8.bf16 %v792
    %v1337 = vunpack.c.l.s8.bf16 %v793
    %v1338 = vunpack.c.l.s8.bf16 %v794
    %v1339 = vunpack.c.l.s8.bf16 %v795
    %v1340 = vunpack.c.l.s8.bf16 %v796
    %v1341 = vunpack.c.l.s8.bf16 %v797
    %v1342 = vunpack.c.l.s8.bf16 %v798
    %v1343 = vunpack.c.l.s8.bf16 %v799
    %v1344 = vunpack.c.l.s8.bf16 %v800
    %v1345 = vunpack.c.h.s8.bf16 %v793
    %v1346 = vunpack.c.h.s8.bf16 %v794
    %v1347 = vunpack.c.h.s8.bf16 %v795
    %v1348 = vunpack.c.h.s8.bf16 %v796
    %v1349 = vunpack.c.h.s8.bf16 %v797
    %v1350 = vunpack.c.h.s8.bf16 %v798
    %v1351 = vunpack.c.h.s8.bf16 %v799
    %v1352 = vunpack.c.h.s8.bf16 %v800
    %v1353 = vunpack.c.l.s8.bf16 %v801
    %v1354 = vunpack.c.l.s8.bf16 %v802
    %v1355 = vunpack.c.l.s8.bf16 %v803
    %v1356 = vunpack.c.l.s8.bf16 %v804
    %v1357 = vunpack.c.l.s8.bf16 %v805
    %v1358 = vunpack.c.l.s8.bf16 %v806
    %v1359 = vunpack.c.l.s8.bf16 %v807
    %v1360 = vunpack.c.l.s8.bf16 %v808
    %v1361 = vunpack.c.h.s8.bf16 %v801
    %v1362 = vunpack.c.h.s8.bf16 %v802
    %v1363 = vunpack.c.h.s8.bf16 %v803
    %v1364 = vunpack.c.h.s8.bf16 %v804
    %v1365 = vunpack.c.h.s8.bf16 %v805
    %v1366 = vunpack.c.h.s8.bf16 %v806
    %v1367 = vunpack.c.h.s8.bf16 %v807
    %v1368 = vunpack.c.h.s8.bf16 %v808
    %v1369 = vunpack.c.l.s8.bf16 %v809
    %v1370 = vunpack.c.l.s8.bf16 %v810
    %v1371 = vunpack.c.l.s8.bf16 %v811
    %v1372 = vunpack.c.l.s8.bf16 %v812
    %v1373 = vunpack.c.l.s8.bf16 %v813
    %v1374 = vunpack.c.l.s8.bf16 %v814
    %v1375 = vunpack.c.l.s8.bf16 %v815
    %v1376 = vunpack.c.l.s8.bf16 %v816
    %v1377 = vunpack.c.h.s8.bf16 %v809
    %v1378 = vunpack.c.h.s8.bf16 %v810
    %v1379 = vunpack.c.h.s8.bf16 %v811
    %v1380 = vunpack.c.h.s8.bf16 %v812
    %v1381 = vunpack.c.h.s8.bf16 %v813
    %v1382 = vunpack.c.h.s8.bf16 %v814
    %v1383 = vunpack.c.h.s8.bf16 %v815
    %v1384 = vunpack.c.h.s8.bf16 %v816
    %v1385 = vunpack.c.l.s8.bf16 %v817
    %v1386 = vunpack.c.l.s8.bf16 %v818
    %v1387 = vunpack.c.l.s8.bf16 %v819
    %v1388 = vunpack.c.l.s8.bf16 %v820
    %v1389 = vunpack.c.l.s8.bf16 %v821
    %v1390 = vunpack.c.l.s8.bf16 %v822
    %v1391 = vunpack.c.l.s8.bf16 %v823
    %v1392 = vunpack.c.l.s8.bf16 %v824
    %v1393 = vunpack.c.h.s8.bf16 %v817
    %v1394 = vunpack.c.h.s8.bf16 %v818
    %v1395 = vunpack.c.h.s8.bf16 %v819
    %v1396 = vunpack.c.h.s8.bf16 %v820
    %v1397 = vunpack.c.h.s8.bf16 %v821
    %v1398 = vunpack.c.h.s8.bf16 %v822
    %v1399 = vunpack.c.h.s8.bf16 %v823
    %v1400 = vunpack.c.h.s8.bf16 %v824
    %v1401 = vunpack.c.l.s8.bf16 %v825
    %v1402 = vunpack.c.l.s8.bf16 %v826
    %v1403 = vunpack.c.l.s8.bf16 %v827
    %v1404 = vunpack.c.l.s8.bf16 %v828
    %v1405 = vunpack.c.l.s8.bf16 %v829
    %v1406 = vunpack.c.l.s8.bf16 %v830
    %v1407 = vunpack.c.l.s8.bf16 %v831
    %v1408 = vunpack.c.l.s8.bf16 %v832
    %v1409 = vunpack.c.h.s8.bf16 %v825
    %v1410 = vunpack.c.h.s8.bf16 %v826
    %v1411 = vunpack.c.h.s8.bf16 %v827
    %v1412 = vunpack.c.h.s8.bf16 %v828
    %v1413 = vunpack.c.h.s8.bf16 %v829
    %v1414 = vunpack.c.h.s8.bf16 %v830
    %v1415 = vunpack.c.h.s8.bf16 %v831
    %v1416 = vunpack.c.h.s8.bf16 %v832
    %v1417 = vunpack.c.l.s8.bf16 %v833
    %v1418 = vunpack.c.l.s8.bf16 %v834
    %v1419 = vunpack.c.l.s8.bf16 %v835
    %v1420 = vunpack.c.l.s8.bf16 %v836
    %v1421 = vunpack.c.l.s8.bf16 %v837
    %v1422 = vunpack.c.l.s8.bf16 %v838
    %v1423 = vunpack.c.l.s8.bf16 %v839
    %v1424 = vunpack.c.l.s8.bf16 %v840
    %v1425 = vunpack.c.h.s8.bf16 %v833
    %v1426 = vunpack.c.h.s8.bf16 %v834
    %v1427 = vunpack.c.h.s8.bf16 %v835
    %v1428 = vunpack.c.h.s8.bf16 %v836
    %v1429 = vunpack.c.h.s8.bf16 %v837
    %v1430 = vunpack.c.h.s8.bf16 %v838
    %v1431 = vunpack.c.h.s8.bf16 %v839
    %v1432 = vunpack.c.h.s8.bf16 %v840
    %v1433 = vunpack.c.l.s8.bf16 %v841
    %v1434 = vunpack.c.l.s8.bf16 %v842
    %v1435 = vunpack.c.l.s8.bf16 %v843
    %v1436 = vunpack.c.l.s8.bf16 %v844
    %v1437 = vunpack.c.l.s8.bf16 %v845
    %v1438 = vunpack.c.l.s8.bf16 %v846
    %v1439 = vunpack.c.l.s8.bf16 %v847
    %v1440 = vunpack.c.l.s8.bf16 %v848
    %v1441 = vunpack.c.h.s8.bf16 %v841
    %v1442 = vunpack.c.h.s8.bf16 %v842
    %v1443 = vunpack.c.h.s8.bf16 %v843
    %v1444 = vunpack.c.h.s8.bf16 %v844
    %v1445 = vunpack.c.h.s8.bf16 %v845
    %v1446 = vunpack.c.h.s8.bf16 %v846
    %v1447 = vunpack.c.h.s8.bf16 %v847
    %v1448 = vunpack.c.h.s8.bf16 %v848
    %v1449 = vunpack.c.l.s8.bf16 %v849
    %v1450 = vunpack.c.l.s8.bf16 %v850
    %v1451 = vunpack.c.l.s8.bf16 %v851
    %v1452 = vunpack.c.l.s8.bf16 %v852
    %v1453 = vunpack.c.l.s8.bf16 %v853
    %v1454 = vunpack.c.l.s8.bf16 %v854
    %v1455 = vunpack.c.l.s8.bf16 %v855
    %v1456 = vunpack.c.l.s8.bf16 %v856
    %v1457 = vunpack.c.h.s8.bf16 %v849
    %v1458 = vunpack.c.h.s8.bf16 %v850
    %v1459 = vunpack.c.h.s8.bf16 %v851
    %v1460 = vunpack.c.h.s8.bf16 %v852
    %v1461 = vunpack.c.h.s8.bf16 %v853
    %v1462 = vunpack.c.h.s8.bf16 %v854
    %v1463 = vunpack.c.h.s8.bf16 %v855
    %v1464 = vunpack.c.h.s8.bf16 %v856
    %v1465 = vunpack.c.l.s8.bf16 %v857
    %v1466 = vunpack.c.l.s8.bf16 %v858
    %v1467 = vunpack.c.l.s8.bf16 %v859
    %v1468 = vunpack.c.l.s8.bf16 %v860
    %v1469 = vunpack.c.l.s8.bf16 %v861
    %v1470 = vunpack.c.l.s8.bf16 %v862
    %v1471 = vunpack.c.l.s8.bf16 %v863
    %v1472 = vunpack.c.l.s8.bf16 %v864
    %v1473 = vunpack.c.h.s8.bf16 %v857
    %v1474 = vunpack.c.h.s8.bf16 %v858
    %v1475 = vunpack.c.h.s8.bf16 %v859
    %v1476 = vunpack.c.h.s8.bf16 %v860
    %v1477 = vunpack.c.h.s8.bf16 %v861
    %v1478 = vunpack.c.h.s8.bf16 %v862
    %v1479 = vunpack.c.h.s8.bf16 %v863
    %v1480 = vunpack.c.h.s8.bf16 %v864
    %v1481 = vunpack.c.l.s8.bf16 %v865
    %v1482 = vunpack.c.l.s8.bf16 %v866
    %v1483 = vunpack.c.l.s8.bf16 %v867
    %v1484 = vunpack.c.l.s8.bf16 %v868
    %v1485 = vunpack.c.l.s8.bf16 %v869
    %v1486 = vunpack.c.l.s8.bf16 %v870
    %v1487 = vunpack.c.l.s8.bf16 %v871
    %v1488 = vunpack.c.l.s8.bf16 %v872
    %v1489 = vunpack.c.h.s8.bf16 %v865
    %v1490 = vunpack.c.h.s8.bf16 %v866
    %v1491 = vunpack.c.h.s8.bf16 %v867
    %v1492 = vunpack.c.h.s8.bf16 %v868
    %v1493 = vunpack.c.h.s8.bf16 %v869
    %v1494 = vunpack.c.h.s8.bf16 %v870
    %v1495 = vunpack.c.h.s8.bf16 %v871
    %v1496 = vunpack.c.h.s8.bf16 %v872
    %v1497 = vunpack.c.l.s8.bf16 %v873
    %v1498 = vunpack.c.l.s8.bf16 %v874
    %v1499 = vunpack.c.l.s8.bf16 %v875
    %v1500 = vunpack.c.l.s8.bf16 %v876
    %v1501 = vunpack.c.l.s8.bf16 %v877
    %v1502 = vunpack.c.l.s8.bf16 %v878
    %v1503 = vunpack.c.l.s8.bf16 %v879
    %v1504 = vunpack.c.l.s8.bf16 %v880
    %v1505 = vunpack.c.h.s8.bf16 %v873
    %v1506 = vunpack.c.h.s8.bf16 %v874
    %v1507 = vunpack.c.h.s8.bf16 %v875
    %v1508 = vunpack.c.h.s8.bf16 %v876
    %v1509 = vunpack.c.h.s8.bf16 %v877
    %v1510 = vunpack.c.h.s8.bf16 %v878
    %v1511 = vunpack.c.h.s8.bf16 %v879
    %v1512 = vunpack.c.h.s8.bf16 %v880
    %v1513 = vunpack.c.l.s8.bf16 %v881
    %v1514 = vunpack.c.l.s8.bf16 %v882
    %v1515 = vunpack.c.l.s8.bf16 %v883
    %v1516 = vunpack.c.l.s8.bf16 %v884
    %v1517 = vunpack.c.l.s8.bf16 %v885
    %v1518 = vunpack.c.l.s8.bf16 %v886
    %v1519 = vunpack.c.l.s8.bf16 %v887
    %v1520 = vunpack.c.l.s8.bf16 %v888
    %v1521 = vunpack.c.h.s8.bf16 %v881
    %v1522 = vunpack.c.h.s8.bf16 %v882
    %v1523 = vunpack.c.h.s8.bf16 %v883
    %v1524 = vunpack.c.h.s8.bf16 %v884
    %v1525 = vunpack.c.h.s8.bf16 %v885
    %v1526 = vunpack.c.h.s8.bf16 %v886
    %v1527 = vunpack.c.h.s8.bf16 %v887
    %v1528 = vunpack.c.h.s8.bf16 %v888
    %v1529 = vunpack.c.l.s8.bf16 %v889
    %v1530 = vunpack.c.l.s8.bf16 %v890
    %v1531 = vunpack.c.l.s8.bf16 %v891
    %v1532 = vunpack.c.l.s8.bf16 %v892
    %v1533 = vunpack.c.l.s8.bf16 %v893
    %v1534 = vunpack.c.l.s8.bf16 %v894
    %v1535 = vunpack.c.l.s8.bf16 %v895
    %v1536 = vunpack.c.l.s8.bf16 %v896
    %v1537 = vunpack.c.h.s8.bf16 %v889
    %v1538 = vunpack.c.h.s8.bf16 %v890
    %v1539 = vunpack.c.h.s8.bf16 %v891
    %v1540 = vunpack.c.h.s8.bf16 %v892
    %v1541 = vunpack.c.h.s8.bf16 %v893
    %v1542 = vunpack.c.h.s8.bf16 %v894
    %v1543 = vunpack.c.h.s8.bf16 %v895
    %v1544 = vunpack.c.h.s8.bf16 %v896
    %v1545 = vunpack.c.l.s8.bf16 %v897
    %v1546 = vunpack.c.l.s8.bf16 %v898
    %v1547 = vunpack.c.l.s8.bf16 %v899
    %v1548 = vunpack.c.l.s8.bf16 %v900
    %v1549 = vunpack.c.l.s8.bf16 %v901
    %v1550 = vunpack.c.l.s8.bf16 %v902
    %v1551 = vunpack.c.l.s8.bf16 %v903
    %v1552 = vunpack.c.l.s8.bf16 %v904
    %v1553 = vunpack.c.h.s8.bf16 %v897
    %v1554 = vunpack.c.h.s8.bf16 %v898
    %v1555 = vunpack.c.h.s8.bf16 %v899
    %v1556 = vunpack.c.h.s8.bf16 %v900
    %v1557 = vunpack.c.h.s8.bf16 %v901
    %v1558 = vunpack.c.h.s8.bf16 %v902
    %v1559 = vunpack.c.h.s8.bf16 %v903
    %v1560 = vunpack.c.h.s8.bf16 %v904
    %v1561 = vunpack.c.l.s8.bf16 %v905
    %v1562 = vunpack.c.l.s8.bf16 %v906
    %v1563 = vunpack.c.l.s8.bf16 %v907
    %v1564 = vunpack.c.l.s8.bf16 %v908
    %v1565 = vunpack.c.l.s8.bf16 %v909
    %v1566 = vunpack.c.l.s8.bf16 %v910
    %v1567 = vunpack.c.l.s8.bf16 %v911
    %v1568 = vunpack.c.l.s8.bf16 %v912
    %v1569 = vunpack.c.h.s8.bf16 %v905
    %v1570 = vunpack.c.h.s8.bf16 %v906
    %v1571 = vunpack.c.h.s8.bf16 %v907
    %v1572 = vunpack.c.h.s8.bf16 %v908
    %v1573 = vunpack.c.h.s8.bf16 %v909
    %v1574 = vunpack.c.h.s8.bf16 %v910
    %v1575 = vunpack.c.h.s8.bf16 %v911
    %v1576 = vunpack.c.h.s8.bf16 %v912
    %v1577 = vunpack.c.l.s8.bf16 %v913
    %v1578 = vunpack.c.l.s8.bf16 %v914
    %v1579 = vunpack.c.l.s8.bf16 %v915
    %v1580 = vunpack.c.l.s8.bf16 %v916
    %v1581 = vunpack.c.l.s8.bf16 %v917
    %v1582 = vunpack.c.l.s8.bf16 %v918
    %v1583 = vunpack.c.l.s8.bf16 %v919
    %v1584 = vunpack.c.l.s8.bf16 %v920
    %v1585 = vunpack.c.h.s8.bf16 %v913
    %v1586 = vunpack.c.h.s8.bf16 %v914
    %v1587 = vunpack.c.h.s8.bf16 %v915
    %v1588 = vunpack.c.h.s8.bf16 %v916
    %v1589 = vunpack.c.h.s8.bf16 %v917
    %v1590 = vunpack.c.h.s8.bf16 %v918
    %v1591 = vunpack.c.h.s8.bf16 %v919
    %v1592 = vunpack.c.h.s8.bf16 %v920
    %v1593 = vunpack.c.l.s8.bf16 %v921
    %v1594 = vunpack.c.l.s8.bf16 %v922
    %v1595 = vunpack.c.l.s8.bf16 %v923
    %v1596 = vunpack.c.l.s8.bf16 %v924
    %v1597 = vunpack.c.l.s8.bf16 %v925
    %v1598 = vunpack.c.l.s8.bf16 %v926
    %v1599 = vunpack.c.l.s8.bf16 %v927
    %v1600 = vunpack.c.l.s8.bf16 %v928
    %v1601 = vunpack.c.h.s8.bf16 %v921
    %v1602 = vunpack.c.h.s8.bf16 %v922
    %v1603 = vunpack.c.h.s8.bf16 %v923
    %v1604 = vunpack.c.h.s8.bf16 %v924
    %v1605 = vunpack.c.h.s8.bf16 %v925
    %v1606 = vunpack.c.h.s8.bf16 %v926
    %v1607 = vunpack.c.h.s8.bf16 %v927
    %v1608 = vunpack.c.h.s8.bf16 %v928
    %v1609 = vunpack.c.l.s8.bf16 %v929
    %v1610 = vunpack.c.l.s8.bf16 %v930
    %v1611 = vunpack.c.l.s8.bf16 %v931
    %v1612 = vunpack.c.l.s8.bf16 %v932
    %v1613 = vunpack.c.l.s8.bf16 %v933
    %v1614 = vunpack.c.l.s8.bf16 %v934
    %v1615 = vunpack.c.l.s8.bf16 %v935
    %v1616 = vunpack.c.l.s8.bf16 %v936
    %v1617 = vunpack.c.h.s8.bf16 %v929
    %v1618 = vunpack.c.h.s8.bf16 %v930
    %v1619 = vunpack.c.h.s8.bf16 %v931
    %v1620 = vunpack.c.h.s8.bf16 %v932
    %v1621 = vunpack.c.h.s8.bf16 %v933
    %v1622 = vunpack.c.h.s8.bf16 %v934
    %v1623 = vunpack.c.h.s8.bf16 %v935
    %v1624 = vunpack.c.h.s8.bf16 %v936
    %v1625 = vunpack.c.l.s8.bf16 %v937
    %v1626 = vunpack.c.l.s8.bf16 %v938
    %v1627 = vunpack.c.l.s8.bf16 %v939
    %v1628 = vunpack.c.l.s8.bf16 %v940
    %v1629 = vunpack.c.l.s8.bf16 %v941
    %v1630 = vunpack.c.l.s8.bf16 %v942
    %v1631 = vunpack.c.l.s8.bf16 %v943
    %v1632 = vunpack.c.l.s8.bf16 %v944
    %v1633 = vunpack.c.h.s8.bf16 %v937
    %v1634 = vunpack.c.h.s8.bf16 %v938
    %v1635 = vunpack.c.h.s8.bf16 %v939
    %v1636 = vunpack.c.h.s8.bf16 %v940
    %v1637 = vunpack.c.h.s8.bf16 %v941
    %v1638 = vunpack.c.h.s8.bf16 %v942
    %v1639 = vunpack.c.h.s8.bf16 %v943
    %v1640 = vunpack.c.h.s8.bf16 %v944
    %v1641 = vunpack.c.l.s8.bf16 %v945
    %v1642 = vunpack.c.l.s8.bf16 %v946
    %v1643 = vunpack.c.l.s8.bf16 %v947
    %v1644 = vunpack.c.l.s8.bf16 %v948
    %v1645 = vunpack.c.l.s8.bf16 %v949
    %v1646 = vunpack.c.l.s8.bf16 %v950
    %v1647 = vunpack.c.l.s8.bf16 %v951
    %v1648 = vunpack.c.l.s8.bf16 %v952
    %v1649 = vunpack.c.h.s8.bf16 %v945
    %v1650 = vunpack.c.h.s8.bf16 %v946
    %v1651 = vunpack.c.h.s8.bf16 %v947
    %v1652 = vunpack.c.h.s8.bf16 %v948
    %v1653 = vunpack.c.h.s8.bf16 %v949
    %v1654 = vunpack.c.h.s8.bf16 %v950
    %v1655 = vunpack.c.h.s8.bf16 %v951
    %v1656 = vunpack.c.h.s8.bf16 %v952
    %v1657 = vunpack.c.l.s8.bf16 %v953
    %v1658 = vunpack.c.l.s8.bf16 %v954
    %v1659 = vunpack.c.l.s8.bf16 %v955
    %v1660 = vunpack.c.l.s8.bf16 %v956
    %v1661 = vunpack.c.l.s8.bf16 %v957
    %v1662 = vunpack.c.l.s8.bf16 %v958
    %v1663 = vunpack.c.l.s8.bf16 %v959
    %v1664 = vunpack.c.l.s8.bf16 %v960
    %v1665 = vunpack.c.h.s8.bf16 %v953
    %v1666 = vunpack.c.h.s8.bf16 %v954
    %v1667 = vunpack.c.h.s8.bf16 %v955
    %v1668 = vunpack.c.h.s8.bf16 %v956
    %v1669 = vunpack.c.h.s8.bf16 %v957
    %v1670 = vunpack.c.h.s8.bf16 %v958
    %v1671 = vunpack.c.h.s8.bf16 %v959
    %v1672 = vunpack.c.h.s8.bf16 %v960
    %v1673 = vunpack.c.l.s8.bf16 %v961
    %v1674 = vunpack.c.l.s8.bf16 %v962
    %v1675 = vunpack.c.l.s8.bf16 %v963
    %v1676 = vunpack.c.l.s8.bf16 %v964
    %v1677 = vunpack.c.l.s8.bf16 %v965
    %v1678 = vunpack.c.l.s8.bf16 %v966
    %v1679 = vunpack.c.l.s8.bf16 %v967
    %v1680 = vunpack.c.l.s8.bf16 %v968
    %v1681 = vunpack.c.h.s8.bf16 %v961
    %v1682 = vunpack.c.h.s8.bf16 %v962
    %v1683 = vunpack.c.h.s8.bf16 %v963
    %v1684 = vunpack.c.h.s8.bf16 %v964
    %v1685 = vunpack.c.h.s8.bf16 %v965
    %v1686 = vunpack.c.h.s8.bf16 %v966
    %v1687 = vunpack.c.h.s8.bf16 %v967
    %v1688 = vunpack.c.h.s8.bf16 %v968
    %v1689 = vunpack.c.l.s8.bf16 %v969
    %v1690 = vunpack.c.l.s8.bf16 %v970
    %v1691 = vunpack.c.l.s8.bf16 %v971
    %v1692 = vunpack.c.l.s8.bf16 %v972
    %v1693 = vunpack.c.l.s8.bf16 %v973
    %v1694 = vunpack.c.l.s8.bf16 %v974
    %v1695 = vunpack.c.l.s8.bf16 %v975
    %v1696 = vunpack.c.l.s8.bf16 %v976
    %v1697 = vunpack.c.h.s8.bf16 %v969
    %v1698 = vunpack.c.h.s8.bf16 %v970
    %v1699 = vunpack.c.h.s8.bf16 %v971
    %v1700 = vunpack.c.h.s8.bf16 %v972
    %v1701 = vunpack.c.h.s8.bf16 %v973
    %v1702 = vunpack.c.h.s8.bf16 %v974
    %v1703 = vunpack.c.h.s8.bf16 %v975
    %v1704 = vunpack.c.h.s8.bf16 %v976
    %v1705 = vunpack.c.l.s8.bf16 %v977
    %v1706 = vunpack.c.l.s8.bf16 %v978
    %v1707 = vunpack.c.l.s8.bf16 %v979
    %v1708 = vunpack.c.l.s8.bf16 %v980
    %v1709 = vunpack.c.l.s8.bf16 %v981
    %v1710 = vunpack.c.l.s8.bf16 %v982
    %v1711 = vunpack.c.l.s8.bf16 %v983
    %v1712 = vunpack.c.l.s8.bf16 %v984
    %v1713 = vunpack.c.h.s8.bf16 %v977
    %v1714 = vunpack.c.h.s8.bf16 %v978
    %v1715 = vunpack.c.h.s8.bf16 %v979
    %v1716 = vunpack.c.h.s8.bf16 %v980
    %v1717 = vunpack.c.h.s8.bf16 %v981
    %v1718 = vunpack.c.h.s8.bf16 %v982
    %v1719 = vunpack.c.h.s8.bf16 %v983
    %v1720 = vunpack.c.h.s8.bf16 %v984
    %v1721 = vunpack.c.l.s8.bf16 %v985
    %v1722 = vunpack.c.l.s8.bf16 %v986
    %v1723 = vunpack.c.l.s8.bf16 %v987
    %v1724 = vunpack.c.l.s8.bf16 %v988
    %v1725 = vunpack.c.l.s8.bf16 %v989
    %v1726 = vunpack.c.l.s8.bf16 %v990
    %v1727 = vunpack.c.l.s8.bf16 %v991
    %v1728 = vunpack.c.l.s8.bf16 %v992
    %v1729 = vunpack.c.h.s8.bf16 %v985
    %v1730 = vunpack.c.h.s8.bf16 %v986
    %v1731 = vunpack.c.h.s8.bf16 %v987
    %v1732 = vunpack.c.h.s8.bf16 %v988
    %v1733 = vunpack.c.h.s8.bf16 %v989
    %v1734 = vunpack.c.h.s8.bf16 %v990
    %v1735 = vunpack.c.h.s8.bf16 %v991
    %v1736 = vunpack.c.h.s8.bf16 %v992
    %v1737 = vunpack.c.l.s8.bf16 %v993
    %v1738 = vunpack.c.l.s8.bf16 %v994
    %v1739 = vunpack.c.l.s8.bf16 %v995
    %v1740 = vunpack.c.l.s8.bf16 %v996
    %v1741 = vunpack.c.l.s8.bf16 %v997
    %v1742 = vunpack.c.l.s8.bf16 %v998
    %v1743 = vunpack.c.l.s8.bf16 %v999
    %v1744 = vunpack.c.l.s8.bf16 %v1000
    %v1745 = vunpack.c.h.s8.bf16 %v993
    %v1746 = vunpack.c.h.s8.bf16 %v994
    %v1747 = vunpack.c.h.s8.bf16 %v995
    %v1748 = vunpack.c.h.s8.bf16 %v996
    %v1749 = vunpack.c.h.s8.bf16 %v997
    %v1750 = vunpack.c.h.s8.bf16 %v998
    %v1751 = vunpack.c.h.s8.bf16 %v999
    %v1752 = vunpack.c.h.s8.bf16 %v1000
    %v1753 = vunpack.c.l.s8.bf16 %v1001
    %v1754 = vunpack.c.l.s8.bf16 %v1002
    %v1755 = vunpack.c.l.s8.bf16 %v1003
    %v1756 = vunpack.c.l.s8.bf16 %v1004
    %v1757 = vunpack.c.l.s8.bf16 %v1005
    %v1758 = vunpack.c.l.s8.bf16 %v1006
    %v1759 = vunpack.c.l.s8.bf16 %v1007
    %v1760 = vunpack.c.l.s8.bf16 %v1008
    %v1761 = vunpack.c.h.s8.bf16 %v1001
    %v1762 = vunpack.c.h.s8.bf16 %v1002
    %v1763 = vunpack.c.h.s8.bf16 %v1003
    %v1764 = vunpack.c.h.s8.bf16 %v1004
    %v1765 = vunpack.c.h.s8.bf16 %v1005
    %v1766 = vunpack.c.h.s8.bf16 %v1006
    %v1767 = vunpack.c.h.s8.bf16 %v1007
    %v1768 = vunpack.c.h.s8.bf16 %v1008
    %v1769 = vunpack.c.l.s8.bf16 %v1009
    %v1770 = vunpack.c.l.s8.bf16 %v1010
    %v1771 = vunpack.c.l.s8.bf16 %v1011
    %v1772 = vunpack.c.l.s8.bf16 %v1012
    %v1773 = vunpack.c.l.s8.bf16 %v1013
    %v1774 = vunpack.c.l.s8.bf16 %v1014
    %v1775 = vunpack.c.l.s8.bf16 %v1015
    %v1776 = vunpack.c.l.s8.bf16 %v1016
    %v1777 = vunpack.c.h.s8.bf16 %v1009
    %v1778 = vunpack.c.h.s8.bf16 %v1010
    %v1779 = vunpack.c.h.s8.bf16 %v1011
    %v1780 = vunpack.c.h.s8.bf16 %v1012
    %v1781 = vunpack.c.h.s8.bf16 %v1013
    %v1782 = vunpack.c.h.s8.bf16 %v1014
    %v1783 = vunpack.c.h.s8.bf16 %v1015
    %v1784 = vunpack.c.h.s8.bf16 %v1016
    %v1785 = vunpack.c.l.s8.bf16 %v1017
    %v1786 = vunpack.c.l.s8.bf16 %v1018
    %v1787 = vunpack.c.l.s8.bf16 %v1019
    %v1788 = vunpack.c.l.s8.bf16 %v1020
    %v1789 = vunpack.c.l.s8.bf16 %v1021
    %v1790 = vunpack.c.l.s8.bf16 %v1022
    %v1791 = vunpack.c.l.s8.bf16 %v1023
    %v1792 = vunpack.c.l.s8.bf16 %v1024
    %v1793 = vunpack.c.h.s8.bf16 %v1017
    %v1794 = vunpack.c.h.s8.bf16 %v1018
    %v1795 = vunpack.c.h.s8.bf16 %v1019
    %v1796 = vunpack.c.h.s8.bf16 %v1020
    %v1797 = vunpack.c.h.s8.bf16 %v1021
    %v1798 = vunpack.c.h.s8.bf16 %v1022
    %v1799 = vunpack.c.h.s8.bf16 %v1023
    %v1800 = vunpack.c.h.s8.bf16 %v1024
    %v1801 = vunpack.c.l.s8.bf16 %v1025
    %v1802 = vunpack.c.l.s8.bf16 %v1026
    %v1803 = vunpack.c.l.s8.bf16 %v1027
    %v1804 = vunpack.c.l.s8.bf16 %v1028
    %v1805 = vunpack.c.l.s8.bf16 %v1029
    %v1806 = vunpack.c.l.s8.bf16 %v1030
    %v1807 = vunpack.c.l.s8.bf16 %v1031
    %v1808 = vunpack.c.l.s8.bf16 %v1032
    %v1809 = vunpack.c.h.s8.bf16 %v1025
    %v1810 = vunpack.c.h.s8.bf16 %v1026
    %v1811 = vunpack.c.h.s8.bf16 %v1027
    %v1812 = vunpack.c.h.s8.bf16 %v1028
    %v1813 = vunpack.c.h.s8.bf16 %v1029
    %v1814 = vunpack.c.h.s8.bf16 %v1030
    %v1815 = vunpack.c.h.s8.bf16 %v1031
    %v1816 = vunpack.c.h.s8.bf16 %v1032
    %v1817 = vunpack.c.l.s8.bf16 %v1033
    %v1818 = vunpack.c.l.s8.bf16 %v1034
    %v1819 = vunpack.c.l.s8.bf16 %v1035
    %v1820 = vunpack.c.l.s8.bf16 %v1036
    %v1821 = vunpack.c.l.s8.bf16 %v1037
    %v1822 = vunpack.c.l.s8.bf16 %v1038
    %v1823 = vunpack.c.l.s8.bf16 %v1039
    %v1824 = vunpack.c.l.s8.bf16 %v1040
    %v1825 = vunpack.c.h.s8.bf16 %v1033
    %v1826 = vunpack.c.h.s8.bf16 %v1034
    %v1827 = vunpack.c.h.s8.bf16 %v1035
    %v1828 = vunpack.c.h.s8.bf16 %v1036
    %v1829 = vunpack.c.h.s8.bf16 %v1037
    %v1830 = vunpack.c.h.s8.bf16 %v1038
    %v1831 = vunpack.c.h.s8.bf16 %v1039
    %v1832 = vunpack.c.h.s8.bf16 %v1040
    %v1833 = vunpack.c.l.s8.bf16 %v1041
    %v1834 = vunpack.c.l.s8.bf16 %v1042
    %v1835 = vunpack.c.l.s8.bf16 %v1043
    %v1836 = vunpack.c.l.s8.bf16 %v1044
    %v1837 = vunpack.c.l.s8.bf16 %v1045
    %v1838 = vunpack.c.l.s8.bf16 %v1046
    %v1839 = vunpack.c.l.s8.bf16 %v1047
    %v1840 = vunpack.c.l.s8.bf16 %v1048
    %v1841 = vunpack.c.h.s8.bf16 %v1041
    %v1842 = vunpack.c.h.s8.bf16 %v1042
    %v1843 = vunpack.c.h.s8.bf16 %v1043
    %v1844 = vunpack.c.h.s8.bf16 %v1044
    %v1845 = vunpack.c.h.s8.bf16 %v1045
    %v1846 = vunpack.c.h.s8.bf16 %v1046
    %v1847 = vunpack.c.h.s8.bf16 %v1047
    %v1848 = vunpack.c.h.s8.bf16 %v1048
    %v1849 = vunpack.c.l.s8.bf16 %v1049
    %v1850 = vunpack.c.l.s8.bf16 %v1050
    %v1851 = vunpack.c.l.s8.bf16 %v1051
    %v1852 = vunpack.c.l.s8.bf16 %v1052
    %v1853 = vunpack.c.l.s8.bf16 %v1053
    %v1854 = vunpack.c.l.s8.bf16 %v1054
    %v1855 = vunpack.c.l.s8.bf16 %v1055
    %v1856 = vunpack.c.l.s8.bf16 %v1056
    %v1857 = vunpack.c.h.s8.bf16 %v1049
    %v1858 = vunpack.c.h.s8.bf16 %v1050
    %v1859 = vunpack.c.h.s8.bf16 %v1051
    %v1860 = vunpack.c.h.s8.bf16 %v1052
    %v1861 = vunpack.c.h.s8.bf16 %v1053
    %v1862 = vunpack.c.h.s8.bf16 %v1054
    %v1863 = vunpack.c.h.s8.bf16 %v1055
    %v1864 = vunpack.c.h.s8.bf16 %v1056
    %v1865 = vunpack.c.l.s8.bf16 %v1057
    %v1866 = vunpack.c.l.s8.bf16 %v1058
    %v1867 = vunpack.c.l.s8.bf16 %v1059
    %v1868 = vunpack.c.l.s8.bf16 %v1060
    %v1869 = vunpack.c.l.s8.bf16 %v1061
    %v1870 = vunpack.c.l.s8.bf16 %v1062
    %v1871 = vunpack.c.l.s8.bf16 %v1063
    %v1872 = vunpack.c.l.s8.bf16 %v1064
    %v1873 = vunpack.c.h.s8.bf16 %v1057
    %v1874 = vunpack.c.h.s8.bf16 %v1058
    %v1875 = vunpack.c.h.s8.bf16 %v1059
    %v1876 = vunpack.c.h.s8.bf16 %v1060
    %v1877 = vunpack.c.h.s8.bf16 %v1061
    %v1878 = vunpack.c.h.s8.bf16 %v1062
    %v1879 = vunpack.c.h.s8.bf16 %v1063
    %v1880 = vunpack.c.h.s8.bf16 %v1064
    %v1881 = vunpack.c.l.s8.bf16 %v1065
    %v1882 = vunpack.c.l.s8.bf16 %v1066
    %v1883 = vunpack.c.l.s8.bf16 %v1067
    %v1884 = vunpack.c.l.s8.bf16 %v1068
    %v1885 = vunpack.c.l.s8.bf16 %v1069
    %v1886 = vunpack.c.l.s8.bf16 %v1070
    %v1887 = vunpack.c.l.s8.bf16 %v1071
    %v1888 = vunpack.c.l.s8.bf16 %v1072
    %v1889 = vunpack.c.h.s8.bf16 %v1065
    %v1890 = vunpack.c.h.s8.bf16 %v1066
    %v1891 = vunpack.c.h.s8.bf16 %v1067
    %v1892 = vunpack.c.h.s8.bf16 %v1068
    %v1893 = vunpack.c.h.s8.bf16 %v1069
    %v1894 = vunpack.c.h.s8.bf16 %v1070
    %v1895 = vunpack.c.h.s8.bf16 %v1071
    %v1896 = vunpack.c.h.s8.bf16 %v1072
    %v1897 = vunpack.c.l.s8.bf16 %v1073
    %v1898 = vunpack.c.l.s8.bf16 %v1074
    %v1899 = vunpack.c.l.s8.bf16 %v1075
    %v1900 = vunpack.c.l.s8.bf16 %v1076
    %v1901 = vunpack.c.l.s8.bf16 %v1077
    %v1902 = vunpack.c.l.s8.bf16 %v1078
    %v1903 = vunpack.c.l.s8.bf16 %v1079
    %v1904 = vunpack.c.l.s8.bf16 %v1080
    %v1905 = vunpack.c.h.s8.bf16 %v1073
    %v1906 = vunpack.c.h.s8.bf16 %v1074
    %v1907 = vunpack.c.h.s8.bf16 %v1075
    %v1908 = vunpack.c.h.s8.bf16 %v1076
    %v1909 = vunpack.c.h.s8.bf16 %v1077
    %v1910 = vunpack.c.h.s8.bf16 %v1078
    %v1911 = vunpack.c.h.s8.bf16 %v1079
    %v1912 = vunpack.c.h.s8.bf16 %v1080
    %v1913 = vunpack.c.l.s8.bf16 %v1081
    %v1914 = vunpack.c.l.s8.bf16 %v1082
    %v1915 = vunpack.c.l.s8.bf16 %v1083
    %v1916 = vunpack.c.l.s8.bf16 %v1084
    %v1917 = vunpack.c.l.s8.bf16 %v1085
    %v1918 = vunpack.c.l.s8.bf16 %v1086
    %v1919 = vunpack.c.l.s8.bf16 %v1087
    %v1920 = vunpack.c.l.s8.bf16 %v1088
    %v1921 = vunpack.c.h.s8.bf16 %v1081
    %v1922 = vunpack.c.h.s8.bf16 %v1082
    %v1923 = vunpack.c.h.s8.bf16 %v1083
    %v1924 = vunpack.c.h.s8.bf16 %v1084
    %v1925 = vunpack.c.h.s8.bf16 %v1085
    %v1926 = vunpack.c.h.s8.bf16 %v1086
    %v1927 = vunpack.c.h.s8.bf16 %v1087
    %v1928 = vunpack.c.h.s8.bf16 %v1088
    %v1929 = vunpack.c.l.s8.bf16 %v1089
    %v1930 = vunpack.c.l.s8.bf16 %v1090
    %v1931 = vunpack.c.l.s8.bf16 %v1091
    %v1932 = vunpack.c.l.s8.bf16 %v1092
    %v1933 = vunpack.c.l.s8.bf16 %v1093
    %v1934 = vunpack.c.l.s8.bf16 %v1094
    %v1935 = vunpack.c.l.s8.bf16 %v1095
    %v1936 = vunpack.c.l.s8.bf16 %v1096
    %v1937 = vunpack.c.h.s8.bf16 %v1089
    %v1938 = vunpack.c.h.s8.bf16 %v1090
    %v1939 = vunpack.c.h.s8.bf16 %v1091
    %v1940 = vunpack.c.h.s8.bf16 %v1092
    %v1941 = vunpack.c.h.s8.bf16 %v1093
    %v1942 = vunpack.c.h.s8.bf16 %v1094
    %v1943 = vunpack.c.h.s8.bf16 %v1095
    %v1944 = vunpack.c.h.s8.bf16 %v1096
    %v1945 = vunpack.c.l.s8.bf16 %v1097
    %v1946 = vunpack.c.l.s8.bf16 %v1098
    %v1947 = vunpack.c.l.s8.bf16 %v1099
    %v1948 = vunpack.c.l.s8.bf16 %v1100
    %v1949 = vunpack.c.l.s8.bf16 %v1101
    %v1950 = vunpack.c.l.s8.bf16 %v1102
    %v1951 = vunpack.c.l.s8.bf16 %v1103
    %v1952 = vunpack.c.l.s8.bf16 %v1104
    %v1953 = vunpack.c.h.s8.bf16 %v1097
    %v1954 = vunpack.c.h.s8.bf16 %v1098
    %v1955 = vunpack.c.h.s8.bf16 %v1099
    %v1956 = vunpack.c.h.s8.bf16 %v1100
    %v1957 = vunpack.c.h.s8.bf16 %v1101
    %v1958 = vunpack.c.h.s8.bf16 %v1102
    %v1959 = vunpack.c.h.s8.bf16 %v1103
    %v1960 = vunpack.c.h.s8.bf16 %v1104
    %v1961 = vunpack.c.l.s8.bf16 %v1105
    %v1962 = vunpack.c.l.s8.bf16 %v1106
    %v1963 = vunpack.c.l.s8.bf16 %v1107
    %v1964 = vunpack.c.l.s8.bf16 %v1108
    %v1965 = vunpack.c.l.s8.bf16 %v1109
    %v1966 = vunpack.c.l.s8.bf16 %v1110
    %v1967 = vunpack.c.l.s8.bf16 %v1111
    %v1968 = vunpack.c.l.s8.bf16 %v1112
    %v1969 = vunpack.c.h.s8.bf16 %v1105
    %v1970 = vunpack.c.h.s8.bf16 %v1106
    %v1971 = vunpack.c.h.s8.bf16 %v1107
    %v1972 = vunpack.c.h.s8.bf16 %v1108
    %v1973 = vunpack.c.h.s8.bf16 %v1109
    %v1974 = vunpack.c.h.s8.bf16 %v1110
    %v1975 = vunpack.c.h.s8.bf16 %v1111
    %v1976 = vunpack.c.h.s8.bf16 %v1112
    %v1977 = vunpack.c.l.s8.bf16 %v1113
    %v1978 = vunpack.c.l.s8.bf16 %v1114
    %v1979 = vunpack.c.l.s8.bf16 %v1115
    %v1980 = vunpack.c.l.s8.bf16 %v1116
    %v1981 = vunpack.c.l.s8.bf16 %v1117
    %v1982 = vunpack.c.l.s8.bf16 %v1118
    %v1983 = vunpack.c.l.s8.bf16 %v1119
    %v1984 = vunpack.c.l.s8.bf16 %v1120
    %v1985 = vunpack.c.h.s8.bf16 %v1113
    %v1986 = vunpack.c.h.s8.bf16 %v1114
    %v1987 = vunpack.c.h.s8.bf16 %v1115
    %v1988 = vunpack.c.h.s8.bf16 %v1116
    %v1989 = vunpack.c.h.s8.bf16 %v1117
    %v1990 = vunpack.c.h.s8.bf16 %v1118
    %v1991 = vunpack.c.h.s8.bf16 %v1119
    %v1992 = vunpack.c.h.s8.bf16 %v1120
    %v1993 = vunpack.c.l.s8.bf16 %v1121
    %v1994 = vunpack.c.l.s8.bf16 %v1122
    %v1995 = vunpack.c.l.s8.bf16 %v1123
    %v1996 = vunpack.c.l.s8.bf16 %v1124
    %v1997 = vunpack.c.l.s8.bf16 %v1125
    %v1998 = vunpack.c.l.s8.bf16 %v1126
    %v1999 = vunpack.c.l.s8.bf16 %v1127
    %v2000 = vunpack.c.l.s8.bf16 %v1128
    %v2001 = vunpack.c.h.s8.bf16 %v1121
    %v2002 = vunpack.c.h.s8.bf16 %v1122
    %v2003 = vunpack.c.h.s8.bf16 %v1123
    %v2004 = vunpack.c.h.s8.bf16 %v1124
    %v2005 = vunpack.c.h.s8.bf16 %v1125
    %v2006 = vunpack.c.h.s8.bf16 %v1126
    %v2007 = vunpack.c.h.s8.bf16 %v1127
    %v2008 = vunpack.c.h.s8.bf16 %v1128
    %v2009 = vunpack.c.l.s8.bf16 %v1129
    %v2010 = vunpack.c.l.s8.bf16 %v1130
    %v2011 = vunpack.c.l.s8.bf16 %v1131
    %v2012 = vunpack.c.l.s8.bf16 %v1132
    %v2013 = vunpack.c.l.s8.bf16 %v1133
    %v2014 = vunpack.c.l.s8.bf16 %v1134
    %v2015 = vunpack.c.l.s8.bf16 %v1135
    %v2016 = vunpack.c.l.s8.bf16 %v1136
    %v2017 = vunpack.c.h.s8.bf16 %v1129
    %v2018 = vunpack.c.h.s8.bf16 %v1130
    %v2019 = vunpack.c.h.s8.bf16 %v1131
    %v2020 = vunpack.c.h.s8.bf16 %v1132
    %v2021 = vunpack.c.h.s8.bf16 %v1133
    %v2022 = vunpack.c.h.s8.bf16 %v1134
    %v2023 = vunpack.c.h.s8.bf16 %v1135
    %v2024 = vunpack.c.h.s8.bf16 %v1136
    %v2025 = vunpack.c.l.s8.bf16 %v1137
    %v2026 = vunpack.c.l.s8.bf16 %v1138
    %v2027 = vunpack.c.l.s8.bf16 %v1139
    %v2028 = vunpack.c.l.s8.bf16 %v1140
    %v2029 = vunpack.c.l.s8.bf16 %v1141
    %v2030 = vunpack.c.l.s8.bf16 %v1142
    %v2031 = vunpack.c.l.s8.bf16 %v1143
    %v2032 = vunpack.c.l.s8.bf16 %v1144
    %v2033 = vunpack.c.h.s8.bf16 %v1137
    %v2034 = vunpack.c.h.s8.bf16 %v1138
    %v2035 = vunpack.c.h.s8.bf16 %v1139
    %v2036 = vunpack.c.h.s8.bf16 %v1140
    %v2037 = vunpack.c.h.s8.bf16 %v1141
    %v2038 = vunpack.c.h.s8.bf16 %v1142
    %v2039 = vunpack.c.h.s8.bf16 %v1143
    %v2040 = vunpack.c.h.s8.bf16 %v1144
    %v2041 = vunpack.c.l.s8.bf16 %v1145
    %v2042 = vunpack.c.l.s8.bf16 %v1146
    %v2043 = vunpack.c.l.s8.bf16 %v1147
    %v2044 = vunpack.c.l.s8.bf16 %v1148
    %v2045 = vunpack.c.l.s8.bf16 %v1149
    %v2046 = vunpack.c.l.s8.bf16 %v1150
    %v2047 = vunpack.c.l.s8.bf16 %v1151
    %v2048 = vunpack.c.l.s8.bf16 %v1152
    %v2049 = vunpack.c.h.s8.bf16 %v1145
    %v2050 = vunpack.c.h.s8.bf16 %v1146
    %v2051 = vunpack.c.h.s8.bf16 %v1147
    %v2052 = vunpack.c.h.s8.bf16 %v1148
    %v2053 = vunpack.c.h.s8.bf16 %v1149
    %v2054 = vunpack.c.h.s8.bf16 %v1150
    %v2055 = vunpack.c.h.s8.bf16 %v1151
    %v2056 = vunpack.c.h.s8.bf16 %v1152
    %v2057 = vunpack.c.l.s8.bf16 %v1153
    %v2058 = vunpack.c.l.s8.bf16 %v1154
    %v2059 = vunpack.c.l.s8.bf16 %v1155
    %v2060 = vunpack.c.l.s8.bf16 %v1156
    %v2061 = vunpack.c.l.s8.bf16 %v1157
    %v2062 = vunpack.c.l.s8.bf16 %v1158
    %v2063 = vunpack.c.l.s8.bf16 %v1159
    %v2064 = vunpack.c.l.s8.bf16 %v1160
    %v2065 = vunpack.c.h.s8.bf16 %v1153
    %v2066 = vunpack.c.h.s8.bf16 %v1154
    %v2067 = vunpack.c.h.s8.bf16 %v1155
    %v2068 = vunpack.c.h.s8.bf16 %v1156
    %v2069 = vunpack.c.h.s8.bf16 %v1157
    %v2070 = vunpack.c.h.s8.bf16 %v1158
    %v2071 = vunpack.c.h.s8.bf16 %v1159
    %v2072 = vunpack.c.h.s8.bf16 %v1160
    %v2073 = vunpack.c.l.s8.bf16 %v1161
    %v2074 = vunpack.c.l.s8.bf16 %v1162
    %v2075 = vunpack.c.l.s8.bf16 %v1163
    %v2076 = vunpack.c.l.s8.bf16 %v1164
    %v2077 = vunpack.c.l.s8.bf16 %v1165
    %v2078 = vunpack.c.l.s8.bf16 %v1166
    %v2079 = vunpack.c.l.s8.bf16 %v1167
    %v2080 = vunpack.c.l.s8.bf16 %v1168
    %v2081 = vunpack.c.h.s8.bf16 %v1161
    %v2082 = vunpack.c.h.s8.bf16 %v1162
    %v2083 = vunpack.c.h.s8.bf16 %v1163
    %v2084 = vunpack.c.h.s8.bf16 %v1164
    %v2085 = vunpack.c.h.s8.bf16 %v1165
    %v2086 = vunpack.c.h.s8.bf16 %v1166
    %v2087 = vunpack.c.h.s8.bf16 %v1167
    %v2088 = vunpack.c.h.s8.bf16 %v1168
    %v2089 = vunpack.c.l.s8.bf16 %v1169
    %v2090 = vunpack.c.l.s8.bf16 %v1170
    %v2091 = vunpack.c.l.s8.bf16 %v1171
    %v2092 = vunpack.c.l.s8.bf16 %v1172
    %v2093 = vunpack.c.l.s8.bf16 %v1173
    %v2094 = vunpack.c.l.s8.bf16 %v1174
    %v2095 = vunpack.c.l.s8.bf16 %v1175
    %v2096 = vunpack.c.l.s8.bf16 %v1176
    %v2097 = vunpack.c.h.s8.bf16 %v1169
    %v2098 = vunpack.c.h.s8.bf16 %v1170
    %v2099 = vunpack.c.h.s8.bf16 %v1171
    %v2100 = vunpack.c.h.s8.bf16 %v1172
    %v2101 = vunpack.c.h.s8.bf16 %v1173
    %v2102 = vunpack.c.h.s8.bf16 %v1174
    %v2103 = vunpack.c.h.s8.bf16 %v1175
    %v2104 = vunpack.c.h.s8.bf16 %v1176
    %v2105 = vunpack.c.l.s8.bf16 %v1177
    %v2106 = vunpack.c.l.s8.bf16 %v1178
    %v2107 = vunpack.c.l.s8.bf16 %v1179
    %v2108 = vunpack.c.l.s8.bf16 %v1180
    %v2109 = vunpack.c.l.s8.bf16 %v1181
    %v2110 = vunpack.c.l.s8.bf16 %v1182
    %v2111 = vunpack.c.l.s8.bf16 %v1183
    %v2112 = vunpack.c.l.s8.bf16 %v1184
    %v2113 = vunpack.c.h.s8.bf16 %v1177
    %v2114 = vunpack.c.h.s8.bf16 %v1178
    %v2115 = vunpack.c.h.s8.bf16 %v1179
    %v2116 = vunpack.c.h.s8.bf16 %v1180
    %v2117 = vunpack.c.h.s8.bf16 %v1181
    %v2118 = vunpack.c.h.s8.bf16 %v1182
    %v2119 = vunpack.c.h.s8.bf16 %v1183
    %v2120 = vunpack.c.h.s8.bf16 %v1184
    %v2121 = vunpack.c.l.s8.bf16 %v1185
    %v2122 = vunpack.c.l.s8.bf16 %v1186
    %v2123 = vunpack.c.l.s8.bf16 %v1187
    %v2124 = vunpack.c.l.s8.bf16 %v1188
    %v2125 = vunpack.c.l.s8.bf16 %v1189
    %v2126 = vunpack.c.l.s8.bf16 %v1190
    %v2127 = vunpack.c.l.s8.bf16 %v1191
    %v2128 = vunpack.c.l.s8.bf16 %v1192
    %v2129 = vunpack.c.h.s8.bf16 %v1185
    %v2130 = vunpack.c.h.s8.bf16 %v1186
    %v2131 = vunpack.c.h.s8.bf16 %v1187
    %v2132 = vunpack.c.h.s8.bf16 %v1188
    %v2133 = vunpack.c.h.s8.bf16 %v1189
    %v2134 = vunpack.c.h.s8.bf16 %v1190
    %v2135 = vunpack.c.h.s8.bf16 %v1191
    %v2136 = vunpack.c.h.s8.bf16 %v1192
    %v2137 = vunpack.c.l.s8.bf16 %v1193
    %v2138 = vunpack.c.l.s8.bf16 %v1194
    %v2139 = vunpack.c.l.s8.bf16 %v1195
    %v2140 = vunpack.c.l.s8.bf16 %v1196
    %v2141 = vunpack.c.l.s8.bf16 %v1197
    %v2142 = vunpack.c.l.s8.bf16 %v1198
    %v2143 = vunpack.c.l.s8.bf16 %v1199
    %v2144 = vunpack.c.l.s8.bf16 %v1200
    %v2145 = vunpack.c.h.s8.bf16 %v1193
    %v2146 = vunpack.c.h.s8.bf16 %v1194
    %v2147 = vunpack.c.h.s8.bf16 %v1195
    %v2148 = vunpack.c.h.s8.bf16 %v1196
    %v2149 = vunpack.c.h.s8.bf16 %v1197
    %v2150 = vunpack.c.h.s8.bf16 %v1198
    %v2151 = vunpack.c.h.s8.bf16 %v1199
    %v2152 = vunpack.c.h.s8.bf16 %v1200
    %v2153 = vunpack.c.l.s8.bf16 %v1201
    %v2154 = vunpack.c.l.s8.bf16 %v1202
    %v2155 = vunpack.c.l.s8.bf16 %v1203
    %v2156 = vunpack.c.l.s8.bf16 %v1204
    %v2157 = vunpack.c.l.s8.bf16 %v1205
    %v2158 = vunpack.c.l.s8.bf16 %v1206
    %v2159 = vunpack.c.l.s8.bf16 %v1207
    %v2160 = vunpack.c.l.s8.bf16 %v1208
    %v2161 = vunpack.c.h.s8.bf16 %v1201
    %v2162 = vunpack.c.h.s8.bf16 %v1202
    %v2163 = vunpack.c.h.s8.bf16 %v1203
    %v2164 = vunpack.c.h.s8.bf16 %v1204
    %v2165 = vunpack.c.h.s8.bf16 %v1205
    %v2166 = vunpack.c.h.s8.bf16 %v1206
    %v2167 = vunpack.c.h.s8.bf16 %v1207
    %v2168 = vunpack.c.h.s8.bf16 %v1208
    %v2169 = vunpack.c.l.s8.bf16 %v1209
    %v2170 = vunpack.c.l.s8.bf16 %v1210
    %v2171 = vunpack.c.l.s8.bf16 %v1211
    %v2172 = vunpack.c.l.s8.bf16 %v1212
    %v2173 = vunpack.c.l.s8.bf16 %v1213
    %v2174 = vunpack.c.l.s8.bf16 %v1214
    %v2175 = vunpack.c.l.s8.bf16 %v1215
    %v2176 = vunpack.c.l.s8.bf16 %v1216
    %v2177 = vunpack.c.h.s8.bf16 %v1209
    %v2178 = vunpack.c.h.s8.bf16 %v1210
    %v2179 = vunpack.c.h.s8.bf16 %v1211
    %v2180 = vunpack.c.h.s8.bf16 %v1212
    %v2181 = vunpack.c.h.s8.bf16 %v1213
    %v2182 = vunpack.c.h.s8.bf16 %v1214
    %v2183 = vunpack.c.h.s8.bf16 %v1215
    %v2184 = vunpack.c.h.s8.bf16 %v1216
    %v2185 = vunpack.c.l.s8.bf16 %v1217
    %v2186 = vunpack.c.l.s8.bf16 %v1218
    %v2187 = vunpack.c.l.s8.bf16 %v1219
    %v2188 = vunpack.c.l.s8.bf16 %v1220
    %v2189 = vunpack.c.l.s8.bf16 %v1221
    %v2190 = vunpack.c.l.s8.bf16 %v1222
    %v2191 = vunpack.c.l.s8.bf16 %v1223
    %v2192 = vunpack.c.l.s8.bf16 %v1224
    %v2193 = vunpack.c.h.s8.bf16 %v1217
    %v2194 = vunpack.c.h.s8.bf16 %v1218
    %v2195 = vunpack.c.h.s8.bf16 %v1219
    %v2196 = vunpack.c.h.s8.bf16 %v1220
    %v2197 = vunpack.c.h.s8.bf16 %v1221
    %v2198 = vunpack.c.h.s8.bf16 %v1222
    %v2199 = vunpack.c.h.s8.bf16 %v1223
    %v2200 = vunpack.c.h.s8.bf16 %v1224
    %v2201 = vunpack.c.l.s8.bf16 %v1225
    %v2202 = vunpack.c.l.s8.bf16 %v1226
    %v2203 = vunpack.c.l.s8.bf16 %v1227
    %v2204 = vunpack.c.l.s8.bf16 %v1228
    %v2205 = vunpack.c.l.s8.bf16 %v1229
    %v2206 = vunpack.c.l.s8.bf16 %v1230
    %v2207 = vunpack.c.l.s8.bf16 %v1231
    %v2208 = vunpack.c.l.s8.bf16 %v1232
    %v2209 = vunpack.c.h.s8.bf16 %v1225
    %v2210 = vunpack.c.h.s8.bf16 %v1226
    %v2211 = vunpack.c.h.s8.bf16 %v1227
    %v2212 = vunpack.c.h.s8.bf16 %v1228
    %v2213 = vunpack.c.h.s8.bf16 %v1229
    %v2214 = vunpack.c.h.s8.bf16 %v1230
    %v2215 = vunpack.c.h.s8.bf16 %v1231
    %v2216 = vunpack.c.h.s8.bf16 %v1232
    %v2217 = vunpack.c.l.s8.bf16 %v1233
    %v2218 = vunpack.c.l.s8.bf16 %v1234
    %v2219 = vunpack.c.l.s8.bf16 %v1235
    %v2220 = vunpack.c.l.s8.bf16 %v1236
    %v2221 = vunpack.c.l.s8.bf16 %v1237
    %v2222 = vunpack.c.l.s8.bf16 %v1238
    %v2223 = vunpack.c.l.s8.bf16 %v1239
    %v2224 = vunpack.c.l.s8.bf16 %v1240
    %v2225 = vunpack.c.h.s8.bf16 %v1233
    %v2226 = vunpack.c.h.s8.bf16 %v1234
    %v2227 = vunpack.c.h.s8.bf16 %v1235
    %v2228 = vunpack.c.h.s8.bf16 %v1236
    %v2229 = vunpack.c.h.s8.bf16 %v1237
    %v2230 = vunpack.c.h.s8.bf16 %v1238
    %v2231 = vunpack.c.h.s8.bf16 %v1239
    %v2232 = vunpack.c.h.s8.bf16 %v1240
    %v2233 = vunpack.c.l.s8.bf16 %v1241
    %v2234 = vunpack.c.l.s8.bf16 %v1242
    %v2235 = vunpack.c.l.s8.bf16 %v1243
    %v2236 = vunpack.c.l.s8.bf16 %v1244
    %v2237 = vunpack.c.l.s8.bf16 %v1245
    %v2238 = vunpack.c.l.s8.bf16 %v1246
    %v2239 = vunpack.c.l.s8.bf16 %v1247
    %v2240 = vunpack.c.l.s8.bf16 %v1248
    %v2241 = vunpack.c.h.s8.bf16 %v1241
    %v2242 = vunpack.c.h.s8.bf16 %v1242
    %v2243 = vunpack.c.h.s8.bf16 %v1243
    %v2244 = vunpack.c.h.s8.bf16 %v1244
    %v2245 = vunpack.c.h.s8.bf16 %v1245
    %v2246 = vunpack.c.h.s8.bf16 %v1246
    %v2247 = vunpack.c.h.s8.bf16 %v1247
    %v2248 = vunpack.c.h.s8.bf16 %v1248
    %v2249 = vunpack.c.l.s8.bf16 %v1249
    %v2250 = vunpack.c.l.s8.bf16 %v1250
    %v2251 = vunpack.c.l.s8.bf16 %v1251
    %v2252 = vunpack.c.l.s8.bf16 %v1252
    %v2253 = vunpack.c.l.s8.bf16 %v1253
    %v2254 = vunpack.c.l.s8.bf16 %v1254
    %v2255 = vunpack.c.l.s8.bf16 %v1255
    %v2256 = vunpack.c.l.s8.bf16 %v1256
    %v2257 = vunpack.c.h.s8.bf16 %v1249
    %v2258 = vunpack.c.h.s8.bf16 %v1250
    %v2259 = vunpack.c.h.s8.bf16 %v1251
    %v2260 = vunpack.c.h.s8.bf16 %v1252
    %v2261 = vunpack.c.h.s8.bf16 %v1253
    %v2262 = vunpack.c.h.s8.bf16 %v1254
    %v2263 = vunpack.c.h.s8.bf16 %v1255
    %v2264 = vunpack.c.h.s8.bf16 %v1256
    %v2265 = vunpack.c.l.s8.bf16 %v1257
    %v2266 = vunpack.c.l.s8.bf16 %v1258
    %v2267 = vunpack.c.l.s8.bf16 %v1259
    %v2268 = vunpack.c.l.s8.bf16 %v1260
    %v2269 = vunpack.c.l.s8.bf16 %v1261
    %v2270 = vunpack.c.l.s8.bf16 %v1262
    %v2271 = vunpack.c.l.s8.bf16 %v1263
    %v2272 = vunpack.c.l.s8.bf16 %v1264
    %v2273 = vunpack.c.h.s8.bf16 %v1257
    %v2274 = vunpack.c.h.s8.bf16 %v1258
    %v2275 = vunpack.c.h.s8.bf16 %v1259
    %v2276 = vunpack.c.h.s8.bf16 %v1260
    %v2277 = vunpack.c.h.s8.bf16 %v1261
    %v2278 = vunpack.c.h.s8.bf16 %v1262
    %v2279 = vunpack.c.h.s8.bf16 %v1263
    %v2280 = vunpack.c.h.s8.bf16 %v1264
    %v2281 = vunpack.c.l.s8.bf16 %v1265
    %v2282 = vunpack.c.l.s8.bf16 %v1266
    %v2283 = vunpack.c.l.s8.bf16 %v1267
    %v2284 = vunpack.c.l.s8.bf16 %v1268
    %v2285 = vunpack.c.l.s8.bf16 %v1269
    %v2286 = vunpack.c.l.s8.bf16 %v1270
    %v2287 = vunpack.c.l.s8.bf16 %v1271
    %v2288 = vunpack.c.l.s8.bf16 %v1272
    %v2289 = vunpack.c.h.s8.bf16 %v1265
    %v2290 = vunpack.c.h.s8.bf16 %v1266
    %v2291 = vunpack.c.h.s8.bf16 %v1267
    %v2292 = vunpack.c.h.s8.bf16 %v1268
    %v2293 = vunpack.c.h.s8.bf16 %v1269
    %v2294 = vunpack.c.h.s8.bf16 %v1270
    %v2295 = vunpack.c.h.s8.bf16 %v1271
    %v2296 = vunpack.c.h.s8.bf16 %v1272
    %v2297 = vpack.c.bf16 %v745, %v729
    %v2298 = vpack.c.bf16 %v746, %v730
    %v2299 = vpack.c.bf16 %v747, %v731
    %v2300 = vpack.c.bf16 %v748, %v732
    %v2301 = vpack.c.bf16 %v749, %v733
    %v2302 = vpack.c.bf16 %v750, %v734
    %v2303 = vpack.c.bf16 %v751, %v735
    %v2304 = vpack.c.bf16 %v752, %v736
    %v2305 = vpack.c.bf16 %v753, %v737
    %v2306 = vpack.c.bf16 %v754, %v738
    %v2307 = vpack.c.bf16 %v755, %v739
    %v2308 = vpack.c.bf16 %v756, %v740
    %v2309 = vpack.c.bf16 %v757, %v741
    %v2310 = vpack.c.bf16 %v758, %v742
    %v2311 = vpack.c.bf16 %v759, %v743
    %v2312 = vpack.c.bf16 %v760, %v744
    %2313 = vmatprep.subr.bf16.mxu0 %v1274
    %2314 = vmatpush1.bf16.msra.mxu0 %v1273
    %2315 = vmatprep.subr.bf16.mxu0 %v1282
    %2316 = vmatpush1.bf16.msra.mxu0 %v1281
    %2317 = vmatprep.subr.bf16.mxu0 %v1290
    %2318 = vmatpush1.bf16.msra.mxu0 %v1289
    %2319 = vmatprep.subr.bf16.mxu0 %v1298
    %2320 = vmatpush1.bf16.msra.mxu0 %v1297
    %2321 = vmatprep.subr.bf16.mxu0 %v1306
    %2322 = vmatpush1.bf16.msra.mxu0 %v1305
    %2323 = vmatprep.subr.bf16.mxu0 %v1314
    %2324 = vmatpush1.bf16.msra.mxu0 %v1313
    %2325 = vmatprep.subr.bf16.mxu0 %v1322
    %2326 = vmatpush1.bf16.msra.mxu0 %v1321
    %2327 = vmatprep.subr.bf16.mxu0 %v1330
    %2328 = vmatpush1.bf16.msra.mxu0 %v1329
    %2329 = vmatprep.subr.bf16.mxu0 %v1338
    %2330 = vmatpush1.bf16.msra.mxu0 %v1337
    %2331 = vmatprep.subr.bf16.mxu0 %v1346
    %2332 = vmatpush1.bf16.msra.mxu0 %v1345
    %2333 = vmatprep.subr.bf16.mxu0 %v1354
    %2334 = vmatpush1.bf16.msra.mxu0 %v1353
    %2335 = vmatprep.subr.bf16.mxu0 %v1362
    %2336 = vmatpush1.bf16.msra.mxu0 %v1361
    %2337 = vmatprep.subr.bf16.mxu0 %v1370
    %2338 = vmatpush1.bf16.msra.mxu0 %v1369
    %2339 = vmatprep.subr.bf16.mxu0 %v1378
    %2340 = vmatpush1.bf16.msra.mxu0 %v1377
    %2341 = vmatprep.subr.bf16.mxu0 %v1386
    %2342 = vmatpush1.bf16.msra.mxu0 %v1385
    %2343 = vmatprep.subr.bf16.mxu0 %v1394
    %2344 = vmatpush1.bf16.msra.mxu0 %v1393
    %2345 = vmatprep.mubr.bf16.mxu0 %v2298
    %2346 = vmatmul.mubr.bf16.gmra.mrb[0].mxu0 %v2297
    %v2347 = vpop.f32.mrb[0].mxu0
    %v2348 = vadd.f32 0.0, %v2347
    %v2349 = vpop.f32.mrb[0].mxu0
    %v2350 = vadd.f32 0.0, %v2349
    %v2351 = vpop.f32.mrb[0].mxu0
    %v2352 = vadd.f32 0.0, %v2351
    %v2353 = vpop.f32.mrb[0].mxu0
    %v2354 = vadd.f32 0.0, %v2353
    %2355 = vdwg.mxu0
    %2356 = vmatprep.subr.bf16.mxu0 %v1402
    %2357 = vmatpush1.bf16.msra.mxu0 %v1401
    %2358 = vmatprep.subr.bf16.mxu0 %v1410
    %2359 = vmatpush1.bf16.msra.mxu0 %v1409
    %2360 = vmatprep.subr.bf16.mxu0 %v1418
    %2361 = vmatpush1.bf16.msra.mxu0 %v1417
    %2362 = vmatprep.subr.bf16.mxu0 %v1426
    %2363 = vmatpush1.bf16.msra.mxu0 %v1425
    %2364 = vmatprep.subr.bf16.mxu0 %v1434
    %2365 = vmatpush1.bf16.msra.mxu0 %v1433
    %2366 = vmatprep.subr.bf16.mxu0 %v1442
    %2367 = vmatpush1.bf16.msra.mxu0 %v1441
    %2368 = vmatprep.subr.bf16.mxu0 %v1450
    %2369 = vmatpush1.bf16.msra.mxu0 %v1449
    %2370 = vmatprep.subr.bf16.mxu0 %v1458
    %2371 = vmatpush1.bf16.msra.mxu0 %v1457
    %2372 = vmatprep.subr.bf16.mxu0 %v1466
    %2373 = vmatpush1.bf16.msra.mxu0 %v1465
    %2374 = vmatprep.subr.bf16.mxu0 %v1474
    %2375 = vmatpush1.bf16.msra.mxu0 %v1473
    %2376 = vmatprep.subr.bf16.mxu0 %v1482
    %2377 = vmatpush1.bf16.msra.mxu0 %v1481
    %2378 = vmatprep.subr.bf16.mxu0 %v1490
    %2379 = vmatpush1.bf16.msra.mxu0 %v1489
    %2380 = vmatprep.subr.bf16.mxu0 %v1498
    %2381 = vmatpush1.bf16.msra.mxu0 %v1497
    %2382 = vmatprep.subr.bf16.mxu0 %v1506
    %2383 = vmatpush1.bf16.msra.mxu0 %v1505
    %2384 = vmatprep.subr.bf16.mxu0 %v1514
    %2385 = vmatpush1.bf16.msra.mxu0 %v1513
    %2386 = vmatprep.subr.bf16.mxu0 %v1522
    %2387 = vmatpush1.bf16.msra.mxu0 %v1521
    %2388 = vmatprep.mubr.bf16.mxu0 %v2300
    %2389 = vmatmul.mubr.bf16.gmra.mrb[0].mxu0 %v2299
    %v2390 = vpop.f32.mrb[0].mxu0
    %v2391 = vadd.f32 %v2348, %v2390
    %v2392 = vpop.f32.mrb[0].mxu0
    %v2393 = vadd.f32 %v2350, %v2392
    %v2394 = vpop.f32.mrb[0].mxu0
    %v2395 = vadd.f32 %v2352, %v2394
    %v2396 = vpop.f32.mrb[0].mxu0
    %v2397 = vadd.f32 %v2354, %v2396
    %2398 = vdwg.mxu0
    %2399 = vmatprep.subr.bf16.mxu0 %v1530
    %2400 = vmatpush1.bf16.msra.mxu0 %v1529
    %2401 = vmatprep.subr.bf16.mxu0 %v1538
    %2402 = vmatpush1.bf16.msra.mxu0 %v1537
    %2403 = vmatprep.subr.bf16.mxu0 %v1546
    %2404 = vmatpush1.bf16.msra.mxu0 %v1545
    %2405 = vmatprep.subr.bf16.mxu0 %v1554
    %2406 = vmatpush1.bf16.msra.mxu0 %v1553
    %2407 = vmatprep.subr.bf16.mxu0 %v1562
    %2408 = vmatpush1.bf16.msra.mxu0 %v1561
    %2409 = vmatprep.subr.bf16.mxu0 %v1570
    %2410 = vmatpush1.bf16.msra.mxu0 %v1569
    %2411 = vmatprep.subr.bf16.mxu0 %v1578
    %2412 = vmatpush1.bf16.msra.mxu0 %v1577
    %2413 = vmatprep.subr.bf16.mxu0 %v1586
    %2414 = vmatpush1.bf16.msra.mxu0 %v1585
    %2415 = vmatprep.subr.bf16.mxu0 %v1594
    %2416 = vmatpush1.bf16.msra.mxu0 %v1593
    %2417 = vmatprep.subr.bf16.mxu0 %v1602
    %2418 = vmatpush1.bf16.msra.mxu0 %v1601
    %2419 = vmatprep.subr.bf16.mxu0 %v1610
    %2420 = vmatpush1.bf16.msra.mxu0 %v1609
    %2421 = vmatprep.subr.bf16.mxu0 %v1618
    %2422 = vmatpush1.bf16.msra.mxu0 %v1617
    %2423 = vmatprep.subr.bf16.mxu0 %v1626
    %2424 = vmatpush1.bf16.msra.mxu0 %v1625
    %2425 = vmatprep.subr.bf16.mxu0 %v1634
    %2426 = vmatpush1.bf16.msra.mxu0 %v1633
    %2427 = vmatprep.subr.bf16.mxu0 %v1642
    %2428 = vmatpush1.bf16.msra.mxu0 %v1641
    %2429 = vmatprep.subr.bf16.mxu0 %v1650
    %2430 = vmatpush1.bf16.msra.mxu0 %v1649
    %2431 = vmatprep.mubr.bf16.mxu0 %v2302
    %2432 = vmatmul.mubr.bf16.gmra.mrb[0].mxu0 %v2301
    %v2433 = vpop.f32.mrb[0].mxu0
    %v2434 = vadd.f32 %v2391, %v2433
    %v2435 = vpop.f32.mrb[0].mxu0
    %v2436 = vadd.f32 %v2393, %v2435
    %v2437 = vpop.f32.mrb[0].mxu0
    %v2438 = vadd.f32 %v2395, %v2437
    %v2439 = vpop.f32.mrb[0].mxu0
    %v2440 = vadd.f32 %v2397, %v2439
    %2441 = vdwg.mxu0
    %2442 = vmatprep.subr.bf16.mxu0 %v1658
    %2443 = vmatpush1.bf16.msra.mxu0 %v1657
    %2444 = vmatprep.subr.bf16.mxu0 %v1666
    %2445 = vmatpush1.bf16.msra.mxu0 %v1665
    %2446 = vmatprep.subr.bf16.mxu0 %v1674
    %2447 = vmatpush1.bf16.msra.mxu0 %v1673
    %2448 = vmatprep.subr.bf16.mxu0 %v1682
    %2449 = vmatpush1.bf16.msra.mxu0 %v1681
    %2450 = vmatprep.subr.bf16.mxu0 %v1690
    %2451 = vmatpush1.bf16.msra.mxu0 %v1689
    %2452 = vmatprep.subr.bf16.mxu0 %v1698
    %2453 = vmatpush1.bf16.msra.mxu0 %v1697
    %2454 = vmatprep.subr.bf16.mxu0 %v1706
    %2455 = vmatpush1.bf16.msra.mxu0 %v1705
    %2456 = vmatprep.subr.bf16.mxu0 %v1714
    %2457 = vmatpush1.bf16.msra.mxu0 %v1713
    %2458 = vmatprep.subr.bf16.mxu0 %v1722
    %2459 = vmatpush1.bf16.msra.mxu0 %v1721
    %2460 = vmatprep.subr.bf16.mxu0 %v1730
    %2461 = vmatpush1.bf16.msra.mxu0 %v1729
    %2462 = vmatprep.subr.bf16.mxu0 %v1738
    %2463 = vmatpush1.bf16.msra.mxu0 %v1737
    %2464 = vmatprep.subr.bf16.mxu0 %v1746
    %2465 = vmatpush1.bf16.msra.mxu0 %v1745
    %2466 = vmatprep.subr.bf16.mxu0 %v1754
    %2467 = vmatpush1.bf16.msra.mxu0 %v1753
    %2468 = vmatprep.subr.bf16.mxu0 %v1762
    %2469 = vmatpush1.bf16.msra.mxu0 %v1761
    %2470 = vmatprep.subr.bf16.mxu0 %v1770
    %2471 = vmatpush1.bf16.msra.mxu0 %v1769
    %2472 = vmatprep.subr.bf16.mxu0 %v1778
    %2473 = vmatpush1.bf16.msra.mxu0 %v1777
    %2474 = vmatprep.mubr.bf16.mxu0 %v2304
    %2475 = vmatmul.mubr.bf16.gmra.mrb[0].mxu0 %v2303
    %v2476 = vpop.f32.mrb[0].mxu0
    %v2477 = vadd.f32 %v2434, %v2476
    %v2478 = vpop.f32.mrb[0].mxu0
    %v2479 = vadd.f32 %v2436, %v2478
    %v2480 = vpop.f32.mrb[0].mxu0
    %v2481 = vadd.f32 %v2438, %v2480
    %v2482 = vpop.f32.mrb[0].mxu0
    %v2483 = vadd.f32 %v2440, %v2482
    %2484 = vdwg.mxu0
    %2485 = vmatprep.subr.bf16.mxu0 %v1786
    %2486 = vmatpush1.bf16.msra.mxu0 %v1785
    %2487 = vmatprep.subr.bf16.mxu0 %v1794
    %2488 = vmatpush1.bf16.msra.mxu0 %v1793
    %2489 = vmatprep.subr.bf16.mxu0 %v1802
    %2490 = vmatpush1.bf16.msra.mxu0 %v1801
    %2491 = vmatprep.subr.bf16.mxu0 %v1810
    %2492 = vmatpush1.bf16.msra.mxu0 %v1809
    %2493 = vmatprep.subr.bf16.mxu0 %v1818
    %2494 = vmatpush1.bf16.msra.mxu0 %v1817
    %2495 = vmatprep.subr.bf16.mxu0 %v1826
    %2496 = vmatpush1.bf16.msra.mxu0 %v1825
    %2497 = vmatprep.subr.bf16.mxu0 %v1834
    %2498 = vmatpush1.bf16.msra.mxu0 %v1833
    %2499 = vmatprep.subr.bf16.mxu0 %v1842
    %2500 = vmatpush1.bf16.msra.mxu0 %v1841
    %2501 = vmatprep.subr.bf16.mxu0 %v1850
    %2502 = vmatpush1.bf16.msra.mxu0 %v1849
    %2503 = vmatprep.subr.bf16.mxu0 %v1858
    %2504 = vmatpush1.bf16.msra.mxu0 %v1857
    %2505 = vmatprep.subr.bf16.mxu0 %v1866
    %2506 = vmatpush1.bf16.msra.mxu0 %v1865
    %2507 = vmatprep.subr.bf16.mxu0 %v1874
    %2508 = vmatpush1.bf16.msra.mxu0 %v1873
    %2509 = vmatprep.subr.bf16.mxu0 %v1882
    %2510 = vmatpush1.bf16.msra.mxu0 %v1881
    %2511 = vmatprep.subr.bf16.mxu0 %v1890
    %2512 = vmatpush1.bf16.msra.mxu0 %v1889
    %2513 = vmatprep.subr.bf16.mxu0 %v1898
    %2514 = vmatpush1.bf16.msra.mxu0 %v1897
    %2515 = vmatprep.subr.bf16.mxu0 %v1906
    %2516 = vmatpush1.bf16.msra.mxu0 %v1905
    %2517 = vmatprep.mubr.bf16.mxu0 %v2306
    %2518 = vmatmul.mubr.bf16.gmra.mrb[0].mxu0 %v2305
    %v2519 = vpop.f32.mrb[0].mxu0
    %v2520 = vadd.f32 %v2477, %v2519
    %v2521 = vpop.f32.mrb[0].mxu0
    %v2522 = vadd.f32 %v2479, %v2521
    %v2523 = vpop.f32.mrb[0].mxu0
    %v2524 = vadd.f32 %v2481, %v2523
    %v2525 = vpop.f32.mrb[0].mxu0
    %v2526 = vadd.f32 %v2483, %v2525
    %2527 = vdwg.mxu0
    %2528 = vmatprep.subr.bf16.mxu0 %v1914
    %2529 = vmatpush1.bf16.msra.mxu0 %v1913
    %2530 = vmatprep.subr.bf16.mxu0 %v1922
    %2531 = vmatpush1.bf16.msra.mxu0 %v1921
    %2532 = vmatprep.subr.bf16.mxu0 %v1930
    %2533 = vmatpush1.bf16.msra.mxu0 %v1929
    %2534 = vmatprep.subr.bf16.mxu0 %v1938
    %2535 = vmatpush1.bf16.msra.mxu0 %v1937
    %2536 = vmatprep.subr.bf16.mxu0 %v1946
    %2537 = vmatpush1.bf16.msra.mxu0 %v1945
    %2538 = vmatprep.subr.bf16.mxu0 %v1954
    %2539 = vmatpush1.bf16.msra.mxu0 %v1953
    %2540 = vmatprep.subr.bf16.mxu0 %v1962
    %2541 = vmatpush1.bf16.msra.mxu0 %v1961
    %2542 = vmatprep.subr.bf16.mxu0 %v1970
    %2543 = vmatpush1.bf16.msra.mxu0 %v1969
    %2544 = vmatprep.subr.bf16.mxu0 %v1978
    %2545 = vmatpush1.bf16.msra.mxu0 %v1977
    %2546 = vmatprep.subr.bf16.mxu0 %v1986
    %2547 = vmatpush1.bf16.msra.mxu0 %v1985
    %2548 = vmatprep.subr.bf16.mxu0 %v1994
    %2549 = vmatpush1.bf16.msra.mxu0 %v1993
    %2550 = vmatprep.subr.bf16.mxu0 %v2002
    %2551 = vmatpush1.bf16.msra.mxu0 %v2001
    %2552 = vmatprep.subr.bf16.mxu0 %v2010
    %2553 = vmatpush1.bf16.msra.mxu0 %v2009
    %2554 = vmatprep.subr.bf16.mxu0 %v2018
    %2555 = vmatpush1.bf16.msra.mxu0 %v2017
    %2556 = vmatprep.subr.bf16.mxu0 %v2026
    %2557 = vmatpush1.bf16.msra.mxu0 %v2025
    %2558 = vmatprep.subr.bf16.mxu0 %v2034
    %2559 = vmatpush1.bf16.msra.mxu0 %v2033
    %2560 = vmatprep.mubr.bf16.mxu0 %v2308
    %2561 = vmatmul.mubr.bf16.gmra.mrb[0].mxu0 %v2307
    %v2562 = vpop.f32.mrb[0].mxu0
    %v2563 = vadd.f32 %v2520, %v2562
    %v2564 = vpop.f32.mrb[0].mxu0
    %v2565 = vadd.f32 %v2522, %v2564
    %v2566 = vpop.f32.mrb[0].mxu0
    %v2567 = vadd.f32 %v2524, %v2566
    %v2568 = vpop.f32.mrb[0].mxu0
    %v2569 = vadd.f32 %v2526, %v2568
    %2570 = vdwg.mxu0
    %2571 = vmatprep.subr.bf16.mxu0 %v2042
    %2572 = vmatpush1.bf16.msra.mxu0 %v2041
    %2573 = vmatprep.subr.bf16.mxu0 %v2050
    %2574 = vmatpush1.bf16.msra.mxu0 %v2049
    %2575 = vmatprep.subr.bf16.mxu0 %v2058
    %2576 = vmatpush1.bf16.msra.mxu0 %v2057
    %2577 = vmatprep.subr.bf16.mxu0 %v2066
    %2578 = vmatpush1.bf16.msra.mxu0 %v2065
    %2579 = vmatprep.subr.bf16.mxu0 %v2074
    %2580 = vmatpush1.bf16.msra.mxu0 %v2073
    %2581 = vmatprep.subr.bf16.mxu0 %v2082
    %2582 = vmatpush1.bf16.msra.mxu0 %v2081
    %2583 = vmatprep.subr.bf16.mxu0 %v2090
    %2584 = vmatpush1.bf16.msra.mxu0 %v2089
    %2585 = vmatprep.subr.bf16.mxu0 %v2098
    %2586 = vmatpush1.bf16.msra.mxu0 %v2097
    %2587 = vmatprep.subr.bf16.mxu0 %v2106
    %2588 = vmatpush1.bf16.msra.mxu0 %v2105
    %2589 = vmatprep.subr.bf16.mxu0 %v2114
    %2590 = vmatpush1.bf16.msra.mxu0 %v2113
    %2591 = vmatprep.subr.bf16.mxu0 %v2122
    %2592 = vmatpush1.bf16.msra.mxu0 %v2121
    %2593 = vmatprep.subr.bf16.mxu0 %v2130
    %2594 = vmatpush1.bf16.msra.mxu0 %v2129
    %2595 = vmatprep.subr.bf16.mxu0 %v2138
    %2596 = vmatpush1.bf16.msra.mxu0 %v2137
    %2597 = vmatprep.subr.bf16.mxu0 %v2146
    %2598 = vmatpush1.bf16.msra.mxu0 %v2145
    %2599 = vmatprep.subr.bf16.mxu0 %v2154
    %2600 = vmatpush1.bf16.msra.mxu0 %v2153
    %2601 = vmatprep.subr.bf16.mxu0 %v2162
    %2602 = vmatpush1.bf16.msra.mxu0 %v2161
    %2603 = vmatprep.mubr.bf16.mxu0 %v2310
    %2604 = vmatmul.mubr.bf16.gmra.mrb[0].mxu0 %v2309
    %v2605 = vpop.f32.mrb[0].mxu0
    %v2606 = vadd.f32 %v2563, %v2605
    %v2607 = vpop.f32.mrb[0].mxu0
    %v2608 = vadd.f32 %v2565, %v2607
    %v2609 = vpop.f32.mrb[0].mxu0
    %v2610 = vadd.f32 %v2567, %v2609
    %v2611 = vpop.f32.mrb[0].mxu0
    %v2612 = vadd.f32 %v2569, %v2611
    %2613 = vdwg.mxu0
    %2614 = vmatprep.subr.bf16.mxu0 %v2170
    %2615 = vmatpush1.bf16.msra.mxu0 %v2169
    %2616 = vmatprep.subr.bf16.mxu0 %v2178
    %2617 = vmatpush1.bf16.msra.mxu0 %v2177
    %2618 = vmatprep.subr.bf16.mxu0 %v2186
    %2619 = vmatpush1.bf16.msra.mxu0 %v2185
    %2620 = vmatprep.subr.bf16.mxu0 %v2194
    %2621 = vmatpush1.bf16.msra.mxu0 %v2193
    %2622 = vmatprep.subr.bf16.mxu0 %v2202
    %2623 = vmatpush1.bf16.msra.mxu0 %v2201
    %2624 = vmatprep.subr.bf16.mxu0 %v2210
    %2625 = vmatpush1.bf16.msra.mxu0 %v2209
    %2626 = vmatprep.subr.bf16.mxu0 %v2218
    %2627 = vmatpush1.bf16.msra.mxu0 %v2217
    %2628 = vmatprep.subr.bf16.mxu0 %v2226
    %2629 = vmatpush1.bf16.msra.mxu0 %v2225
    %2630 = vmatprep.subr.bf16.mxu0 %v2234
    %2631 = vmatpush1.bf16.msra.mxu0 %v2233
    %2632 = vmatprep.subr.bf16.mxu0 %v2242
    %2633 = vmatpush1.bf16.msra.mxu0 %v2241
    %2634 = vmatprep.subr.bf16.mxu0 %v2250
    %2635 = vmatpush1.bf16.msra.mxu0 %v2249
    %2636 = vmatprep.subr.bf16.mxu0 %v2258
    %2637 = vmatpush1.bf16.msra.mxu0 %v2257
    %2638 = vmatprep.subr.bf16.mxu0 %v2266
    %2639 = vmatpush1.bf16.msra.mxu0 %v2265
    %2640 = vmatprep.subr.bf16.mxu0 %v2274
    %2641 = vmatpush1.bf16.msra.mxu0 %v2273
    %2642 = vmatprep.subr.bf16.mxu0 %v2282
    %2643 = vmatpush1.bf16.msra.mxu0 %v2281
    %2644 = vmatprep.subr.bf16.mxu0 %v2290
    %2645 = vmatpush1.bf16.msra.mxu0 %v2289
    %2646 = vmatprep.mubr.bf16.mxu0 %v2312
    %2647 = vmatmul.mubr.bf16.gmra.mrb[0].mxu0 %v2311
    %v2648 = vpop.f32.mrb[0].mxu0
    %v2649 = vadd.f32 %v2606, %v2648
    %v2650 = vpop.f32.mrb[0].mxu0
    %v2651 = vadd.f32 %v2608, %v2650
    %v2652 = vpop.f32.mrb[0].mxu0
    %v2653 = vadd.f32 %v2610, %v2652
    %v2654 = vpop.f32.mrb[0].mxu0
    %v2655 = vadd.f32 %v2612, %v2654
    %2656 = vdwg.mxu0
    %2657 = vmatprep.subr.bf16.mxu0 %v1276
    %2658 = vmatpush1.bf16.msra.mxu0 %v1275
    %2659 = vmatprep.subr.bf16.mxu0 %v1284
    %2660 = vmatpush1.bf16.msra.mxu0 %v1283
    %2661 = vmatprep.subr.bf16.mxu0 %v1292
    %2662 = vmatpush1.bf16.msra.mxu0 %v1291
    %2663 = vmatprep.subr.bf16.mxu0 %v1300
    %2664 = vmatpush1.bf16.msra.mxu0 %v1299
    %2665 = vmatprep.subr.bf16.mxu0 %v1308
    %2666 = vmatpush1.bf16.msra.mxu0 %v1307
    %2667 = vmatprep.subr.bf16.mxu0 %v1316
    %2668 = vmatpush1.bf16.msra.mxu0 %v1315
    %2669 = vmatprep.subr.bf16.mxu0 %v1324
    %2670 = vmatpush1.bf16.msra.mxu0 %v1323
    %2671 = vmatprep.subr.bf16.mxu0 %v1332
    %2672 = vmatpush1.bf16.msra.mxu0 %v1331
    %2673 = vmatprep.subr.bf16.mxu0 %v1340
    %2674 = vmatpush1.bf16.msra.mxu0 %v1339
    %2675 = vmatprep.subr.bf16.mxu0 %v1348
    %2676 = vmatpush1.bf16.msra.mxu0 %v1347
    %2677 = vmatprep.subr.bf16.mxu0 %v1356
    %2678 = vmatpush1.bf16.msra.mxu0 %v1355
    %2679 = vmatprep.subr.bf16.mxu0 %v1364
    %2680 = vmatpush1.bf16.msra.mxu0 %v1363
    %2681 = vmatprep.subr.bf16.mxu0 %v1372
    %2682 = vmatpush1.bf16.msra.mxu0 %v1371
    %2683 = vmatprep.subr.bf16.mxu0 %v1380
    %2684 = vmatpush1.bf16.msra.mxu0 %v1379
    %2685 = vmatprep.subr.bf16.mxu0 %v1388
    %2686 = vmatpush1.bf16.msra.mxu0 %v1387
    %2687 = vmatprep.subr.bf16.mxu0 %v1396
    %2688 = vmatpush1.bf16.msra.mxu0 %v1395
    %2689 = vmatprep.mubr.bf16.mxu0 %v2298
    %2690 = vmatmul.mubr.bf16.gmra.mrb[0].mxu0 %v2297
    %v2691 = vpop.f32.mrb[0].mxu0
    %v2692 = vadd.f32 0.0, %v2691
    %v2693 = vpop.f32.mrb[0].mxu0
    %v2694 = vadd.f32 0.0, %v2693
    %v2695 = vpop.f32.mrb[0].mxu0
    %v2696 = vadd.f32 0.0, %v2695
    %v2697 = vpop.f32.mrb[0].mxu0
    %v2698 = vadd.f32 0.0, %v2697
    %2699 = vdwg.mxu0
    %2700 = vmatprep.subr.bf16.mxu0 %v1404
    %2701 = vmatpush1.bf16.msra.mxu0 %v1403
    %2702 = vmatprep.subr.bf16.mxu0 %v1412
    %2703 = vmatpush1.bf16.msra.mxu0 %v1411
    %2704 = vmatprep.subr.bf16.mxu0 %v1420
    %2705 = vmatpush1.bf16.msra.mxu0 %v1419
    %2706 = vmatprep.subr.bf16.mxu0 %v1428
    %2707 = vmatpush1.bf16.msra.mxu0 %v1427
    %2708 = vmatprep.subr.bf16.mxu0 %v1436
    %2709 = vmatpush1.bf16.msra.mxu0 %v1435
    %2710 = vmatprep.subr.bf16.mxu0 %v1444
    %2711 = vmatpush1.bf16.msra.mxu0 %v1443
    %2712 = vmatprep.subr.bf16.mxu0 %v1452
    %2713 = vmatpush1.bf16.msra.mxu0 %v1451
    %2714 = vmatprep.subr.bf16.mxu0 %v1460
    %2715 = vmatpush1.bf16.msra.mxu0 %v1459
    %2716 = vmatprep.subr.bf16.mxu0 %v1468
    %2717 = vmatpush1.bf16.msra.mxu0 %v1467
    %2718 = vmatprep.subr.bf16.mxu0 %v1476
    %2719 = vmatpush1.bf16.msra.mxu0 %v1475
    %2720 = vmatprep.subr.bf16.mxu0 %v1484
    %2721 = vmatpush1.bf16.msra.mxu0 %v1483
    %2722 = vmatprep.subr.bf16.mxu0 %v1492
    %2723 = vmatpush1.bf16.msra.mxu0 %v1491
    %2724 = vmatprep.subr.bf16.mxu0 %v1500
    %2725 = vmatpush1.bf16.msra.mxu0 %v1499
    %2726 = vmatprep.subr.bf16.mxu0 %v1508
    %2727 = vmatpush1.bf16.msra.mxu0 %v1507
    %2728 = vmatprep.subr.bf16.mxu0 %v1516
    %2729 = vmatpush1.bf16.msra.mxu0 %v1515
    %2730 = vmatprep.subr.bf16.mxu0 %v1524
    %2731 = vmatpush1.bf16.msra.mxu0 %v1523
    %2732 = vmatprep.mubr.bf16.mxu0 %v2300
    %2733 = vmatmul.mubr.bf16.gmra.mrb[0].mxu0 %v2299
    %v2734 = vpop.f32.mrb[0].mxu0
    %v2735 = vadd.f32 %v2692, %v2734
    %v2736 = vpop.f32.mrb[0].mxu0
    %v2737 = vadd.f32 %v2694, %v2736
    %v2738 = vpop.f32.mrb[0].mxu0
    %v2739 = vadd.f32 %v2696, %v2738
    %v2740 = vpop.f32.mrb[0].mxu0
    %v2741 = vadd.f32 %v2698, %v2740
    %2742 = vdwg.mxu0
    %2743 = vmatprep.subr.bf16.mxu0 %v1532
    %2744 = vmatpush1.bf16.msra.mxu0 %v1531
    %2745 = vmatprep.subr.bf16.mxu0 %v1540
    %2746 = vmatpush1.bf16.msra.mxu0 %v1539
    %2747 = vmatprep.subr.bf16.mxu0 %v1548
    %2748 = vmatpush1.bf16.msra.mxu0 %v1547
    %2749 = vmatprep.subr.bf16.mxu0 %v1556
    %2750 = vmatpush1.bf16.msra.mxu0 %v1555
    %2751 = vmatprep.subr.bf16.mxu0 %v1564
    %2752 = vmatpush1.bf16.msra.mxu0 %v1563
    %2753 = vmatprep.subr.bf16.mxu0 %v1572
    %2754 = vmatpush1.bf16.msra.mxu0 %v1571
    %2755 = vmatprep.subr.bf16.mxu0 %v1580
    %2756 = vmatpush1.bf16.msra.mxu0 %v1579
    %2757 = vmatprep.subr.bf16.mxu0 %v1588
    %2758 = vmatpush1.bf16.msra.mxu0 %v1587
    %2759 = vmatprep.subr.bf16.mxu0 %v1596
    %2760 = vmatpush1.bf16.msra.mxu0 %v1595
    %2761 = vmatprep.subr.bf16.mxu0 %v1604
    %2762 = vmatpush1.bf16.msra.mxu0 %v1603
    %2763 = vmatprep.subr.bf16.mxu0 %v1612
    %2764 = vmatpush1.bf16.msra.mxu0 %v1611
    %2765 = vmatprep.subr.bf16.mxu0 %v1620
    %2766 = vmatpush1.bf16.msra.mxu0 %v1619
    %2767 = vmatprep.subr.bf16.mxu0 %v1628
    %2768 = vmatpush1.bf16.msra.mxu0 %v1627
    %2769 = vmatprep.subr.bf16.mxu0 %v1636
    %2770 = vmatpush1.bf16.msra.mxu0 %v1635
    %2771 = vmatprep.subr.bf16.mxu0 %v1644
    %2772 = vmatpush1.bf16.msra.mxu0 %v1643
    %2773 = vmatprep.subr.bf16.mxu0 %v1652
    %2774 = vmatpush1.bf16.msra.mxu0 %v1651
    %2775 = vmatprep.mubr.bf16.mxu0 %v2302
    %2776 = vmatmul.mubr.bf16.gmra.mrb[0].mxu0 %v2301
    %v2777 = vpop.f32.mrb[0].mxu0
    %v2778 = vadd.f32 %v2735, %v2777
    %v2779 = vpop.f32.mrb[0].mxu0
    %v2780 = vadd.f32 %v2737, %v2779
    %v2781 = vpop.f32.mrb[0].mxu0
    %v2782 = vadd.f32 %v2739, %v2781
    %v2783 = vpop.f32.mrb[0].mxu0
    %v2784 = vadd.f32 %v2741, %v2783
    %2785 = vdwg.mxu0
    %2786 = vmatprep.subr.bf16.mxu0 %v1660
    %2787 = vmatpush1.bf16.msra.mxu0 %v1659
    %2788 = vmatprep.subr.bf16.mxu0 %v1668
    %2789 = vmatpush1.bf16.msra.mxu0 %v1667
    %2790 = vmatprep.subr.bf16.mxu0 %v1676
    %2791 = vmatpush1.bf16.msra.mxu0 %v1675
    %2792 = vmatprep.subr.bf16.mxu0 %v1684
    %2793 = vmatpush1.bf16.msra.mxu0 %v1683
    %2794 = vmatprep.subr.bf16.mxu0 %v1692
    %2795 = vmatpush1.bf16.msra.mxu0 %v1691
    %2796 = vmatprep.subr.bf16.mxu0 %v1700
    %2797 = vmatpush1.bf16.msra.mxu0 %v1699
    %2798 = vmatprep.subr.bf16.mxu0 %v1708
    %2799 = vmatpush1.bf16.msra.mxu0 %v1707
    %2800 = vmatprep.subr.bf16.mxu0 %v1716
    %2801 = vmatpush1.bf16.msra.mxu0 %v1715
    %2802 = vmatprep.subr.bf16.mxu0 %v1724
    %2803 = vmatpush1.bf16.msra.mxu0 %v1723
    %2804 = vmatprep.subr.bf16.mxu0 %v1732
    %2805 = vmatpush1.bf16.msra.mxu0 %v1731
    %2806 = vmatprep.subr.bf16.mxu0 %v1740
    %2807 = vmatpush1.bf16.msra.mxu0 %v1739
    %2808 = vmatprep.subr.bf16.mxu0 %v1748
    %2809 = vmatpush1.bf16.msra.mxu0 %v1747
    %2810 = vmatprep.subr.bf16.mxu0 %v1756
    %2811 = vmatpush1.bf16.msra.mxu0 %v1755
    %2812 = vmatprep.subr.bf16.mxu0 %v1764
    %2813 = vmatpush1.bf16.msra.mxu0 %v1763
    %2814 = vmatprep.subr.bf16.mxu0 %v1772
    %2815 = vmatpush1.bf16.msra.mxu0 %v1771
    %2816 = vmatprep.subr.bf16.mxu0 %v1780
    %2817 = vmatpush1.bf16.msra.mxu0 %v1779
    %2818 = vmatprep.mubr.bf16.mxu0 %v2304
    %2819 = vmatmul.mubr.bf16.gmra.mrb[0].mxu0 %v2303
    %v2820 = vpop.f32.mrb[0].mxu0
    %v2821 = vadd.f32 %v2778, %v2820
    %v2822 = vpop.f32.mrb[0].mxu0
    %v2823 = vadd.f32 %v2780, %v2822
    %v2824 = vpop.f32.mrb[0].mxu0
    %v2825 = vadd.f32 %v2782, %v2824
    %v2826 = vpop.f32.mrb[0].mxu0
    %v2827 = vadd.f32 %v2784, %v2826
    %2828 = vdwg.mxu0
    %2829 = vmatprep.subr.bf16.mxu0 %v1788
    %2830 = vmatpush1.bf16.msra.mxu0 %v1787
    %2831 = vmatprep.subr.bf16.mxu0 %v1796
    %2832 = vmatpush1.bf16.msra.mxu0 %v1795
    %2833 = vmatprep.subr.bf16.mxu0 %v1804
    %2834 = vmatpush1.bf16.msra.mxu0 %v1803
    %2835 = vmatprep.subr.bf16.mxu0 %v1812
    %2836 = vmatpush1.bf16.msra.mxu0 %v1811
    %2837 = vmatprep.subr.bf16.mxu0 %v1820
    %2838 = vmatpush1.bf16.msra.mxu0 %v1819
    %2839 = vmatprep.subr.bf16.mxu0 %v1828
    %2840 = vmatpush1.bf16.msra.mxu0 %v1827
    %2841 = vmatprep.subr.bf16.mxu0 %v1836
    %2842 = vmatpush1.bf16.msra.mxu0 %v1835
    %2843 = vmatprep.subr.bf16.mxu0 %v1844
    %2844 = vmatpush1.bf16.msra.mxu0 %v1843
    %2845 = vmatprep.subr.bf16.mxu0 %v1852
    %2846 = vmatpush1.bf16.msra.mxu0 %v1851
    %2847 = vmatprep.subr.bf16.mxu0 %v1860
    %2848 = vmatpush1.bf16.msra.mxu0 %v1859
    %2849 = vmatprep.subr.bf16.mxu0 %v1868
    %2850 = vmatpush1.bf16.msra.mxu0 %v1867
    %2851 = vmatprep.subr.bf16.mxu0 %v1876
    %2852 = vmatpush1.bf16.msra.mxu0 %v1875
    %2853 = vmatprep.subr.bf16.mxu0 %v1884
    %2854 = vmatpush1.bf16.msra.mxu0 %v1883
    %2855 = vmatprep.subr.bf16.mxu0 %v1892
    %2856 = vmatpush1.bf16.msra.mxu0 %v1891
    %2857 = vmatprep.subr.bf16.mxu0 %v1900
    %2858 = vmatpush1.bf16.msra.mxu0 %v1899
    %2859 = vmatprep.subr.bf16.mxu0 %v1908
    %2860 = vmatpush1.bf16.msra.mxu0 %v1907
    %2861 = vmatprep.mubr.bf16.mxu0 %v2306
    %2862 = vmatmul.mubr.bf16.gmra.mrb[0].mxu0 %v2305
    %v2863 = vpop.f32.mrb[0].mxu0
    %v2864 = vadd.f32 %v2821, %v2863
    %v2865 = vpop.f32.mrb[0].mxu0
    %v2866 = vadd.f32 %v2823, %v2865
    %v2867 = vpop.f32.mrb[0].mxu0
    %v2868 = vadd.f32 %v2825, %v2867
    %v2869 = vpop.f32.mrb[0].mxu0
    %v2870 = vadd.f32 %v2827, %v2869
    %2871 = vdwg.mxu0
    %2872 = vmatprep.subr.bf16.mxu0 %v1916
    %2873 = vmatpush1.bf16.msra.mxu0 %v1915
    %2874 = vmatprep.subr.bf16.mxu0 %v1924
    %2875 = vmatpush1.bf16.msra.mxu0 %v1923
    %2876 = vmatprep.subr.bf16.mxu0 %v1932
    %2877 = vmatpush1.bf16.msra.mxu0 %v1931
    %2878 = vmatprep.subr.bf16.mxu0 %v1940
    %2879 = vmatpush1.bf16.msra.mxu0 %v1939
    %2880 = vmatprep.subr.bf16.mxu0 %v1948
    %2881 = vmatpush1.bf16.msra.mxu0 %v1947
    %2882 = vmatprep.subr.bf16.mxu0 %v1956
    %2883 = vmatpush1.bf16.msra.mxu0 %v1955
    %2884 = vmatprep.subr.bf16.mxu0 %v1964
    %2885 = vmatpush1.bf16.msra.mxu0 %v1963
    %2886 = vmatprep.subr.bf16.mxu0 %v1972
    %2887 = vmatpush1.bf16.msra.mxu0 %v1971
    %2888 = vmatprep.subr.bf16.mxu0 %v1980
    %2889 = vmatpush1.bf16.msra.mxu0 %v1979
    %2890 = vmatprep.subr.bf16.mxu0 %v1988
    %2891 = vmatpush1.bf16.msra.mxu0 %v1987
    %2892 = vmatprep.subr.bf16.mxu0 %v1996
    %2893 = vmatpush1.bf16.msra.mxu0 %v1995
    %2894 = vmatprep.subr.bf16.mxu0 %v2004
    %2895 = vmatpush1.bf16.msra.mxu0 %v2003
    %2896 = vmatprep.subr.bf16.mxu0 %v2012
    %2897 = vmatpush1.bf16.msra.mxu0 %v2011
    %2898 = vmatprep.subr.bf16.mxu0 %v2020
    %2899 = vmatpush1.bf16.msra.mxu0 %v2019
    %2900 = vmatprep.subr.bf16.mxu0 %v2028
    %2901 = vmatpush1.bf16.msra.mxu0 %v2027
    %2902 = vmatprep.subr.bf16.mxu0 %v2036
    %2903 = vmatpush1.bf16.msra.mxu0 %v2035
    %2904 = vmatprep.mubr.bf16.mxu0 %v2308
    %2905 = vmatmul.mubr.bf16.gmra.mrb[0].mxu0 %v2307
    %v2906 = vpop.f32.mrb[0].mxu0
    %v2907 = vadd.f32 %v2864, %v2906
    %v2908 = vpop.f32.mrb[0].mxu0
    %v2909 = vadd.f32 %v2866, %v2908
    %v2910 = vpop.f32.mrb[0].mxu0
    %v2911 = vadd.f32 %v2868, %v2910
    %v2912 = vpop.f32.mrb[0].mxu0
    %v2913 = vadd.f32 %v2870, %v2912
    %2914 = vdwg.mxu0
    %2915 = vmatprep.subr.bf16.mxu0 %v2044
    %2916 = vmatpush1.bf16.msra.mxu0 %v2043
    %2917 = vmatprep.subr.bf16.mxu0 %v2052
    %2918 = vmatpush1.bf16.msra.mxu0 %v2051
    %2919 = vmatprep.subr.bf16.mxu0 %v2060
    %2920 = vmatpush1.bf16.msra.mxu0 %v2059
    %2921 = vmatprep.subr.bf16.mxu0 %v2068
    %2922 = vmatpush1.bf16.msra.mxu0 %v2067
    %2923 = vmatprep.subr.bf16.mxu0 %v2076
    %2924 = vmatpush1.bf16.msra.mxu0 %v2075
    %2925 = vmatprep.subr.bf16.mxu0 %v2084
    %2926 = vmatpush1.bf16.msra.mxu0 %v2083
    %2927 = vmatprep.subr.bf16.mxu0 %v2092
    %2928 = vmatpush1.bf16.msra.mxu0 %v2091
    %2929 = vmatprep.subr.bf16.mxu0 %v2100
    %2930 = vmatpush1.bf16.msra.mxu0 %v2099
    %2931 = vmatprep.subr.bf16.mxu0 %v2108
    %2932 = vmatpush1.bf16.msra.mxu0 %v2107
    %2933 = vmatprep.subr.bf16.mxu0 %v2116
    %2934 = vmatpush1.bf16.msra.mxu0 %v2115
    %2935 = vmatprep.subr.bf16.mxu0 %v2124
    %2936 = vmatpush1.bf16.msra.mxu0 %v2123
    %2937 = vmatprep.subr.bf16.mxu0 %v2132
    %2938 = vmatpush1.bf16.msra.mxu0 %v2131
    %2939 = vmatprep.subr.bf16.mxu0 %v2140
    %2940 = vmatpush1.bf16.msra.mxu0 %v2139
    %2941 = vmatprep.subr.bf16.mxu0 %v2148
    %2942 = vmatpush1.bf16.msra.mxu0 %v2147
    %2943 = vmatprep.subr.bf16.mxu0 %v2156
    %2944 = vmatpush1.bf16.msra.mxu0 %v2155
    %2945 = vmatprep.subr.bf16.mxu0 %v2164
    %2946 = vmatpush1.bf16.msra.mxu0 %v2163
    %2947 = vmatprep.mubr.bf16.mxu0 %v2310
    %2948 = vmatmul.mubr.bf16.gmra.mrb[0].mxu0 %v2309
    %v2949 = vpop.f32.mrb[0].mxu0
    %v2950 = vadd.f32 %v2907, %v2949
    %v2951 = vpop.f32.mrb[0].mxu0
    %v2952 = vadd.f32 %v2909, %v2951
    %v2953 = vpop.f32.mrb[0].mxu0
    %v2954 = vadd.f32 %v2911, %v2953
    %v2955 = vpop.f32.mrb[0].mxu0
    %v2956 = vadd.f32 %v2913, %v2955
    %2957 = vdwg.mxu0
    %2958 = vmatprep.subr.bf16.mxu0 %v2172
    %2959 = vmatpush1.bf16.msra.mxu0 %v2171
    %2960 = vmatprep.subr.bf16.mxu0 %v2180
    %2961 = vmatpush1.bf16.msra.mxu0 %v2179
    %2962 = vmatprep.subr.bf16.mxu0 %v2188
    %2963 = vmatpush1.bf16.msra.mxu0 %v2187
    %2964 = vmatprep.subr.bf16.mxu0 %v2196
    %2965 = vmatpush1.bf16.msra.mxu0 %v2195
    %2966 = vmatprep.subr.bf16.mxu0 %v2204
    %2967 = vmatpush1.bf16.msra.mxu0 %v2203
    %2968 = vmatprep.subr.bf16.mxu0 %v2212
    %2969 = vmatpush1.bf16.msra.mxu0 %v2211
    %2970 = vmatprep.subr.bf16.mxu0 %v2220
    %2971 = vmatpush1.bf16.msra.mxu0 %v2219
    %2972 = vmatprep.subr.bf16.mxu0 %v2228
    %2973 = vmatpush1.bf16.msra.mxu0 %v2227
    %2974 = vmatprep.subr.bf16.mxu0 %v2236
    %2975 = vmatpush1.bf16.msra.mxu0 %v2235
    %2976 = vmatprep.subr.bf16.mxu0 %v2244
    %2977 = vmatpush1.bf16.msra.mxu0 %v2243
    %2978 = vmatprep.subr.bf16.mxu0 %v2252
    %2979 = vmatpush1.bf16.msra.mxu0 %v2251
    %2980 = vmatprep.subr.bf16.mxu0 %v2260
    %2981 = vmatpush1.bf16.msra.mxu0 %v2259
    %2982 = vmatprep.subr.bf16.mxu0 %v2268
    %2983 = vmatpush1.bf16.msra.mxu0 %v2267
    %2984 = vmatprep.subr.bf16.mxu0 %v2276
    %2985 = vmatpush1.bf16.msra.mxu0 %v2275
    %2986 = vmatprep.subr.bf16.mxu0 %v2284
    %2987 = vmatpush1.bf16.msra.mxu0 %v2283
    %2988 = vmatprep.subr.bf16.mxu0 %v2292
    %2989 = vmatpush1.bf16.msra.mxu0 %v2291
    %2990 = vmatprep.mubr.bf16.mxu0 %v2312
    %2991 = vmatmul.mubr.bf16.gmra.mrb[0].mxu0 %v2311
    %v2992 = vpop.f32.mrb[0].mxu0
    %v2993 = vadd.f32 %v2950, %v2992
    %v2994 = vpop.f32.mrb[0].mxu0
    %v2995 = vadd.f32 %v2952, %v2994
    %v2996 = vpop.f32.mrb[0].mxu0
    %v2997 = vadd.f32 %v2954, %v2996
    %v2998 = vpop.f32.mrb[0].mxu0
    %v2999 = vadd.f32 %v2956, %v2998
    %3000 = vdwg.mxu0
    %3001 = vmatprep.subr.bf16.mxu0 %v1278
    %3002 = vmatpush1.bf16.msra.mxu0 %v1277
    %3003 = vmatprep.subr.bf16.mxu0 %v1286
    %3004 = vmatpush1.bf16.msra.mxu0 %v1285
    %3005 = vmatprep.subr.bf16.mxu0 %v1294
    %3006 = vmatpush1.bf16.msra.mxu0 %v1293
    %3007 = vmatprep.subr.bf16.mxu0 %v1302
    %3008 = vmatpush1.bf16.msra.mxu0 %v1301
    %3009 = vmatprep.subr.bf16.mxu0 %v1310
    %3010 = vmatpush1.bf16.msra.mxu0 %v1309
    %3011 = vmatprep.subr.bf16.mxu0 %v1318
    %3012 = vmatpush1.bf16.msra.mxu0 %v1317
    %3013 = vmatprep.subr.bf16.mxu0 %v1326
    %3014 = vmatpush1.bf16.msra.mxu0 %v1325
    %3015 = vmatprep.subr.bf16.mxu0 %v1334
    %3016 = vmatpush1.bf16.msra.mxu0 %v1333
    %3017 = vmatprep.subr.bf16.mxu0 %v1342
    %3018 = vmatpush1.bf16.msra.mxu0 %v1341
    %3019 = vmatprep.subr.bf16.mxu0 %v1350
    %3020 = vmatpush1.bf16.msra.mxu0 %v1349
    %3021 = vmatprep.subr.bf16.mxu0 %v1358
    %3022 = vmatpush1.bf16.msra.mxu0 %v1357
    %3023 = vmatprep.subr.bf16.mxu0 %v1366
    %3024 = vmatpush1.bf16.msra.mxu0 %v1365
    %3025 = vmatprep.subr.bf16.mxu0 %v1374
    %3026 = vmatpush1.bf16.msra.mxu0 %v1373
    %3027 = vmatprep.subr.bf16.mxu0 %v1382
    %3028 = vmatpush1.bf16.msra.mxu0 %v1381
    %3029 = vmatprep.subr.bf16.mxu0 %v1390
    %3030 = vmatpush1.bf16.msra.mxu0 %v1389
    %3031 = vmatprep.subr.bf16.mxu0 %v1398
    %3032 = vmatpush1.bf16.msra.mxu0 %v1397
    %3033 = vmatprep.mubr.bf16.mxu0 %v2298
    %3034 = vmatmul.mubr.bf16.gmra.mrb[0].mxu0 %v2297
    %v3035 = vpop.f32.mrb[0].mxu0
    %v3036 = vadd.f32 0.0, %v3035
    %v3037 = vpop.f32.mrb[0].mxu0
    %v3038 = vadd.f32 0.0, %v3037
    %v3039 = vpop.f32.mrb[0].mxu0
    %v3040 = vadd.f32 0.0, %v3039
    %v3041 = vpop.f32.mrb[0].mxu0
    %v3042 = vadd.f32 0.0, %v3041
    %3043 = vdwg.mxu0
    %3044 = vmatprep.subr.bf16.mxu0 %v1406
    %3045 = vmatpush1.bf16.msra.mxu0 %v1405
    %3046 = vmatprep.subr.bf16.mxu0 %v1414
    %3047 = vmatpush1.bf16.msra.mxu0 %v1413
    %3048 = vmatprep.subr.bf16.mxu0 %v1422
    %3049 = vmatpush1.bf16.msra.mxu0 %v1421
    %3050 = vmatprep.subr.bf16.mxu0 %v1430
    %3051 = vmatpush1.bf16.msra.mxu0 %v1429
    %3052 = vmatprep.subr.bf16.mxu0 %v1438
    %3053 = vmatpush1.bf16.msra.mxu0 %v1437
    %3054 = vmatprep.subr.bf16.mxu0 %v1446
    %3055 = vmatpush1.bf16.msra.mxu0 %v1445
    %3056 = vmatprep.subr.bf16.mxu0 %v1454
    %3057 = vmatpush1.bf16.msra.mxu0 %v1453
    %3058 = vmatprep.subr.bf16.mxu0 %v1462
    %3059 = vmatpush1.bf16.msra.mxu0 %v1461
    %3060 = vmatprep.subr.bf16.mxu0 %v1470
    %3061 = vmatpush1.bf16.msra.mxu0 %v1469
    %3062 = vmatprep.subr.bf16.mxu0 %v1478
    %3063 = vmatpush1.bf16.msra.mxu0 %v1477
    %3064 = vmatprep.subr.bf16.mxu0 %v1486
    %3065 = vmatpush1.bf16.msra.mxu0 %v1485
    %3066 = vmatprep.subr.bf16.mxu0 %v1494
    %3067 = vmatpush1.bf16.msra.mxu0 %v1493
    %3068 = vmatprep.subr.bf16.mxu0 %v1502
    %3069 = vmatpush1.bf16.msra.mxu0 %v1501
    %3070 = vmatprep.subr.bf16.mxu0 %v1510
    %3071 = vmatpush1.bf16.msra.mxu0 %v1509
    %3072 = vmatprep.subr.bf16.mxu0 %v1518
    %3073 = vmatpush1.bf16.msra.mxu0 %v1517
    %3074 = vmatprep.subr.bf16.mxu0 %v1526
    %3075 = vmatpush1.bf16.msra.mxu0 %v1525
    %3076 = vmatprep.mubr.bf16.mxu0 %v2300
    %3077 = vmatmul.mubr.bf16.gmra.mrb[0].mxu0 %v2299
    %v3078 = vpop.f32.mrb[0].mxu0
    %v3079 = vadd.f32 %v3036, %v3078
    %v3080 = vpop.f32.mrb[0].mxu0
    %v3081 = vadd.f32 %v3038, %v3080
    %v3082 = vpop.f32.mrb[0].mxu0
    %v3083 = vadd.f32 %v3040, %v3082
    %v3084 = vpop.f32.mrb[0].mxu0
    %v3085 = vadd.f32 %v3042, %v3084
    %3086 = vdwg.mxu0
    %3087 = vmatprep.subr.bf16.mxu0 %v1534
    %3088 = vmatpush1.bf16.msra.mxu0 %v1533
    %3089 = vmatprep.subr.bf16.mxu0 %v1542
    %3090 = vmatpush1.bf16.msra.mxu0 %v1541
    %3091 = vmatprep.subr.bf16.mxu0 %v1550
    %3092 = vmatpush1.bf16.msra.mxu0 %v1549
    %3093 = vmatprep.subr.bf16.mxu0 %v1558
    %3094 = vmatpush1.bf16.msra.mxu0 %v1557
    %3095 = vmatprep.subr.bf16.mxu0 %v1566
    %3096 = vmatpush1.bf16.msra.mxu0 %v1565
    %3097 = vmatprep.subr.bf16.mxu0 %v1574
    %3098 = vmatpush1.bf16.msra.mxu0 %v1573
    %3099 = vmatprep.subr.bf16.mxu0 %v1582
    %3100 = vmatpush1.bf16.msra.mxu0 %v1581
    %3101 = vmatprep.subr.bf16.mxu0 %v1590
    %3102 = vmatpush1.bf16.msra.mxu0 %v1589
    %3103 = vmatprep.subr.bf16.mxu0 %v1598
    %3104 = vmatpush1.bf16.msra.mxu0 %v1597
    %3105 = vmatprep.subr.bf16.mxu0 %v1606
    %3106 = vmatpush1.bf16.msra.mxu0 %v1605
    %3107 = vmatprep.subr.bf16.mxu0 %v1614
    %3108 = vmatpush1.bf16.msra.mxu0 %v1613
    %3109 = vmatprep.subr.bf16.mxu0 %v1622
    %3110 = vmatpush1.bf16.msra.mxu0 %v1621
    %3111 = vmatprep.subr.bf16.mxu0 %v1630
    %3112 = vmatpush1.bf16.msra.mxu0 %v1629
    %3113 = vmatprep.subr.bf16.mxu0 %v1638
    %3114 = vmatpush1.bf16.msra.mxu0 %v1637
    %3115 = vmatprep.subr.bf16.mxu0 %v1646
    %3116 = vmatpush1.bf16.msra.mxu0 %v1645
    %3117 = vmatprep.subr.bf16.mxu0 %v1654
    %3118 = vmatpush1.bf16.msra.mxu0 %v1653
    %3119 = vmatprep.mubr.bf16.mxu0 %v2302
    %3120 = vmatmul.mubr.bf16.gmra.mrb[0].mxu0 %v2301
    %v3121 = vpop.f32.mrb[0].mxu0
    %v3122 = vadd.f32 %v3079, %v3121
    %v3123 = vpop.f32.mrb[0].mxu0
    %v3124 = vadd.f32 %v3081, %v3123
    %v3125 = vpop.f32.mrb[0].mxu0
    %v3126 = vadd.f32 %v3083, %v3125
    %v3127 = vpop.f32.mrb[0].mxu0
    %v3128 = vadd.f32 %v3085, %v3127
    %3129 = vdwg.mxu0
    %3130 = vmatprep.subr.bf16.mxu0 %v1662
    %3131 = vmatpush1.bf16.msra.mxu0 %v1661
    %3132 = vmatprep.subr.bf16.mxu0 %v1670
    %3133 = vmatpush1.bf16.msra.mxu0 %v1669
    %3134 = vmatprep.subr.bf16.mxu0 %v1678
    %3135 = vmatpush1.bf16.msra.mxu0 %v1677
    %3136 = vmatprep.subr.bf16.mxu0 %v1686
    %3137 = vmatpush1.bf16.msra.mxu0 %v1685
    %3138 = vmatprep.subr.bf16.mxu0 %v1694
    %3139 = vmatpush1.bf16.msra.mxu0 %v1693
    %3140 = vmatprep.subr.bf16.mxu0 %v1702
    %3141 = vmatpush1.bf16.msra.mxu0 %v1701
    %3142 = vmatprep.subr.bf16.mxu0 %v1710
    %3143 = vmatpush1.bf16.msra.mxu0 %v1709
    %3144 = vmatprep.subr.bf16.mxu0 %v1718
    %3145 = vmatpush1.bf16.msra.mxu0 %v1717
    %3146 = vmatprep.subr.bf16.mxu0 %v1726
    %3147 = vmatpush1.bf16.msra.mxu0 %v1725
    %3148 = vmatprep.subr.bf16.mxu0 %v1734
    %3149 = vmatpush1.bf16.msra.mxu0 %v1733
    %3150 = vmatprep.subr.bf16.mxu0 %v1742
    %3151 = vmatpush1.bf16.msra.mxu0 %v1741
    %3152 = vmatprep.subr.bf16.mxu0 %v1750
    %3153 = vmatpush1.bf16.msra.mxu0 %v1749
    %3154 = vmatprep.subr.bf16.mxu0 %v1758
    %3155 = vmatpush1.bf16.msra.mxu0 %v1757
    %3156 = vmatprep.subr.bf16.mxu0 %v1766
    %3157 = vmatpush1.bf16.msra.mxu0 %v1765
    %3158 = vmatprep.subr.bf16.mxu0 %v1774
    %3159 = vmatpush1.bf16.msra.mxu0 %v1773
    %3160 = vmatprep.subr.bf16.mxu0 %v1782
    %3161 = vmatpush1.bf16.msra.mxu0 %v1781
    %3162 = vmatprep.mubr.bf16.mxu0 %v2304
    %3163 = vmatmul.mubr.bf16.gmra.mrb[0].mxu0 %v2303
    %v3164 = vpop.f32.mrb[0].mxu0
    %v3165 = vadd.f32 %v3122, %v3164
    %v3166 = vpop.f32.mrb[0].mxu0
    %v3167 = vadd.f32 %v3124, %v3166
    %v3168 = vpop.f32.mrb[0].mxu0
    %v3169 = vadd.f32 %v3126, %v3168
    %v3170 = vpop.f32.mrb[0].mxu0
    %v3171 = vadd.f32 %v3128, %v3170
    %3172 = vdwg.mxu0
    %3173 = vmatprep.subr.bf16.mxu0 %v1790
    %3174 = vmatpush1.bf16.msra.mxu0 %v1789
    %3175 = vmatprep.subr.bf16.mxu0 %v1798
    %3176 = vmatpush1.bf16.msra.mxu0 %v1797
    %3177 = vmatprep.subr.bf16.mxu0 %v1806
    %3178 = vmatpush1.bf16.msra.mxu0 %v1805
    %3179 = vmatprep.subr.bf16.mxu0 %v1814
    %3180 = vmatpush1.bf16.msra.mxu0 %v1813
    %3181 = vmatprep.subr.bf16.mxu0 %v1822
    %3182 = vmatpush1.bf16.msra.mxu0 %v1821
    %3183 = vmatprep.subr.bf16.mxu0 %v1830
    %3184 = vmatpush1.bf16.msra.mxu0 %v1829
    %3185 = vmatprep.subr.bf16.mxu0 %v1838
    %3186 = vmatpush1.bf16.msra.mxu0 %v1837
    %3187 = vmatprep.subr.bf16.mxu0 %v1846
    %3188 = vmatpush1.bf16.msra.mxu0 %v1845
    %3189 = vmatprep.subr.bf16.mxu0 %v1854
    %3190 = vmatpush1.bf16.msra.mxu0 %v1853
    %3191 = vmatprep.subr.bf16.mxu0 %v1862
    %3192 = vmatpush1.bf16.msra.mxu0 %v1861
    %3193 = vmatprep.subr.bf16.mxu0 %v1870
    %3194 = vmatpush1.bf16.msra.mxu0 %v1869
    %3195 = vmatprep.subr.bf16.mxu0 %v1878
    %3196 = vmatpush1.bf16.msra.mxu0 %v1877
    %3197 = vmatprep.subr.bf16.mxu0 %v1886
    %3198 = vmatpush1.bf16.msra.mxu0 %v1885
    %3199 = vmatprep.subr.bf16.mxu0 %v1894
    %3200 = vmatpush1.bf16.msra.mxu0 %v1893
    %3201 = vmatprep.subr.bf16.mxu0 %v1902
    %3202 = vmatpush1.bf16.msra.mxu0 %v1901
    %3203 = vmatprep.subr.bf16.mxu0 %v1910
    %3204 = vmatpush1.bf16.msra.mxu0 %v1909
    %3205 = vmatprep.mubr.bf16.mxu0 %v2306
    %3206 = vmatmul.mubr.bf16.gmra.mrb[0].mxu0 %v2305
    %v3207 = vpop.f32.mrb[0].mxu0
    %v3208 = vadd.f32 %v3165, %v3207
    %v3209 = vpop.f32.mrb[0].mxu0
    %v3210 = vadd.f32 %v3167, %v3209
    %v3211 = vpop.f32.mrb[0].mxu0
    %v3212 = vadd.f32 %v3169, %v3211
    %v3213 = vpop.f32.mrb[0].mxu0
    %v3214 = vadd.f32 %v3171, %v3213
    %3215 = vdwg.mxu0
    %3216 = vmatprep.subr.bf16.mxu0 %v1918
    %3217 = vmatpush1.bf16.msra.mxu0 %v1917
    %3218 = vmatprep.subr.bf16.mxu0 %v1926
    %3219 = vmatpush1.bf16.msra.mxu0 %v1925
    %3220 = vmatprep.subr.bf16.mxu0 %v1934
    %3221 = vmatpush1.bf16.msra.mxu0 %v1933
    %3222 = vmatprep.subr.bf16.mxu0 %v1942
    %3223 = vmatpush1.bf16.msra.mxu0 %v1941
    %3224 = vmatprep.subr.bf16.mxu0 %v1950
    %3225 = vmatpush1.bf16.msra.mxu0 %v1949
    %3226 = vmatprep.subr.bf16.mxu0 %v1958
    %3227 = vmatpush1.bf16.msra.mxu0 %v1957
    %3228 = vmatprep.subr.bf16.mxu0 %v1966
    %3229 = vmatpush1.bf16.msra.mxu0 %v1965
    %3230 = vmatprep.subr.bf16.mxu0 %v1974
    %3231 = vmatpush1.bf16.msra.mxu0 %v1973
    %3232 = vmatprep.subr.bf16.mxu0 %v1982
    %3233 = vmatpush1.bf16.msra.mxu0 %v1981
    %3234 = vmatprep.subr.bf16.mxu0 %v1990
    %3235 = vmatpush1.bf16.msra.mxu0 %v1989
    %3236 = vmatprep.subr.bf16.mxu0 %v1998
    %3237 = vmatpush1.bf16.msra.mxu0 %v1997
    %3238 = vmatprep.subr.bf16.mxu0 %v2006
    %3239 = vmatpush1.bf16.msra.mxu0 %v2005
    %3240 = vmatprep.subr.bf16.mxu0 %v2014
    %3241 = vmatpush1.bf16.msra.mxu0 %v2013
    %3242 = vmatprep.subr.bf16.mxu0 %v2022
    %3243 = vmatpush1.bf16.msra.mxu0 %v2021
    %3244 = vmatprep.subr.bf16.mxu0 %v2030
    %3245 = vmatpush1.bf16.msra.mxu0 %v2029
    %3246 = vmatprep.subr.bf16.mxu0 %v2038
    %3247 = vmatpush1.bf16.msra.mxu0 %v2037
    %3248 = vmatprep.mubr.bf16.mxu0 %v2308
    %3249 = vmatmul.mubr.bf16.gmra.mrb[0].mxu0 %v2307
    %v3250 = vpop.f32.mrb[0].mxu0
    %v3251 = vadd.f32 %v3208, %v3250
    %v3252 = vpop.f32.mrb[0].mxu0
    %v3253 = vadd.f32 %v3210, %v3252
    %v3254 = vpop.f32.mrb[0].mxu0
    %v3255 = vadd.f32 %v3212, %v3254
    %v3256 = vpop.f32.mrb[0].mxu0
    %v3257 = vadd.f32 %v3214, %v3256
    %3258 = vdwg.mxu0
    %3259 = vmatprep.subr.bf16.mxu0 %v2046
    %3260 = vmatpush1.bf16.msra.mxu0 %v2045
    %3261 = vmatprep.subr.bf16.mxu0 %v2054
    %3262 = vmatpush1.bf16.msra.mxu0 %v2053
    %3263 = vmatprep.subr.bf16.mxu0 %v2062
    %3264 = vmatpush1.bf16.msra.mxu0 %v2061
    %3265 = vmatprep.subr.bf16.mxu0 %v2070
    %3266 = vmatpush1.bf16.msra.mxu0 %v2069
    %3267 = vmatprep.subr.bf16.mxu0 %v2078
    %3268 = vmatpush1.bf16.msra.mxu0 %v2077
    %3269 = vmatprep.subr.bf16.mxu0 %v2086
    %3270 = vmatpush1.bf16.msra.mxu0 %v2085
    %3271 = vmatprep.subr.bf16.mxu0 %v2094
    %3272 = vmatpush1.bf16.msra.mxu0 %v2093
    %3273 = vmatprep.subr.bf16.mxu0 %v2102
    %3274 = vmatpush1.bf16.msra.mxu0 %v2101
    %3275 = vmatprep.subr.bf16.mxu0 %v2110
    %3276 = vmatpush1.bf16.msra.mxu0 %v2109
    %3277 = vmatprep.subr.bf16.mxu0 %v2118
    %3278 = vmatpush1.bf16.msra.mxu0 %v2117
    %3279 = vmatprep.subr.bf16.mxu0 %v2126
    %3280 = vmatpush1.bf16.msra.mxu0 %v2125
    %3281 = vmatprep.subr.bf16.mxu0 %v2134
    %3282 = vmatpush1.bf16.msra.mxu0 %v2133
    %3283 = vmatprep.subr.bf16.mxu0 %v2142
    %3284 = vmatpush1.bf16.msra.mxu0 %v2141
    %3285 = vmatprep.subr.bf16.mxu0 %v2150
    %3286 = vmatpush1.bf16.msra.mxu0 %v2149
    %3287 = vmatprep.subr.bf16.mxu0 %v2158
    %3288 = vmatpush1.bf16.msra.mxu0 %v2157
    %3289 = vmatprep.subr.bf16.mxu0 %v2166
    %3290 = vmatpush1.bf16.msra.mxu0 %v2165
    %3291 = vmatprep.mubr.bf16.mxu0 %v2310
    %3292 = vmatmul.mubr.bf16.gmra.mrb[0].mxu0 %v2309
    %v3293 = vpop.f32.mrb[0].mxu0
    %v3294 = vadd.f32 %v3251, %v3293
    %v3295 = vpop.f32.mrb[0].mxu0
    %v3296 = vadd.f32 %v3253, %v3295
    %v3297 = vpop.f32.mrb[0].mxu0
    %v3298 = vadd.f32 %v3255, %v3297
    %v3299 = vpop.f32.mrb[0].mxu0
    %v3300 = vadd.f32 %v3257, %v3299
    %3301 = vdwg.mxu0
    %3302 = vmatprep.subr.bf16.mxu0 %v2174
    %3303 = vmatpush1.bf16.msra.mxu0 %v2173
    %3304 = vmatprep.subr.bf16.mxu0 %v2182
    %3305 = vmatpush1.bf16.msra.mxu0 %v2181
    %3306 = vmatprep.subr.bf16.mxu0 %v2190
    %3307 = vmatpush1.bf16.msra.mxu0 %v2189
    %3308 = vmatprep.subr.bf16.mxu0 %v2198
    %3309 = vmatpush1.bf16.msra.mxu0 %v2197
    %3310 = vmatprep.subr.bf16.mxu0 %v2206
    %3311 = vmatpush1.bf16.msra.mxu0 %v2205
    %3312 = vmatprep.subr.bf16.mxu0 %v2214
    %3313 = vmatpush1.bf16.msra.mxu0 %v2213
    %3314 = vmatprep.subr.bf16.mxu0 %v2222
    %3315 = vmatpush1.bf16.msra.mxu0 %v2221
    %3316 = vmatprep.subr.bf16.mxu0 %v2230
    %3317 = vmatpush1.bf16.msra.mxu0 %v2229
    %3318 = vmatprep.subr.bf16.mxu0 %v2238
    %3319 = vmatpush1.bf16.msra.mxu0 %v2237
    %3320 = vmatprep.subr.bf16.mxu0 %v2246
    %3321 = vmatpush1.bf16.msra.mxu0 %v2245
    %3322 = vmatprep.subr.bf16.mxu0 %v2254
    %3323 = vmatpush1.bf16.msra.mxu0 %v2253
    %3324 = vmatprep.subr.bf16.mxu0 %v2262
    %3325 = vmatpush1.bf16.msra.mxu0 %v2261
    %3326 = vmatprep.subr.bf16.mxu0 %v2270
    %3327 = vmatpush1.bf16.msra.mxu0 %v2269
    %3328 = vmatprep.subr.bf16.mxu0 %v2278
    %3329 = vmatpush1.bf16.msra.mxu0 %v2277
    %3330 = vmatprep.subr.bf16.mxu0 %v2286
    %3331 = vmatpush1.bf16.msra.mxu0 %v2285
    %3332 = vmatprep.subr.bf16.mxu0 %v2294
    %3333 = vmatpush1.bf16.msra.mxu0 %v2293
    %3334 = vmatprep.mubr.bf16.mxu0 %v2312
    %3335 = vmatmul.mubr.bf16.gmra.mrb[0].mxu0 %v2311
    %v3336 = vpop.f32.mrb[0].mxu0
    %v3337 = vadd.f32 %v3294, %v3336
    %v3338 = vpop.f32.mrb[0].mxu0
    %v3339 = vadd.f32 %v3296, %v3338
    %v3340 = vpop.f32.mrb[0].mxu0
    %v3341 = vadd.f32 %v3298, %v3340
    %v3342 = vpop.f32.mrb[0].mxu0
    %v3343 = vadd.f32 %v3300, %v3342
    %3344 = vdwg.mxu0
    %3345 = vmatprep.subr.bf16.mxu0 %v1280
    %3346 = vmatpush1.bf16.msra.mxu0 %v1279
    %3347 = vmatprep.subr.bf16.mxu0 %v1288
    %3348 = vmatpush1.bf16.msra.mxu0 %v1287
    %3349 = vmatprep.subr.bf16.mxu0 %v1296
    %3350 = vmatpush1.bf16.msra.mxu0 %v1295
    %3351 = vmatprep.subr.bf16.mxu0 %v1304
    %3352 = vmatpush1.bf16.msra.mxu0 %v1303
    %3353 = vmatprep.subr.bf16.mxu0 %v1312
    %3354 = vmatpush1.bf16.msra.mxu0 %v1311
    %3355 = vmatprep.subr.bf16.mxu0 %v1320
    %3356 = vmatpush1.bf16.msra.mxu0 %v1319
    %3357 = vmatprep.subr.bf16.mxu0 %v1328
    %3358 = vmatpush1.bf16.msra.mxu0 %v1327
    %3359 = vmatprep.subr.bf16.mxu0 %v1336
    %3360 = vmatpush1.bf16.msra.mxu0 %v1335
    %3361 = vmatprep.subr.bf16.mxu0 %v1344
    %3362 = vmatpush1.bf16.msra.mxu0 %v1343
    %3363 = vmatprep.subr.bf16.mxu0 %v1352
    %3364 = vmatpush1.bf16.msra.mxu0 %v1351
    %3365 = vmatprep.subr.bf16.mxu0 %v1360
    %3366 = vmatpush1.bf16.msra.mxu0 %v1359
    %3367 = vmatprep.subr.bf16.mxu0 %v1368
    %3368 = vmatpush1.bf16.msra.mxu0 %v1367
    %3369 = vmatprep.subr.bf16.mxu0 %v1376
    %3370 = vmatpush1.bf16.msra.mxu0 %v1375
    %3371 = vmatprep.subr.bf16.mxu0 %v1384
    %3372 = vmatpush1.bf16.msra.mxu0 %v1383
    %3373 = vmatprep.subr.bf16.mxu0 %v1392
    %3374 = vmatpush1.bf16.msra.mxu0 %v1391
    %3375 = vmatprep.subr.bf16.mxu0 %v1400
    %3376 = vmatpush1.bf16.msra.mxu0 %v1399
    %3377 = vmatprep.mubr.bf16.mxu0 %v2298
    %3378 = vmatmul.mubr.bf16.gmra.mrb[0].mxu0 %v2297
    %v3379 = vpop.f32.mrb[0].mxu0
    %v3380 = vadd.f32 0.0, %v3379
    %v3381 = vpop.f32.mrb[0].mxu0
    %v3382 = vadd.f32 0.0, %v3381
    %v3383 = vpop.f32.mrb[0].mxu0
    %v3384 = vadd.f32 0.0, %v3383
    %v3385 = vpop.f32.mrb[0].mxu0
    %v3386 = vadd.f32 0.0, %v3385
    %3387 = vdwg.mxu0
    %3388 = vmatprep.subr.bf16.mxu0 %v1408
    %3389 = vmatpush1.bf16.msra.mxu0 %v1407
    %3390 = vmatprep.subr.bf16.mxu0 %v1416
    %3391 = vmatpush1.bf16.msra.mxu0 %v1415
    %3392 = vmatprep.subr.bf16.mxu0 %v1424
    %3393 = vmatpush1.bf16.msra.mxu0 %v1423
    %3394 = vmatprep.subr.bf16.mxu0 %v1432
    %3395 = vmatpush1.bf16.msra.mxu0 %v1431
    %3396 = vmatprep.subr.bf16.mxu0 %v1440
    %3397 = vmatpush1.bf16.msra.mxu0 %v1439
    %3398 = vmatprep.subr.bf16.mxu0 %v1448
    %3399 = vmatpush1.bf16.msra.mxu0 %v1447
    %3400 = vmatprep.subr.bf16.mxu0 %v1456
    %3401 = vmatpush1.bf16.msra.mxu0 %v1455
    %3402 = vmatprep.subr.bf16.mxu0 %v1464
    %3403 = vmatpush1.bf16.msra.mxu0 %v1463
    %3404 = vmatprep.subr.bf16.mxu0 %v1472
    %3405 = vmatpush1.bf16.msra.mxu0 %v1471
    %3406 = vmatprep.subr.bf16.mxu0 %v1480
    %3407 = vmatpush1.bf16.msra.mxu0 %v1479
    %3408 = vmatprep.subr.bf16.mxu0 %v1488
    %3409 = vmatpush1.bf16.msra.mxu0 %v1487
    %3410 = vmatprep.subr.bf16.mxu0 %v1496
    %3411 = vmatpush1.bf16.msra.mxu0 %v1495
    %3412 = vmatprep.subr.bf16.mxu0 %v1504
    %3413 = vmatpush1.bf16.msra.mxu0 %v1503
    %3414 = vmatprep.subr.bf16.mxu0 %v1512
    %3415 = vmatpush1.bf16.msra.mxu0 %v1511
    %3416 = vmatprep.subr.bf16.mxu0 %v1520
    %3417 = vmatpush1.bf16.msra.mxu0 %v1519
    %3418 = vmatprep.subr.bf16.mxu0 %v1528
    %3419 = vmatpush1.bf16.msra.mxu0 %v1527
    %3420 = vmatprep.mubr.bf16.mxu0 %v2300
    %3421 = vmatmul.mubr.bf16.gmra.mrb[0].mxu0 %v2299
    %v3422 = vpop.f32.mrb[0].mxu0
    %v3423 = vadd.f32 %v3380, %v3422
    %v3424 = vpop.f32.mrb[0].mxu0
    %v3425 = vadd.f32 %v3382, %v3424
    %v3426 = vpop.f32.mrb[0].mxu0
    %v3427 = vadd.f32 %v3384, %v3426
    %v3428 = vpop.f32.mrb[0].mxu0
    %v3429 = vadd.f32 %v3386, %v3428
    %3430 = vdwg.mxu0
    %3431 = vmatprep.subr.bf16.mxu0 %v1536
    %3432 = vmatpush1.bf16.msra.mxu0 %v1535
    %3433 = vmatprep.subr.bf16.mxu0 %v1544
    %3434 = vmatpush1.bf16.msra.mxu0 %v1543
    %3435 = vmatprep.subr.bf16.mxu0 %v1552
    %3436 = vmatpush1.bf16.msra.mxu0 %v1551
    %3437 = vmatprep.subr.bf16.mxu0 %v1560
    %3438 = vmatpush1.bf16.msra.mxu0 %v1559
    %3439 = vmatprep.subr.bf16.mxu0 %v1568
    %3440 = vmatpush1.bf16.msra.mxu0 %v1567
    %3441 = vmatprep.subr.bf16.mxu0 %v1576
    %3442 = vmatpush1.bf16.msra.mxu0 %v1575
    %3443 = vmatprep.subr.bf16.mxu0 %v1584
    %3444 = vmatpush1.bf16.msra.mxu0 %v1583
    %3445 = vmatprep.subr.bf16.mxu0 %v1592
    %3446 = vmatpush1.bf16.msra.mxu0 %v1591
    %3447 = vmatprep.subr.bf16.mxu0 %v1600
    %3448 = vmatpush1.bf16.msra.mxu0 %v1599
    %3449 = vmatprep.subr.bf16.mxu0 %v1608
    %3450 = vmatpush1.bf16.msra.mxu0 %v1607
    %3451 = vmatprep.subr.bf16.mxu0 %v1616
    %3452 = vmatpush1.bf16.msra.mxu0 %v1615
    %3453 = vmatprep.subr.bf16.mxu0 %v1624
    %3454 = vmatpush1.bf16.msra.mxu0 %v1623
    %3455 = vmatprep.subr.bf16.mxu0 %v1632
    %3456 = vmatpush1.bf16.msra.mxu0 %v1631
    %3457 = vmatprep.subr.bf16.mxu0 %v1640
    %3458 = vmatpush1.bf16.msra.mxu0 %v1639
    %3459 = vmatprep.subr.bf16.mxu0 %v1648
    %3460 = vmatpush1.bf16.msra.mxu0 %v1647
    %3461 = vmatprep.subr.bf16.mxu0 %v1656
    %3462 = vmatpush1.bf16.msra.mxu0 %v1655
    %3463 = vmatprep.mubr.bf16.mxu0 %v2302
    %3464 = vmatmul.mubr.bf16.gmra.mrb[0].mxu0 %v2301
    %v3465 = vpop.f32.mrb[0].mxu0
    %v3466 = vadd.f32 %v3423, %v3465
    %v3467 = vpop.f32.mrb[0].mxu0
    %v3468 = vadd.f32 %v3425, %v3467
    %v3469 = vpop.f32.mrb[0].mxu0
    %v3470 = vadd.f32 %v3427, %v3469
    %v3471 = vpop.f32.mrb[0].mxu0
    %v3472 = vadd.f32 %v3429, %v3471
    %3473 = vdwg.mxu0
    %3474 = vmatprep.subr.bf16.mxu0 %v1664
    %3475 = vmatpush1.bf16.msra.mxu0 %v1663
    %3476 = vmatprep.subr.bf16.mxu0 %v1672
    %3477 = vmatpush1.bf16.msra.mxu0 %v1671
    %3478 = vmatprep.subr.bf16.mxu0 %v1680
    %3479 = vmatpush1.bf16.msra.mxu0 %v1679
    %3480 = vmatprep.subr.bf16.mxu0 %v1688
    %3481 = vmatpush1.bf16.msra.mxu0 %v1687
    %3482 = vmatprep.subr.bf16.mxu0 %v1696
    %3483 = vmatpush1.bf16.msra.mxu0 %v1695
    %3484 = vmatprep.subr.bf16.mxu0 %v1704
    %3485 = vmatpush1.bf16.msra.mxu0 %v1703
    %3486 = vmatprep.subr.bf16.mxu0 %v1712
    %3487 = vmatpush1.bf16.msra.mxu0 %v1711
    %3488 = vmatprep.subr.bf16.mxu0 %v1720
    %3489 = vmatpush1.bf16.msra.mxu0 %v1719
    %3490 = vmatprep.subr.bf16.mxu0 %v1728
    %3491 = vmatpush1.bf16.msra.mxu0 %v1727
    %3492 = vmatprep.subr.bf16.mxu0 %v1736
    %3493 = vmatpush1.bf16.msra.mxu0 %v1735
    %3494 = vmatprep.subr.bf16.mxu0 %v1744
    %3495 = vmatpush1.bf16.msra.mxu0 %v1743
    %3496 = vmatprep.subr.bf16.mxu0 %v1752
    %3497 = vmatpush1.bf16.msra.mxu0 %v1751
    %3498 = vmatprep.subr.bf16.mxu0 %v1760
    %3499 = vmatpush1.bf16.msra.mxu0 %v1759
    %3500 = vmatprep.subr.bf16.mxu0 %v1768
    %3501 = vmatpush1.bf16.msra.mxu0 %v1767
    %3502 = vmatprep.subr.bf16.mxu0 %v1776
    %3503 = vmatpush1.bf16.msra.mxu0 %v1775
    %3504 = vmatprep.subr.bf16.mxu0 %v1784
    %3505 = vmatpush1.bf16.msra.mxu0 %v1783
    %3506 = vmatprep.mubr.bf16.mxu0 %v2304
    %3507 = vmatmul.mubr.bf16.gmra.mrb[0].mxu0 %v2303
    %v3508 = vpop.f32.mrb[0].mxu0
    %v3509 = vadd.f32 %v3466, %v3508
    %v3510 = vpop.f32.mrb[0].mxu0
    %v3511 = vadd.f32 %v3468, %v3510
    %v3512 = vpop.f32.mrb[0].mxu0
    %v3513 = vadd.f32 %v3470, %v3512
    %v3514 = vpop.f32.mrb[0].mxu0
    %v3515 = vadd.f32 %v3472, %v3514
    %3516 = vdwg.mxu0
    %3517 = vmatprep.subr.bf16.mxu0 %v1792
    %3518 = vmatpush1.bf16.msra.mxu0 %v1791
    %3519 = vmatprep.subr.bf16.mxu0 %v1800
    %3520 = vmatpush1.bf16.msra.mxu0 %v1799
    %3521 = vmatprep.subr.bf16.mxu0 %v1808
    %3522 = vmatpush1.bf16.msra.mxu0 %v1807
    %3523 = vmatprep.subr.bf16.mxu0 %v1816
    %3524 = vmatpush1.bf16.msra.mxu0 %v1815
    %3525 = vmatprep.subr.bf16.mxu0 %v1824
    %3526 = vmatpush1.bf16.msra.mxu0 %v1823
    %3527 = vmatprep.subr.bf16.mxu0 %v1832
    %3528 = vmatpush1.bf16.msra.mxu0 %v1831
    %3529 = vmatprep.subr.bf16.mxu0 %v1840
    %3530 = vmatpush1.bf16.msra.mxu0 %v1839
    %3531 = vmatprep.subr.bf16.mxu0 %v1848
    %3532 = vmatpush1.bf16.msra.mxu0 %v1847
    %3533 = vmatprep.subr.bf16.mxu0 %v1856
    %3534 = vmatpush1.bf16.msra.mxu0 %v1855
    %3535 = vmatprep.subr.bf16.mxu0 %v1864
    %3536 = vmatpush1.bf16.msra.mxu0 %v1863
    %3537 = vmatprep.subr.bf16.mxu0 %v1872
    %3538 = vmatpush1.bf16.msra.mxu0 %v1871
    %3539 = vmatprep.subr.bf16.mxu0 %v1880
    %3540 = vmatpush1.bf16.msra.mxu0 %v1879
    %3541 = vmatprep.subr.bf16.mxu0 %v1888
    %3542 = vmatpush1.bf16.msra.mxu0 %v1887
    %3543 = vmatprep.subr.bf16.mxu0 %v1896
    %3544 = vmatpush1.bf16.msra.mxu0 %v1895
    %3545 = vmatprep.subr.bf16.mxu0 %v1904
    %3546 = vmatpush1.bf16.msra.mxu0 %v1903
    %3547 = vmatprep.subr.bf16.mxu0 %v1912
    %3548 = vmatpush1.bf16.msra.mxu0 %v1911
    %3549 = vmatprep.mubr.bf16.mxu0 %v2306
    %3550 = vmatmul.mubr.bf16.gmra.mrb[0].mxu0 %v2305
    %v3551 = vpop.f32.mrb[0].mxu0
    %v3552 = vadd.f32 %v3509, %v3551
    %v3553 = vpop.f32.mrb[0].mxu0
    %v3554 = vadd.f32 %v3511, %v3553
    %v3555 = vpop.f32.mrb[0].mxu0
    %v3556 = vadd.f32 %v3513, %v3555
    %v3557 = vpop.f32.mrb[0].mxu0
    %v3558 = vadd.f32 %v3515, %v3557
    %3559 = vdwg.mxu0
    %3560 = vmatprep.subr.bf16.mxu0 %v1920
    %3561 = vmatpush1.bf16.msra.mxu0 %v1919
    %3562 = vmatprep.subr.bf16.mxu0 %v1928
    %3563 = vmatpush1.bf16.msra.mxu0 %v1927
    %3564 = vmatprep.subr.bf16.mxu0 %v1936
    %3565 = vmatpush1.bf16.msra.mxu0 %v1935
    %3566 = vmatprep.subr.bf16.mxu0 %v1944
    %3567 = vmatpush1.bf16.msra.mxu0 %v1943
    %3568 = vmatprep.subr.bf16.mxu0 %v1952
    %3569 = vmatpush1.bf16.msra.mxu0 %v1951
    %3570 = vmatprep.subr.bf16.mxu0 %v1960
    %3571 = vmatpush1.bf16.msra.mxu0 %v1959
    %3572 = vmatprep.subr.bf16.mxu0 %v1968
    %3573 = vmatpush1.bf16.msra.mxu0 %v1967
    %3574 = vmatprep.subr.bf16.mxu0 %v1976
    %3575 = vmatpush1.bf16.msra.mxu0 %v1975
    %3576 = vmatprep.subr.bf16.mxu0 %v1984
    %3577 = vmatpush1.bf16.msra.mxu0 %v1983
    %3578 = vmatprep.subr.bf16.mxu0 %v1992
    %3579 = vmatpush1.bf16.msra.mxu0 %v1991
    %3580 = vmatprep.subr.bf16.mxu0 %v2000
    %3581 = vmatpush1.bf16.msra.mxu0 %v1999
    %3582 = vmatprep.subr.bf16.mxu0 %v2008
    %3583 = vmatpush1.bf16.msra.mxu0 %v2007
    %3584 = vmatprep.subr.bf16.mxu0 %v2016
    %3585 = vmatpush1.bf16.msra.mxu0 %v2015
    %3586 = vmatprep.subr.bf16.mxu0 %v2024
    %3587 = vmatpush1.bf16.msra.mxu0 %v2023
    %3588 = vmatprep.subr.bf16.mxu0 %v2032
    %3589 = vmatpush1.bf16.msra.mxu0 %v2031
    %3590 = vmatprep.subr.bf16.mxu0 %v2040
    %3591 = vmatpush1.bf16.msra.mxu0 %v2039
    %3592 = vmatprep.mubr.bf16.mxu0 %v2308
    %3593 = vmatmul.mubr.bf16.gmra.mrb[0].mxu0 %v2307
    %v3594 = vpop.f32.mrb[0].mxu0
    %v3595 = vadd.f32 %v3552, %v3594
    %v3596 = vpop.f32.mrb[0].mxu0
    %v3597 = vadd.f32 %v3554, %v3596
    %v3598 = vpop.f32.mrb[0].mxu0
    %v3599 = vadd.f32 %v3556, %v3598
    %v3600 = vpop.f32.mrb[0].mxu0
    %v3601 = vadd.f32 %v3558, %v3600
    %3602 = vdwg.mxu0
    %3603 = vmatprep.subr.bf16.mxu0 %v2048
    %3604 = vmatpush1.bf16.msra.mxu0 %v2047
    %3605 = vmatprep.subr.bf16.mxu0 %v2056
    %3606 = vmatpush1.bf16.msra.mxu0 %v2055
    %3607 = vmatprep.subr.bf16.mxu0 %v2064
    %3608 = vmatpush1.bf16.msra.mxu0 %v2063
    %3609 = vmatprep.subr.bf16.mxu0 %v2072
    %3610 = vmatpush1.bf16.msra.mxu0 %v2071
    %3611 = vmatprep.subr.bf16.mxu0 %v2080
    %3612 = vmatpush1.bf16.msra.mxu0 %v2079
    %3613 = vmatprep.subr.bf16.mxu0 %v2088
    %3614 = vmatpush1.bf16.msra.mxu0 %v2087
    %3615 = vmatprep.subr.bf16.mxu0 %v2096
    %3616 = vmatpush1.bf16.msra.mxu0 %v2095
    %3617 = vmatprep.subr.bf16.mxu0 %v2104
    %3618 = vmatpush1.bf16.msra.mxu0 %v2103
    %3619 = vmatprep.subr.bf16.mxu0 %v2112
    %3620 = vmatpush1.bf16.msra.mxu0 %v2111
    %3621 = vmatprep.subr.bf16.mxu0 %v2120
    %3622 = vmatpush1.bf16.msra.mxu0 %v2119
    %3623 = vmatprep.subr.bf16.mxu0 %v2128
    %3624 = vmatpush1.bf16.msra.mxu0 %v2127
    %3625 = vmatprep.subr.bf16.mxu0 %v2136
    %3626 = vmatpush1.bf16.msra.mxu0 %v2135
    %3627 = vmatprep.subr.bf16.mxu0 %v2144
    %3628 = vmatpush1.bf16.msra.mxu0 %v2143
    %3629 = vmatprep.subr.bf16.mxu0 %v2152
    %3630 = vmatpush1.bf16.msra.mxu0 %v2151
    %3631 = vmatprep.subr.bf16.mxu0 %v2160
    %3632 = vmatpush1.bf16.msra.mxu0 %v2159
    %3633 = vmatprep.subr.bf16.mxu0 %v2168
    %3634 = vmatpush1.bf16.msra.mxu0 %v2167
    %3635 = vmatprep.mubr.bf16.mxu0 %v2310
    %3636 = vmatmul.mubr.bf16.gmra.mrb[0].mxu0 %v2309
    %v3637 = vpop.f32.mrb[0].mxu0
    %v3638 = vadd.f32 %v3595, %v3637
    %v3639 = vpop.f32.mrb[0].mxu0
    %v3640 = vadd.f32 %v3597, %v3639
    %v3641 = vpop.f32.mrb[0].mxu0
    %v3642 = vadd.f32 %v3599, %v3641
    %v3643 = vpop.f32.mrb[0].mxu0
    %v3644 = vadd.f32 %v3601, %v3643
    %3645 = vdwg.mxu0
    %3646 = vmatprep.subr.bf16.mxu0 %v2176
    %3647 = vmatpush1.bf16.msra.mxu0 %v2175
    %3648 = vmatprep.subr.bf16.mxu0 %v2184
    %3649 = vmatpush1.bf16.msra.mxu0 %v2183
    %3650 = vmatprep.subr.bf16.mxu0 %v2192
    %3651 = vmatpush1.bf16.msra.mxu0 %v2191
    %3652 = vmatprep.subr.bf16.mxu0 %v2200
    %3653 = vmatpush1.bf16.msra.mxu0 %v2199
    %3654 = vmatprep.subr.bf16.mxu0 %v2208
    %3655 = vmatpush1.bf16.msra.mxu0 %v2207
    %3656 = vmatprep.subr.bf16.mxu0 %v2216
    %3657 = vmatpush1.bf16.msra.mxu0 %v2215
    %3658 = vmatprep.subr.bf16.mxu0 %v2224
    %3659 = vmatpush1.bf16.msra.mxu0 %v2223
    %3660 = vmatprep.subr.bf16.mxu0 %v2232
    %3661 = vmatpush1.bf16.msra.mxu0 %v2231
    %3662 = vmatprep.subr.bf16.mxu0 %v2240
    %3663 = vmatpush1.bf16.msra.mxu0 %v2239
    %3664 = vmatprep.subr.bf16.mxu0 %v2248
    %3665 = vmatpush1.bf16.msra.mxu0 %v2247
    %3666 = vmatprep.subr.bf16.mxu0 %v2256
    %3667 = vmatpush1.bf16.msra.mxu0 %v2255
    %3668 = vmatprep.subr.bf16.mxu0 %v2264
    %3669 = vmatpush1.bf16.msra.mxu0 %v2263
    %3670 = vmatprep.subr.bf16.mxu0 %v2272
    %3671 = vmatpush1.bf16.msra.mxu0 %v2271
    %3672 = vmatprep.subr.bf16.mxu0 %v2280
    %3673 = vmatpush1.bf16.msra.mxu0 %v2279
    %3674 = vmatprep.subr.bf16.mxu0 %v2288
    %3675 = vmatpush1.bf16.msra.mxu0 %v2287
    %3676 = vmatprep.subr.bf16.mxu0 %v2296
    %3677 = vmatpush1.bf16.msra.mxu0 %v2295
    %3678 = vmatprep.mubr.bf16.mxu0 %v2312
    %3679 = vmatmul.mubr.bf16.gmra.mrb[0].mxu0 %v2311
    %v3680 = vpop.f32.mrb[0].mxu0
    %v3681 = vadd.f32 %v3638, %v3680
    %v3682 = vpop.f32.mrb[0].mxu0
    %v3683 = vadd.f32 %v3640, %v3682
    %v3684 = vpop.f32.mrb[0].mxu0
    %v3685 = vadd.f32 %v3642, %v3684
    %v3686 = vpop.f32.mrb[0].mxu0
    %v3687 = vadd.f32 %v3644, %v3686
    %3688 = vdwg.mxu0
    %v3690 = vlaneseq
    %v3691 = vshrl.u32 %v3690, 7
    %v3692 = vsub.s32 0, %v3691
    %v3693 = vrot.slane %v96, %v3692
    %v3694 = vlaneseq
    %v3695 = vshrl.u32 %v3694, 7
    %v3696 = vsub.s32 1, %v3695
    %v3697 = vrot.slane %v96, %v3696
    %v3698 = vlaneseq
    %v3699 = vshrl.u32 %v3698, 7
    %v3700 = vsub.s32 2, %v3699
    %v3701 = vrot.slane %v96, %v3700
    %v3702 = vlaneseq
    %v3703 = vshrl.u32 %v3702, 7
    %v3704 = vsub.s32 3, %v3703
    %v3705 = vrot.slane %v96, %v3704
    %v3706 = vlaneseq
    %v3707 = vshrl.u32 %v3706, 7
    %v3708 = vsub.s32 4, %v3707
    %v3709 = vrot.slane %v96, %v3708
    %v3710 = vlaneseq
    %v3711 = vshrl.u32 %v3710, 7
    %v3712 = vsub.s32 5, %v3711
    %v3713 = vrot.slane %v96, %v3712
    %v3714 = vlaneseq
    %v3715 = vshrl.u32 %v3714, 7
    %v3716 = vsub.s32 6, %v3715
    %v3717 = vrot.slane %v96, %v3716
    %v3718 = vlaneseq
    %v3719 = vshrl.u32 %v3718, 7
    %v3720 = vsub.s32 7, %v3719
    %v3721 = vrot.slane %v96, %v3720
    %v3730 = vmul.f32 %v2649, %v3693
    %v3731 = vmul.f32 %v2651, %v3697
    %v3732 = vmul.f32 %v2993, %v3701
    %v3733 = vmul.f32 %v2995, %v3705
    %v3734 = vmul.f32 %v3337, %v3709
    %v3735 = vmul.f32 %v3339, %v3713
    %v3736 = vmul.f32 %v3681, %v3717
    %v3737 = vmul.f32 %v3683, %v3721
    %v3738 = vmul.f32 %v2653, %v3693
    %v3739 = vmul.f32 %v2655, %v3697
    %v3740 = vmul.f32 %v2997, %v3701
    %v3741 = vmul.f32 %v2999, %v3705
    %v3742 = vmul.f32 %v3341, %v3709
    %v3743 = vmul.f32 %v3343, %v3713
    %v3744 = vmul.f32 %v3685, %v3717
    %v3745 = vmul.f32 %v3687, %v3721
    %v3747 = vlaneseq
    %v3748 = vshrl.u32 %v3747, 7
    %v3749 = vsub.s32 0, %v3748
    %v3750 = vrot.slane %v98, %v3749
    %v3751 = vlaneseq
    %v3752 = vshrl.u32 %v3751, 7
    %v3753 = vsub.s32 1, %v3752
    %v3754 = vrot.slane %v98, %v3753
    %v3755 = vlaneseq
    %v3756 = vshrl.u32 %v3755, 7
    %v3757 = vsub.s32 2, %v3756
    %v3758 = vrot.slane %v98, %v3757
    %v3759 = vlaneseq
    %v3760 = vshrl.u32 %v3759, 7
    %v3761 = vsub.s32 3, %v3760
    %v3762 = vrot.slane %v98, %v3761
    %v3763 = vlaneseq
    %v3764 = vshrl.u32 %v3763, 7
    %v3765 = vsub.s32 4, %v3764
    %v3766 = vrot.slane %v98, %v3765
    %v3767 = vlaneseq
    %v3768 = vshrl.u32 %v3767, 7
    %v3769 = vsub.s32 5, %v3768
    %v3770 = vrot.slane %v98, %v3769
    %v3771 = vlaneseq
    %v3772 = vshrl.u32 %v3771, 7
    %v3773 = vsub.s32 6, %v3772
    %v3774 = vrot.slane %v98, %v3773
    %v3775 = vlaneseq
    %v3776 = vshrl.u32 %v3775, 7
    %v3777 = vsub.s32 7, %v3776
    %v3778 = vrot.slane %v98, %v3777
    %v3787 = vadd.f32 %v3730, %v3750
    %v3788 = vadd.f32 %v3731, %v3754
    %v3789 = vadd.f32 %v3732, %v3758
    %v3790 = vadd.f32 %v3733, %v3762
    %v3791 = vadd.f32 %v3734, %v3766
    %v3792 = vadd.f32 %v3735, %v3770
    %v3793 = vadd.f32 %v3736, %v3774
    %v3794 = vadd.f32 %v3737, %v3778
    %v3795 = vadd.f32 %v3738, %v3750
    %v3796 = vadd.f32 %v3739, %v3754
    %v3797 = vadd.f32 %v3740, %v3758
    %v3798 = vadd.f32 %v3741, %v3762
    %v3799 = vadd.f32 %v3742, %v3766
    %v3800 = vadd.f32 %v3743, %v3770
    %v3801 = vadd.f32 %v3744, %v3774
    %v3802 = vadd.f32 %v3745, %v3778
    %v3803 = vmax.f32 %v3787, 0.0
    %v3804 = vmax.f32 %v3788, 0.0
    %v3805 = vmax.f32 %v3789, 0.0
    %v3806 = vmax.f32 %v3790, 0.0
    %v3807 = vmax.f32 %v3791, 0.0
    %v3808 = vmax.f32 %v3792, 0.0
    %v3809 = vmax.f32 %v3793, 0.0
    %v3810 = vmax.f32 %v3794, 0.0
    %v3811 = vmax.f32 %v3795, 0.0
    %v3812 = vmax.f32 %v3796, 0.0
    %v3813 = vmax.f32 %v3797, 0.0
    %v3814 = vmax.f32 %v3798, 0.0
    %v3815 = vmax.f32 %v3799, 0.0
    %v3816 = vmax.f32 %v3800, 0.0
    %v3817 = vmax.f32 %v3801, 0.0
    %v3818 = vmax.f32 %v3802, 0.0
    %v3819 = vld [vmem:[#allocation8] sm:$0xff]
    %v3820 = vld [vmem:[#allocation8 + $0x8] sm:$0xff]
    %v3821 = vld [vmem:[#allocation8 + $0x10] sm:$0xff]
    %v3822 = vld [vmem:[#allocation8 + $0x18] sm:$0xff]
    %v3823 = vld [vmem:[#allocation8 + $0x20] sm:$0xff]
    %v3824 = vld [vmem:[#allocation8 + $0x28] sm:$0xff]
    %v3825 = vld [vmem:[#allocation8 + $0x30] sm:$0xff]
    %v3826 = vld [vmem:[#allocation8 + $0x38] sm:$0xff]
    %v3827 = vld [vmem:[#allocation8 + $0x40] sm:$0xff]
    %v3828 = vld [vmem:[#allocation8 + $0x48] sm:$0xff]
    %v3829 = vld [vmem:[#allocation8 + $0x50] sm:$0xff]
    %v3830 = vld [vmem:[#allocation8 + $0x58] sm:$0xff]
    %v3831 = vld [vmem:[#allocation8 + $0x60] sm:$0xff]
    %v3832 = vld [vmem:[#allocation8 + $0x68] sm:$0xff]
    %v3833 = vld [vmem:[#allocation8 + $0x70] sm:$0xff]
    %v3834 = vld [vmem:[#allocation8 + $0x78] sm:$0xff]
    %v3835 = vld [vmem:[#allocation8 + $0x80] sm:$0xff]
    %v3836 = vld [vmem:[#allocation8 + $0x88] sm:$0xff]
    %v3837 = vld [vmem:[#allocation8 + $0x90] sm:$0xff]
    %v3838 = vld [vmem:[#allocation8 + $0x98] sm:$0xff]
    %v3839 = vld [vmem:[#allocation8 + $0xa0] sm:$0xff]
    %v3840 = vld [vmem:[#allocation8 + $0xa8] sm:$0xff]
    %v3841 = vld [vmem:[#allocation8 + $0xb0] sm:$0xff]
    %v3842 = vld [vmem:[#allocation8 + $0xb8] sm:$0xff]
    %v3843 = vld [vmem:[#allocation8 + $0xc0] sm:$0xff]
    %v3844 = vld [vmem:[#allocation8 + $0xc8] sm:$0xff]
    %v3845 = vld [vmem:[#allocation8 + $0xd0] sm:$0xff]
    %v3846 = vld [vmem:[#allocation8 + $0xd8] sm:$0xff]
    %v3847 = vld [vmem:[#allocation8 + $0xe0] sm:$0xff]
    %v3848 = vld [vmem:[#allocation8 + $0xe8] sm:$0xff]
    %v3849 = vld [vmem:[#allocation8 + $0xf0] sm:$0xff]
    %v3850 = vld [vmem:[#allocation8 + $0xf8] sm:$0xff]
    %v3851 = vld [vmem:[#allocation8 + $0x100] sm:$0xff]
    %v3852 = vld [vmem:[#allocation8 + $0x108] sm:$0xff]
    %v3853 = vld [vmem:[#allocation8 + $0x110] sm:$0xff]
    %v3854 = vld [vmem:[#allocation8 + $0x118] sm:$0xff]
    %v3855 = vld [vmem:[#allocation8 + $0x120] sm:$0xff]
    %v3856 = vld [vmem:[#allocation8 + $0x128] sm:$0xff]
    %v3857 = vld [vmem:[#allocation8 + $0x130] sm:$0xff]
    %v3858 = vld [vmem:[#allocation8 + $0x138] sm:$0xff]
    %v3859 = vld [vmem:[#allocation8 + $0x140] sm:$0xff]
    %v3860 = vld [vmem:[#allocation8 + $0x148] sm:$0xff]
    %v3861 = vld [vmem:[#allocation8 + $0x150] sm:$0xff]
    %v3862 = vld [vmem:[#allocation8 + $0x158] sm:$0xff]
    %v3863 = vld [vmem:[#allocation8 + $0x160] sm:$0xff]
    %v3864 = vld [vmem:[#allocation8 + $0x168] sm:$0xff]
    %v3865 = vld [vmem:[#allocation8 + $0x170] sm:$0xff]
    %v3866 = vld [vmem:[#allocation8 + $0x178] sm:$0xff]
    %v3867 = vld [vmem:[#allocation8 + $0x180] sm:$0xff]
    %v3868 = vld [vmem:[#allocation8 + $0x188] sm:$0xff]
    %v3869 = vld [vmem:[#allocation8 + $0x190] sm:$0xff]
    %v3870 = vld [vmem:[#allocation8 + $0x198] sm:$0xff]
    %v3871 = vld [vmem:[#allocation8 + $0x1a0] sm:$0xff]
    %v3872 = vld [vmem:[#allocation8 + $0x1a8] sm:$0xff]
    %v3873 = vld [vmem:[#allocation8 + $0x1b0] sm:$0xff]
    %v3874 = vld [vmem:[#allocation8 + $0x1b8] sm:$0xff]
    %v3875 = vld [vmem:[#allocation8 + $0x1c0] sm:$0xff]
    %v3876 = vld [vmem:[#allocation8 + $0x1c8] sm:$0xff]
    %v3877 = vld [vmem:[#allocation8 + $0x1d0] sm:$0xff]
    %v3878 = vld [vmem:[#allocation8 + $0x1d8] sm:$0xff]
    %v3879 = vld [vmem:[#allocation8 + $0x1e0] sm:$0xff]
    %v3880 = vld [vmem:[#allocation8 + $0x1e8] sm:$0xff]
    %v3881 = vld [vmem:[#allocation8 + $0x1f0] sm:$0xff]
    %v3882 = vld [vmem:[#allocation8 + $0x1f8] sm:$0xff]
    %v3883 = vld [vmem:[#allocation8 + $0x200] sm:$0xff]
    %v3884 = vld [vmem:[#allocation8 + $0x208] sm:$0xff]
    %v3885 = vld [vmem:[#allocation8 + $0x210] sm:$0xff]
    %v3886 = vld [vmem:[#allocation8 + $0x218] sm:$0xff]
    %v3887 = vld [vmem:[#allocation8 + $0x220] sm:$0xff]
    %v3888 = vld [vmem:[#allocation8 + $0x228] sm:$0xff]
    %v3889 = vld [vmem:[#allocation8 + $0x230] sm:$0xff]
    %v3890 = vld [vmem:[#allocation8 + $0x238] sm:$0xff]
    %v3891 = vld [vmem:[#allocation8 + $0x240] sm:$0xff]
    %v3892 = vld [vmem:[#allocation8 + $0x248] sm:$0xff]
    %v3893 = vld [vmem:[#allocation8 + $0x250] sm:$0xff]
    %v3894 = vld [vmem:[#allocation8 + $0x258] sm:$0xff]
    %v3895 = vld [vmem:[#allocation8 + $0x260] sm:$0xff]
    %v3896 = vld [vmem:[#allocation8 + $0x268] sm:$0xff]
    %v3897 = vld [vmem:[#allocation8 + $0x270] sm:$0xff]
    %v3898 = vld [vmem:[#allocation8 + $0x278] sm:$0xff]
    %v3899 = vld [vmem:[#allocation8 + $0x280] sm:$0xff]
    %v3900 = vld [vmem:[#allocation8 + $0x288] sm:$0xff]
    %v3901 = vld [vmem:[#allocation8 + $0x290] sm:$0xff]
    %v3902 = vld [vmem:[#allocation8 + $0x298] sm:$0xff]
    %v3903 = vld [vmem:[#allocation8 + $0x2a0] sm:$0xff]
    %v3904 = vld [vmem:[#allocation8 + $0x2a8] sm:$0xff]
    %v3905 = vld [vmem:[#allocation8 + $0x2b0] sm:$0xff]
    %v3906 = vld [vmem:[#allocation8 + $0x2b8] sm:$0xff]
    %v3907 = vld [vmem:[#allocation8 + $0x2c0] sm:$0xff]
    %v3908 = vld [vmem:[#allocation8 + $0x2c8] sm:$0xff]
    %v3909 = vld [vmem:[#allocation8 + $0x2d0] sm:$0xff]
    %v3910 = vld [vmem:[#allocation8 + $0x2d8] sm:$0xff]
    %v3911 = vld [vmem:[#allocation8 + $0x2e0] sm:$0xff]
    %v3912 = vld [vmem:[#allocation8 + $0x2e8] sm:$0xff]
    %v3913 = vld [vmem:[#allocation8 + $0x2f0] sm:$0xff]
    %v3914 = vld [vmem:[#allocation8 + $0x2f8] sm:$0xff]
    %v3915 = vld [vmem:[#allocation8 + $0x300] sm:$0xff]
    %v3916 = vld [vmem:[#allocation8 + $0x308] sm:$0xff]
    %v3917 = vld [vmem:[#allocation8 + $0x310] sm:$0xff]
    %v3918 = vld [vmem:[#allocation8 + $0x318] sm:$0xff]
    %v3919 = vld [vmem:[#allocation8 + $0x320] sm:$0xff]
    %v3920 = vld [vmem:[#allocation8 + $0x328] sm:$0xff]
    %v3921 = vld [vmem:[#allocation8 + $0x330] sm:$0xff]
    %v3922 = vld [vmem:[#allocation8 + $0x338] sm:$0xff]
    %v3923 = vld [vmem:[#allocation8 + $0x340] sm:$0xff]
    %v3924 = vld [vmem:[#allocation8 + $0x348] sm:$0xff]
    %v3925 = vld [vmem:[#allocation8 + $0x350] sm:$0xff]
    %v3926 = vld [vmem:[#allocation8 + $0x358] sm:$0xff]
    %v3927 = vld [vmem:[#allocation8 + $0x360] sm:$0xff]
    %v3928 = vld [vmem:[#allocation8 + $0x368] sm:$0xff]
    %v3929 = vld [vmem:[#allocation8 + $0x370] sm:$0xff]
    %v3930 = vld [vmem:[#allocation8 + $0x378] sm:$0xff]
    %v3931 = vld [vmem:[#allocation8 + $0x380] sm:$0xff]
    %v3932 = vld [vmem:[#allocation8 + $0x388] sm:$0xff]
    %v3933 = vld [vmem:[#allocation8 + $0x390] sm:$0xff]
    %v3934 = vld [vmem:[#allocation8 + $0x398] sm:$0xff]
    %v3935 = vld [vmem:[#allocation8 + $0x3a0] sm:$0xff]
    %v3936 = vld [vmem:[#allocation8 + $0x3a8] sm:$0xff]
    %v3937 = vld [vmem:[#allocation8 + $0x3b0] sm:$0xff]
    %v3938 = vld [vmem:[#allocation8 + $0x3b8] sm:$0xff]
    %v3939 = vld [vmem:[#allocation8 + $0x3c0] sm:$0xff]
    %v3940 = vld [vmem:[#allocation8 + $0x3c8] sm:$0xff]
    %v3941 = vld [vmem:[#allocation8 + $0x3d0] sm:$0xff]
    %v3942 = vld [vmem:[#allocation8 + $0x3d8] sm:$0xff]
    %v3943 = vld [vmem:[#allocation8 + $0x3e0] sm:$0xff]
    %v3944 = vld [vmem:[#allocation8 + $0x3e8] sm:$0xff]
    %v3945 = vld [vmem:[#allocation8 + $0x3f0] sm:$0xff]
    %v3946 = vld [vmem:[#allocation8 + $0x3f8] sm:$0xff]
    %v3947 = vld [vmem:[#allocation8 + $0x400] sm:$0xff]
    %v3948 = vld [vmem:[#allocation8 + $0x408] sm:$0xff]
    %v3949 = vld [vmem:[#allocation8 + $0x410] sm:$0xff]
    %v3950 = vld [vmem:[#allocation8 + $0x418] sm:$0xff]
    %v3951 = vld [vmem:[#allocation8 + $0x420] sm:$0xff]
    %v3952 = vld [vmem:[#allocation8 + $0x428] sm:$0xff]
    %v3953 = vld [vmem:[#allocation8 + $0x430] sm:$0xff]
    %v3954 = vld [vmem:[#allocation8 + $0x438] sm:$0xff]
    %v3955 = vld [vmem:[#allocation8 + $0x440] sm:$0xff]
    %v3956 = vld [vmem:[#allocation8 + $0x448] sm:$0xff]
    %v3957 = vld [vmem:[#allocation8 + $0x450] sm:$0xff]
    %v3958 = vld [vmem:[#allocation8 + $0x458] sm:$0xff]
    %v3959 = vld [vmem:[#allocation8 + $0x460] sm:$0xff]
    %v3960 = vld [vmem:[#allocation8 + $0x468] sm:$0xff]
    %v3961 = vld [vmem:[#allocation8 + $0x470] sm:$0xff]
    %v3962 = vld [vmem:[#allocation8 + $0x478] sm:$0xff]
    %v3963 = vld [vmem:[#allocation8 + $0x480] sm:$0xff]
    %v3964 = vld [vmem:[#allocation8 + $0x488] sm:$0xff]
    %v3965 = vld [vmem:[#allocation8 + $0x490] sm:$0xff]
    %v3966 = vld [vmem:[#allocation8 + $0x498] sm:$0xff]
    %v3967 = vld [vmem:[#allocation8 + $0x4a0] sm:$0xff]
    %v3968 = vld [vmem:[#allocation8 + $0x4a8] sm:$0xff]
    %v3969 = vld [vmem:[#allocation8 + $0x4b0] sm:$0xff]
    %v3970 = vld [vmem:[#allocation8 + $0x4b8] sm:$0xff]
    %v3971 = vld [vmem:[#allocation8 + $0x4c0] sm:$0xff]
    %v3972 = vld [vmem:[#allocation8 + $0x4c8] sm:$0xff]
    %v3973 = vld [vmem:[#allocation8 + $0x4d0] sm:$0xff]
    %v3974 = vld [vmem:[#allocation8 + $0x4d8] sm:$0xff]
    %v3975 = vld [vmem:[#allocation8 + $0x4e0] sm:$0xff]
    %v3976 = vld [vmem:[#allocation8 + $0x4e8] sm:$0xff]
    %v3977 = vld [vmem:[#allocation8 + $0x4f0] sm:$0xff]
    %v3978 = vld [vmem:[#allocation8 + $0x4f8] sm:$0xff]
    %v3979 = vld [vmem:[#allocation8 + $0x500] sm:$0xff]
    %v3980 = vld [vmem:[#allocation8 + $0x508] sm:$0xff]
    %v3981 = vld [vmem:[#allocation8 + $0x510] sm:$0xff]
    %v3982 = vld [vmem:[#allocation8 + $0x518] sm:$0xff]
    %v3983 = vld [vmem:[#allocation8 + $0x520] sm:$0xff]
    %v3984 = vld [vmem:[#allocation8 + $0x528] sm:$0xff]
    %v3985 = vld [vmem:[#allocation8 + $0x530] sm:$0xff]
    %v3986 = vld [vmem:[#allocation8 + $0x538] sm:$0xff]
    %v3987 = vld [vmem:[#allocation8 + $0x540] sm:$0xff]
    %v3988 = vld [vmem:[#allocation8 + $0x548] sm:$0xff]
    %v3989 = vld [vmem:[#allocation8 + $0x550] sm:$0xff]
    %v3990 = vld [vmem:[#allocation8 + $0x558] sm:$0xff]
    %v3991 = vld [vmem:[#allocation8 + $0x560] sm:$0xff]
    %v3992 = vld [vmem:[#allocation8 + $0x568] sm:$0xff]
    %v3993 = vld [vmem:[#allocation8 + $0x570] sm:$0xff]
    %v3994 = vld [vmem:[#allocation8 + $0x578] sm:$0xff]
    %v3995 = vld [vmem:[#allocation8 + $0x580] sm:$0xff]
    %v3996 = vld [vmem:[#allocation8 + $0x588] sm:$0xff]
    %v3997 = vld [vmem:[#allocation8 + $0x590] sm:$0xff]
    %v3998 = vld [vmem:[#allocation8 + $0x598] sm:$0xff]
    %v3999 = vld [vmem:[#allocation8 + $0x5a0] sm:$0xff]
    %v4000 = vld [vmem:[#allocation8 + $0x5a8] sm:$0xff]
    %v4001 = vld [vmem:[#allocation8 + $0x5b0] sm:$0xff]
    %v4002 = vld [vmem:[#allocation8 + $0x5b8] sm:$0xff]
    %v4003 = vld [vmem:[#allocation8 + $0x5c0] sm:$0xff]
    %v4004 = vld [vmem:[#allocation8 + $0x5c8] sm:$0xff]
    %v4005 = vld [vmem:[#allocation8 + $0x5d0] sm:$0xff]
    %v4006 = vld [vmem:[#allocation8 + $0x5d8] sm:$0xff]
    %v4007 = vld [vmem:[#allocation8 + $0x5e0] sm:$0xff]
    %v4008 = vld [vmem:[#allocation8 + $0x5e8] sm:$0xff]
    %v4009 = vld [vmem:[#allocation8 + $0x5f0] sm:$0xff]
    %v4010 = vld [vmem:[#allocation8 + $0x5f8] sm:$0xff]
    %v4011 = vld [vmem:[#allocation8 + $0x600] sm:$0xff]
    %v4012 = vld [vmem:[#allocation8 + $0x608] sm:$0xff]
    %v4013 = vld [vmem:[#allocation8 + $0x610] sm:$0xff]
    %v4014 = vld [vmem:[#allocation8 + $0x618] sm:$0xff]
    %v4015 = vld [vmem:[#allocation8 + $0x620] sm:$0xff]
    %v4016 = vld [vmem:[#allocation8 + $0x628] sm:$0xff]
    %v4017 = vld [vmem:[#allocation8 + $0x630] sm:$0xff]
    %v4018 = vld [vmem:[#allocation8 + $0x638] sm:$0xff]
    %v4019 = vld [vmem:[#allocation8 + $0x640] sm:$0xff]
    %v4020 = vld [vmem:[#allocation8 + $0x648] sm:$0xff]
    %v4021 = vld [vmem:[#allocation8 + $0x650] sm:$0xff]
    %v4022 = vld [vmem:[#allocation8 + $0x658] sm:$0xff]
    %v4023 = vld [vmem:[#allocation8 + $0x660] sm:$0xff]
    %v4024 = vld [vmem:[#allocation8 + $0x668] sm:$0xff]
    %v4025 = vld [vmem:[#allocation8 + $0x670] sm:$0xff]
    %v4026 = vld [vmem:[#allocation8 + $0x678] sm:$0xff]
    %v4027 = vld [vmem:[#allocation8 + $0x680] sm:$0xff]
    %v4028 = vld [vmem:[#allocation8 + $0x688] sm:$0xff]
    %v4029 = vld [vmem:[#allocation8 + $0x690] sm:$0xff]
    %v4030 = vld [vmem:[#allocation8 + $0x698] sm:$0xff]
    %v4031 = vld [vmem:[#allocation8 + $0x6a0] sm:$0xff]
    %v4032 = vld [vmem:[#allocation8 + $0x6a8] sm:$0xff]
    %v4033 = vld [vmem:[#allocation8 + $0x6b0] sm:$0xff]
    %v4034 = vld [vmem:[#allocation8 + $0x6b8] sm:$0xff]
    %v4035 = vld [vmem:[#allocation8 + $0x6c0] sm:$0xff]
    %v4036 = vld [vmem:[#allocation8 + $0x6c8] sm:$0xff]
    %v4037 = vld [vmem:[#allocation8 + $0x6d0] sm:$0xff]
    %v4038 = vld [vmem:[#allocation8 + $0x6d8] sm:$0xff]
    %v4039 = vld [vmem:[#allocation8 + $0x6e0] sm:$0xff]
    %v4040 = vld [vmem:[#allocation8 + $0x6e8] sm:$0xff]
    %v4041 = vld [vmem:[#allocation8 + $0x6f0] sm:$0xff]
    %v4042 = vld [vmem:[#allocation8 + $0x6f8] sm:$0xff]
    %v4043 = vld [vmem:[#allocation8 + $0x700] sm:$0xff]
    %v4044 = vld [vmem:[#allocation8 + $0x708] sm:$0xff]
    %v4045 = vld [vmem:[#allocation8 + $0x710] sm:$0xff]
    %v4046 = vld [vmem:[#allocation8 + $0x718] sm:$0xff]
    %v4047 = vld [vmem:[#allocation8 + $0x720] sm:$0xff]
    %v4048 = vld [vmem:[#allocation8 + $0x728] sm:$0xff]
    %v4049 = vld [vmem:[#allocation8 + $0x730] sm:$0xff]
    %v4050 = vld [vmem:[#allocation8 + $0x738] sm:$0xff]
    %v4051 = vld [vmem:[#allocation8 + $0x740] sm:$0xff]
    %v4052 = vld [vmem:[#allocation8 + $0x748] sm:$0xff]
    %v4053 = vld [vmem:[#allocation8 + $0x750] sm:$0xff]
    %v4054 = vld [vmem:[#allocation8 + $0x758] sm:$0xff]
    %v4055 = vld [vmem:[#allocation8 + $0x760] sm:$0xff]
    %v4056 = vld [vmem:[#allocation8 + $0x768] sm:$0xff]
    %v4057 = vld [vmem:[#allocation8 + $0x770] sm:$0xff]
    %v4058 = vld [vmem:[#allocation8 + $0x778] sm:$0xff]
    %v4059 = vld [vmem:[#allocation8 + $0x780] sm:$0xff]
    %v4060 = vld [vmem:[#allocation8 + $0x788] sm:$0xff]
    %v4061 = vld [vmem:[#allocation8 + $0x790] sm:$0xff]
    %v4062 = vld [vmem:[#allocation8 + $0x798] sm:$0xff]
    %v4063 = vld [vmem:[#allocation8 + $0x7a0] sm:$0xff]
    %v4064 = vld [vmem:[#allocation8 + $0x7a8] sm:$0xff]
    %v4065 = vld [vmem:[#allocation8 + $0x7b0] sm:$0xff]
    %v4066 = vld [vmem:[#allocation8 + $0x7b8] sm:$0xff]
    %v4067 = vld [vmem:[#allocation8 + $0x7c0] sm:$0xff]
    %v4068 = vld [vmem:[#allocation8 + $0x7c8] sm:$0xff]
    %v4069 = vld [vmem:[#allocation8 + $0x7d0] sm:$0xff]
    %v4070 = vld [vmem:[#allocation8 + $0x7d8] sm:$0xff]
    %v4071 = vld [vmem:[#allocation8 + $0x7e0] sm:$0xff]
    %v4072 = vld [vmem:[#allocation8 + $0x7e8] sm:$0xff]
    %v4073 = vld [vmem:[#allocation8 + $0x7f0] sm:$0xff]
    %v4074 = vld [vmem:[#allocation8 + $0x7f8] sm:$0xff]
    %v4075 = vunpack.c.l.s8.bf16 %v3819
    %v4076 = vunpack.c.l.s8.bf16 %v3820
    %v4077 = vunpack.c.l.s8.bf16 %v3821
    %v4078 = vunpack.c.l.s8.bf16 %v3822
    %v4079 = vunpack.c.l.s8.bf16 %v3823
    %v4080 = vunpack.c.l.s8.bf16 %v3824
    %v4081 = vunpack.c.l.s8.bf16 %v3825
    %v4082 = vunpack.c.l.s8.bf16 %v3826
    %v4083 = vunpack.c.h.s8.bf16 %v3819
    %v4084 = vunpack.c.h.s8.bf16 %v3820
    %v4085 = vunpack.c.h.s8.bf16 %v3821
    %v4086 = vunpack.c.h.s8.bf16 %v3822
    %v4087 = vunpack.c.h.s8.bf16 %v3823
    %v4088 = vunpack.c.h.s8.bf16 %v3824
    %v4089 = vunpack.c.h.s8.bf16 %v3825
    %v4090 = vunpack.c.h.s8.bf16 %v3826
    %v4091 = vunpack.c.l.s8.bf16 %v3827
    %v4092 = vunpack.c.l.s8.bf16 %v3828
    %v4093 = vunpack.c.l.s8.bf16 %v3829
    %v4094 = vunpack.c.l.s8.bf16 %v3830
    %v4095 = vunpack.c.l.s8.bf16 %v3831
    %v4096 = vunpack.c.l.s8.bf16 %v3832
    %v4097 = vunpack.c.l.s8.bf16 %v3833
    %v4098 = vunpack.c.l.s8.bf16 %v3834
    %v4099 = vunpack.c.h.s8.bf16 %v3827
    %v4100 = vunpack.c.h.s8.bf16 %v3828
    %v4101 = vunpack.c.h.s8.bf16 %v3829
    %v4102 = vunpack.c.h.s8.bf16 %v3830
    %v4103 = vunpack.c.h.s8.bf16 %v3831
    %v4104 = vunpack.c.h.s8.bf16 %v3832
    %v4105 = vunpack.c.h.s8.bf16 %v3833
    %v4106 = vunpack.c.h.s8.bf16 %v3834
    %v4107 = vunpack.c.l.s8.bf16 %v3835
    %v4108 = vunpack.c.l.s8.bf16 %v3836
    %v4109 = vunpack.c.l.s8.bf16 %v3837
    %v4110 = vunpack.c.l.s8.bf16 %v3838
    %v4111 = vunpack.c.l.s8.bf16 %v3839
    %v4112 = vunpack.c.l.s8.bf16 %v3840
    %v4113 = vunpack.c.l.s8.bf16 %v3841
    %v4114 = vunpack.c.l.s8.bf16 %v3842
    %v4115 = vunpack.c.h.s8.bf16 %v3835
    %v4116 = vunpack.c.h.s8.bf16 %v3836
    %v4117 = vunpack.c.h.s8.bf16 %v3837
    %v4118 = vunpack.c.h.s8.bf16 %v3838
    %v4119 = vunpack.c.h.s8.bf16 %v3839
    %v4120 = vunpack.c.h.s8.bf16 %v3840
    %v4121 = vunpack.c.h.s8.bf16 %v3841
    %v4122 = vunpack.c.h.s8.bf16 %v3842
    %v4123 = vunpack.c.l.s8.bf16 %v3843
    %v4124 = vunpack.c.l.s8.bf16 %v3844
    %v4125 = vunpack.c.l.s8.bf16 %v3845
    %v4126 = vunpack.c.l.s8.bf16 %v3846
    %v4127 = vunpack.c.l.s8.bf16 %v3847
    %v4128 = vunpack.c.l.s8.bf16 %v3848
    %v4129 = vunpack.c.l.s8.bf16 %v3849
    %v4130 = vunpack.c.l.s8.bf16 %v3850
    %v4131 = vunpack.c.h.s8.bf16 %v3843
    %v4132 = vunpack.c.h.s8.bf16 %v3844
    %v4133 = vunpack.c.h.s8.bf16 %v3845
    %v4134 = vunpack.c.h.s8.bf16 %v3846
    %v4135 = vunpack.c.h.s8.bf16 %v3847
    %v4136 = vunpack.c.h.s8.bf16 %v3848
    %v4137 = vunpack.c.h.s8.bf16 %v3849
    %v4138 = vunpack.c.h.s8.bf16 %v3850
    %v4139 = vunpack.c.l.s8.bf16 %v3851
    %v4140 = vunpack.c.l.s8.bf16 %v3852
    %v4141 = vunpack.c.l.s8.bf16 %v3853
    %v4142 = vunpack.c.l.s8.bf16 %v3854
    %v4143 = vunpack.c.l.s8.bf16 %v3855
    %v4144 = vunpack.c.l.s8.bf16 %v3856
    %v4145 = vunpack.c.l.s8.bf16 %v3857
    %v4146 = vunpack.c.l.s8.bf16 %v3858
    %v4147 = vunpack.c.h.s8.bf16 %v3851
    %v4148 = vunpack.c.h.s8.bf16 %v3852
    %v4149 = vunpack.c.h.s8.bf16 %v3853
    %v4150 = vunpack.c.h.s8.bf16 %v3854
    %v4151 = vunpack.c.h.s8.bf16 %v3855
    %v4152 = vunpack.c.h.s8.bf16 %v3856
    %v4153 = vunpack.c.h.s8.bf16 %v3857
    %v4154 = vunpack.c.h.s8.bf16 %v3858
    %v4155 = vunpack.c.l.s8.bf16 %v3859
    %v4156 = vunpack.c.l.s8.bf16 %v3860
    %v4157 = vunpack.c.l.s8.bf16 %v3861
    %v4158 = vunpack.c.l.s8.bf16 %v3862
    %v4159 = vunpack.c.l.s8.bf16 %v3863
    %v4160 = vunpack.c.l.s8.bf16 %v3864
    %v4161 = vunpack.c.l.s8.bf16 %v3865
    %v4162 = vunpack.c.l.s8.bf16 %v3866
    %v4163 = vunpack.c.h.s8.bf16 %v3859
    %v4164 = vunpack.c.h.s8.bf16 %v3860
    %v4165 = vunpack.c.h.s8.bf16 %v3861
    %v4166 = vunpack.c.h.s8.bf16 %v3862
    %v4167 = vunpack.c.h.s8.bf16 %v3863
    %v4168 = vunpack.c.h.s8.bf16 %v3864
    %v4169 = vunpack.c.h.s8.bf16 %v3865
    %v4170 = vunpack.c.h.s8.bf16 %v3866
    %v4171 = vunpack.c.l.s8.bf16 %v3867
    %v4172 = vunpack.c.l.s8.bf16 %v3868
    %v4173 = vunpack.c.l.s8.bf16 %v3869
    %v4174 = vunpack.c.l.s8.bf16 %v3870
    %v4175 = vunpack.c.l.s8.bf16 %v3871
    %v4176 = vunpack.c.l.s8.bf16 %v3872
    %v4177 = vunpack.c.l.s8.bf16 %v3873
    %v4178 = vunpack.c.l.s8.bf16 %v3874
    %v4179 = vunpack.c.h.s8.bf16 %v3867
    %v4180 = vunpack.c.h.s8.bf16 %v3868
    %v4181 = vunpack.c.h.s8.bf16 %v3869
    %v4182 = vunpack.c.h.s8.bf16 %v3870
    %v4183 = vunpack.c.h.s8.bf16 %v3871
    %v4184 = vunpack.c.h.s8.bf16 %v3872
    %v4185 = vunpack.c.h.s8.bf16 %v3873
    %v4186 = vunpack.c.h.s8.bf16 %v3874
    %v4187 = vunpack.c.l.s8.bf16 %v3875
    %v4188 = vunpack.c.l.s8.bf16 %v3876
    %v4189 = vunpack.c.l.s8.bf16 %v3877
    %v4190 = vunpack.c.l.s8.bf16 %v3878
    %v4191 = vunpack.c.l.s8.bf16 %v3879
    %v4192 = vunpack.c.l.s8.bf16 %v3880
    %v4193 = vunpack.c.l.s8.bf16 %v3881
    %v4194 = vunpack.c.l.s8.bf16 %v3882
    %v4195 = vunpack.c.h.s8.bf16 %v3875
    %v4196 = vunpack.c.h.s8.bf16 %v3876
    %v4197 = vunpack.c.h.s8.bf16 %v3877
    %v4198 = vunpack.c.h.s8.bf16 %v3878
    %v4199 = vunpack.c.h.s8.bf16 %v3879
    %v4200 = vunpack.c.h.s8.bf16 %v3880
    %v4201 = vunpack.c.h.s8.bf16 %v3881
    %v4202 = vunpack.c.h.s8.bf16 %v3882
    %v4203 = vunpack.c.l.s8.bf16 %v3883
    %v4204 = vunpack.c.l.s8.bf16 %v3884
    %v4205 = vunpack.c.l.s8.bf16 %v3885
    %v4206 = vunpack.c.l.s8.bf16 %v3886
    %v4207 = vunpack.c.l.s8.bf16 %v3887
    %v4208 = vunpack.c.l.s8.bf16 %v3888
    %v4209 = vunpack.c.l.s8.bf16 %v3889
    %v4210 = vunpack.c.l.s8.bf16 %v3890
    %v4211 = vunpack.c.h.s8.bf16 %v3883
    %v4212 = vunpack.c.h.s8.bf16 %v3884
    %v4213 = vunpack.c.h.s8.bf16 %v3885
    %v4214 = vunpack.c.h.s8.bf16 %v3886
    %v4215 = vunpack.c.h.s8.bf16 %v3887
    %v4216 = vunpack.c.h.s8.bf16 %v3888
    %v4217 = vunpack.c.h.s8.bf16 %v3889
    %v4218 = vunpack.c.h.s8.bf16 %v3890
    %v4219 = vunpack.c.l.s8.bf16 %v3891
    %v4220 = vunpack.c.l.s8.bf16 %v3892
    %v4221 = vunpack.c.l.s8.bf16 %v3893
    %v4222 = vunpack.c.l.s8.bf16 %v3894
    %v4223 = vunpack.c.l.s8.bf16 %v3895
    %v4224 = vunpack.c.l.s8.bf16 %v3896
    %v4225 = vunpack.c.l.s8.bf16 %v3897
    %v4226 = vunpack.c.l.s8.bf16 %v3898
    %v4227 = vunpack.c.h.s8.bf16 %v3891
    %v4228 = vunpack.c.h.s8.bf16 %v3892
    %v4229 = vunpack.c.h.s8.bf16 %v3893
    %v4230 = vunpack.c.h.s8.bf16 %v3894
    %v4231 = vunpack.c.h.s8.bf16 %v3895
    %v4232 = vunpack.c.h.s8.bf16 %v3896
    %v4233 = vunpack.c.h.s8.bf16 %v3897
    %v4234 = vunpack.c.h.s8.bf16 %v3898
    %v4235 = vunpack.c.l.s8.bf16 %v3899
    %v4236 = vunpack.c.l.s8.bf16 %v3900
    %v4237 = vunpack.c.l.s8.bf16 %v3901
    %v4238 = vunpack.c.l.s8.bf16 %v3902
    %v4239 = vunpack.c.l.s8.bf16 %v3903
    %v4240 = vunpack.c.l.s8.bf16 %v3904
    %v4241 = vunpack.c.l.s8.bf16 %v3905
    %v4242 = vunpack.c.l.s8.bf16 %v3906
    %v4243 = vunpack.c.h.s8.bf16 %v3899
    %v4244 = vunpack.c.h.s8.bf16 %v3900
    %v4245 = vunpack.c.h.s8.bf16 %v3901
    %v4246 = vunpack.c.h.s8.bf16 %v3902
    %v4247 = vunpack.c.h.s8.bf16 %v3903
    %v4248 = vunpack.c.h.s8.bf16 %v3904
    %v4249 = vunpack.c.h.s8.bf16 %v3905
    %v4250 = vunpack.c.h.s8.bf16 %v3906
    %v4251 = vunpack.c.l.s8.bf16 %v3907
    %v4252 = vunpack.c.l.s8.bf16 %v3908
    %v4253 = vunpack.c.l.s8.bf16 %v3909
    %v4254 = vunpack.c.l.s8.bf16 %v3910
    %v4255 = vunpack.c.l.s8.bf16 %v3911
    %v4256 = vunpack.c.l.s8.bf16 %v3912
    %v4257 = vunpack.c.l.s8.bf16 %v3913
    %v4258 = vunpack.c.l.s8.bf16 %v3914
    %v4259 = vunpack.c.h.s8.bf16 %v3907
    %v4260 = vunpack.c.h.s8.bf16 %v3908
    %v4261 = vunpack.c.h.s8.bf16 %v3909
    %v4262 = vunpack.c.h.s8.bf16 %v3910
    %v4263 = vunpack.c.h.s8.bf16 %v3911
    %v4264 = vunpack.c.h.s8.bf16 %v3912
    %v4265 = vunpack.c.h.s8.bf16 %v3913
    %v4266 = vunpack.c.h.s8.bf16 %v3914
    %v4267 = vunpack.c.l.s8.bf16 %v3915
    %v4268 = vunpack.c.l.s8.bf16 %v3916
    %v4269 = vunpack.c.l.s8.bf16 %v3917
    %v4270 = vunpack.c.l.s8.bf16 %v3918
    %v4271 = vunpack.c.l.s8.bf16 %v3919
    %v4272 = vunpack.c.l.s8.bf16 %v3920
    %v4273 = vunpack.c.l.s8.bf16 %v3921
    %v4274 = vunpack.c.l.s8.bf16 %v3922
    %v4275 = vunpack.c.h.s8.bf16 %v3915
    %v4276 = vunpack.c.h.s8.bf16 %v3916
    %v4277 = vunpack.c.h.s8.bf16 %v3917
    %v4278 = vunpack.c.h.s8.bf16 %v3918
    %v4279 = vunpack.c.h.s8.bf16 %v3919
    %v4280 = vunpack.c.h.s8.bf16 %v3920
    %v4281 = vunpack.c.h.s8.bf16 %v3921
    %v4282 = vunpack.c.h.s8.bf16 %v3922
    %v4283 = vunpack.c.l.s8.bf16 %v3923
    %v4284 = vunpack.c.l.s8.bf16 %v3924
    %v4285 = vunpack.c.l.s8.bf16 %v3925
    %v4286 = vunpack.c.l.s8.bf16 %v3926
    %v4287 = vunpack.c.l.s8.bf16 %v3927
    %v4288 = vunpack.c.l.s8.bf16 %v3928
    %v4289 = vunpack.c.l.s8.bf16 %v3929
    %v4290 = vunpack.c.l.s8.bf16 %v3930
    %v4291 = vunpack.c.h.s8.bf16 %v3923
    %v4292 = vunpack.c.h.s8.bf16 %v3924
    %v4293 = vunpack.c.h.s8.bf16 %v3925
    %v4294 = vunpack.c.h.s8.bf16 %v3926
    %v4295 = vunpack.c.h.s8.bf16 %v3927
    %v4296 = vunpack.c.h.s8.bf16 %v3928
    %v4297 = vunpack.c.h.s8.bf16 %v3929
    %v4298 = vunpack.c.h.s8.bf16 %v3930
    %v4299 = vunpack.c.l.s8.bf16 %v3931
    %v4300 = vunpack.c.l.s8.bf16 %v3932
    %v4301 = vunpack.c.l.s8.bf16 %v3933
    %v4302 = vunpack.c.l.s8.bf16 %v3934
    %v4303 = vunpack.c.l.s8.bf16 %v3935
    %v4304 = vunpack.c.l.s8.bf16 %v3936
    %v4305 = vunpack.c.l.s8.bf16 %v3937
    %v4306 = vunpack.c.l.s8.bf16 %v3938
    %v4307 = vunpack.c.h.s8.bf16 %v3931
    %v4308 = vunpack.c.h.s8.bf16 %v3932
    %v4309 = vunpack.c.h.s8.bf16 %v3933
    %v4310 = vunpack.c.h.s8.bf16 %v3934
    %v4311 = vunpack.c.h.s8.bf16 %v3935
    %v4312 = vunpack.c.h.s8.bf16 %v3936
    %v4313 = vunpack.c.h.s8.bf16 %v3937
    %v4314 = vunpack.c.h.s8.bf16 %v3938
    %v4315 = vunpack.c.l.s8.bf16 %v3939
    %v4316 = vunpack.c.l.s8.bf16 %v3940
    %v4317 = vunpack.c.l.s8.bf16 %v3941
    %v4318 = vunpack.c.l.s8.bf16 %v3942
    %v4319 = vunpack.c.l.s8.bf16 %v3943
    %v4320 = vunpack.c.l.s8.bf16 %v3944
    %v4321 = vunpack.c.l.s8.bf16 %v3945
    %v4322 = vunpack.c.l.s8.bf16 %v3946
    %v4323 = vunpack.c.h.s8.bf16 %v3939
    %v4324 = vunpack.c.h.s8.bf16 %v3940
    %v4325 = vunpack.c.h.s8.bf16 %v3941
    %v4326 = vunpack.c.h.s8.bf16 %v3942
    %v4327 = vunpack.c.h.s8.bf16 %v3943
    %v4328 = vunpack.c.h.s8.bf16 %v3944
    %v4329 = vunpack.c.h.s8.bf16 %v3945
    %v4330 = vunpack.c.h.s8.bf16 %v3946
    %v4331 = vunpack.c.l.s8.bf16 %v3947
    %v4332 = vunpack.c.l.s8.bf16 %v3948
    %v4333 = vunpack.c.l.s8.bf16 %v3949
    %v4334 = vunpack.c.l.s8.bf16 %v3950
    %v4335 = vunpack.c.l.s8.bf16 %v3951
    %v4336 = vunpack.c.l.s8.bf16 %v3952
    %v4337 = vunpack.c.l.s8.bf16 %v3953
    %v4338 = vunpack.c.l.s8.bf16 %v3954
    %v4339 = vunpack.c.h.s8.bf16 %v3947
    %v4340 = vunpack.c.h.s8.bf16 %v3948
    %v4341 = vunpack.c.h.s8.bf16 %v3949
    %v4342 = vunpack.c.h.s8.bf16 %v3950
    %v4343 = vunpack.c.h.s8.bf16 %v3951
    %v4344 = vunpack.c.h.s8.bf16 %v3952
    %v4345 = vunpack.c.h.s8.bf16 %v3953
    %v4346 = vunpack.c.h.s8.bf16 %v3954
    %v4347 = vunpack.c.l.s8.bf16 %v3955
    %v4348 = vunpack.c.l.s8.bf16 %v3956
    %v4349 = vunpack.c.l.s8.bf16 %v3957
    %v4350 = vunpack.c.l.s8.bf16 %v3958
    %v4351 = vunpack.c.l.s8.bf16 %v3959
    %v4352 = vunpack.c.l.s8.bf16 %v3960
    %v4353 = vunpack.c.l.s8.bf16 %v3961
    %v4354 = vunpack.c.l.s8.bf16 %v3962
    %v4355 = vunpack.c.h.s8.bf16 %v3955
    %v4356 = vunpack.c.h.s8.bf16 %v3956
    %v4357 = vunpack.c.h.s8.bf16 %v3957
    %v4358 = vunpack.c.h.s8.bf16 %v3958
    %v4359 = vunpack.c.h.s8.bf16 %v3959
    %v4360 = vunpack.c.h.s8.bf16 %v3960
    %v4361 = vunpack.c.h.s8.bf16 %v3961
    %v4362 = vunpack.c.h.s8.bf16 %v3962
    %v4363 = vunpack.c.l.s8.bf16 %v3963
    %v4364 = vunpack.c.l.s8.bf16 %v3964
    %v4365 = vunpack.c.l.s8.bf16 %v3965
    %v4366 = vunpack.c.l.s8.bf16 %v3966
    %v4367 = vunpack.c.l.s8.bf16 %v3967
    %v4368 = vunpack.c.l.s8.bf16 %v3968
    %v4369 = vunpack.c.l.s8.bf16 %v3969
    %v4370 = vunpack.c.l.s8.bf16 %v3970
    %v4371 = vunpack.c.h.s8.bf16 %v3963
    %v4372 = vunpack.c.h.s8.bf16 %v3964
    %v4373 = vunpack.c.h.s8.bf16 %v3965
    %v4374 = vunpack.c.h.s8.bf16 %v3966
    %v4375 = vunpack.c.h.s8.bf16 %v3967
    %v4376 = vunpack.c.h.s8.bf16 %v3968
    %v4377 = vunpack.c.h.s8.bf16 %v3969
    %v4378 = vunpack.c.h.s8.bf16 %v3970
    %v4379 = vunpack.c.l.s8.bf16 %v3971
    %v4380 = vunpack.c.l.s8.bf16 %v3972
    %v4381 = vunpack.c.l.s8.bf16 %v3973
    %v4382 = vunpack.c.l.s8.bf16 %v3974
    %v4383 = vunpack.c.l.s8.bf16 %v3975
    %v4384 = vunpack.c.l.s8.bf16 %v3976
    %v4385 = vunpack.c.l.s8.bf16 %v3977
    %v4386 = vunpack.c.l.s8.bf16 %v3978
    %v4387 = vunpack.c.h.s8.bf16 %v3971
    %v4388 = vunpack.c.h.s8.bf16 %v3972
    %v4389 = vunpack.c.h.s8.bf16 %v3973
    %v4390 = vunpack.c.h.s8.bf16 %v3974
    %v4391 = vunpack.c.h.s8.bf16 %v3975
    %v4392 = vunpack.c.h.s8.bf16 %v3976
    %v4393 = vunpack.c.h.s8.bf16 %v3977
    %v4394 = vunpack.c.h.s8.bf16 %v3978
    %v4395 = vunpack.c.l.s8.bf16 %v3979
    %v4396 = vunpack.c.l.s8.bf16 %v3980
    %v4397 = vunpack.c.l.s8.bf16 %v3981
    %v4398 = vunpack.c.l.s8.bf16 %v3982
    %v4399 = vunpack.c.l.s8.bf16 %v3983
    %v4400 = vunpack.c.l.s8.bf16 %v3984
    %v4401 = vunpack.c.l.s8.bf16 %v3985
    %v4402 = vunpack.c.l.s8.bf16 %v3986
    %v4403 = vunpack.c.h.s8.bf16 %v3979
    %v4404 = vunpack.c.h.s8.bf16 %v3980
    %v4405 = vunpack.c.h.s8.bf16 %v3981
    %v4406 = vunpack.c.h.s8.bf16 %v3982
    %v4407 = vunpack.c.h.s8.bf16 %v3983
    %v4408 = vunpack.c.h.s8.bf16 %v3984
    %v4409 = vunpack.c.h.s8.bf16 %v3985
    %v4410 = vunpack.c.h.s8.bf16 %v3986
    %v4411 = vunpack.c.l.s8.bf16 %v3987
    %v4412 = vunpack.c.l.s8.bf16 %v3988
    %v4413 = vunpack.c.l.s8.bf16 %v3989
    %v4414 = vunpack.c.l.s8.bf16 %v3990
    %v4415 = vunpack.c.l.s8.bf16 %v3991
    %v4416 = vunpack.c.l.s8.bf16 %v3992
    %v4417 = vunpack.c.l.s8.bf16 %v3993
    %v4418 = vunpack.c.l.s8.bf16 %v3994
    %v4419 = vunpack.c.h.s8.bf16 %v3987
    %v4420 = vunpack.c.h.s8.bf16 %v3988
    %v4421 = vunpack.c.h.s8.bf16 %v3989
    %v4422 = vunpack.c.h.s8.bf16 %v3990
    %v4423 = vunpack.c.h.s8.bf16 %v3991
    %v4424 = vunpack.c.h.s8.bf16 %v3992
    %v4425 = vunpack.c.h.s8.bf16 %v3993
    %v4426 = vunpack.c.h.s8.bf16 %v3994
    %v4427 = vunpack.c.l.s8.bf16 %v3995
    %v4428 = vunpack.c.l.s8.bf16 %v3996
    %v4429 = vunpack.c.l.s8.bf16 %v3997
    %v4430 = vunpack.c.l.s8.bf16 %v3998
    %v4431 = vunpack.c.l.s8.bf16 %v3999
    %v4432 = vunpack.c.l.s8.bf16 %v4000
    %v4433 = vunpack.c.l.s8.bf16 %v4001
    %v4434 = vunpack.c.l.s8.bf16 %v4002
    %v4435 = vunpack.c.h.s8.bf16 %v3995
    %v4436 = vunpack.c.h.s8.bf16 %v3996
    %v4437 = vunpack.c.h.s8.bf16 %v3997
    %v4438 = vunpack.c.h.s8.bf16 %v3998
    %v4439 = vunpack.c.h.s8.bf16 %v3999
    %v4440 = vunpack.c.h.s8.bf16 %v4000
    %v4441 = vunpack.c.h.s8.bf16 %v4001
    %v4442 = vunpack.c.h.s8.bf16 %v4002
    %v4443 = vunpack.c.l.s8.bf16 %v4003
    %v4444 = vunpack.c.l.s8.bf16 %v4004
    %v4445 = vunpack.c.l.s8.bf16 %v4005
    %v4446 = vunpack.c.l.s8.bf16 %v4006
    %v4447 = vunpack.c.l.s8.bf16 %v4007
    %v4448 = vunpack.c.l.s8.bf16 %v4008
    %v4449 = vunpack.c.l.s8.bf16 %v4009
    %v4450 = vunpack.c.l.s8.bf16 %v4010
    %v4451 = vunpack.c.h.s8.bf16 %v4003
    %v4452 = vunpack.c.h.s8.bf16 %v4004
    %v4453 = vunpack.c.h.s8.bf16 %v4005
    %v4454 = vunpack.c.h.s8.bf16 %v4006
    %v4455 = vunpack.c.h.s8.bf16 %v4007
    %v4456 = vunpack.c.h.s8.bf16 %v4008
    %v4457 = vunpack.c.h.s8.bf16 %v4009
    %v4458 = vunpack.c.h.s8.bf16 %v4010
    %v4459 = vunpack.c.l.s8.bf16 %v4011
    %v4460 = vunpack.c.l.s8.bf16 %v4012
    %v4461 = vunpack.c.l.s8.bf16 %v4013
    %v4462 = vunpack.c.l.s8.bf16 %v4014
    %v4463 = vunpack.c.l.s8.bf16 %v4015
    %v4464 = vunpack.c.l.s8.bf16 %v4016
    %v4465 = vunpack.c.l.s8.bf16 %v4017
    %v4466 = vunpack.c.l.s8.bf16 %v4018
    %v4467 = vunpack.c.h.s8.bf16 %v4011
    %v4468 = vunpack.c.h.s8.bf16 %v4012
    %v4469 = vunpack.c.h.s8.bf16 %v4013
    %v4470 = vunpack.c.h.s8.bf16 %v4014
    %v4471 = vunpack.c.h.s8.bf16 %v4015
    %v4472 = vunpack.c.h.s8.bf16 %v4016
    %v4473 = vunpack.c.h.s8.bf16 %v4017
    %v4474 = vunpack.c.h.s8.bf16 %v4018
    %v4475 = vunpack.c.l.s8.bf16 %v4019
    %v4476 = vunpack.c.l.s8.bf16 %v4020
    %v4477 = vunpack.c.l.s8.bf16 %v4021
    %v4478 = vunpack.c.l.s8.bf16 %v4022
    %v4479 = vunpack.c.l.s8.bf16 %v4023
    %v4480 = vunpack.c.l.s8.bf16 %v4024
    %v4481 = vunpack.c.l.s8.bf16 %v4025
    %v4482 = vunpack.c.l.s8.bf16 %v4026
    %v4483 = vunpack.c.h.s8.bf16 %v4019
    %v4484 = vunpack.c.h.s8.bf16 %v4020
    %v4485 = vunpack.c.h.s8.bf16 %v4021
    %v4486 = vunpack.c.h.s8.bf16 %v4022
    %v4487 = vunpack.c.h.s8.bf16 %v4023
    %v4488 = vunpack.c.h.s8.bf16 %v4024
    %v4489 = vunpack.c.h.s8.bf16 %v4025
    %v4490 = vunpack.c.h.s8.bf16 %v4026
    %v4491 = vunpack.c.l.s8.bf16 %v4027
    %v4492 = vunpack.c.l.s8.bf16 %v4028
    %v4493 = vunpack.c.l.s8.bf16 %v4029
    %v4494 = vunpack.c.l.s8.bf16 %v4030
    %v4495 = vunpack.c.l.s8.bf16 %v4031
    %v4496 = vunpack.c.l.s8.bf16 %v4032
    %v4497 = vunpack.c.l.s8.bf16 %v4033
    %v4498 = vunpack.c.l.s8.bf16 %v4034
    %v4499 = vunpack.c.h.s8.bf16 %v4027
    %v4500 = vunpack.c.h.s8.bf16 %v4028
    %v4501 = vunpack.c.h.s8.bf16 %v4029
    %v4502 = vunpack.c.h.s8.bf16 %v4030
    %v4503 = vunpack.c.h.s8.bf16 %v4031
    %v4504 = vunpack.c.h.s8.bf16 %v4032
    %v4505 = vunpack.c.h.s8.bf16 %v4033
    %v4506 = vunpack.c.h.s8.bf16 %v4034
    %v4507 = vunpack.c.l.s8.bf16 %v4035
    %v4508 = vunpack.c.l.s8.bf16 %v4036
    %v4509 = vunpack.c.l.s8.bf16 %v4037
    %v4510 = vunpack.c.l.s8.bf16 %v4038
    %v4511 = vunpack.c.l.s8.bf16 %v4039
    %v4512 = vunpack.c.l.s8.bf16 %v4040
    %v4513 = vunpack.c.l.s8.bf16 %v4041
    %v4514 = vunpack.c.l.s8.bf16 %v4042
    %v4515 = vunpack.c.h.s8.bf16 %v4035
    %v4516 = vunpack.c.h.s8.bf16 %v4036
    %v4517 = vunpack.c.h.s8.bf16 %v4037
    %v4518 = vunpack.c.h.s8.bf16 %v4038
    %v4519 = vunpack.c.h.s8.bf16 %v4039
    %v4520 = vunpack.c.h.s8.bf16 %v4040
    %v4521 = vunpack.c.h.s8.bf16 %v4041
    %v4522 = vunpack.c.h.s8.bf16 %v4042
    %v4523 = vunpack.c.l.s8.bf16 %v4043
    %v4524 = vunpack.c.l.s8.bf16 %v4044
    %v4525 = vunpack.c.l.s8.bf16 %v4045
    %v4526 = vunpack.c.l.s8.bf16 %v4046
    %v4527 = vunpack.c.l.s8.bf16 %v4047
    %v4528 = vunpack.c.l.s8.bf16 %v4048
    %v4529 = vunpack.c.l.s8.bf16 %v4049
    %v4530 = vunpack.c.l.s8.bf16 %v4050
    %v4531 = vunpack.c.h.s8.bf16 %v4043
    %v4532 = vunpack.c.h.s8.bf16 %v4044
    %v4533 = vunpack.c.h.s8.bf16 %v4045
    %v4534 = vunpack.c.h.s8.bf16 %v4046
    %v4535 = vunpack.c.h.s8.bf16 %v4047
    %v4536 = vunpack.c.h.s8.bf16 %v4048
    %v4537 = vunpack.c.h.s8.bf16 %v4049
    %v4538 = vunpack.c.h.s8.bf16 %v4050
    %v4539 = vunpack.c.l.s8.bf16 %v4051
    %v4540 = vunpack.c.l.s8.bf16 %v4052
    %v4541 = vunpack.c.l.s8.bf16 %v4053
    %v4542 = vunpack.c.l.s8.bf16 %v4054
    %v4543 = vunpack.c.l.s8.bf16 %v4055
    %v4544 = vunpack.c.l.s8.bf16 %v4056
    %v4545 = vunpack.c.l.s8.bf16 %v4057
    %v4546 = vunpack.c.l.s8.bf16 %v4058
    %v4547 = vunpack.c.h.s8.bf16 %v4051
    %v4548 = vunpack.c.h.s8.bf16 %v4052
    %v4549 = vunpack.c.h.s8.bf16 %v4053
    %v4550 = vunpack.c.h.s8.bf16 %v4054
    %v4551 = vunpack.c.h.s8.bf16 %v4055
    %v4552 = vunpack.c.h.s8.bf16 %v4056
    %v4553 = vunpack.c.h.s8.bf16 %v4057
    %v4554 = vunpack.c.h.s8.bf16 %v4058
    %v4555 = vunpack.c.l.s8.bf16 %v4059
    %v4556 = vunpack.c.l.s8.bf16 %v4060
    %v4557 = vunpack.c.l.s8.bf16 %v4061
    %v4558 = vunpack.c.l.s8.bf16 %v4062
    %v4559 = vunpack.c.l.s8.bf16 %v4063
    %v4560 = vunpack.c.l.s8.bf16 %v4064
    %v4561 = vunpack.c.l.s8.bf16 %v4065
    %v4562 = vunpack.c.l.s8.bf16 %v4066
    %v4563 = vunpack.c.h.s8.bf16 %v4059
    %v4564 = vunpack.c.h.s8.bf16 %v4060
    %v4565 = vunpack.c.h.s8.bf16 %v4061
    %v4566 = vunpack.c.h.s8.bf16 %v4062
    %v4567 = vunpack.c.h.s8.bf16 %v4063
    %v4568 = vunpack.c.h.s8.bf16 %v4064
    %v4569 = vunpack.c.h.s8.bf16 %v4065
    %v4570 = vunpack.c.h.s8.bf16 %v4066
    %v4571 = vunpack.c.l.s8.bf16 %v4067
    %v4572 = vunpack.c.l.s8.bf16 %v4068
    %v4573 = vunpack.c.l.s8.bf16 %v4069
    %v4574 = vunpack.c.l.s8.bf16 %v4070
    %v4575 = vunpack.c.l.s8.bf16 %v4071
    %v4576 = vunpack.c.l.s8.bf16 %v4072
    %v4577 = vunpack.c.l.s8.bf16 %v4073
    %v4578 = vunpack.c.l.s8.bf16 %v4074
    %v4579 = vunpack.c.h.s8.bf16 %v4067
    %v4580 = vunpack.c.h.s8.bf16 %v4068
    %v4581 = vunpack.c.h.s8.bf16 %v4069
    %v4582 = vunpack.c.h.s8.bf16 %v4070
    %v4583 = vunpack.c.h.s8.bf16 %v4071
    %v4584 = vunpack.c.h.s8.bf16 %v4072
    %v4585 = vunpack.c.h.s8.bf16 %v4073
    %v4586 = vunpack.c.h.s8.bf16 %v4074
    %v4587 = vpack.c.bf16 %v3811, %v3803
    %v4588 = vpack.c.bf16 %v3812, %v3804
    %v4589 = vpack.c.bf16 %v3813, %v3805
    %v4590 = vpack.c.bf16 %v3814, %v3806
    %v4591 = vpack.c.bf16 %v3815, %v3807
    %v4592 = vpack.c.bf16 %v3816, %v3808
    %v4593 = vpack.c.bf16 %v3817, %v3809
    %v4594 = vpack.c.bf16 %v3818, %v3810
    %4595 = vmatprep.subr.bf16.mxu0 %v4076
    %4596 = vmatpush1.bf16.msra.mxu0 %v4075
    %4597 = vmatprep.subr.bf16.mxu0 %v4084
    %4598 = vmatpush1.bf16.msra.mxu0 %v4083
    %4599 = vmatprep.subr.bf16.mxu0 %v4092
    %4600 = vmatpush1.bf16.msra.mxu0 %v4091
    %4601 = vmatprep.subr.bf16.mxu0 %v4100
    %4602 = vmatpush1.bf16.msra.mxu0 %v4099
    %4603 = vmatprep.subr.bf16.mxu0 %v4108
    %4604 = vmatpush1.bf16.msra.mxu0 %v4107
    %4605 = vmatprep.subr.bf16.mxu0 %v4116
    %4606 = vmatpush1.bf16.msra.mxu0 %v4115
    %4607 = vmatprep.subr.bf16.mxu0 %v4124
    %4608 = vmatpush1.bf16.msra.mxu0 %v4123
    %4609 = vmatprep.subr.bf16.mxu0 %v4132
    %4610 = vmatpush1.bf16.msra.mxu0 %v4131
    %4611 = vmatprep.subr.bf16.mxu0 %v4140
    %4612 = vmatpush1.bf16.msra.mxu0 %v4139
    %4613 = vmatprep.subr.bf16.mxu0 %v4148
    %4614 = vmatpush1.bf16.msra.mxu0 %v4147
    %4615 = vmatprep.subr.bf16.mxu0 %v4156
    %4616 = vmatpush1.bf16.msra.mxu0 %v4155
    %4617 = vmatprep.subr.bf16.mxu0 %v4164
    %4618 = vmatpush1.bf16.msra.mxu0 %v4163
    %4619 = vmatprep.subr.bf16.mxu0 %v4172
    %4620 = vmatpush1.bf16.msra.mxu0 %v4171
    %4621 = vmatprep.subr.bf16.mxu0 %v4180
    %4622 = vmatpush1.bf16.msra.mxu0 %v4179
    %4623 = vmatprep.subr.bf16.mxu0 %v4188
    %4624 = vmatpush1.bf16.msra.mxu0 %v4187
    %4625 = vmatprep.subr.bf16.mxu0 %v4196
    %4626 = vmatpush1.bf16.msra.mxu0 %v4195
    %4627 = vmatprep.mubr.bf16.mxu0 %v4588
    %4628 = vmatmul.mubr.bf16.gmra.mrb[0].mxu0 %v4587
    %v4629 = vpop.f32.mrb[0].mxu0
    %v4630 = vadd.f32 0.0, %v4629
    %v4631 = vpop.f32.mrb[0].mxu0
    %v4632 = vadd.f32 0.0, %v4631
    %v4633 = vpop.f32.mrb[0].mxu0
    %v4634 = vadd.f32 0.0, %v4633
    %v4635 = vpop.f32.mrb[0].mxu0
    %v4636 = vadd.f32 0.0, %v4635
    %4637 = vdwg.mxu0
    %4638 = vmatprep.subr.bf16.mxu0 %v4204
    %4639 = vmatpush1.bf16.msra.mxu0 %v4203
    %4640 = vmatprep.subr.bf16.mxu0 %v4212
    %4641 = vmatpush1.bf16.msra.mxu0 %v4211
    %4642 = vmatprep.subr.bf16.mxu0 %v4220
    %4643 = vmatpush1.bf16.msra.mxu0 %v4219
    %4644 = vmatprep.subr.bf16.mxu0 %v4228
    %4645 = vmatpush1.bf16.msra.mxu0 %v4227
    %4646 = vmatprep.subr.bf16.mxu0 %v4236
    %4647 = vmatpush1.bf16.msra.mxu0 %v4235
    %4648 = vmatprep.subr.bf16.mxu0 %v4244
    %4649 = vmatpush1.bf16.msra.mxu0 %v4243
    %4650 = vmatprep.subr.bf16.mxu0 %v4252
    %4651 = vmatpush1.bf16.msra.mxu0 %v4251
    %4652 = vmatprep.subr.bf16.mxu0 %v4260
    %4653 = vmatpush1.bf16.msra.mxu0 %v4259
    %4654 = vmatprep.subr.bf16.mxu0 %v4268
    %4655 = vmatpush1.bf16.msra.mxu0 %v4267
    %4656 = vmatprep.subr.bf16.mxu0 %v4276
    %4657 = vmatpush1.bf16.msra.mxu0 %v4275
    %4658 = vmatprep.subr.bf16.mxu0 %v4284
    %4659 = vmatpush1.bf16.msra.mxu0 %v4283
    %4660 = vmatprep.subr.bf16.mxu0 %v4292
    %4661 = vmatpush1.bf16.msra.mxu0 %v4291
    %4662 = vmatprep.subr.bf16.mxu0 %v4300
    %4663 = vmatpush1.bf16.msra.mxu0 %v4299
    %4664 = vmatprep.subr.bf16.mxu0 %v4308
    %4665 = vmatpush1.bf16.msra.mxu0 %v4307
    %4666 = vmatprep.subr.bf16.mxu0 %v4316
    %4667 = vmatpush1.bf16.msra.mxu0 %v4315
    %4668 = vmatprep.subr.bf16.mxu0 %v4324
    %4669 = vmatpush1.bf16.msra.mxu0 %v4323
    %4670 = vmatprep.mubr.bf16.mxu0 %v4590
    %4671 = vmatmul.mubr.bf16.gmra.mrb[0].mxu0 %v4589
    %v4672 = vpop.f32.mrb[0].mxu0
    %v4673 = vadd.f32 %v4630, %v4672
    %v4674 = vpop.f32.mrb[0].mxu0
    %v4675 = vadd.f32 %v4632, %v4674
    %v4676 = vpop.f32.mrb[0].mxu0
    %v4677 = vadd.f32 %v4634, %v4676
    %v4678 = vpop.f32.mrb[0].mxu0
    %v4679 = vadd.f32 %v4636, %v4678
    %4680 = vdwg.mxu0
    %4681 = vmatprep.subr.bf16.mxu0 %v4332
    %4682 = vmatpush1.bf16.msra.mxu0 %v4331
    %4683 = vmatprep.subr.bf16.mxu0 %v4340
    %4684 = vmatpush1.bf16.msra.mxu0 %v4339
    %4685 = vmatprep.subr.bf16.mxu0 %v4348
    %4686 = vmatpush1.bf16.msra.mxu0 %v4347
    %4687 = vmatprep.subr.bf16.mxu0 %v4356
    %4688 = vmatpush1.bf16.msra.mxu0 %v4355
    %4689 = vmatprep.subr.bf16.mxu0 %v4364
    %4690 = vmatpush1.bf16.msra.mxu0 %v4363
    %4691 = vmatprep.subr.bf16.mxu0 %v4372
    %4692 = vmatpush1.bf16.msra.mxu0 %v4371
    %4693 = vmatprep.subr.bf16.mxu0 %v4380
    %4694 = vmatpush1.bf16.msra.mxu0 %v4379
    %4695 = vmatprep.subr.bf16.mxu0 %v4388
    %4696 = vmatpush1.bf16.msra.mxu0 %v4387
    %4697 = vmatprep.subr.bf16.mxu0 %v4396
    %4698 = vmatpush1.bf16.msra.mxu0 %v4395
    %4699 = vmatprep.subr.bf16.mxu0 %v4404
    %4700 = vmatpush1.bf16.msra.mxu0 %v4403
    %4701 = vmatprep.subr.bf16.mxu0 %v4412
    %4702 = vmatpush1.bf16.msra.mxu0 %v4411
    %4703 = vmatprep.subr.bf16.mxu0 %v4420
    %4704 = vmatpush1.bf16.msra.mxu0 %v4419
    %4705 = vmatprep.subr.bf16.mxu0 %v4428
    %4706 = vmatpush1.bf16.msra.mxu0 %v4427
    %4707 = vmatprep.subr.bf16.mxu0 %v4436
    %4708 = vmatpush1.bf16.msra.mxu0 %v4435
    %4709 = vmatprep.subr.bf16.mxu0 %v4444
    %4710 = vmatpush1.bf16.msra.mxu0 %v4443
    %4711 = vmatprep.subr.bf16.mxu0 %v4452
    %4712 = vmatpush1.bf16.msra.mxu0 %v4451
    %4713 = vmatprep.mubr.bf16.mxu0 %v4592
    %4714 = vmatmul.mubr.bf16.gmra.mrb[0].mxu0 %v4591
    %v4715 = vpop.f32.mrb[0].mxu0
    %v4716 = vadd.f32 %v4673, %v4715
    %v4717 = vpop.f32.mrb[0].mxu0
    %v4718 = vadd.f32 %v4675, %v4717
    %v4719 = vpop.f32.mrb[0].mxu0
    %v4720 = vadd.f32 %v4677, %v4719
    %v4721 = vpop.f32.mrb[0].mxu0
    %v4722 = vadd.f32 %v4679, %v4721
    %4723 = vdwg.mxu0
    %4724 = vmatprep.subr.bf16.mxu0 %v4460
    %4725 = vmatpush1.bf16.msra.mxu0 %v4459
    %4726 = vmatprep.subr.bf16.mxu0 %v4468
    %4727 = vmatpush1.bf16.msra.mxu0 %v4467
    %4728 = vmatprep.subr.bf16.mxu0 %v4476
    %4729 = vmatpush1.bf16.msra.mxu0 %v4475
    %4730 = vmatprep.subr.bf16.mxu0 %v4484
    %4731 = vmatpush1.bf16.msra.mxu0 %v4483
    %4732 = vmatprep.subr.bf16.mxu0 %v4492
    %4733 = vmatpush1.bf16.msra.mxu0 %v4491
    %4734 = vmatprep.subr.bf16.mxu0 %v4500
    %4735 = vmatpush1.bf16.msra.mxu0 %v4499
    %4736 = vmatprep.subr.bf16.mxu0 %v4508
    %4737 = vmatpush1.bf16.msra.mxu0 %v4507
    %4738 = vmatprep.subr.bf16.mxu0 %v4516
    %4739 = vmatpush1.bf16.msra.mxu0 %v4515
    %4740 = vmatprep.subr.bf16.mxu0 %v4524
    %4741 = vmatpush1.bf16.msra.mxu0 %v4523
    %4742 = vmatprep.subr.bf16.mxu0 %v4532
    %4743 = vmatpush1.bf16.msra.mxu0 %v4531
    %4744 = vmatprep.subr.bf16.mxu0 %v4540
    %4745 = vmatpush1.bf16.msra.mxu0 %v4539
    %4746 = vmatprep.subr.bf16.mxu0 %v4548
    %4747 = vmatpush1.bf16.msra.mxu0 %v4547
    %4748 = vmatprep.subr.bf16.mxu0 %v4556
    %4749 = vmatpush1.bf16.msra.mxu0 %v4555
    %4750 = vmatprep.subr.bf16.mxu0 %v4564
    %4751 = vmatpush1.bf16.msra.mxu0 %v4563
    %4752 = vmatprep.subr.bf16.mxu0 %v4572
    %4753 = vmatpush1.bf16.msra.mxu0 %v4571
    %4754 = vmatprep.subr.bf16.mxu0 %v4580
    %4755 = vmatpush1.bf16.msra.mxu0 %v4579
    %4756 = vmatprep.mubr.bf16.mxu0 %v4594
    %4757 = vmatmul.mubr.bf16.gmra.mrb[0].mxu0 %v4593
    %v4758 = vpop.f32.mrb[0].mxu0
    %v4759 = vadd.f32 %v4716, %v4758
    %v4760 = vpop.f32.mrb[0].mxu0
    %v4761 = vadd.f32 %v4718, %v4760
    %v4762 = vpop.f32.mrb[0].mxu0
    %v4763 = vadd.f32 %v4720, %v4762
    %v4764 = vpop.f32.mrb[0].mxu0
    %v4765 = vadd.f32 %v4722, %v4764
    %4766 = vdwg.mxu0
    %4767 = vmatprep.subr.bf16.mxu0 %v4078
    %4768 = vmatpush1.bf16.msra.mxu0 %v4077
    %4769 = vmatprep.subr.bf16.mxu0 %v4086
    %4770 = vmatpush1.bf16.msra.mxu0 %v4085
    %4771 = vmatprep.subr.bf16.mxu0 %v4094
    %4772 = vmatpush1.bf16.msra.mxu0 %v4093
    %4773 = vmatprep.subr.bf16.mxu0 %v4102
    %4774 = vmatpush1.bf16.msra.mxu0 %v4101
    %4775 = vmatprep.subr.bf16.mxu0 %v4110
    %4776 = vmatpush1.bf16.msra.mxu0 %v4109
    %4777 = vmatprep.subr.bf16.mxu0 %v4118
    %4778 = vmatpush1.bf16.msra.mxu0 %v4117
    %4779 = vmatprep.subr.bf16.mxu0 %v4126
    %4780 = vmatpush1.bf16.msra.mxu0 %v4125
    %4781 = vmatprep.subr.bf16.mxu0 %v4134
    %4782 = vmatpush1.bf16.msra.mxu0 %v4133
    %4783 = vmatprep.subr.bf16.mxu0 %v4142
    %4784 = vmatpush1.bf16.msra.mxu0 %v4141
    %4785 = vmatprep.subr.bf16.mxu0 %v4150
    %4786 = vmatpush1.bf16.msra.mxu0 %v4149
    %4787 = vmatprep.subr.bf16.mxu0 %v4158
    %4788 = vmatpush1.bf16.msra.mxu0 %v4157
    %4789 = vmatprep.subr.bf16.mxu0 %v4166
    %4790 = vmatpush1.bf16.msra.mxu0 %v4165
    %4791 = vmatprep.subr.bf16.mxu0 %v4174
    %4792 = vmatpush1.bf16.msra.mxu0 %v4173
    %4793 = vmatprep.subr.bf16.mxu0 %v4182
    %4794 = vmatpush1.bf16.msra.mxu0 %v4181
    %4795 = vmatprep.subr.bf16.mxu0 %v4190
    %4796 = vmatpush1.bf16.msra.mxu0 %v4189
    %4797 = vmatprep.subr.bf16.mxu0 %v4198
    %4798 = vmatpush1.bf16.msra.mxu0 %v4197
    %4799 = vmatprep.mubr.bf16.mxu0 %v4588
    %4800 = vmatmul.mubr.bf16.gmra.mrb[0].mxu0 %v4587
    %v4801 = vpop.f32.mrb[0].mxu0
    %v4802 = vadd.f32 0.0, %v4801
    %v4803 = vpop.f32.mrb[0].mxu0
    %v4804 = vadd.f32 0.0, %v4803
    %v4805 = vpop.f32.mrb[0].mxu0
    %v4806 = vadd.f32 0.0, %v4805
    %v4807 = vpop.f32.mrb[0].mxu0
    %v4808 = vadd.f32 0.0, %v4807
    %4809 = vdwg.mxu0
    %4810 = vmatprep.subr.bf16.mxu0 %v4206
    %4811 = vmatpush1.bf16.msra.mxu0 %v4205
    %4812 = vmatprep.subr.bf16.mxu0 %v4214
    %4813 = vmatpush1.bf16.msra.mxu0 %v4213
    %4814 = vmatprep.subr.bf16.mxu0 %v4222
    %4815 = vmatpush1.bf16.msra.mxu0 %v4221
    %4816 = vmatprep.subr.bf16.mxu0 %v4230
    %4817 = vmatpush1.bf16.msra.mxu0 %v4229
    %4818 = vmatprep.subr.bf16.mxu0 %v4238
    %4819 = vmatpush1.bf16.msra.mxu0 %v4237
    %4820 = vmatprep.subr.bf16.mxu0 %v4246
    %4821 = vmatpush1.bf16.msra.mxu0 %v4245
    %4822 = vmatprep.subr.bf16.mxu0 %v4254
    %4823 = vmatpush1.bf16.msra.mxu0 %v4253
    %4824 = vmatprep.subr.bf16.mxu0 %v4262
    %4825 = vmatpush1.bf16.msra.mxu0 %v4261
    %4826 = vmatprep.subr.bf16.mxu0 %v4270
    %4827 = vmatpush1.bf16.msra.mxu0 %v4269
    %4828 = vmatprep.subr.bf16.mxu0 %v4278
    %4829 = vmatpush1.bf16.msra.mxu0 %v4277
    %4830 = vmatprep.subr.bf16.mxu0 %v4286
    %4831 = vmatpush1.bf16.msra.mxu0 %v4285
    %4832 = vmatprep.subr.bf16.mxu0 %v4294
    %4833 = vmatpush1.bf16.msra.mxu0 %v4293
    %4834 = vmatprep.subr.bf16.mxu0 %v4302
    %4835 = vmatpush1.bf16.msra.mxu0 %v4301
    %4836 = vmatprep.subr.bf16.mxu0 %v4310
    %4837 = vmatpush1.bf16.msra.mxu0 %v4309
    %4838 = vmatprep.subr.bf16.mxu0 %v4318
    %4839 = vmatpush1.bf16.msra.mxu0 %v4317
    %4840 = vmatprep.subr.bf16.mxu0 %v4326
    %4841 = vmatpush1.bf16.msra.mxu0 %v4325
    %4842 = vmatprep.mubr.bf16.mxu0 %v4590
    %4843 = vmatmul.mubr.bf16.gmra.mrb[0].mxu0 %v4589
    %v4844 = vpop.f32.mrb[0].mxu0
    %v4845 = vadd.f32 %v4802, %v4844
    %v4846 = vpop.f32.mrb[0].mxu0
    %v4847 = vadd.f32 %v4804, %v4846
    %v4848 = vpop.f32.mrb[0].mxu0
    %v4849 = vadd.f32 %v4806, %v4848
    %v4850 = vpop.f32.mrb[0].mxu0
    %v4851 = vadd.f32 %v4808, %v4850
    %4852 = vdwg.mxu0
    %4853 = vmatprep.subr.bf16.mxu0 %v4334
    %4854 = vmatpush1.bf16.msra.mxu0 %v4333
    %4855 = vmatprep.subr.bf16.mxu0 %v4342
    %4856 = vmatpush1.bf16.msra.mxu0 %v4341
    %4857 = vmatprep.subr.bf16.mxu0 %v4350
    %4858 = vmatpush1.bf16.msra.mxu0 %v4349
    %4859 = vmatprep.subr.bf16.mxu0 %v4358
    %4860 = vmatpush1.bf16.msra.mxu0 %v4357
    %4861 = vmatprep.subr.bf16.mxu0 %v4366
    %4862 = vmatpush1.bf16.msra.mxu0 %v4365
    %4863 = vmatprep.subr.bf16.mxu0 %v4374
    %4864 = vmatpush1.bf16.msra.mxu0 %v4373
    %4865 = vmatprep.subr.bf16.mxu0 %v4382
    %4866 = vmatpush1.bf16.msra.mxu0 %v4381
    %4867 = vmatprep.subr.bf16.mxu0 %v4390
    %4868 = vmatpush1.bf16.msra.mxu0 %v4389
    %4869 = vmatprep.subr.bf16.mxu0 %v4398
    %4870 = vmatpush1.bf16.msra.mxu0 %v4397
    %4871 = vmatprep.subr.bf16.mxu0 %v4406
    %4872 = vmatpush1.bf16.msra.mxu0 %v4405
    %4873 = vmatprep.subr.bf16.mxu0 %v4414
    %4874 = vmatpush1.bf16.msra.mxu0 %v4413
    %4875 = vmatprep.subr.bf16.mxu0 %v4422
    %4876 = vmatpush1.bf16.msra.mxu0 %v4421
    %4877 = vmatprep.subr.bf16.mxu0 %v4430
    %4878 = vmatpush1.bf16.msra.mxu0 %v4429
    %4879 = vmatprep.subr.bf16.mxu0 %v4438
    %4880 = vmatpush1.bf16.msra.mxu0 %v4437
    %4881 = vmatprep.subr.bf16.mxu0 %v4446
    %4882 = vmatpush1.bf16.msra.mxu0 %v4445
    %4883 = vmatprep.subr.bf16.mxu0 %v4454
    %4884 = vmatpush1.bf16.msra.mxu0 %v4453
    %4885 = vmatprep.mubr.bf16.mxu0 %v4592
    %4886 = vmatmul.mubr.bf16.gmra.mrb[0].mxu0 %v4591
    %v4887 = vpop.f32.mrb[0].mxu0
    %v4888 = vadd.f32 %v4845, %v4887
    %v4889 = vpop.f32.mrb[0].mxu0
    %v4890 = vadd.f32 %v4847, %v4889
    %v4891 = vpop.f32.mrb[0].mxu0
    %v4892 = vadd.f32 %v4849, %v4891
    %v4893 = vpop.f32.mrb[0].mxu0
    %v4894 = vadd.f32 %v4851, %v4893
    %4895 = vdwg.mxu0
    %4896 = vmatprep.subr.bf16.mxu0 %v4462
    %4897 = vmatpush1.bf16.msra.mxu0 %v4461
    %4898 = vmatprep.subr.bf16.mxu0 %v4470
    %4899 = vmatpush1.bf16.msra.mxu0 %v4469
    %4900 = vmatprep.subr.bf16.mxu0 %v4478
    %4901 = vmatpush1.bf16.msra.mxu0 %v4477
    %4902 = vmatprep.subr.bf16.mxu0 %v4486
    %4903 = vmatpush1.bf16.msra.mxu0 %v4485
    %4904 = vmatprep.subr.bf16.mxu0 %v4494
    %4905 = vmatpush1.bf16.msra.mxu0 %v4493
    %4906 = vmatprep.subr.bf16.mxu0 %v4502
    %4907 = vmatpush1.bf16.msra.mxu0 %v4501
    %4908 = vmatprep.subr.bf16.mxu0 %v4510
    %4909 = vmatpush1.bf16.msra.mxu0 %v4509
    %4910 = vmatprep.subr.bf16.mxu0 %v4518
    %4911 = vmatpush1.bf16.msra.mxu0 %v4517
    %4912 = vmatprep.subr.bf16.mxu0 %v4526
    %4913 = vmatpush1.bf16.msra.mxu0 %v4525
    %4914 = vmatprep.subr.bf16.mxu0 %v4534
    %4915 = vmatpush1.bf16.msra.mxu0 %v4533
    %4916 = vmatprep.subr.bf16.mxu0 %v4542
    %4917 = vmatpush1.bf16.msra.mxu0 %v4541
    %4918 = vmatprep.subr.bf16.mxu0 %v4550
    %4919 = vmatpush1.bf16.msra.mxu0 %v4549
    %4920 = vmatprep.subr.bf16.mxu0 %v4558
    %4921 = vmatpush1.bf16.msra.mxu0 %v4557
    %4922 = vmatprep.subr.bf16.mxu0 %v4566
    %4923 = vmatpush1.bf16.msra.mxu0 %v4565
    %4924 = vmatprep.subr.bf16.mxu0 %v4574
    %4925 = vmatpush1.bf16.msra.mxu0 %v4573
    %4926 = vmatprep.subr.bf16.mxu0 %v4582
    %4927 = vmatpush1.bf16.msra.mxu0 %v4581
    %4928 = vmatprep.mubr.bf16.mxu0 %v4594
    %4929 = vmatmul.mubr.bf16.gmra.mrb[0].mxu0 %v4593
    %v4930 = vpop.f32.mrb[0].mxu0
    %v4931 = vadd.f32 %v4888, %v4930
    %v4932 = vpop.f32.mrb[0].mxu0
    %v4933 = vadd.f32 %v4890, %v4932
    %v4934 = vpop.f32.mrb[0].mxu0
    %v4935 = vadd.f32 %v4892, %v4934
    %v4936 = vpop.f32.mrb[0].mxu0
    %v4937 = vadd.f32 %v4894, %v4936
    %4938 = vdwg.mxu0
    %4939 = vmatprep.subr.bf16.mxu0 %v4080
    %4940 = vmatpush1.bf16.msra.mxu0 %v4079
    %4941 = vmatprep.subr.bf16.mxu0 %v4088
    %4942 = vmatpush1.bf16.msra.mxu0 %v4087
    %4943 = vmatprep.subr.bf16.mxu0 %v4096
    %4944 = vmatpush1.bf16.msra.mxu0 %v4095
    %4945 = vmatprep.subr.bf16.mxu0 %v4104
    %4946 = vmatpush1.bf16.msra.mxu0 %v4103
    %4947 = vmatprep.subr.bf16.mxu0 %v4112
    %4948 = vmatpush1.bf16.msra.mxu0 %v4111
    %4949 = vmatprep.subr.bf16.mxu0 %v4120
    %4950 = vmatpush1.bf16.msra.mxu0 %v4119
    %4951 = vmatprep.subr.bf16.mxu0 %v4128
    %4952 = vmatpush1.bf16.msra.mxu0 %v4127
    %4953 = vmatprep.subr.bf16.mxu0 %v4136
    %4954 = vmatpush1.bf16.msra.mxu0 %v4135
    %4955 = vmatprep.subr.bf16.mxu0 %v4144
    %4956 = vmatpush1.bf16.msra.mxu0 %v4143
    %4957 = vmatprep.subr.bf16.mxu0 %v4152
    %4958 = vmatpush1.bf16.msra.mxu0 %v4151
    %4959 = vmatprep.subr.bf16.mxu0 %v4160
    %4960 = vmatpush1.bf16.msra.mxu0 %v4159
    %4961 = vmatprep.subr.bf16.mxu0 %v4168
    %4962 = vmatpush1.bf16.msra.mxu0 %v4167
    %4963 = vmatprep.subr.bf16.mxu0 %v4176
    %4964 = vmatpush1.bf16.msra.mxu0 %v4175
    %4965 = vmatprep.subr.bf16.mxu0 %v4184
    %4966 = vmatpush1.bf16.msra.mxu0 %v4183
    %4967 = vmatprep.subr.bf16.mxu0 %v4192
    %4968 = vmatpush1.bf16.msra.mxu0 %v4191
    %4969 = vmatprep.subr.bf16.mxu0 %v4200
    %4970 = vmatpush1.bf16.msra.mxu0 %v4199
    %4971 = vmatprep.mubr.bf16.mxu0 %v4588
    %4972 = vmatmul.mubr.bf16.gmra.mrb[0].mxu0 %v4587
    %v4973 = vpop.f32.mrb[0].mxu0
    %v4974 = vadd.f32 0.0, %v4973
    %v4975 = vpop.f32.mrb[0].mxu0
    %v4976 = vadd.f32 0.0, %v4975
    %v4977 = vpop.f32.mrb[0].mxu0
    %v4978 = vadd.f32 0.0, %v4977
    %v4979 = vpop.f32.mrb[0].mxu0
    %v4980 = vadd.f32 0.0, %v4979
    %4981 = vdwg.mxu0
    %4982 = vmatprep.subr.bf16.mxu0 %v4208
    %4983 = vmatpush1.bf16.msra.mxu0 %v4207
    %4984 = vmatprep.subr.bf16.mxu0 %v4216
    %4985 = vmatpush1.bf16.msra.mxu0 %v4215
    %4986 = vmatprep.subr.bf16.mxu0 %v4224
    %4987 = vmatpush1.bf16.msra.mxu0 %v4223
    %4988 = vmatprep.subr.bf16.mxu0 %v4232
    %4989 = vmatpush1.bf16.msra.mxu0 %v4231
    %4990 = vmatprep.subr.bf16.mxu0 %v4240
    %4991 = vmatpush1.bf16.msra.mxu0 %v4239
    %4992 = vmatprep.subr.bf16.mxu0 %v4248
    %4993 = vmatpush1.bf16.msra.mxu0 %v4247
    %4994 = vmatprep.subr.bf16.mxu0 %v4256
    %4995 = vmatpush1.bf16.msra.mxu0 %v4255
    %4996 = vmatprep.subr.bf16.mxu0 %v4264
    %4997 = vmatpush1.bf16.msra.mxu0 %v4263
    %4998 = vmatprep.subr.bf16.mxu0 %v4272
    %4999 = vmatpush1.bf16.msra.mxu0 %v4271
    %5000 = vmatprep.subr.bf16.mxu0 %v4280
    %5001 = vmatpush1.bf16.msra.mxu0 %v4279
    %5002 = vmatprep.subr.bf16.mxu0 %v4288
    %5003 = vmatpush1.bf16.msra.mxu0 %v4287
    %5004 = vmatprep.subr.bf16.mxu0 %v4296
    %5005 = vmatpush1.bf16.msra.mxu0 %v4295
    %5006 = vmatprep.subr.bf16.mxu0 %v4304
    %5007 = vmatpush1.bf16.msra.mxu0 %v4303
    %5008 = vmatprep.subr.bf16.mxu0 %v4312
    %5009 = vmatpush1.bf16.msra.mxu0 %v4311
    %5010 = vmatprep.subr.bf16.mxu0 %v4320
    %5011 = vmatpush1.bf16.msra.mxu0 %v4319
    %5012 = vmatprep.subr.bf16.mxu0 %v4328
    %5013 = vmatpush1.bf16.msra.mxu0 %v4327
    %5014 = vmatprep.mubr.bf16.mxu0 %v4590
    %5015 = vmatmul.mubr.bf16.gmra.mrb[0].mxu0 %v4589
    %v5016 = vpop.f32.mrb[0].mxu0
    %v5017 = vadd.f32 %v4974, %v5016
    %v5018 = vpop.f32.mrb[0].mxu0
    %v5019 = vadd.f32 %v4976, %v5018
    %v5020 = vpop.f32.mrb[0].mxu0
    %v5021 = vadd.f32 %v4978, %v5020
    %v5022 = vpop.f32.mrb[0].mxu0
    %v5023 = vadd.f32 %v4980, %v5022
    %5024 = vdwg.mxu0
    %5025 = vmatprep.subr.bf16.mxu0 %v4336
    %5026 = vmatpush1.bf16.msra.mxu0 %v4335
    %5027 = vmatprep.subr.bf16.mxu0 %v4344
    %5028 = vmatpush1.bf16.msra.mxu0 %v4343
    %5029 = vmatprep.subr.bf16.mxu0 %v4352
    %5030 = vmatpush1.bf16.msra.mxu0 %v4351
    %5031 = vmatprep.subr.bf16.mxu0 %v4360
    %5032 = vmatpush1.bf16.msra.mxu0 %v4359
    %5033 = vmatprep.subr.bf16.mxu0 %v4368
    %5034 = vmatpush1.bf16.msra.mxu0 %v4367
    %5035 = vmatprep.subr.bf16.mxu0 %v4376
    %5036 = vmatpush1.bf16.msra.mxu0 %v4375
    %5037 = vmatprep.subr.bf16.mxu0 %v4384
    %5038 = vmatpush1.bf16.msra.mxu0 %v4383
    %5039 = vmatprep.subr.bf16.mxu0 %v4392
    %5040 = vmatpush1.bf16.msra.mxu0 %v4391
    %5041 = vmatprep.subr.bf16.mxu0 %v4400
    %5042 = vmatpush1.bf16.msra.mxu0 %v4399
    %5043 = vmatprep.subr.bf16.mxu0 %v4408
    %5044 = vmatpush1.bf16.msra.mxu0 %v4407
    %5045 = vmatprep.subr.bf16.mxu0 %v4416
    %5046 = vmatpush1.bf16.msra.mxu0 %v4415
    %5047 = vmatprep.subr.bf16.mxu0 %v4424
    %5048 = vmatpush1.bf16.msra.mxu0 %v4423
    %5049 = vmatprep.subr.bf16.mxu0 %v4432
    %5050 = vmatpush1.bf16.msra.mxu0 %v4431
    %5051 = vmatprep.subr.bf16.mxu0 %v4440
    %5052 = vmatpush1.bf16.msra.mxu0 %v4439
    %5053 = vmatprep.subr.bf16.mxu0 %v4448
    %5054 = vmatpush1.bf16.msra.mxu0 %v4447
    %5055 = vmatprep.subr.bf16.mxu0 %v4456
    %5056 = vmatpush1.bf16.msra.mxu0 %v4455
    %5057 = vmatprep.mubr.bf16.mxu0 %v4592
    %5058 = vmatmul.mubr.bf16.gmra.mrb[0].mxu0 %v4591
    %v5059 = vpop.f32.mrb[0].mxu0
    %v5060 = vadd.f32 %v5017, %v5059
    %v5061 = vpop.f32.mrb[0].mxu0
    %v5062 = vadd.f32 %v5019, %v5061
    %v5063 = vpop.f32.mrb[0].mxu0
    %v5064 = vadd.f32 %v5021, %v5063
    %v5065 = vpop.f32.mrb[0].mxu0
    %v5066 = vadd.f32 %v5023, %v5065
    %5067 = vdwg.mxu0
    %5068 = vmatprep.subr.bf16.mxu0 %v4464
    %5069 = vmatpush1.bf16.msra.mxu0 %v4463
    %5070 = vmatprep.subr.bf16.mxu0 %v4472
    %5071 = vmatpush1.bf16.msra.mxu0 %v4471
    %5072 = vmatprep.subr.bf16.mxu0 %v4480
    %5073 = vmatpush1.bf16.msra.mxu0 %v4479
    %5074 = vmatprep.subr.bf16.mxu0 %v4488
    %5075 = vmatpush1.bf16.msra.mxu0 %v4487
    %5076 = vmatprep.subr.bf16.mxu0 %v4496
    %5077 = vmatpush1.bf16.msra.mxu0 %v4495
    %5078 = vmatprep.subr.bf16.mxu0 %v4504
    %5079 = vmatpush1.bf16.msra.mxu0 %v4503
    %5080 = vmatprep.subr.bf16.mxu0 %v4512
    %5081 = vmatpush1.bf16.msra.mxu0 %v4511
    %5082 = vmatprep.subr.bf16.mxu0 %v4520
    %5083 = vmatpush1.bf16.msra.mxu0 %v4519
    %5084 = vmatprep.subr.bf16.mxu0 %v4528
    %5085 = vmatpush1.bf16.msra.mxu0 %v4527
    %5086 = vmatprep.subr.bf16.mxu0 %v4536
    %5087 = vmatpush1.bf16.msra.mxu0 %v4535
    %5088 = vmatprep.subr.bf16.mxu0 %v4544
    %5089 = vmatpush1.bf16.msra.mxu0 %v4543
    %5090 = vmatprep.subr.bf16.mxu0 %v4552
    %5091 = vmatpush1.bf16.msra.mxu0 %v4551
    %5092 = vmatprep.subr.bf16.mxu0 %v4560
    %5093 = vmatpush1.bf16.msra.mxu0 %v4559
    %5094 = vmatprep.subr.bf16.mxu0 %v4568
    %5095 = vmatpush1.bf16.msra.mxu0 %v4567
    %5096 = vmatprep.subr.bf16.mxu0 %v4576
    %5097 = vmatpush1.bf16.msra.mxu0 %v4575
    %5098 = vmatprep.subr.bf16.mxu0 %v4584
    %5099 = vmatpush1.bf16.msra.mxu0 %v4583
    %5100 = vmatprep.mubr.bf16.mxu0 %v4594
    %5101 = vmatmul.mubr.bf16.gmra.mrb[0].mxu0 %v4593
    %v5102 = vpop.f32.mrb[0].mxu0
    %v5103 = vadd.f32 %v5060, %v5102
    %v5104 = vpop.f32.mrb[0].mxu0
    %v5105 = vadd.f32 %v5062, %v5104
    %v5106 = vpop.f32.mrb[0].mxu0
    %v5107 = vadd.f32 %v5064, %v5106
    %v5108 = vpop.f32.mrb[0].mxu0
    %v5109 = vadd.f32 %v5066, %v5108
    %5110 = vdwg.mxu0
    %5111 = vmatprep.subr.bf16.mxu0 %v4082
    %5112 = vmatpush1.bf16.msra.mxu0 %v4081
    %5113 = vmatprep.subr.bf16.mxu0 %v4090
    %5114 = vmatpush1.bf16.msra.mxu0 %v4089
    %5115 = vmatprep.subr.bf16.mxu0 %v4098
    %5116 = vmatpush1.bf16.msra.mxu0 %v4097
    %5117 = vmatprep.subr.bf16.mxu0 %v4106
    %5118 = vmatpush1.bf16.msra.mxu0 %v4105
    %5119 = vmatprep.subr.bf16.mxu0 %v4114
    %5120 = vmatpush1.bf16.msra.mxu0 %v4113
    %5121 = vmatprep.subr.bf16.mxu0 %v4122
    %5122 = vmatpush1.bf16.msra.mxu0 %v4121
    %5123 = vmatprep.subr.bf16.mxu0 %v4130
    %5124 = vmatpush1.bf16.msra.mxu0 %v4129
    %5125 = vmatprep.subr.bf16.mxu0 %v4138
    %5126 = vmatpush1.bf16.msra.mxu0 %v4137
    %5127 = vmatprep.subr.bf16.mxu0 %v4146
    %5128 = vmatpush1.bf16.msra.mxu0 %v4145
    %5129 = vmatprep.subr.bf16.mxu0 %v4154
    %5130 = vmatpush1.bf16.msra.mxu0 %v4153
    %5131 = vmatprep.subr.bf16.mxu0 %v4162
    %5132 = vmatpush1.bf16.msra.mxu0 %v4161
    %5133 = vmatprep.subr.bf16.mxu0 %v4170
    %5134 = vmatpush1.bf16.msra.mxu0 %v4169
    %5135 = vmatprep.subr.bf16.mxu0 %v4178
    %5136 = vmatpush1.bf16.msra.mxu0 %v4177
    %5137 = vmatprep.subr.bf16.mxu0 %v4186
    %5138 = vmatpush1.bf16.msra.mxu0 %v4185
    %5139 = vmatprep.subr.bf16.mxu0 %v4194
    %5140 = vmatpush1.bf16.msra.mxu0 %v4193
    %5141 = vmatprep.subr.bf16.mxu0 %v4202
    %5142 = vmatpush1.bf16.msra.mxu0 %v4201
    %5143 = vmatprep.mubr.bf16.mxu0 %v4588
    %5144 = vmatmul.mubr.bf16.gmra.mrb[0].mxu0 %v4587
    %v5145 = vpop.f32.mrb[0].mxu0
    %v5146 = vadd.f32 0.0, %v5145
    %v5147 = vpop.f32.mrb[0].mxu0
    %v5148 = vadd.f32 0.0, %v5147
    %v5149 = vpop.f32.mrb[0].mxu0
    %v5150 = vadd.f32 0.0, %v5149
    %v5151 = vpop.f32.mrb[0].mxu0
    %v5152 = vadd.f32 0.0, %v5151
    %5153 = vdwg.mxu0
    %5154 = vmatprep.subr.bf16.mxu0 %v4210
    %5155 = vmatpush1.bf16.msra.mxu0 %v4209
    %5156 = vmatprep.subr.bf16.mxu0 %v4218
    %5157 = vmatpush1.bf16.msra.mxu0 %v4217
    %5158 = vmatprep.subr.bf16.mxu0 %v4226
    %5159 = vmatpush1.bf16.msra.mxu0 %v4225
    %5160 = vmatprep.subr.bf16.mxu0 %v4234
    %5161 = vmatpush1.bf16.msra.mxu0 %v4233
    %5162 = vmatprep.subr.bf16.mxu0 %v4242
    %5163 = vmatpush1.bf16.msra.mxu0 %v4241
    %5164 = vmatprep.subr.bf16.mxu0 %v4250
    %5165 = vmatpush1.bf16.msra.mxu0 %v4249
    %5166 = vmatprep.subr.bf16.mxu0 %v4258
    %5167 = vmatpush1.bf16.msra.mxu0 %v4257
    %5168 = vmatprep.subr.bf16.mxu0 %v4266
    %5169 = vmatpush1.bf16.msra.mxu0 %v4265
    %5170 = vmatprep.subr.bf16.mxu0 %v4274
    %5171 = vmatpush1.bf16.msra.mxu0 %v4273
    %5172 = vmatprep.subr.bf16.mxu0 %v4282
    %5173 = vmatpush1.bf16.msra.mxu0 %v4281
    %5174 = vmatprep.subr.bf16.mxu0 %v4290
    %5175 = vmatpush1.bf16.msra.mxu0 %v4289
    %5176 = vmatprep.subr.bf16.mxu0 %v4298
    %5177 = vmatpush1.bf16.msra.mxu0 %v4297
    %5178 = vmatprep.subr.bf16.mxu0 %v4306
    %5179 = vmatpush1.bf16.msra.mxu0 %v4305
    %5180 = vmatprep.subr.bf16.mxu0 %v4314
    %5181 = vmatpush1.bf16.msra.mxu0 %v4313
    %5182 = vmatprep.subr.bf16.mxu0 %v4322
    %5183 = vmatpush1.bf16.msra.mxu0 %v4321
    %5184 = vmatprep.subr.bf16.mxu0 %v4330
    %5185 = vmatpush1.bf16.msra.mxu0 %v4329
    %5186 = vmatprep.mubr.bf16.mxu0 %v4590
    %5187 = vmatmul.mubr.bf16.gmra.mrb[0].mxu0 %v4589
    %v5188 = vpop.f32.mrb[0].mxu0
    %v5189 = vadd.f32 %v5146, %v5188
    %v5190 = vpop.f32.mrb[0].mxu0
    %v5191 = vadd.f32 %v5148, %v5190
    %v5192 = vpop.f32.mrb[0].mxu0
    %v5193 = vadd.f32 %v5150, %v5192
    %v5194 = vpop.f32.mrb[0].mxu0
    %v5195 = vadd.f32 %v5152, %v5194
    %5196 = vdwg.mxu0
    %5197 = vmatprep.subr.bf16.mxu0 %v4338
    %5198 = vmatpush1.bf16.msra.mxu0 %v4337
    %5199 = vmatprep.subr.bf16.mxu0 %v4346
    %5200 = vmatpush1.bf16.msra.mxu0 %v4345
    %5201 = vmatprep.subr.bf16.mxu0 %v4354
    %5202 = vmatpush1.bf16.msra.mxu0 %v4353
    %5203 = vmatprep.subr.bf16.mxu0 %v4362
    %5204 = vmatpush1.bf16.msra.mxu0 %v4361
    %5205 = vmatprep.subr.bf16.mxu0 %v4370
    %5206 = vmatpush1.bf16.msra.mxu0 %v4369
    %5207 = vmatprep.subr.bf16.mxu0 %v4378
    %5208 = vmatpush1.bf16.msra.mxu0 %v4377
    %5209 = vmatprep.subr.bf16.mxu0 %v4386
    %5210 = vmatpush1.bf16.msra.mxu0 %v4385
    %5211 = vmatprep.subr.bf16.mxu0 %v4394
    %5212 = vmatpush1.bf16.msra.mxu0 %v4393
    %5213 = vmatprep.subr.bf16.mxu0 %v4402
    %5214 = vmatpush1.bf16.msra.mxu0 %v4401
    %5215 = vmatprep.subr.bf16.mxu0 %v4410
    %5216 = vmatpush1.bf16.msra.mxu0 %v4409
    %5217 = vmatprep.subr.bf16.mxu0 %v4418
    %5218 = vmatpush1.bf16.msra.mxu0 %v4417
    %5219 = vmatprep.subr.bf16.mxu0 %v4426
    %5220 = vmatpush1.bf16.msra.mxu0 %v4425
    %5221 = vmatprep.subr.bf16.mxu0 %v4434
    %5222 = vmatpush1.bf16.msra.mxu0 %v4433
    %5223 = vmatprep.subr.bf16.mxu0 %v4442
    %5224 = vmatpush1.bf16.msra.mxu0 %v4441
    %5225 = vmatprep.subr.bf16.mxu0 %v4450
    %5226 = vmatpush1.bf16.msra.mxu0 %v4449
    %5227 = vmatprep.subr.bf16.mxu0 %v4458
    %5228 = vmatpush1.bf16.msra.mxu0 %v4457
    %5229 = vmatprep.mubr.bf16.mxu0 %v4592
    %5230 = vmatmul.mubr.bf16.gmra.mrb[0].mxu0 %v4591
    %v5231 = vpop.f32.mrb[0].mxu0
    %v5232 = vadd.f32 %v5189, %v5231
    %v5233 = vpop.f32.mrb[0].mxu0
    %v5234 = vadd.f32 %v5191, %v5233
    %v5235 = vpop.f32.mrb[0].mxu0
    %v5236 = vadd.f32 %v5193, %v5235
    %v5237 = vpop.f32.mrb[0].mxu0
    %v5238 = vadd.f32 %v5195, %v5237
    %5239 = vdwg.mxu0
    %5240 = vmatprep.subr.bf16.mxu0 %v4466
    %5241 = vmatpush1.bf16.msra.mxu0 %v4465
    %5242 = vmatprep.subr.bf16.mxu0 %v4474
    %5243 = vmatpush1.bf16.msra.mxu0 %v4473
    %5244 = vmatprep.subr.bf16.mxu0 %v4482
    %5245 = vmatpush1.bf16.msra.mxu0 %v4481
    %5246 = vmatprep.subr.bf16.mxu0 %v4490
    %5247 = vmatpush1.bf16.msra.mxu0 %v4489
    %5248 = vmatprep.subr.bf16.mxu0 %v4498
    %5249 = vmatpush1.bf16.msra.mxu0 %v4497
    %5250 = vmatprep.subr.bf16.mxu0 %v4506
    %5251 = vmatpush1.bf16.msra.mxu0 %v4505
    %5252 = vmatprep.subr.bf16.mxu0 %v4514
    %5253 = vmatpush1.bf16.msra.mxu0 %v4513
    %5254 = vmatprep.subr.bf16.mxu0 %v4522
    %5255 = vmatpush1.bf16.msra.mxu0 %v4521
    %5256 = vmatprep.subr.bf16.mxu0 %v4530
    %5257 = vmatpush1.bf16.msra.mxu0 %v4529
    %5258 = vmatprep.subr.bf16.mxu0 %v4538
    %5259 = vmatpush1.bf16.msra.mxu0 %v4537
    %5260 = vmatprep.subr.bf16.mxu0 %v4546
    %5261 = vmatpush1.bf16.msra.mxu0 %v4545
    %5262 = vmatprep.subr.bf16.mxu0 %v4554
    %5263 = vmatpush1.bf16.msra.mxu0 %v4553
    %5264 = vmatprep.subr.bf16.mxu0 %v4562
    %5265 = vmatpush1.bf16.msra.mxu0 %v4561
    %5266 = vmatprep.subr.bf16.mxu0 %v4570
    %5267 = vmatpush1.bf16.msra.mxu0 %v4569
    %5268 = vmatprep.subr.bf16.mxu0 %v4578
    %5269 = vmatpush1.bf16.msra.mxu0 %v4577
    %5270 = vmatprep.subr.bf16.mxu0 %v4586
    %5271 = vmatpush1.bf16.msra.mxu0 %v4585
    %5272 = vmatprep.mubr.bf16.mxu0 %v4594
    %5273 = vmatmul.mubr.bf16.gmra.mrb[0].mxu0 %v4593
    %v5274 = vpop.f32.mrb[0].mxu0
    %v5275 = vadd.f32 %v5232, %v5274
    %v5276 = vpop.f32.mrb[0].mxu0
    %v5277 = vadd.f32 %v5234, %v5276
    %v5278 = vpop.f32.mrb[0].mxu0
    %v5279 = vadd.f32 %v5236, %v5278
    %v5280 = vpop.f32.mrb[0].mxu0
    %v5281 = vadd.f32 %v5238, %v5280
    %5282 = vdwg.mxu0
    %v5284 = vlaneseq
    %v5285 = vshrl.u32 %v5284, 7
    %v5286 = vsub.s32 0, %v5285
    %v5287 = vrot.slane %v100, %v5286
    %v5288 = vlaneseq
    %v5289 = vshrl.u32 %v5288, 7
    %v5290 = vsub.s32 1, %v5289
    %v5291 = vrot.slane %v100, %v5290
    %v5292 = vlaneseq
    %v5293 = vshrl.u32 %v5292, 7
    %v5294 = vsub.s32 2, %v5293
    %v5295 = vrot.slane %v100, %v5294
    %v5296 = vlaneseq
    %v5297 = vshrl.u32 %v5296, 7
    %v5298 = vsub.s32 3, %v5297
    %v5299 = vrot.slane %v100, %v5298
    %v5300 = vlaneseq
    %v5301 = vshrl.u32 %v5300, 7
    %v5302 = vsub.s32 4, %v5301
    %v5303 = vrot.slane %v100, %v5302
    %v5304 = vlaneseq
    %v5305 = vshrl.u32 %v5304, 7
    %v5306 = vsub.s32 5, %v5305
    %v5307 = vrot.slane %v100, %v5306
    %v5308 = vlaneseq
    %v5309 = vshrl.u32 %v5308, 7
    %v5310 = vsub.s32 6, %v5309
    %v5311 = vrot.slane %v100, %v5310
    %v5312 = vlaneseq
    %v5313 = vshrl.u32 %v5312, 7
    %v5314 = vsub.s32 7, %v5313
    %v5315 = vrot.slane %v100, %v5314
    %v5324 = vmul.f32 %v4759, %v5287
    %v5325 = vmul.f32 %v4761, %v5291
    %v5326 = vmul.f32 %v4931, %v5295
    %v5327 = vmul.f32 %v4933, %v5299
    %v5328 = vmul.f32 %v5103, %v5303
    %v5329 = vmul.f32 %v5105, %v5307
    %v5330 = vmul.f32 %v5275, %v5311
    %v5331 = vmul.f32 %v5277, %v5315
    %v5332 = vmul.f32 %v4763, %v5287
    %v5333 = vmul.f32 %v4765, %v5291
    %v5334 = vmul.f32 %v4935, %v5295
    %v5335 = vmul.f32 %v4937, %v5299
    %v5336 = vmul.f32 %v5107, %v5303
    %v5337 = vmul.f32 %v5109, %v5307
    %v5338 = vmul.f32 %v5279, %v5311
    %v5339 = vmul.f32 %v5281, %v5315
    %v5341 = vlaneseq
    %v5342 = vshrl.u32 %v5341, 7
    %v5343 = vsub.s32 0, %v5342
    %v5344 = vrot.slane %v102, %v5343
    %v5345 = vlaneseq
    %v5346 = vshrl.u32 %v5345, 7
    %v5347 = vsub.s32 1, %v5346
    %v5348 = vrot.slane %v102, %v5347
    %v5349 = vlaneseq
    %v5350 = vshrl.u32 %v5349, 7
    %v5351 = vsub.s32 2, %v5350
    %v5352 = vrot.slane %v102, %v5351
    %v5353 = vlaneseq
    %v5354 = vshrl.u32 %v5353, 7
    %v5355 = vsub.s32 3, %v5354
    %v5356 = vrot.slane %v102, %v5355
    %v5357 = vlaneseq
    %v5358 = vshrl.u32 %v5357, 7
    %v5359 = vsub.s32 4, %v5358
    %v5360 = vrot.slane %v102, %v5359
    %v5361 = vlaneseq
    %v5362 = vshrl.u32 %v5361, 7
    %v5363 = vsub.s32 5, %v5362
    %v5364 = vrot.slane %v102, %v5363
    %v5365 = vlaneseq
    %v5366 = vshrl.u32 %v5365, 7
    %v5367 = vsub.s32 6, %v5366
    %v5368 = vrot.slane %v102, %v5367
    %v5369 = vlaneseq
    %v5370 = vshrl.u32 %v5369, 7
    %v5371 = vsub.s32 7, %v5370
    %v5372 = vrot.slane %v102, %v5371
    %v5381 = vadd.f32 %v5324, %v5344
    %v5382 = vadd.f32 %v5325, %v5348
    %v5383 = vadd.f32 %v5326, %v5352
    %v5384 = vadd.f32 %v5327, %v5356
    %v5385 = vadd.f32 %v5328, %v5360
    %v5386 = vadd.f32 %v5329, %v5364
    %v5387 = vadd.f32 %v5330, %v5368
    %v5388 = vadd.f32 %v5331, %v5372
    %v5389 = vadd.f32 %v5332, %v5344
    %v5390 = vadd.f32 %v5333, %v5348
    %v5391 = vadd.f32 %v5334, %v5352
    %v5392 = vadd.f32 %v5335, %v5356
    %v5393 = vadd.f32 %v5336, %v5360
    %v5394 = vadd.f32 %v5337, %v5364
    %v5395 = vadd.f32 %v5338, %v5368
    %v5396 = vadd.f32 %v5339, %v5372
    %v5397 = vmax.f32 %v5381, 0.0
    %v5398 = vmax.f32 %v5382, 0.0
    %v5399 = vmax.f32 %v5383, 0.0
    %v5400 = vmax.f32 %v5384, 0.0
    %v5401 = vmax.f32 %v5385, 0.0
    %v5402 = vmax.f32 %v5386, 0.0
    %v5403 = vmax.f32 %v5387, 0.0
    %v5404 = vmax.f32 %v5388, 0.0
    %v5405 = vmax.f32 %v5389, 0.0
    %v5406 = vmax.f32 %v5390, 0.0
    %v5407 = vmax.f32 %v5391, 0.0
    %v5408 = vmax.f32 %v5392, 0.0
    %v5409 = vmax.f32 %v5393, 0.0
    %v5410 = vmax.f32 %v5394, 0.0
    %v5411 = vmax.f32 %v5395, 0.0
    %v5412 = vmax.f32 %v5396, 0.0
    %v5413 = vpack.c.bf16 %v5405, %v5397
    %v5414 = vpack.c.bf16 %v5406, %v5398
    %v5415 = vpack.c.bf16 %v5407, %v5399
    %v5416 = vpack.c.bf16 %v5408, %v5400
    %v5417 = vpack.c.bf16 %v5409, %v5401
    %v5418 = vpack.c.bf16 %v5410, %v5402
    %v5419 = vpack.c.bf16 %v5411, %v5403
    %v5420 = vpack.c.bf16 %v5412, %v5404
    %v5421 = vld [vmem:[%s4] sm:$0xf]
    %v5422 = vld [vmem:[%s4 + $0x4] sm:$0xf]
    %v5423 = vld [vmem:[%s4 + $0x8] sm:$0xf]
    %v5424 = vld [vmem:[%s4 + $0xc] sm:$0xf]
    %v5425 = vld [vmem:[%s4 + $0x10] sm:$0xf]
    %v5426 = vld [vmem:[%s4 + $0x14] sm:$0xf]
    %v5427 = vld [vmem:[%s4 + $0x18] sm:$0xf]
    %v5428 = vld [vmem:[%s4 + $0x1c] sm:$0xf]
    %v5429 = vld [vmem:[%s4 + $0x20] sm:$0xf]
    %v5430 = vld [vmem:[%s4 + $0x24] sm:$0xf]
    %v5431 = vld [vmem:[%s4 + $0x28] sm:$0xf]
    %v5432 = vld [vmem:[%s4 + $0x2c] sm:$0xf]
    %v5433 = vld [vmem:[%s4 + $0x30] sm:$0xf]
    %v5434 = vld [vmem:[%s4 + $0x34] sm:$0xf]
    %v5435 = vld [vmem:[%s4 + $0x38] sm:$0xf]
    %v5436 = vld [vmem:[%s4 + $0x3c] sm:$0xf]
    %v5437 = vld [vmem:[%s4 + $0x40] sm:$0xf]
    %v5438 = vld [vmem:[%s4 + $0x44] sm:$0xf]
    %v5439 = vld [vmem:[%s4 + $0x48] sm:$0xf]
    %v5440 = vld [vmem:[%s4 + $0x4c] sm:$0xf]
    %v5441 = vld [vmem:[%s4 + $0x50] sm:$0xf]
    %v5442 = vld [vmem:[%s4 + $0x54] sm:$0xf]
    %v5443 = vld [vmem:[%s4 + $0x58] sm:$0xf]
    %v5444 = vld [vmem:[%s4 + $0x5c] sm:$0xf]
    %v5445 = vld [vmem:[%s4 + $0x60] sm:$0xf]
    %v5446 = vld [vmem:[%s4 + $0x64] sm:$0xf]
    %v5447 = vld [vmem:[%s4 + $0x68] sm:$0xf]
    %v5448 = vld [vmem:[%s4 + $0x6c] sm:$0xf]
    %v5449 = vld [vmem:[%s4 + $0x70] sm:$0xf]
    %v5450 = vld [vmem:[%s4 + $0x74] sm:$0xf]
    %v5451 = vld [vmem:[%s4 + $0x78] sm:$0xf]
    %v5452 = vld [vmem:[%s4 + $0x7c] sm:$0xf]
    %v5453 = vld [vmem:[%s4 + $0x80] sm:$0xf]
    %v5454 = vld [vmem:[%s4 + $0x84] sm:$0xf]
    %v5455 = vld [vmem:[%s4 + $0x88] sm:$0xf]
    %v5456 = vld [vmem:[%s4 + $0x8c] sm:$0xf]
    %v5457 = vld [vmem:[%s4 + $0x90] sm:$0xf]
    %v5458 = vld [vmem:[%s4 + $0x94] sm:$0xf]
    %v5459 = vld [vmem:[%s4 + $0x98] sm:$0xf]
    %v5460 = vld [vmem:[%s4 + $0x9c] sm:$0xf]
    %v5461 = vld [vmem:[%s4 + $0xa0] sm:$0xf]
    %v5462 = vld [vmem:[%s4 + $0xa4] sm:$0xf]
    %v5463 = vld [vmem:[%s4 + $0xa8] sm:$0xf]
    %v5464 = vld [vmem:[%s4 + $0xac] sm:$0xf]
    %v5465 = vld [vmem:[%s4 + $0xb0] sm:$0xf]
    %v5466 = vld [vmem:[%s4 + $0xb4] sm:$0xf]
    %v5467 = vld [vmem:[%s4 + $0xb8] sm:$0xf]
    %v5468 = vld [vmem:[%s4 + $0xbc] sm:$0xf]
    %v5469 = vld [vmem:[%s4 + $0xc0] sm:$0xf]
    %v5470 = vld [vmem:[%s4 + $0xc4] sm:$0xf]
    %v5471 = vld [vmem:[%s4 + $0xc8] sm:$0xf]
    %v5472 = vld [vmem:[%s4 + $0xcc] sm:$0xf]
    %v5473 = vld [vmem:[%s4 + $0xd0] sm:$0xf]
    %v5474 = vld [vmem:[%s4 + $0xd4] sm:$0xf]
    %v5475 = vld [vmem:[%s4 + $0xd8] sm:$0xf]
    %v5476 = vld [vmem:[%s4 + $0xdc] sm:$0xf]
    %v5477 = vld [vmem:[%s4 + $0xe0] sm:$0xf]
    %v5478 = vld [vmem:[%s4 + $0xe4] sm:$0xf]
    %v5479 = vld [vmem:[%s4 + $0xe8] sm:$0xf]
    %v5480 = vld [vmem:[%s4 + $0xec] sm:$0xf]
    %v5481 = vld [vmem:[%s4 + $0xf0] sm:$0xf]
    %v5482 = vld [vmem:[%s4 + $0xf4] sm:$0xf]
    %v5483 = vld [vmem:[%s4 + $0xf8] sm:$0xf]
    %v5484 = vld [vmem:[%s4 + $0xfc] sm:$0xf]
    %v5485 = vld [vmem:[%s4 + $0x100] sm:$0xf]
    %v5486 = vld [vmem:[%s4 + $0x104] sm:$0xf]
    %v5487 = vld [vmem:[%s4 + $0x108] sm:$0xf]
    %v5488 = vld [vmem:[%s4 + $0x10c] sm:$0xf]
    %v5489 = vld [vmem:[%s4 + $0x110] sm:$0xf]
    %v5490 = vld [vmem:[%s4 + $0x114] sm:$0xf]
    %v5491 = vld [vmem:[%s4 + $0x118] sm:$0xf]
    %v5492 = vld [vmem:[%s4 + $0x11c] sm:$0xf]
    %v5493 = vld [vmem:[%s4 + $0x120] sm:$0xf]
    %v5494 = vld [vmem:[%s4 + $0x124] sm:$0xf]
    %v5495 = vld [vmem:[%s4 + $0x128] sm:$0xf]
    %v5496 = vld [vmem:[%s4 + $0x12c] sm:$0xf]
    %v5497 = vld [vmem:[%s4 + $0x130] sm:$0xf]
    %v5498 = vld [vmem:[%s4 + $0x134] sm:$0xf]
    %v5499 = vld [vmem:[%s4 + $0x138] sm:$0xf]
    %v5500 = vld [vmem:[%s4 + $0x13c] sm:$0xf]
    %v5501 = vld [vmem:[%s4 + $0x140] sm:$0xf]
    %v5502 = vld [vmem:[%s4 + $0x144] sm:$0xf]
    %v5503 = vld [vmem:[%s4 + $0x148] sm:$0xf]
    %v5504 = vld [vmem:[%s4 + $0x14c] sm:$0xf]
    %v5505 = vld [vmem:[%s4 + $0x150] sm:$0xf]
    %v5506 = vld [vmem:[%s4 + $0x154] sm:$0xf]
    %v5507 = vld [vmem:[%s4 + $0x158] sm:$0xf]
    %v5508 = vld [vmem:[%s4 + $0x15c] sm:$0xf]
    %v5509 = vld [vmem:[%s4 + $0x160] sm:$0xf]
    %v5510 = vld [vmem:[%s4 + $0x164] sm:$0xf]
    %v5511 = vld [vmem:[%s4 + $0x168] sm:$0xf]
    %v5512 = vld [vmem:[%s4 + $0x16c] sm:$0xf]
    %v5513 = vld [vmem:[%s4 + $0x170] sm:$0xf]
    %v5514 = vld [vmem:[%s4 + $0x174] sm:$0xf]
    %v5515 = vld [vmem:[%s4 + $0x178] sm:$0xf]
    %v5516 = vld [vmem:[%s4 + $0x17c] sm:$0xf]
    %v5517 = vld [vmem:[%s4 + $0x180] sm:$0xf]
    %v5518 = vld [vmem:[%s4 + $0x184] sm:$0xf]
    %v5519 = vld [vmem:[%s4 + $0x188] sm:$0xf]
    %v5520 = vld [vmem:[%s4 + $0x18c] sm:$0xf]
    %v5521 = vld [vmem:[%s4 + $0x190] sm:$0xf]
    %v5522 = vld [vmem:[%s4 + $0x194] sm:$0xf]
    %v5523 = vld [vmem:[%s4 + $0x198] sm:$0xf]
    %v5524 = vld [vmem:[%s4 + $0x19c] sm:$0xf]
    %v5525 = vld [vmem:[%s4 + $0x1a0] sm:$0xf]
    %v5526 = vld [vmem:[%s4 + $0x1a4] sm:$0xf]
    %v5527 = vld [vmem:[%s4 + $0x1a8] sm:$0xf]
    %v5528 = vld [vmem:[%s4 + $0x1ac] sm:$0xf]
    %v5529 = vld [vmem:[%s4 + $0x1b0] sm:$0xf]
    %v5530 = vld [vmem:[%s4 + $0x1b4] sm:$0xf]
    %v5531 = vld [vmem:[%s4 + $0x1b8] sm:$0xf]
    %v5532 = vld [vmem:[%s4 + $0x1bc] sm:$0xf]
    %v5533 = vld [vmem:[%s4 + $0x1c0] sm:$0xf]
    %v5534 = vld [vmem:[%s4 + $0x1c4] sm:$0xf]
    %v5535 = vld [vmem:[%s4 + $0x1c8] sm:$0xf]
    %v5536 = vld [vmem:[%s4 + $0x1cc] sm:$0xf]
    %v5537 = vld [vmem:[%s4 + $0x1d0] sm:$0xf]
    %v5538 = vld [vmem:[%s4 + $0x1d4] sm:$0xf]
    %v5539 = vld [vmem:[%s4 + $0x1d8] sm:$0xf]
    %v5540 = vld [vmem:[%s4 + $0x1dc] sm:$0xf]
    %v5541 = vld [vmem:[%s4 + $0x1e0] sm:$0xf]
    %v5542 = vld [vmem:[%s4 + $0x1e4] sm:$0xf]
    %v5543 = vld [vmem:[%s4 + $0x1e8] sm:$0xf]
    %v5544 = vld [vmem:[%s4 + $0x1ec] sm:$0xf]
    %v5545 = vld [vmem:[%s4 + $0x1f0] sm:$0xf]
    %v5546 = vld [vmem:[%s4 + $0x1f4] sm:$0xf]
    %v5547 = vld [vmem:[%s4 + $0x1f8] sm:$0xf]
    %v5548 = vld [vmem:[%s4 + $0x1fc] sm:$0xf]
    %v5549 = vlaneseq
    %v5550 = vshrl.u32 %v5549, 7
    %v5551 = vsub.s32 0, %v5550
    %v5552 = vrot.slane %v103, %v5551
    %v5681 = vunpack.c.l.b16 %v5421
    %v5682 = vunpack.c.l.b16 %v5422
    %v5683 = vunpack.c.l.b16 %v5423
    %v5684 = vunpack.c.l.b16 %v5424
    %v5685 = vunpack.c.l.b16 %v5425
    %v5686 = vunpack.c.l.b16 %v5426
    %v5687 = vunpack.c.l.b16 %v5427
    %v5688 = vunpack.c.l.b16 %v5428
    %v5689 = vunpack.c.l.b16 %v5429
    %v5690 = vunpack.c.l.b16 %v5430
    %v5691 = vunpack.c.l.b16 %v5431
    %v5692 = vunpack.c.l.b16 %v5432
    %v5693 = vunpack.c.l.b16 %v5433
    %v5694 = vunpack.c.l.b16 %v5434
    %v5695 = vunpack.c.l.b16 %v5435
    %v5696 = vunpack.c.l.b16 %v5436
    %v5697 = vunpack.c.l.b16 %v5437
    %v5698 = vunpack.c.l.b16 %v5438
    %v5699 = vunpack.c.l.b16 %v5439
    %v5700 = vunpack.c.l.b16 %v5440
    %v5701 = vunpack.c.l.b16 %v5441
    %v5702 = vunpack.c.l.b16 %v5442
    %v5703 = vunpack.c.l.b16 %v5443
    %v5704 = vunpack.c.l.b16 %v5444
    %v5705 = vunpack.c.l.b16 %v5445
    %v5706 = vunpack.c.l.b16 %v5446
    %v5707 = vunpack.c.l.b16 %v5447
    %v5708 = vunpack.c.l.b16 %v5448
    %v5709 = vunpack.c.l.b16 %v5449
    %v5710 = vunpack.c.l.b16 %v5450
    %v5711 = vunpack.c.l.b16 %v5451
    %v5712 = vunpack.c.l.b16 %v5452
    %v5713 = vunpack.c.l.b16 %v5453
    %v5714 = vunpack.c.l.b16 %v5454
    %v5715 = vunpack.c.l.b16 %v5455
    %v5716 = vunpack.c.l.b16 %v5456
    %v5717 = vunpack.c.l.b16 %v5457
    %v5718 = vunpack.c.l.b16 %v5458
    %v5719 = vunpack.c.l.b16 %v5459
    %v5720 = vunpack.c.l.b16 %v5460
    %v5721 = vunpack.c.l.b16 %v5461
    %v5722 = vunpack.c.l.b16 %v5462
    %v5723 = vunpack.c.l.b16 %v5463
    %v5724 = vunpack.c.l.b16 %v5464
    %v5725 = vunpack.c.l.b16 %v5465
    %v5726 = vunpack.c.l.b16 %v5466
    %v5727 = vunpack.c.l.b16 %v5467
    %v5728 = vunpack.c.l.b16 %v5468
    %v5729 = vunpack.c.l.b16 %v5469
    %v5730 = vunpack.c.l.b16 %v5470
    %v5731 = vunpack.c.l.b16 %v5471
    %v5732 = vunpack.c.l.b16 %v5472
    %v5733 = vunpack.c.l.b16 %v5473
    %v5734 = vunpack.c.l.b16 %v5474
    %v5735 = vunpack.c.l.b16 %v5475
    %v5736 = vunpack.c.l.b16 %v5476
    %v5737 = vunpack.c.l.b16 %v5477
    %v5738 = vunpack.c.l.b16 %v5478
    %v5739 = vunpack.c.l.b16 %v5479
    %v5740 = vunpack.c.l.b16 %v5480
    %v5741 = vunpack.c.l.b16 %v5481
    %v5742 = vunpack.c.l.b16 %v5482
    %v5743 = vunpack.c.l.b16 %v5483
    %v5744 = vunpack.c.l.b16 %v5484
    %v5745 = vunpack.c.l.b16 %v5485
    %v5746 = vunpack.c.l.b16 %v5486
    %v5747 = vunpack.c.l.b16 %v5487
    %v5748 = vunpack.c.l.b16 %v5488
    %v5749 = vunpack.c.l.b16 %v5489
    %v5750 = vunpack.c.l.b16 %v5490
    %v5751 = vunpack.c.l.b16 %v5491
    %v5752 = vunpack.c.l.b16 %v5492
    %v5753 = vunpack.c.l.b16 %v5493
    %v5754 = vunpack.c.l.b16 %v5494
    %v5755 = vunpack.c.l.b16 %v5495
    %v5756 = vunpack.c.l.b16 %v5496
    %v5757 = vunpack.c.l.b16 %v5497
    %v5758 = vunpack.c.l.b16 %v5498
    %v5759 = vunpack.c.l.b16 %v5499
    %v5760 = vunpack.c.l.b16 %v5500
    %v5761 = vunpack.c.l.b16 %v5501
    %v5762 = vunpack.c.l.b16 %v5502
    %v5763 = vunpack.c.l.b16 %v5503
    %v5764 = vunpack.c.l.b16 %v5504
    %v5765 = vunpack.c.l.b16 %v5505
    %v5766 = vunpack.c.l.b16 %v5506
    %v5767 = vunpack.c.l.b16 %v5507
    %v5768 = vunpack.c.l.b16 %v5508
    %v5769 = vunpack.c.l.b16 %v5509
    %v5770 = vunpack.c.l.b16 %v5510
    %v5771 = vunpack.c.l.b16 %v5511
    %v5772 = vunpack.c.l.b16 %v5512
    %v5773 = vunpack.c.l.b16 %v5513
    %v5774 = vunpack.c.l.b16 %v5514
    %v5775 = vunpack.c.l.b16 %v5515
    %v5776 = vunpack.c.l.b16 %v5516
    %v5777 = vunpack.c.l.b16 %v5517
    %v5778 = vunpack.c.l.b16 %v5518
    %v5779 = vunpack.c.l.b16 %v5519
    %v5780 = vunpack.c.l.b16 %v5520
    %v5781 = vunpack.c.l.b16 %v5521
    %v5782 = vunpack.c.l.b16 %v5522
    %v5783 = vunpack.c.l.b16 %v5523
    %v5784 = vunpack.c.l.b16 %v5524
    %v5785 = vunpack.c.l.b16 %v5525
    %v5786 = vunpack.c.l.b16 %v5526
    %v5787 = vunpack.c.l.b16 %v5527
    %v5788 = vunpack.c.l.b16 %v5528
    %v5789 = vunpack.c.l.b16 %v5529
    %v5790 = vunpack.c.l.b16 %v5530
    %v5791 = vunpack.c.l.b16 %v5531
    %v5792 = vunpack.c.l.b16 %v5532
    %v5793 = vunpack.c.l.b16 %v5533
    %v5794 = vunpack.c.l.b16 %v5534
    %v5795 = vunpack.c.l.b16 %v5535
    %v5796 = vunpack.c.l.b16 %v5536
    %v5797 = vunpack.c.l.b16 %v5537
    %v5798 = vunpack.c.l.b16 %v5538
    %v5799 = vunpack.c.l.b16 %v5539
    %v5800 = vunpack.c.l.b16 %v5540
    %v5801 = vunpack.c.l.b16 %v5541
    %v5802 = vunpack.c.l.b16 %v5542
    %v5803 = vunpack.c.l.b16 %v5543
    %v5804 = vunpack.c.l.b16 %v5544
    %v5805 = vunpack.c.l.b16 %v5545
    %v5806 = vunpack.c.l.b16 %v5546
    %v5807 = vunpack.c.l.b16 %v5547
    %v5808 = vunpack.c.l.b16 %v5548
    %v5809 = vpack.c.b16 %v5682, %v5681
    %v5810 = vpack.c.b16 %v5684, %v5683
    %v5811 = vpack.c.b16 %v5686, %v5685
    %v5812 = vpack.c.b16 %v5688, %v5687
    %v5813 = vpack.c.b16 %v5690, %v5689
    %v5814 = vpack.c.b16 %v5692, %v5691
    %v5815 = vpack.c.b16 %v5694, %v5693
    %v5816 = vpack.c.b16 %v5696, %v5695
    %v5817 = vpack.c.b16 %v5698, %v5697
    %v5818 = vpack.c.b16 %v5700, %v5699
    %v5819 = vpack.c.b16 %v5702, %v5701
    %v5820 = vpack.c.b16 %v5704, %v5703
    %v5821 = vpack.c.b16 %v5706, %v5705
    %v5822 = vpack.c.b16 %v5708, %v5707
    %v5823 = vpack.c.b16 %v5710, %v5709
    %v5824 = vpack.c.b16 %v5712, %v5711
    %v5825 = vpack.c.b16 %v5714, %v5713
    %v5826 = vpack.c.b16 %v5716, %v5715
    %v5827 = vpack.c.b16 %v5718, %v5717
    %v5828 = vpack.c.b16 %v5720, %v5719
    %v5829 = vpack.c.b16 %v5722, %v5721
    %v5830 = vpack.c.b16 %v5724, %v5723
    %v5831 = vpack.c.b16 %v5726, %v5725
    %v5832 = vpack.c.b16 %v5728, %v5727
    %v5833 = vpack.c.b16 %v5730, %v5729
    %v5834 = vpack.c.b16 %v5732, %v5731
    %v5835 = vpack.c.b16 %v5734, %v5733
    %v5836 = vpack.c.b16 %v5736, %v5735
    %v5837 = vpack.c.b16 %v5738, %v5737
    %v5838 = vpack.c.b16 %v5740, %v5739
    %v5839 = vpack.c.b16 %v5742, %v5741
    %v5840 = vpack.c.b16 %v5744, %v5743
    %v5841 = vpack.c.b16 %v5746, %v5745
    %v5842 = vpack.c.b16 %v5748, %v5747
    %v5843 = vpack.c.b16 %v5750, %v5749
    %v5844 = vpack.c.b16 %v5752, %v5751
    %v5845 = vpack.c.b16 %v5754, %v5753
    %v5846 = vpack.c.b16 %v5756, %v5755
    %v5847 = vpack.c.b16 %v5758, %v5757
    %v5848 = vpack.c.b16 %v5760, %v5759
    %v5849 = vpack.c.b16 %v5762, %v5761
    %v5850 = vpack.c.b16 %v5764, %v5763
    %v5851 = vpack.c.b16 %v5766, %v5765
    %v5852 = vpack.c.b16 %v5768, %v5767
    %v5853 = vpack.c.b16 %v5770, %v5769
    %v5854 = vpack.c.b16 %v5772, %v5771
    %v5855 = vpack.c.b16 %v5774, %v5773
    %v5856 = vpack.c.b16 %v5776, %v5775
    %v5857 = vpack.c.b16 %v5778, %v5777
    %v5858 = vpack.c.b16 %v5780, %v5779
    %v5859 = vpack.c.b16 %v5782, %v5781
    %v5860 = vpack.c.b16 %v5784, %v5783
    %v5861 = vpack.c.b16 %v5786, %v5785
    %v5862 = vpack.c.b16 %v5788, %v5787
    %v5863 = vpack.c.b16 %v5790, %v5789
    %v5864 = vpack.c.b16 %v5792, %v5791
    %v5865 = vpack.c.b16 %v5794, %v5793
    %v5866 = vpack.c.b16 %v5796, %v5795
    %v5867 = vpack.c.b16 %v5798, %v5797
    %v5868 = vpack.c.b16 %v5800, %v5799
    %v5869 = vpack.c.b16 %v5802, %v5801
    %v5870 = vpack.c.b16 %v5804, %v5803
    %v5871 = vpack.c.b16 %v5806, %v5805
    %v5872 = vpack.c.b16 %v5808, %v5807
    %5937 = vmatprep.subr.bf16.mxu0 0
    %5938 = vmatpush1.bf16.msra.mxu0 %v5809
    %5939 = vmatprep.subr.bf16.mxu0 0
    %5940 = vmatpush1.bf16.msra.mxu0 %v5810
    %5941 = vmatprep.subr.bf16.mxu0 0
    %5942 = vmatpush1.bf16.msra.mxu0 %v5811
    %5943 = vmatprep.subr.bf16.mxu0 0
    %5944 = vmatpush1.bf16.msra.mxu0 %v5812
    %5945 = vmatprep.subr.bf16.mxu0 0
    %5946 = vmatpush1.bf16.msra.mxu0 %v5813
    %5947 = vmatprep.subr.bf16.mxu0 0
    %5948 = vmatpush1.bf16.msra.mxu0 %v5814
    %5949 = vmatprep.subr.bf16.mxu0 0
    %5950 = vmatpush1.bf16.msra.mxu0 %v5815
    %5951 = vmatprep.subr.bf16.mxu0 0
    %5952 = vmatpush1.bf16.msra.mxu0 %v5816
    %5953 = vmatprep.subr.bf16.mxu0 0
    %5954 = vmatpush1.bf16.msra.mxu0 %v5817
    %5955 = vmatprep.subr.bf16.mxu0 0
    %5956 = vmatpush1.bf16.msra.mxu0 %v5818
    %5957 = vmatprep.subr.bf16.mxu0 0
    %5958 = vmatpush1.bf16.msra.mxu0 %v5819
    %5959 = vmatprep.subr.bf16.mxu0 0
    %5960 = vmatpush1.bf16.msra.mxu0 %v5820
    %5961 = vmatprep.subr.bf16.mxu0 0
    %5962 = vmatpush1.bf16.msra.mxu0 %v5821
    %5963 = vmatprep.subr.bf16.mxu0 0
    %5964 = vmatpush1.bf16.msra.mxu0 %v5822
    %5965 = vmatprep.subr.bf16.mxu0 0
    %5966 = vmatpush1.bf16.msra.mxu0 %v5823
    %5967 = vmatprep.subr.bf16.mxu0 0
    %5968 = vmatpush1.bf16.msra.mxu0 %v5824
    %5969 = vmatprep.mubr.bf16.mxu0 %v5414
    %5970 = vmatmul.mubr.bf16.gmra.mrb[0].mxu0 %v5413
    %v5971 = vpop.f32.mrb[0].mxu0
    %v5972 = vadd.f32 %v5552, %v5971
    %v5973 = vpop.f32.mrb[0].mxu0
    %v5974 = vpop.f32.mrb[0].mxu0
    %v5975 = vadd.f32 %v5552, %v5974
    %v5976 = vpop.f32.mrb[0].mxu0
    %5977 = vdwg.mxu0
    %5978 = vmatprep.subr.bf16.mxu0 0
    %5979 = vmatpush1.bf16.msra.mxu0 %v5825
    %5980 = vmatprep.subr.bf16.mxu0 0
    %5981 = vmatpush1.bf16.msra.mxu0 %v5826
    %5982 = vmatprep.subr.bf16.mxu0 0
    %5983 = vmatpush1.bf16.msra.mxu0 %v5827
    %5984 = vmatprep.subr.bf16.mxu0 0
    %5985 = vmatpush1.bf16.msra.mxu0 %v5828
    %5986 = vmatprep.subr.bf16.mxu0 0
    %5987 = vmatpush1.bf16.msra.mxu0 %v5829
    %5988 = vmatprep.subr.bf16.mxu0 0
    %5989 = vmatpush1.bf16.msra.mxu0 %v5830
    %5990 = vmatprep.subr.bf16.mxu0 0
    %5991 = vmatpush1.bf16.msra.mxu0 %v5831
    %5992 = vmatprep.subr.bf16.mxu0 0
    %5993 = vmatpush1.bf16.msra.mxu0 %v5832
    %5994 = vmatprep.subr.bf16.mxu0 0
    %5995 = vmatpush1.bf16.msra.mxu0 %v5833
    %5996 = vmatprep.subr.bf16.mxu0 0
    %5997 = vmatpush1.bf16.msra.mxu0 %v5834
    %5998 = vmatprep.subr.bf16.mxu0 0
    %5999 = vmatpush1.bf16.msra.mxu0 %v5835
    %6000 = vmatprep.subr.bf16.mxu0 0
    %6001 = vmatpush1.bf16.msra.mxu0 %v5836
    %6002 = vmatprep.subr.bf16.mxu0 0
    %6003 = vmatpush1.bf16.msra.mxu0 %v5837
    %6004 = vmatprep.subr.bf16.mxu0 0
    %6005 = vmatpush1.bf16.msra.mxu0 %v5838
    %6006 = vmatprep.subr.bf16.mxu0 0
    %6007 = vmatpush1.bf16.msra.mxu0 %v5839
    %6008 = vmatprep.subr.bf16.mxu0 0
    %6009 = vmatpush1.bf16.msra.mxu0 %v5840
    %6010 = vmatprep.mubr.bf16.mxu0 %v5416
    %6011 = vmatmul.mubr.bf16.gmra.mrb[0].mxu0 %v5415
    %v6012 = vpop.f32.mrb[0].mxu0
    %v6013 = vadd.f32 %v5972, %v6012
    %v6014 = vpop.f32.mrb[0].mxu0
    %v6015 = vpop.f32.mrb[0].mxu0
    %v6016 = vadd.f32 %v5975, %v6015
    %v6017 = vpop.f32.mrb[0].mxu0
    %6018 = vdwg.mxu0
    %6019 = vmatprep.subr.bf16.mxu0 0
    %6020 = vmatpush1.bf16.msra.mxu0 %v5841
    %6021 = vmatprep.subr.bf16.mxu0 0
    %6022 = vmatpush1.bf16.msra.mxu0 %v5842
    %6023 = vmatprep.subr.bf16.mxu0 0
    %6024 = vmatpush1.bf16.msra.mxu0 %v5843
    %6025 = vmatprep.subr.bf16.mxu0 0
    %6026 = vmatpush1.bf16.msra.mxu0 %v5844
    %6027 = vmatprep.subr.bf16.mxu0 0
    %6028 = vmatpush1.bf16.msra.mxu0 %v5845
    %6029 = vmatprep.subr.bf16.mxu0 0
    %6030 = vmatpush1.bf16.msra.mxu0 %v5846
    %6031 = vmatprep.subr.bf16.mxu0 0
    %6032 = vmatpush1.bf16.msra.mxu0 %v5847
    %6033 = vmatprep.subr.bf16.mxu0 0
    %6034 = vmatpush1.bf16.msra.mxu0 %v5848
    %6035 = vmatprep.subr.bf16.mxu0 0
    %6036 = vmatpush1.bf16.msra.mxu0 %v5849
    %6037 = vmatprep.subr.bf16.mxu0 0
    %6038 = vmatpush1.bf16.msra.mxu0 %v5850
    %6039 = vmatprep.subr.bf16.mxu0 0
    %6040 = vmatpush1.bf16.msra.mxu0 %v5851
    %6041 = vmatprep.subr.bf16.mxu0 0
    %6042 = vmatpush1.bf16.msra.mxu0 %v5852
    %6043 = vmatprep.subr.bf16.mxu0 0
    %6044 = vmatpush1.bf16.msra.mxu0 %v5853
    %6045 = vmatprep.subr.bf16.mxu0 0
    %6046 = vmatpush1.bf16.msra.mxu0 %v5854
    %6047 = vmatprep.subr.bf16.mxu0 0
    %6048 = vmatpush1.bf16.msra.mxu0 %v5855
    %6049 = vmatprep.subr.bf16.mxu0 0
    %6050 = vmatpush1.bf16.msra.mxu0 %v5856
    %6051 = vmatprep.mubr.bf16.mxu0 %v5418
    %6052 = vmatmul.mubr.bf16.gmra.mrb[0].mxu0 %v5417
    %v6053 = vpop.f32.mrb[0].mxu0
    %v6054 = vadd.f32 %v6013, %v6053
    %v6055 = vpop.f32.mrb[0].mxu0
    %v6056 = vpop.f32.mrb[0].mxu0
    %v6057 = vadd.f32 %v6016, %v6056
    %v6058 = vpop.f32.mrb[0].mxu0
    %6059 = vdwg.mxu0
    %6060 = vmatprep.subr.bf16.mxu0 0
    %6061 = vmatpush1.bf16.msra.mxu0 %v5857
    %6062 = vmatprep.subr.bf16.mxu0 0
    %6063 = vmatpush1.bf16.msra.mxu0 %v5858
    %6064 = vmatprep.subr.bf16.mxu0 0
    %6065 = vmatpush1.bf16.msra.mxu0 %v5859
    %6066 = vmatprep.subr.bf16.mxu0 0
    %6067 = vmatpush1.bf16.msra.mxu0 %v5860
    %6068 = vmatprep.subr.bf16.mxu0 0
    %6069 = vmatpush1.bf16.msra.mxu0 %v5861
    %6070 = vmatprep.subr.bf16.mxu0 0
    %6071 = vmatpush1.bf16.msra.mxu0 %v5862
    %6072 = vmatprep.subr.bf16.mxu0 0
    %6073 = vmatpush1.bf16.msra.mxu0 %v5863
    %6074 = vmatprep.subr.bf16.mxu0 0
    %6075 = vmatpush1.bf16.msra.mxu0 %v5864
    %6076 = vmatprep.subr.bf16.mxu0 0
    %6077 = vmatpush1.bf16.msra.mxu0 %v5865
    %6078 = vmatprep.subr.bf16.mxu0 0
    %6079 = vmatpush1.bf16.msra.mxu0 %v5866
    %6080 = vmatprep.subr.bf16.mxu0 0
    %6081 = vmatpush1.bf16.msra.mxu0 %v5867
    %6082 = vmatprep.subr.bf16.mxu0 0
    %6083 = vmatpush1.bf16.msra.mxu0 %v5868
    %6084 = vmatprep.subr.bf16.mxu0 0
    %6085 = vmatpush1.bf16.msra.mxu0 %v5869
    %6086 = vmatprep.subr.bf16.mxu0 0
    %6087 = vmatpush1.bf16.msra.mxu0 %v5870
    %6088 = vmatprep.subr.bf16.mxu0 0
    %6089 = vmatpush1.bf16.msra.mxu0 %v5871
    %6090 = vmatprep.subr.bf16.mxu0 0
    %6091 = vmatpush1.bf16.msra.mxu0 %v5872
    %6092 = vmatprep.mubr.bf16.mxu0 %v5420
    %6093 = vmatmul.mubr.bf16.gmra.mrb[0].mxu0 %v5419
    %v6094 = vpop.f32.mrb[0].mxu0
    %v6095 = vadd.f32 %v6054, %v6094
    %v6096 = vpop.f32.mrb[0].mxu0
    %v6097 = vpop.f32.mrb[0].mxu0
    %v6098 = vadd.f32 %v6057, %v6097
    %v6099 = vpop.f32.mrb[0].mxu0
    %6100 = vdwg.mxu0
    %v6101 = vand.u32 2147483647, %v6095
    %vm6102 = vcmp.le.f32.partialorder %v6101, 0.7853982
    %vm6103 = vcmp.lt.s32.totalorder %v6095, 0
    %v6104 = vand.u32 %v6095, 2139095040
    %v6105 = vshrl.u32 %v6104, 23
    %v6106 = vsub.s32 %v6105, 127
    %v6107 = vand.u32 2147483647, %v6095
    %v6108 = vand.u32 %v6107, 8388607
    %v6109 = vor.u32 %v6108, 8388608
    %v6110 = vsub.s32 0, %v6109
    %v6111 = vadd.s32 %v6106, 1
    %vm6112 = vcmp.gt.s32.totalorder %v6111, 0
    %v6113 = vsel %vm6112, %v6111, 0
    %v6114 = vshrl.u32 %v6113, 5
    %v6115 = vand.u32 %v6113, 31
    %v6116 = vsub.s32 32, %v6115
    %v6117 = vshrl.u32 683565275, %v6116
    %v6118 = vshll.u32 683565275, %v6115
    %v6119 = vshrl.u32 2475754826, %v6116
    %v6120 = vor.u32 %v6118, %v6119
    %v6121 = vshll.u32 2475754826, %v6115
    %v6122 = vshrl.u32 2131351028, %v6116
    %v6123 = vor.u32 %v6121, %v6122
    %v6124 = vshll.u32 2131351028, %v6115
    %v6125 = vshrl.u32 2102212464, %v6116
    %v6126 = vor.u32 %v6124, %v6125
    %v6127 = vshll.u32 2102212464, %v6115
    %v6128 = vshrl.u32 920167782, %v6116
    %v6129 = vor.u32 %v6127, %v6128
    %v6130 = vshll.u32 920167782, %v6115
    %v6131 = vshrl.u32 1326507024, %v6116
    %v6132 = vor.u32 %v6130, %v6131
    %vm6133 = vcmp.lt.s32.totalorder %v6114, 1
    %vm6134 = vcmp.lt.s32.totalorder %v6114, 2
    %vm6135 = vcmp.lt.s32.totalorder %v6114, 3
    %vm6136 = vcmp.lt.s32.totalorder %v6114, 4
    %v6137 = vsel %vm6133, %v6117, %v6120
    %v6138 = vsel %vm6136, %v6126, 2102212464
    %v6139 = vsel %vm6135, %v6123, %v6138
    %v6140 = vsel %vm6134, %v6137, %v6139
    %v6141 = vsel %vm6133, %v6120, %v6123
    %v6142 = vsel %vm6136, %v6129, 920167782
    %v6143 = vsel %vm6135, %v6126, %v6142
    %v6144 = vsel %vm6134, %v6141, %v6143
    %v6145 = vsel %vm6133, %v6123, %v6126
    %v6146 = vsel %vm6136, %v6132, 1326507024
    %v6147 = vsel %vm6135, %v6129, %v6146
    %v6148 = vsel %vm6134, %v6145, %v6147
    %v6149 = vshll.u32 %v6109, 8
    %v6150 = vmul.u32.u64.compose %v6149, %v6148
    %v6151 = vextract.low.u32 %v6150
    %v6152 = vextract.high.u32 %v6150
    %v6153 = vmul.u32.u64.compose %v6149, %v6144
    %v6154 = vextract.low.u32 %v6153
    %v6155 = vextract.high.u32 %v6153
    %v6156 = vmul.u32 %v6149, %v6140
    %v6157 = vadd.s32 %v6152, %v6154
    %vm6158 = vc.u32 %v6152, %v6154
    %v6159 = vadd.s32 %v6155, 1
    %v6160 = vsel %vm6158, %v6159, %v6155
    %v6161 = vadd.s32 %v6156, %v6160
    %v6162 = vadd.s32 %v6161, 536870912
    %v6163 = vshrl.u32 %v6162, 30
    %v6164 = vshll.u32 %v6163, 30
    %v6165 = vsub.s32 %v6161, %v6164
    %vm6166 = vcmp.lt.s32.totalorder %v6165, 0
    %v6167 = vsub.s32 0, %v6165
    %v6168 = vsel %vm6166, %v6167, %v6165
    %v6169 = vclz %v6168
    %v6170 = vsub.s32 %v6169, 2
    %vm6171 = vcmp.gt.s32.totalorder 0, %v6170
    %v6172 = vsel %vm6171, 0, %v6170
    %v6173 = vsub.s32 32, %v6172
    %v6174 = vshll.u32 %v6165, %v6172
    %v6175 = vshrl.u32 %v6157, %v6173
    %v6176 = vor.u32 %v6174, %v6175
    %v6177 = vsub.s32 4294967266, %v6172
    %v6178 = vadd.s32 %v6177, 127
    %v6179 = vshll.u32 %v6178, 23
    %v6180 = vor.u32 4788187, %v6179
    %v6181 = vand.u32 2147483647, %v6180
    %v6183 = vcvt.s32.f32 %v6176
    %v6184 = vmul.f32 %v6183, %v6181
    %v6185 = vxor.u32 %v6184, 2147483648
    %v6186 = vsel %vm6103, %v6185, %v6184
    %v6187 = vsub.s32 4, %v6163
    %v6188 = vsel %vm6103, %v6187, %v6163
    %v6189 = vsel %vm6102, %v6095, %v6186
    %v6190 = vsel %vm6102, 0, %v6188
    %v6191 = vcosq.f32.pop %v6189
    %v6192 = vsinq.f32.pop %v6189
    %vm6193 = vweird.f32 %v6095
    %v6194 = vand.u32 %v6190, 3
    %vm6195 = vcmp.lt.s32.totalorder %v6194, 2
    %vm6196 = vcmp.eq.s32.totalorder %v6194, 0
    %v6197 = vxor.u32 %v6192, 2147483648
    %v6198 = vsel %vm6196, %v6191, %v6197
    %vm6199 = vcmp.eq.s32.totalorder %v6194, 2
    %v6200 = vxor.u32 %v6191, 2147483648
    %v6201 = vsel %vm6199, %v6200, %v6192
    %v6202 = vsel %vm6195, %v6198, %v6201
    %v6203 = vsel %vm6193, nan, %v6202
    %v6204 = vand.u32 2147483647, %v6098
    %vm6205 = vcmp.le.f32.partialorder %v6204, 0.7853982
    %vm6206 = vcmp.lt.s32.totalorder %v6098, 0
    %v6207 = vand.u32 %v6098, 2139095040
    %v6208 = vshrl.u32 %v6207, 23
    %v6209 = vsub.s32 %v6208, 127
    %v6210 = vand.u32 2147483647, %v6098
    %v6211 = vand.u32 %v6210, 8388607
    %v6212 = vor.u32 %v6211, 8388608
    %v6213 = vsub.s32 0, %v6212
    %v6214 = vadd.s32 %v6209, 1
    %vm6215 = vcmp.gt.s32.totalorder %v6214, 0
    %v6216 = vsel %vm6215, %v6214, 0
    %v6217 = vshrl.u32 %v6216, 5
    %v6218 = vand.u32 %v6216, 31
    %v6219 = vsub.s32 32, %v6218
    %v6220 = vshrl.u32 683565275, %v6219
    %v6221 = vshll.u32 683565275, %v6218
    %v6222 = vshrl.u32 2475754826, %v6219
    %v6223 = vor.u32 %v6221, %v6222
    %v6224 = vshll.u32 2475754826, %v6218
    %v6225 = vshrl.u32 2131351028, %v6219
    %v6226 = vor.u32 %v6224, %v6225
    %v6227 = vshll.u32 2131351028, %v6218
    %v6228 = vshrl.u32 2102212464, %v6219
    %v6229 = vor.u32 %v6227, %v6228
    %v6230 = vshll.u32 2102212464, %v6218
    %v6231 = vshrl.u32 920167782, %v6219
    %v6232 = vor.u32 %v6230, %v6231
    %v6233 = vshll.u32 920167782, %v6218
    %v6234 = vshrl.u32 1326507024, %v6219
    %v6235 = vor.u32 %v6233, %v6234
    %vm6236 = vcmp.lt.s32.totalorder %v6217, 1
    %vm6237 = vcmp.lt.s32.totalorder %v6217, 2
    %vm6238 = vcmp.lt.s32.totalorder %v6217, 3
    %vm6239 = vcmp.lt.s32.totalorder %v6217, 4
    %v6240 = vsel %vm6236, %v6220, %v6223
    %v6241 = vsel %vm6239, %v6229, 2102212464
    %v6242 = vsel %vm6238, %v6226, %v6241
    %v6243 = vsel %vm6237, %v6240, %v6242
    %v6244 = vsel %vm6236, %v6223, %v6226
    %v6245 = vsel %vm6239, %v6232, 920167782
    %v6246 = vsel %vm6238, %v6229, %v6245
    %v6247 = vsel %vm6237, %v6244, %v6246
    %v6248 = vsel %vm6236, %v6226, %v6229
    %v6249 = vsel %vm6239, %v6235, 1326507024
    %v6250 = vsel %vm6238, %v6232, %v6249
    %v6251 = vsel %vm6237, %v6248, %v6250
    %v6252 = vshll.u32 %v6212, 8
    %v6253 = vmul.u32.u64.compose %v6252, %v6251
    %v6254 = vextract.low.u32 %v6253
    %v6255 = vextract.high.u32 %v6253
    %v6256 = vmul.u32.u64.compose %v6252, %v6247
    %v6257 = vextract.low.u32 %v6256
    %v6258 = vextract.high.u32 %v6256
    %v6259 = vmul.u32 %v6252, %v6243
    %v6260 = vadd.s32 %v6255, %v6257
    %vm6261 = vc.u32 %v6255, %v6257
    %v6262 = vadd.s32 %v6258, 1
    %v6263 = vsel %vm6261, %v6262, %v6258
    %v6264 = vadd.s32 %v6259, %v6263
    %v6265 = vadd.s32 %v6264, 536870912
    %v6266 = vshrl.u32 %v6265, 30
    %v6267 = vshll.u32 %v6266, 30
    %v6268 = vsub.s32 %v6264, %v6267
    %vm6269 = vcmp.lt.s32.totalorder %v6268, 0
    %v6270 = vsub.s32 0, %v6268
    %v6271 = vsel %vm6269, %v6270, %v6268
    %v6272 = vclz %v6271
    %v6273 = vsub.s32 %v6272, 2
    %vm6274 = vcmp.gt.s32.totalorder 0, %v6273
    %v6275 = vsel %vm6274, 0, %v6273
    %v6276 = vsub.s32 32, %v6275
    %v6277 = vshll.u32 %v6268, %v6275
    %v6278 = vshrl.u32 %v6260, %v6276
    %v6279 = vor.u32 %v6277, %v6278
    %v6280 = vsub.s32 4294967266, %v6275
    %v6281 = vadd.s32 %v6280, 127
    %v6282 = vshll.u32 %v6281, 23
    %v6283 = vor.u32 4788187, %v6282
    %v6284 = vand.u32 2147483647, %v6283
    %v6286 = vcvt.s32.f32 %v6279
    %v6287 = vmul.f32 %v6286, %v6284
    %v6288 = vxor.u32 %v6287, 2147483648
    %v6289 = vsel %vm6206, %v6288, %v6287
    %v6290 = vsub.s32 4, %v6266
    %v6291 = vsel %vm6206, %v6290, %v6266
    %v6292 = vsel %vm6205, %v6098, %v6289
    %v6293 = vsel %vm6205, 0, %v6291
    %v6294 = vcosq.f32.pop %v6292
    %v6295 = vsinq.f32.pop %v6292
    %vm6296 = vweird.f32 %v6098
    %v6297 = vand.u32 %v6293, 3
    %vm6298 = vcmp.lt.s32.totalorder %v6297, 2
    %vm6299 = vcmp.eq.s32.totalorder %v6297, 0
    %v6300 = vxor.u32 %v6295, 2147483648
    %v6301 = vsel %vm6299, %v6294, %v6300
    %vm6302 = vcmp.eq.s32.totalorder %v6297, 2
    %v6303 = vxor.u32 %v6294, 2147483648
    %v6304 = vsel %vm6302, %v6303, %v6295
    %v6305 = vsel %vm6298, %v6301, %v6304
    %v6306 = vsel %vm6296, nan, %v6305
    %v6307 = vand.u32 2147483647, %v6095
    %vm6308 = vcmp.le.f32.partialorder %v6307, 0.7853982
    %vm6309 = vcmp.lt.s32.totalorder %v6095, 0
    %v6310 = vand.u32 %v6095, 2139095040
    %v6311 = vshrl.u32 %v6310, 23
    %v6312 = vsub.s32 %v6311, 127
    %v6313 = vand.u32 2147483647, %v6095
    %v6314 = vand.u32 %v6313, 8388607
    %v6315 = vor.u32 %v6314, 8388608
    %v6316 = vsub.s32 0, %v6315
    %v6317 = vadd.s32 %v6312, 1
    %vm6318 = vcmp.gt.s32.totalorder %v6317, 0
    %v6319 = vsel %vm6318, %v6317, 0
    %v6320 = vshrl.u32 %v6319, 5
    %v6321 = vand.u32 %v6319, 31
    %v6322 = vsub.s32 32, %v6321
    %v6323 = vshrl.u32 683565275, %v6322
    %v6324 = vshll.u32 683565275, %v6321
    %v6325 = vshrl.u32 2475754826, %v6322
    %v6326 = vor.u32 %v6324, %v6325
    %v6327 = vshll.u32 2475754826, %v6321
    %v6328 = vshrl.u32 2131351028, %v6322
    %v6329 = vor.u32 %v6327, %v6328
    %v6330 = vshll.u32 2131351028, %v6321
    %v6331 = vshrl.u32 2102212464, %v6322
    %v6332 = vor.u32 %v6330, %v6331
    %v6333 = vshll.u32 2102212464, %v6321
    %v6334 = vshrl.u32 920167782, %v6322
    %v6335 = vor.u32 %v6333, %v6334
    %v6336 = vshll.u32 920167782, %v6321
    %v6337 = vshrl.u32 1326507024, %v6322
    %v6338 = vor.u32 %v6336, %v6337
    %vm6339 = vcmp.lt.s32.totalorder %v6320, 1
    %vm6340 = vcmp.lt.s32.totalorder %v6320, 2
    %vm6341 = vcmp.lt.s32.totalorder %v6320, 3
    %vm6342 = vcmp.lt.s32.totalorder %v6320, 4
    %v6343 = vsel %vm6339, %v6323, %v6326
    %v6344 = vsel %vm6342, %v6332, 2102212464
    %v6345 = vsel %vm6341, %v6329, %v6344
    %v6346 = vsel %vm6340, %v6343, %v6345
    %v6347 = vsel %vm6339, %v6326, %v6329
    %v6348 = vsel %vm6342, %v6335, 920167782
    %v6349 = vsel %vm6341, %v6332, %v6348
    %v6350 = vsel %vm6340, %v6347, %v6349
    %v6351 = vsel %vm6339, %v6329, %v6332
    %v6352 = vsel %vm6342, %v6338, 1326507024
    %v6353 = vsel %vm6341, %v6335, %v6352
    %v6354 = vsel %vm6340, %v6351, %v6353
    %v6355 = vshll.u32 %v6315, 8
    %v6356 = vmul.u32.u64.compose %v6355, %v6354
    %v6357 = vextract.low.u32 %v6356
    %v6358 = vextract.high.u32 %v6356
    %v6359 = vmul.u32.u64.compose %v6355, %v6350
    %v6360 = vextract.low.u32 %v6359
    %v6361 = vextract.high.u32 %v6359
    %v6362 = vmul.u32 %v6355, %v6346
    %v6363 = vadd.s32 %v6358, %v6360
    %vm6364 = vc.u32 %v6358, %v6360
    %v6365 = vadd.s32 %v6361, 1
    %v6366 = vsel %vm6364, %v6365, %v6361
    %v6367 = vadd.s32 %v6362, %v6366
    %v6368 = vadd.s32 %v6367, 536870912
    %v6369 = vshrl.u32 %v6368, 30
    %v6370 = vshll.u32 %v6369, 30
    %v6371 = vsub.s32 %v6367, %v6370
    %vm6372 = vcmp.lt.s32.totalorder %v6371, 0
    %v6373 = vsub.s32 0, %v6371
    %v6374 = vsel %vm6372, %v6373, %v6371
    %v6375 = vclz %v6374
    %v6376 = vsub.s32 %v6375, 2
    %vm6377 = vcmp.gt.s32.totalorder 0, %v6376
    %v6378 = vsel %vm6377, 0, %v6376
    %v6379 = vsub.s32 32, %v6378
    %v6380 = vshll.u32 %v6371, %v6378
    %v6381 = vshrl.u32 %v6363, %v6379
    %v6382 = vor.u32 %v6380, %v6381
    %v6383 = vsub.s32 4294967266, %v6378
    %v6384 = vadd.s32 %v6383, 127
    %v6385 = vshll.u32 %v6384, 23
    %v6386 = vor.u32 4788187, %v6385
    %v6387 = vand.u32 2147483647, %v6386
    %v6389 = vcvt.s32.f32 %v6382
    %v6390 = vmul.f32 %v6389, %v6387
    %v6391 = vxor.u32 %v6390, 2147483648
    %v6392 = vsel %vm6309, %v6391, %v6390
    %v6393 = vsub.s32 4, %v6369
    %v6394 = vsel %vm6309, %v6393, %v6369
    %v6395 = vsel %vm6308, %v6095, %v6392
    %v6396 = vsel %vm6308, 0, %v6394
    %v6397 = vcosq.f32.pop %v6395
    %v6398 = vsinq.f32.pop %v6395
    %vm6399 = vweird.f32 %v6095
    %v6400 = vadd.s32 %v6396, 3
    %v6401 = vand.u32 %v6400, 3
    %vm6402 = vcmp.lt.s32.totalorder %v6401, 2
    %vm6403 = vcmp.eq.s32.totalorder %v6401, 0
    %v6404 = vxor.u32 %v6398, 2147483648
    %v6405 = vsel %vm6403, %v6397, %v6404
    %vm6406 = vcmp.eq.s32.totalorder %v6401, 2
    %v6407 = vxor.u32 %v6397, 2147483648
    %v6408 = vsel %vm6406, %v6407, %v6398
    %v6409 = vsel %vm6402, %v6405, %v6408
    %v6410 = vsel %vm6399, nan, %v6409
    %v6411 = vand.u32 2147483647, %v6098
    %vm6412 = vcmp.le.f32.partialorder %v6411, 0.7853982
    %vm6413 = vcmp.lt.s32.totalorder %v6098, 0
    %v6414 = vand.u32 %v6098, 2139095040
    %v6415 = vshrl.u32 %v6414, 23
    %v6416 = vsub.s32 %v6415, 127
    %v6417 = vand.u32 2147483647, %v6098
    %v6418 = vand.u32 %v6417, 8388607
    %v6419 = vor.u32 %v6418, 8388608
    %v6420 = vsub.s32 0, %v6419
    %v6421 = vadd.s32 %v6416, 1
    %vm6422 = vcmp.gt.s32.totalorder %v6421, 0
    %v6423 = vsel %vm6422, %v6421, 0
    %v6424 = vshrl.u32 %v6423, 5
    %v6425 = vand.u32 %v6423, 31
    %v6426 = vsub.s32 32, %v6425
    %v6427 = vshrl.u32 683565275, %v6426
    %v6428 = vshll.u32 683565275, %v6425
    %v6429 = vshrl.u32 2475754826, %v6426
    %v6430 = vor.u32 %v6428, %v6429
    %v6431 = vshll.u32 2475754826, %v6425
    %v6432 = vshrl.u32 2131351028, %v6426
    %v6433 = vor.u32 %v6431, %v6432
    %v6434 = vshll.u32 2131351028, %v6425
    %v6435 = vshrl.u32 2102212464, %v6426
    %v6436 = vor.u32 %v6434, %v6435
    %v6437 = vshll.u32 2102212464, %v6425
    %v6438 = vshrl.u32 920167782, %v6426
    %v6439 = vor.u32 %v6437, %v6438
    %v6440 = vshll.u32 920167782, %v6425
    %v6441 = vshrl.u32 1326507024, %v6426
    %v6442 = vor.u32 %v6440, %v6441
    %vm6443 = vcmp.lt.s32.totalorder %v6424, 1
    %vm6444 = vcmp.lt.s32.totalorder %v6424, 2
    %vm6445 = vcmp.lt.s32.totalorder %v6424, 3
    %vm6446 = vcmp.lt.s32.totalorder %v6424, 4
    %v6447 = vsel %vm6443, %v6427, %v6430
    %v6448 = vsel %vm6446, %v6436, 2102212464
    %v6449 = vsel %vm6445, %v6433, %v6448
    %v6450 = vsel %vm6444, %v6447, %v6449
    %v6451 = vsel %vm6443, %v6430, %v6433
    %v6452 = vsel %vm6446, %v6439, 920167782
    %v6453 = vsel %vm6445, %v6436, %v6452
    %v6454 = vsel %vm6444, %v6451, %v6453
    %v6455 = vsel %vm6443, %v6433, %v6436
    %v6456 = vsel %vm6446, %v6442, 1326507024
    %v6457 = vsel %vm6445, %v6439, %v6456
    %v6458 = vsel %vm6444, %v6455, %v6457
    %v6459 = vshll.u32 %v6419, 8
    %v6460 = vmul.u32.u64.compose %v6459, %v6458
    %v6461 = vextract.low.u32 %v6460
    %v6462 = vextract.high.u32 %v6460
    %v6463 = vmul.u32.u64.compose %v6459, %v6454
    %v6464 = vextract.low.u32 %v6463
    %v6465 = vextract.high.u32 %v6463
    %v6466 = vmul.u32 %v6459, %v6450
    %v6467 = vadd.s32 %v6462, %v6464
    %vm6468 = vc.u32 %v6462, %v6464
    %v6469 = vadd.s32 %v6465, 1
    %v6470 = vsel %vm6468, %v6469, %v6465
    %v6471 = vadd.s32 %v6466, %v6470
    %v6472 = vadd.s32 %v6471, 536870912
    %v6473 = vshrl.u32 %v6472, 30
    %v6474 = vshll.u32 %v6473, 30
    %v6475 = vsub.s32 %v6471, %v6474
    %vm6476 = vcmp.lt.s32.totalorder %v6475, 0
    %v6477 = vsub.s32 0, %v6475
    %v6478 = vsel %vm6476, %v6477, %v6475
    %v6479 = vclz %v6478
    %v6480 = vsub.s32 %v6479, 2
    %vm6481 = vcmp.gt.s32.totalorder 0, %v6480
    %v6482 = vsel %vm6481, 0, %v6480
    %v6483 = vsub.s32 32, %v6482
    %v6484 = vshll.u32 %v6475, %v6482
    %v6485 = vshrl.u32 %v6467, %v6483
    %v6486 = vor.u32 %v6484, %v6485
    %v6487 = vsub.s32 4294967266, %v6482
    %v6488 = vadd.s32 %v6487, 127
    %v6489 = vshll.u32 %v6488, 23
    %v6490 = vor.u32 4788187, %v6489
    %v6491 = vand.u32 2147483647, %v6490
    %v6493 = vcvt.s32.f32 %v6486
    %v6494 = vmul.f32 %v6493, %v6491
    %v6495 = vxor.u32 %v6494, 2147483648
    %v6496 = vsel %vm6413, %v6495, %v6494
    %v6497 = vsub.s32 4, %v6473
    %v6498 = vsel %vm6413, %v6497, %v6473
    %v6499 = vsel %vm6412, %v6098, %v6496
    %v6500 = vsel %vm6412, 0, %v6498
    %v6501 = vcosq.f32.pop %v6499
    %v6502 = vsinq.f32.pop %v6499
    %vm6503 = vweird.f32 %v6098
    %v6504 = vadd.s32 %v6500, 3
    %v6505 = vand.u32 %v6504, 3
    %vm6506 = vcmp.lt.s32.totalorder %v6505, 2
    %vm6507 = vcmp.eq.s32.totalorder %v6505, 0
    %v6508 = vxor.u32 %v6502, 2147483648
    %v6509 = vsel %vm6507, %v6501, %v6508
    %vm6510 = vcmp.eq.s32.totalorder %v6505, 2
    %v6511 = vxor.u32 %v6501, 2147483648
    %v6512 = vsel %vm6510, %v6511, %v6502
    %v6513 = vsel %vm6506, %v6509, %v6512
    %v6514 = vsel %vm6503, nan, %v6513
    %v6515 = vlaneseq
    %v6516 = vshrl.u32 %v6515, 7
    %v6517 = vadd.s32 %v6516, 8
    %v6518 = vadd.s32 %v6516, 16
    %v6519 = vadd.s32 %v6516, 24
    %v6520 = vlaneseq
    %v6521 = vand.u32 %v6520, 127
    %v6522 = vshra.s32 %v6521, 6
    %v6523 = vand.u32 %v6521, 63
    %v6524 = vshra.s32 %v6523, 2
    %v6525 = vand.u32 %v6523, 3
    %v6526 = vshra.s32 %v6524, 3
    %v6527 = vshll.u32 %v6526, 2
    %v6528 = vadd.s32 %v6527, 16
    %v6529 = vadd.s32 %v6528, %v6525
    %v6530 = vadd.s32 %v6529, 8
    %vm6531 = vcmp.eq.s32.totalorder %v6516, %v6529
    %vm6532 = vcmp.eq.s32.totalorder %v6517, %v6529
    %vm6533 = vcmp.eq.s32.totalorder %v6518, %v6529
    %vm6534 = vcmp.eq.s32.totalorder %v6519, %v6529
    %v6535 = vsel %vm6531, 1, 0
    %v6536 = vsel %vm6532, 1, 0
    %v6537 = vsel %vm6533, 1, 0
    %v6538 = vsel %vm6534, 1, 0
    %v6539 = vcvt.s32.f32 %v6535
    %v6540 = vcvt.s32.f32 %v6536
    %v6541 = vcvt.s32.f32 %v6537
    %v6542 = vcvt.s32.f32 %v6538
    %vm6543 = vcmp.eq.s32.totalorder %v6516, %v6530
    %vm6544 = vcmp.eq.s32.totalorder %v6517, %v6530
    %vm6545 = vcmp.eq.s32.totalorder %v6518, %v6530
    %vm6546 = vcmp.eq.s32.totalorder %v6519, %v6530
    %v6547 = vsel %vm6543, 1, 0
    %v6548 = vsel %vm6544, 1, 0
    %v6549 = vsel %vm6545, 1, 0
    %v6550 = vsel %vm6546, 1, 0
    %v6551 = vcvt.s32.f32 %v6547
    %v6552 = vcvt.s32.f32 %v6548
    %v6553 = vcvt.s32.f32 %v6549
    %v6554 = vcvt.s32.f32 %v6550
    %vm6555 = vcmp.lt.s32.totalorder %v6516, 16
    %vm6556 = vcmp.lt.s32.totalorder %v6517, 16
    %vm6557 = vcmp.lt.s32.totalorder %v6518, 16
    %vm6558 = vcmp.lt.s32.totalorder %v6519, 16
    %vm6559 = vcmp.eq.s32.totalorder %v6516, %v6524
    %vm6560 = vcmp.eq.s32.totalorder %v6517, %v6524
    %vm6561 = vcmp.eq.s32.totalorder %v6518, %v6524
    %vm6562 = vcmp.eq.s32.totalorder %v6519, %v6524
    %vm6563 = vmand %vm6555, %vm6559
    %vm6564 = vmand %vm6556, %vm6560
    %vm6565 = vmand %vm6557, %vm6561
    %vm6566 = vmand %vm6558, %vm6562
    %v6567 = vsel %vm6563, 1, 0
    %v6568 = vsel %vm6564, 1, 0
    %v6569 = vsel %vm6565, 1, 0
    %v6570 = vsel %vm6566, 1, 0
    %v6571 = vcvt.s32.f32 %v6567
    %v6572 = vcvt.s32.f32 %v6568
    %v6573 = vcvt.s32.f32 %v6569
    %v6574 = vcvt.s32.f32 %v6570
    %vm6575 = vcmp.eq.s32.totalorder %v6522, 0
    %v6576 = vsel %vm6575, %v6539, %v6551
    %v6577 = vsel %vm6575, %v6540, %v6552
    %v6578 = vsel %vm6575, %v6541, %v6553
    %v6579 = vsel %vm6575, %v6542, %v6554
    %v6580 = vsub.f32 0.0, %v6551
    %v6581 = vsub.f32 0.0, %v6552
    %v6582 = vsub.f32 0.0, %v6553
    %v6583 = vsub.f32 0.0, %v6554
    %v6584 = vsel %vm6575, %v6580, %v6539
    %v6585 = vsel %vm6575, %v6581, %v6540
    %v6586 = vsel %vm6575, %v6582, %v6541
    %v6587 = vsel %vm6575, %v6583, %v6542
    %v6589 = vsel %vm381, %v6203, 0
    %v6592 = vsel %vm381, %v6306, 0
    %6594 = vmatprep.subr.mxu0 0.0
    %6595 = vmatpush1.msra.mxu0 %v6571
    %6596 = vmatprep.subr.mxu0 0.0
    %6597 = vmatpush1.msra.mxu0 %v6572
    %6598 = vmatprep.subr.mxu0 0.0
    %6599 = vmatpush1.msra.mxu0 %v6573
    %6600 = vmatprep.subr.mxu0 0.0
    %6601 = vmatpush1.msra.mxu0 %v6574
    %6602 = vmatprep.subr.mxu0 0.0
    %6603 = vmatpush1.msra.mxu0 0.0
    %6604 = vmatprep.subr.mxu0 0.0
    %6605 = vmatpush1.msra.mxu0 0.0
    %6606 = vmatprep.subr.mxu0 0.0
    %6607 = vmatpush1.msra.mxu0 0.0
    %6608 = vmatprep.subr.mxu0 0.0
    %6609 = vmatpush1.msra.mxu0 0.0
    %6610 = vmatprep.subr.mxu0 0.0
    %6611 = vmatpush1.msra.mxu0 0.0
    %6612 = vmatprep.subr.mxu0 0.0
    %6613 = vmatpush1.msra.mxu0 0.0
    %6614 = vmatprep.subr.mxu0 0.0
    %6615 = vmatpush1.msra.mxu0 0.0
    %6616 = vmatprep.subr.mxu0 0.0
    %6617 = vmatpush1.msra.mxu0 0.0
    %6618 = vmatprep.subr.mxu0 0.0
    %6619 = vmatpush1.msra.mxu0 0.0
    %6620 = vmatprep.subr.mxu0 0.0
    %6621 = vmatpush1.msra.mxu0 0.0
    %6622 = vmatprep.subr.mxu0 0.0
    %6623 = vmatpush1.msra.mxu0 0.0
    %6624 = vmatprep.subr.mxu0 0.0
    %6625 = vmatpush1.msra.mxu0 0.0
    %6626 = vmatprep.subr.mxu0 0.0
    %6627 = vmatpush1.msra.mxu0 0.0
    %6628 = vmatprep.subr.mxu0 0.0
    %6629 = vmatpush1.msra.mxu0 0.0
    %6630 = vmatprep.subr.mxu0 0.0
    %6631 = vmatpush1.msra.mxu0 0.0
    %6632 = vmatprep.subr.mxu0 0.0
    %6633 = vmatpush1.msra.mxu0 0.0
    %6634 = vmatprep.subr.mxu0 0.0
    %6635 = vmatpush1.msra.mxu0 0.0
    %6636 = vmatprep.subr.mxu0 0.0
    %6637 = vmatpush1.msra.mxu0 0.0
    %6638 = vmatprep.subr.mxu0 0.0
    %6639 = vmatpush1.msra.mxu0 0.0
    %6640 = vmatprep.subr.mxu0 0.0
    %6641 = vmatpush1.msra.mxu0 0.0
    %6642 = vmatprep.subr.mxu0 0.0
    %6643 = vmatpush1.msra.mxu0 0.0
    %6644 = vmatprep.subr.mxu0 0.0
    %6645 = vmatpush1.msra.mxu0 0.0
    %6646 = vmatprep.subr.mxu0 0.0
    %6647 = vmatpush1.msra.mxu0 0.0
    %6648 = vmatprep.subr.mxu0 0.0
    %6649 = vmatpush1.msra.mxu0 0.0
    %6650 = vmatprep.subr.mxu0 0.0
    %6651 = vmatpush1.msra.mxu0 0.0
    %6652 = vmatprep.subr.mxu0 0.0
    %6653 = vmatpush1.msra.mxu0 0.0
    %6654 = vmatprep.subr.mxu0 0.0
    %6655 = vmatpush1.msra.mxu0 0.0
    %6656 = vmatprep.subr.mxu0 0.0
    %6657 = vmatpush1.msra.mxu0 0.0
    %6658 = vmatprep.mubr.f32.mxu0 0.0
    %6659 = vmatmul.mubr.f32.gmra.mrb[0].mxu0 %v6589
    %v6660 = vpop.f32.mrb[0].mxu0
    %v6661 = vadd.f32 0.0, %v6660
    %v6662 = vpop.f32.mrb[0].mxu0
    %6663 = vmatprep.mubr.f32.mxu0 0.0
    %6664 = vmatmul.mubr.f32.gmra.mrb[0].mxu0 %v6592
    %v6665 = vpop.f32.mrb[0].mxu0
    %v6666 = vadd.f32 0.0, %v6665
    %v6667 = vpop.f32.mrb[0].mxu0
    %6668 = vdwg.mxu0
    %v6670 = vsel %vm381, %v6410, 0
    %v6673 = vsel %vm381, %v6514, 0
    %6675 = vmatprep.subr.mxu0 0.0
    %6676 = vmatpush1.msra.mxu0 %v6571
    %6677 = vmatprep.subr.mxu0 0.0
    %6678 = vmatpush1.msra.mxu0 %v6572
    %6679 = vmatprep.subr.mxu0 0.0
    %6680 = vmatpush1.msra.mxu0 %v6573
    %6681 = vmatprep.subr.mxu0 0.0
    %6682 = vmatpush1.msra.mxu0 %v6574
    %6683 = vmatprep.subr.mxu0 0.0
    %6684 = vmatpush1.msra.mxu0 0.0
    %6685 = vmatprep.subr.mxu0 0.0
    %6686 = vmatpush1.msra.mxu0 0.0
    %6687 = vmatprep.subr.mxu0 0.0
    %6688 = vmatpush1.msra.mxu0 0.0
    %6689 = vmatprep.subr.mxu0 0.0
    %6690 = vmatpush1.msra.mxu0 0.0
    %6691 = vmatprep.subr.mxu0 0.0
    %6692 = vmatpush1.msra.mxu0 0.0
    %6693 = vmatprep.subr.mxu0 0.0
    %6694 = vmatpush1.msra.mxu0 0.0
    %6695 = vmatprep.subr.mxu0 0.0
    %6696 = vmatpush1.msra.mxu0 0.0
    %6697 = vmatprep.subr.mxu0 0.0
    %6698 = vmatpush1.msra.mxu0 0.0
    %6699 = vmatprep.subr.mxu0 0.0
    %6700 = vmatpush1.msra.mxu0 0.0
    %6701 = vmatprep.subr.mxu0 0.0
    %6702 = vmatpush1.msra.mxu0 0.0
    %6703 = vmatprep.subr.mxu0 0.0
    %6704 = vmatpush1.msra.mxu0 0.0
    %6705 = vmatprep.subr.mxu0 0.0
    %6706 = vmatpush1.msra.mxu0 0.0
    %6707 = vmatprep.subr.mxu0 0.0
    %6708 = vmatpush1.msra.mxu0 0.0
    %6709 = vmatprep.subr.mxu0 0.0
    %6710 = vmatpush1.msra.mxu0 0.0
    %6711 = vmatprep.subr.mxu0 0.0
    %6712 = vmatpush1.msra.mxu0 0.0
    %6713 = vmatprep.subr.mxu0 0.0
    %6714 = vmatpush1.msra.mxu0 0.0
    %6715 = vmatprep.subr.mxu0 0.0
    %6716 = vmatpush1.msra.mxu0 0.0
    %6717 = vmatprep.subr.mxu0 0.0
    %6718 = vmatpush1.msra.mxu0 0.0
    %6719 = vmatprep.subr.mxu0 0.0
    %6720 = vmatpush1.msra.mxu0 0.0
    %6721 = vmatprep.subr.mxu0 0.0
    %6722 = vmatpush1.msra.mxu0 0.0
    %6723 = vmatprep.subr.mxu0 0.0
    %6724 = vmatpush1.msra.mxu0 0.0
    %6725 = vmatprep.subr.mxu0 0.0
    %6726 = vmatpush1.msra.mxu0 0.0
    %6727 = vmatprep.subr.mxu0 0.0
    %6728 = vmatpush1.msra.mxu0 0.0
    %6729 = vmatprep.subr.mxu0 0.0
    %6730 = vmatpush1.msra.mxu0 0.0
    %6731 = vmatprep.subr.mxu0 0.0
    %6732 = vmatpush1.msra.mxu0 0.0
    %6733 = vmatprep.subr.mxu0 0.0
    %6734 = vmatpush1.msra.mxu0 0.0
    %6735 = vmatprep.subr.mxu0 0.0
    %6736 = vmatpush1.msra.mxu0 0.0
    %6737 = vmatprep.subr.mxu0 0.0
    %6738 = vmatpush1.msra.mxu0 0.0
    %6739 = vmatprep.mubr.f32.mxu0 0.0
    %6740 = vmatmul.mubr.f32.gmra.mrb[0].mxu0 %v6670
    %v6741 = vpop.f32.mrb[0].mxu0
    %v6742 = vadd.f32 0.0, %v6741
    %v6743 = vpop.f32.mrb[0].mxu0
    %6744 = vmatprep.mubr.f32.mxu0 0.0
    %6745 = vmatmul.mubr.f32.gmra.mrb[0].mxu0 %v6673
    %v6746 = vpop.f32.mrb[0].mxu0
    %v6747 = vadd.f32 0.0, %v6746
    %v6748 = vpop.f32.mrb[0].mxu0
    %6749 = vdwg.mxu0
    %v6751 = vsel %vm381, %v6095, 0
    %v6754 = vsel %vm381, %v6098, 0
    %6756 = vmatprep.subr.mxu0 0.0
    %6757 = vmatpush1.msra.mxu0 %v6576
    %6758 = vmatprep.subr.mxu0 0.0
    %6759 = vmatpush1.msra.mxu0 %v6577
    %6760 = vmatprep.subr.mxu0 0.0
    %6761 = vmatpush1.msra.mxu0 %v6578
    %6762 = vmatprep.subr.mxu0 0.0
    %6763 = vmatpush1.msra.mxu0 %v6579
    %6764 = vmatprep.subr.mxu0 0.0
    %6765 = vmatpush1.msra.mxu0 0.0
    %6766 = vmatprep.subr.mxu0 0.0
    %6767 = vmatpush1.msra.mxu0 0.0
    %6768 = vmatprep.subr.mxu0 0.0
    %6769 = vmatpush1.msra.mxu0 0.0
    %6770 = vmatprep.subr.mxu0 0.0
    %6771 = vmatpush1.msra.mxu0 0.0
    %6772 = vmatprep.subr.mxu0 0.0
    %6773 = vmatpush1.msra.mxu0 0.0
    %6774 = vmatprep.subr.mxu0 0.0
    %6775 = vmatpush1.msra.mxu0 0.0
    %6776 = vmatprep.subr.mxu0 0.0
    %6777 = vmatpush1.msra.mxu0 0.0
    %6778 = vmatprep.subr.mxu0 0.0
    %6779 = vmatpush1.msra.mxu0 0.0
    %6780 = vmatprep.subr.mxu0 0.0
    %6781 = vmatpush1.msra.mxu0 0.0
    %6782 = vmatprep.subr.mxu0 0.0
    %6783 = vmatpush1.msra.mxu0 0.0
    %6784 = vmatprep.subr.mxu0 0.0
    %6785 = vmatpush1.msra.mxu0 0.0
    %6786 = vmatprep.subr.mxu0 0.0
    %6787 = vmatpush1.msra.mxu0 0.0
    %6788 = vmatprep.subr.mxu0 0.0
    %6789 = vmatpush1.msra.mxu0 0.0
    %6790 = vmatprep.subr.mxu0 0.0
    %6791 = vmatpush1.msra.mxu0 0.0
    %6792 = vmatprep.subr.mxu0 0.0
    %6793 = vmatpush1.msra.mxu0 0.0
    %6794 = vmatprep.subr.mxu0 0.0
    %6795 = vmatpush1.msra.mxu0 0.0
    %6796 = vmatprep.subr.mxu0 0.0
    %6797 = vmatpush1.msra.mxu0 0.0
    %6798 = vmatprep.subr.mxu0 0.0
    %6799 = vmatpush1.msra.mxu0 0.0
    %6800 = vmatprep.subr.mxu0 0.0
    %6801 = vmatpush1.msra.mxu0 0.0
    %6802 = vmatprep.subr.mxu0 0.0
    %6803 = vmatpush1.msra.mxu0 0.0
    %6804 = vmatprep.subr.mxu0 0.0
    %6805 = vmatpush1.msra.mxu0 0.0
    %6806 = vmatprep.subr.mxu0 0.0
    %6807 = vmatpush1.msra.mxu0 0.0
    %6808 = vmatprep.subr.mxu0 0.0
    %6809 = vmatpush1.msra.mxu0 0.0
    %6810 = vmatprep.subr.mxu0 0.0
    %6811 = vmatpush1.msra.mxu0 0.0
    %6812 = vmatprep.subr.mxu0 0.0
    %6813 = vmatpush1.msra.mxu0 0.0
    %6814 = vmatprep.subr.mxu0 0.0
    %6815 = vmatpush1.msra.mxu0 0.0
    %6816 = vmatprep.subr.mxu0 0.0
    %6817 = vmatpush1.msra.mxu0 0.0
    %6818 = vmatprep.subr.mxu0 0.0
    %6819 = vmatpush1.msra.mxu0 0.0
    %6820 = vmatprep.mubr.f32.mxu0 0.0
    %6821 = vmatmul.mubr.f32.gmra.mrb[0].mxu0 %v6751
    %v6822 = vpop.f32.mrb[0].mxu0
    %v6823 = vadd.f32 0.0, %v6822
    %v6824 = vpop.f32.mrb[0].mxu0
    %6825 = vmatprep.mubr.f32.mxu0 0.0
    %6826 = vmatmul.mubr.f32.gmra.mrb[0].mxu0 %v6754
    %v6827 = vpop.f32.mrb[0].mxu0
    %v6828 = vadd.f32 0.0, %v6827
    %v6829 = vpop.f32.mrb[0].mxu0
    %6830 = vdwg.mxu0
    %6831 = vmatprep.subr.mxu0 0.0
    %6832 = vmatpush1.msra.mxu0 %v6584
    %6833 = vmatprep.subr.mxu0 0.0
    %6834 = vmatpush1.msra.mxu0 %v6585
    %6835 = vmatprep.subr.mxu0 0.0
    %6836 = vmatpush1.msra.mxu0 %v6586
    %6837 = vmatprep.subr.mxu0 0.0
    %6838 = vmatpush1.msra.mxu0 %v6587
    %6839 = vmatprep.subr.mxu0 0.0
    %6840 = vmatpush1.msra.mxu0 0.0
    %6841 = vmatprep.subr.mxu0 0.0
    %6842 = vmatpush1.msra.mxu0 0.0
    %6843 = vmatprep.subr.mxu0 0.0
    %6844 = vmatpush1.msra.mxu0 0.0
    %6845 = vmatprep.subr.mxu0 0.0
    %6846 = vmatpush1.msra.mxu0 0.0
    %6847 = vmatprep.subr.mxu0 0.0
    %6848 = vmatpush1.msra.mxu0 0.0
    %6849 = vmatprep.subr.mxu0 0.0
    %6850 = vmatpush1.msra.mxu0 0.0
    %6851 = vmatprep.subr.mxu0 0.0
    %6852 = vmatpush1.msra.mxu0 0.0
    %6853 = vmatprep.subr.mxu0 0.0
    %6854 = vmatpush1.msra.mxu0 0.0
    %6855 = vmatprep.subr.mxu0 0.0
    %6856 = vmatpush1.msra.mxu0 0.0
    %6857 = vmatprep.subr.mxu0 0.0
    %6858 = vmatpush1.msra.mxu0 0.0
    %6859 = vmatprep.subr.mxu0 0.0
    %6860 = vmatpush1.msra.mxu0 0.0
    %6861 = vmatprep.subr.mxu0 0.0
    %6862 = vmatpush1.msra.mxu0 0.0
    %6863 = vmatprep.subr.mxu0 0.0
    %6864 = vmatpush1.msra.mxu0 0.0
    %6865 = vmatprep.subr.mxu0 0.0
    %6866 = vmatpush1.msra.mxu0 0.0
    %6867 = vmatprep.subr.mxu0 0.0
    %6868 = vmatpush1.msra.mxu0 0.0
    %6869 = vmatprep.subr.mxu0 0.0
    %6870 = vmatpush1.msra.mxu0 0.0
    %6871 = vmatprep.subr.mxu0 0.0
    %6872 = vmatpush1.msra.mxu0 0.0
    %6873 = vmatprep.subr.mxu0 0.0
    %6874 = vmatpush1.msra.mxu0 0.0
    %6875 = vmatprep.subr.mxu0 0.0
    %6876 = vmatpush1.msra.mxu0 0.0
    %6877 = vmatprep.subr.mxu0 0.0
    %6878 = vmatpush1.msra.mxu0 0.0
    %6879 = vmatprep.subr.mxu0 0.0
    %6880 = vmatpush1.msra.mxu0 0.0
    %6881 = vmatprep.subr.mxu0 0.0
    %6882 = vmatpush1.msra.mxu0 0.0
    %6883 = vmatprep.subr.mxu0 0.0
    %6884 = vmatpush1.msra.mxu0 0.0
    %6885 = vmatprep.subr.mxu0 0.0
    %6886 = vmatpush1.msra.mxu0 0.0
    %6887 = vmatprep.subr.mxu0 0.0
    %6888 = vmatpush1.msra.mxu0 0.0
    %6889 = vmatprep.subr.mxu0 0.0
    %6890 = vmatpush1.msra.mxu0 0.0
    %6891 = vmatprep.subr.mxu0 0.0
    %6892 = vmatpush1.msra.mxu0 0.0
    %6893 = vmatprep.subr.mxu0 0.0
    %6894 = vmatpush1.msra.mxu0 0.0
    %6895 = vmatprep.mubr.f32.mxu0 0.0
    %6896 = vmatmul.mubr.f32.gmra.mrb[0].mxu0 %v6751
    %v6897 = vpop.f32.mrb[0].mxu0
    %v6898 = vadd.f32 0.0, %v6897
    %v6899 = vpop.f32.mrb[0].mxu0
    %6900 = vmatprep.mubr.f32.mxu0 0.0
    %6901 = vmatmul.mubr.f32.gmra.mrb[0].mxu0 %v6754
    %v6902 = vpop.f32.mrb[0].mxu0
    %v6903 = vadd.f32 0.0, %v6902
    %v6904 = vpop.f32.mrb[0].mxu0
    %6905 = vdwg.mxu0
    %v6906 = vmul.f32 %v6661, %v6823
    %v6907 = vmul.f32 %v6666, %v6828
    %v6908 = vmul.f32 %v6742, %v6898
    %v6909 = vmul.f32 %v6747, %v6903
    %v6910 = vadd.f32 %v6906, %v6908
    %v6911 = vadd.f32 %v6907, %v6909
    %v6912 = vmul.f32 %v6910, %v6910
    %v6913 = vmul.f32 %v6911, %v6911
    %6914 = vadd.xlane.f32.xlu0 %v6912
    %v6915 = vpop.xlane.xlu0 %6914
    %6916 = vadd.xlane.f32.xlu0 %v6913
    %v6917 = vpop.xlane.xlu0 %6916
    %v6918 = vadd.f32 %v6915, 1e-12
    %v6919 = vadd.f32 %v6917, 1e-12
    %v6920 = vrsqrt.pop %v6918
    %v6921 = vrsqrt.pop %v6919
    %v6922 = vmul.f32 %v6920, 2.0
    %v6923 = vmul.f32 %v6921, 2.0
    %v6924 = vmul.f32 %v6910, %v6922
    %v6925 = vmul.f32 %v6911, %v6923
    %6926 = vst [vmem:[#allocation11] sm:$0xff] %v6924
    %6927 = vst [vmem:[#allocation11 + $0x8] sm:$0xff] %v6925
    // Predicated region
    $region46: #{tpu_custom_call.1} parent=1 // pred_check
      _
    $region47: #{tpu_custom_call.1} parent=1 // pred_check_branch
      %6929 = sbr.rel (0) target = $region49
    $region48: #{tpu_custom_call.1} parent=1 // pred_region
      %s6931 = ssub.s32 256, 256
      %6932 = vsyncadd [#allocation4], %s6931
      %s6933 = sshll.u32 [#allocation11], 4
      %s6934 = int_to_ptr.vmem [resolvable:$true] %s6933
      %6939 = dma.vmem_to_hbm [thread:$0]  %s6934, 256, %s6, [#allocation4], 128, 128, 8
    $region49: #{tpu_custom_call.1} parent=1 // pred_fallthru
      _
    // Predicated region
    $region50: #{tpu_custom_call.1} parent=1 // pred_check
      _
    $region51: #{tpu_custom_call.1} parent=1 // pred_check_branch
      %6941 = sbr.rel (0) target = $region53
    $region52: #{tpu_custom_call.1} parent=1 // pred_region
      %6942 = dma.done [#allocation4], 256
    $region53: #{tpu_custom_call.1} parent=1 // pred_fallthru
      _
    %6943 = vsyncpa [#allocation3], 1
    %6944 = vsyncpa [#allocation6], 1
    %6945 = vsyncpa [#allocation9], 1
    %6946 = vsyncpa [#allocation4], 1

</llo_original>
